<compile_context>
chip_gen: v7x
topology: tpu7x:2x2x1
jax: 0.10.0
libtpu: 0.0.40
codegen_flags: <defaults>
</compile_context>

<pallas_src>
import jax
import jax.numpy as jnp
from jax.experimental import pallas as pl
from jax.experimental.pallas import tpu as pltpu

SEQ = 512       # forward() views ids/masks as (1, 512)
HID = 768       # BERT pooler_output width / FCNN in/out dim
VOCAB = 1024    # synthetic vocab size (multiple of 128 for clean MXU K / lane dims)
EPS = 1e-6      # CosineSimilarity eps


def feature_extractor_kernel(hist_ref, emb_ref, wp_ref, wf_ref, bias_ref, out_ref):
    """One (question, answer) pair per grid step.

    hist_ref : (2, VOCAB)    f32  masked token-count histogram (row 0 = q, 1 = a)
    emb_ref  : (VOCAB, HID)  bf16 embedding table       (resident across grid)
    wp_ref   : (HID, HID)    bf16 stub-pooler dense W   (resident)
    wf_ref   : (2*HID, HID)  bf16 stacked FCNN W [wq;wa](resident)
    bias_ref : (3, HID)      f32  packed biases: row 0 = bp, 1 = bq, 2 = ba
    out_ref  : (1, 1)        f32  cosine similarity for this pair
    """
    hist = hist_ref[...]                                       # (2, VOCAB) f32

    # ---- stub BERT pooler: masked mean pooling -> dense -> tanh ------------
    # masked token sums for BOTH branches in one MXU call:  hist @ emb
    sums = jnp.dot(hist.astype(jnp.bfloat16), emb_ref[...],
                   preferred_element_type=jnp.float32)          # (2, HID) f32
    # row-sum of the histogram == number of masked tokens per branch
    cnt = jnp.sum(hist, axis=1, keepdims=True)                  # (2, 1) f32
    inv_cnt = pl.reciprocal(jnp.maximum(cnt, 1.0), approx=True)
    pooled = sums * inv_cnt                                     # (2, HID) f32

    # shared pooler dense + tanh, fused for both branches (one matmul, one tanh)
    emb2 = jnp.tanh(
        jnp.dot(pooled.astype(jnp.bfloat16), wp_ref[...],
                preferred_element_type=jnp.float32)
        + bias_ref[0:1, :])                                     # (2, HID) f32

    # ---- FCNN: Linear(768,768) + ReLU (+ Dropout) then residual add --------
    # Both branch matmuls fused into ONE MXU call with a block-diagonal LHS:
    #   [[q, 0], [0, a]] (2, 2*HID)  @  [[wq], [wa]] (2*HID, HID)
    # TODO(synk): Dropout(0.2) is treated as inference-mode identity (no RNG mask).
    row = jax.lax.broadcasted_iota(jnp.int32, (2, 1), 0)        # [[0], [1]]
    lhs = jnp.concatenate(
        [jnp.where(row == 0, emb2, 0.0),
         jnp.where(row == 1, emb2, 0.0)], axis=1)               # (2, 2*HID) f32
    fc = jnp.dot(lhs.astype(jnp.bfloat16), wf_ref[...],
                 preferred_element_type=jnp.float32)            # (2, HID) f32
    fc = jnp.maximum(fc + bias_ref[1:3, :], 0.0) + emb2         # ReLU + residual

    # ---- cosine similarity along hidden dim (torch dim=1, eps=1e-6) --------
    q = fc[0:1, :]
    a = fc[1:2, :]
    dot_qa = jnp.sum(q * a, keepdims=True)                      # (1, 1)
    nq2 = jnp.sum(q * q, keepdims=True)
    na2 = jnp.sum(a * a, keepdims=True)
    denom = jnp.maximum(jnp.sqrt(nq2 * na2), EPS)
    out_ref[...] = dot_qa / denom                               # exact divide


def feature_extractor(ques_ids, ques_mask, ans_ids, ans_mask, params):
    """Mirrors Feature_Extractor.forward(Inputs), batched over (q, a) pairs."""
    ids = jnp.stack([ques_ids.reshape(-1, SEQ),
                     ans_ids.reshape(-1, SEQ)], axis=1)          # (B, 2, SEQ)
    masks = jnp.stack([ques_mask.reshape(-1, SEQ),
                       ans_mask.reshape(-1, SEQ)], axis=1)       # (B, 2, SEQ)
    B = ids.shape[0]

    # Tiny scatter-add -> (B, 2, VOCAB) masked histogram.  This replaces the old
    # (2*SEQ, HID) bf16 gathered-token slab (~3 MiB of avoidable HBM traffic).
    b_idx = jnp.arange(B, dtype=jnp.int32)[:, None, None]
    r_idx = jnp.arange(2, dtype=jnp.int32)[None, :, None]
    hist = jnp.zeros((B, 2, VOCAB), jnp.float32).at[
        b_idx, r_idx, ids.astype(jnp.int32)].add(masks.astype(jnp.float32))

    out = pl.pallas_call(
        feature_extractor_kernel,
        out_shape=jax.ShapeDtypeStruct((B, 1, 1), jnp.float32),
        grid=(B,),
        in_specs=[
            pl.BlockSpec((None, 2, VOCAB), lambda b: (b, 0, 0)),  # per-pair hist
            pl.BlockSpec((VOCAB, HID),     lambda b: (0, 0)),     # emb (resident)
            pl.BlockSpec((HID, HID),       lambda b: (0, 0)),     # pooler W (resident)
            pl.BlockSpec((2 * HID, HID),   lambda b: (0, 0)),     # [wq; wa] (resident)
            pl.BlockSpec((3, HID),         lambda b: (0, 0)),     # packed biases
        ],
        out_specs=pl.BlockSpec((None, 1, 1), lambda b: (b, 0, 0)),
        compiler_params=pltpu.CompilerParams(
            dimension_semantics=("parallel",),
            vmem_limit_bytes=16 * 1024 * 1024),
    )(hist, params["emb"], params["wp"], params["wf"], params["bias"])

    # torch CosineSimilarity(dim=1) on (1, 768) tensors -> one scalar per pair
    return out.reshape(B)


def init_params(key):
    ks = jax.random.split(key, 7)
    scale = 1.0 / jnp.sqrt(jnp.float32(HID))
    uni = lambda k: jax.random.uniform(k, (HID, HID), jnp.float32, -scale, scale)
    unib = lambda k: jax.random.uniform(k, (1, HID), jnp.float32, -scale, scale)
    wq, wa = uni(ks[3]), uni(ks[5])
    return {
        # synthetic BERT: bf16 embedding table + pooler dense (shared for q/a)
        "emb": (0.02 * jax.random.normal(ks[0], (VOCAB, HID), jnp.float32)
                ).astype(jnp.bfloat16),
        "wp": uni(ks[1]).astype(jnp.bfloat16),
        # stacked FCNN weights: rows [0:HID) = question branch, [HID:2*HID) = answer
        "wf": jnp.concatenate([wq, wa], axis=0).astype(jnp.bfloat16),
        # packed biases: row 0 = pooler, row 1 = question FCNN, row 2 = answer FCNN
        "bias": jnp.concatenate([unib(ks[2]), unib(ks[4]), unib(ks[6])], axis=0),
    }


if __name__ == "__main__":
    B = 4
    root = jax.random.PRNGKey(0)
    kp, kq, ka = jax.random.split(root, 3)
    params = init_params(kp)

    ques_ids = jax.random.randint(kq, (B, SEQ), 0, VOCAB, dtype=jnp.int32)
    ans_ids = jax.random.randint(ka, (B, SEQ), 0, VOCAB, dtype=jnp.int32)
    # attention masks: per-pair valid prefix lengths, rest padding
    pos = jnp.arange(SEQ)[None, :]
    ques_mask = (pos < jnp.array([400, 128, 512, 37])[:, None]).astype(jnp.int32)
    ans_mask = (pos < jnp.array([350, 512, 64, 410])[:, None]).astype(jnp.int32)

    out = feature_extractor(ques_ids, ques_mask, ans_ids, ans_mask, params)
    out = jax.block_until_ready(out)

    assert out.shape == (B,)
    assert bool(jnp.all(jnp.isfinite(out)))
    assert bool(jnp.all(jnp.abs(out) <= 1.0 + 1e-2))
    print("KERNEL_OK")
</pallas_src>

<mosaic_0001>
module attributes {stable_mosaic.version = 11 : i64} {
  func.func @feature_extractor_kernel(%arg0: i32, %arg1: memref<1x2x1024xf32, #tpu.memory_space<vmem>>, %arg2: memref<1024x768xbf16, #tpu.memory_space<vmem>>, %arg3: memref<768x768xbf16, #tpu.memory_space<vmem>>, %arg4: memref<1536x768xbf16, #tpu.memory_space<vmem>>, %arg5: memref<3x768xf32, #tpu.memory_space<vmem>>, %arg6: memref<1x1x1xf32, #tpu.memory_space<vmem>>) attributes {dimension_semantics = [#tpu.dimension_semantics<parallel>], iteration_bounds = array<i64: 4>, scalar_prefetch = 0 : i64, scratch_operands = 0 : i64, tpu.core_type = #tpu.core_type<tc>, window_params = [{transform_indices = @transform_0, window_bounds = array<i64: 1, 2, 1024>}, {pipeline_mode = #tpu.pipeline_mode<synchronous>, transform_indices = @transform_1, window_bounds = array<i64: 1024, 768>}, {pipeline_mode = #tpu.pipeline_mode<synchronous>, transform_indices = @transform_2, window_bounds = array<i64: 768, 768>}, {pipeline_mode = #tpu.pipeline_mode<synchronous>, transform_indices = @transform_3, window_bounds = array<i64: 1536, 768>}, {pipeline_mode = #tpu.pipeline_mode<synchronous>, transform_indices = @transform_4, window_bounds = array<i64: 3, 768>}, {transform_indices = @transform_5, window_bounds = array<i64: 1, 1, 1>}]} {
    %c0 = arith.constant 0 : index
    %c0_0 = arith.constant 0 : index
    %c0_1 = arith.constant 0 : index
    %0 = vector.load %arg1[%c0, %c0_0, %c0_1] : memref<1x2x1024xf32, #tpu.memory_space<vmem>>, vector<1x2x1024xf32>
    %1 = vector.shape_cast %0 : vector<1x2x1024xf32> to vector<2x1024xf32>
    %2 = arith.truncf %1 : vector<2x1024xf32> to vector<2x1024xbf16>
    %c0_2 = arith.constant 0 : index
    %c0_3 = arith.constant 0 : index
    %3 = vector.load %arg2[%c0_2, %c0_3] : memref<1024x768xbf16, #tpu.memory_space<vmem>>, vector<1024x768xbf16>
    %cst = arith.constant dense<0.000000e+00> : vector<2x768xf32>
    %4 = tpu.matmul %2, %3, %cst {dimension_numbers = #tpu.dot_dimension_numbers<[1], [0], [0], [1], [0, 0, 1, 1], [], []>} : vector<2x1024xbf16>, vector<1024x768xbf16>, vector<2x768xf32> -> vector<2x768xf32>
    %cst_4 = arith.constant dense<0.000000e+00> : vector<2xf32>
    %5 = vector.multi_reduction <add>, %1, %cst_4 [1] : vector<2x1024xf32> to vector<2xf32>
    %6 = vector.shape_cast %5 : vector<2xf32> to vector<2x1xf32>
    %cst_5 = arith.constant 1.000000e+00 : f32
    %7 = vector.broadcast %cst_5 : f32 to vector<2x1xf32>
    %8 = arith.maximumf %6, %7 : vector<2x1xf32>
    %9 = tpu.reciprocal %8 {approx = true} : vector<2x1xf32> -> vector<2x1xf32>
    %10 = vector.broadcast %9 : vector<2x1xf32> to vector<2x768xf32>
    %11 = arith.mulf %4, %10 : vector<2x768xf32>
    %12 = arith.truncf %11 : vector<2x768xf32> to vector<2x768xbf16>
    %c0_6 = arith.constant 0 : index
    %c0_7 = arith.constant 0 : index
    %13 = vector.load %arg3[%c0_6, %c0_7] : memref<768x768xbf16, #tpu.memory_space<vmem>>, vector<768x768xbf16>
    %cst_8 = arith.constant dense<0.000000e+00> : vector<2x768xf32>
    %14 = tpu.matmul %12, %13, %cst_8 {dimension_numbers = #tpu.dot_dimension_numbers<[1], [0], [0], [1], [0, 0, 1, 1], [], []>} : vector<2x768xbf16>, vector<768x768xbf16>, vector<2x768xf32> -> vector<2x768xf32>
    %c0_9 = arith.constant 0 : index
    %c0_10 = arith.constant 0 : index
    %15 = vector.load %arg5[%c0_9, %c0_10] : memref<3x768xf32, #tpu.memory_space<vmem>>, vector<1x768xf32>
    %16 = vector.broadcast %15 : vector<1x768xf32> to vector<2x768xf32>
    %17 = arith.addf %14, %16 : vector<2x768xf32>
    %18 = math.tanh %17 : vector<2x768xf32>
    %19 = tpu.iota {dimensions = array<i32: 0>} : vector<2x1xi32>
    %c0_i32 = arith.constant 0 : i32
    %20 = vector.broadcast %c0_i32 : i32 to vector<2x1xi32>
    %21 = arith.cmpi eq, %19, %20 : vector<2x1xi32>
    %cst_11 = arith.constant 0.000000e+00 : f32
    %22 = vector.shape_cast %21 : vector<2x1xi1> to vector<2x1xi1>
    %23 = vector.broadcast %22 : vector<2x1xi1> to vector<2x768xi1>
    %24 = vector.broadcast %cst_11 : f32 to vector<2x768xf32>
    %25 = arith.select %23, %18, %24 : vector<2x768xi1>, vector<2x768xf32>
    %c1_i32 = arith.constant 1 : i32
    %26 = vector.broadcast %c1_i32 : i32 to vector<2x1xi32>
    %27 = arith.cmpi eq, %19, %26 : vector<2x1xi32>
    %cst_12 = arith.constant 0.000000e+00 : f32
    %28 = vector.shape_cast %27 : vector<2x1xi1> to vector<2x1xi1>
    %29 = vector.broadcast %28 : vector<2x1xi1> to vector<2x768xi1>
    %30 = vector.broadcast %cst_12 : f32 to vector<2x768xf32>
    %31 = arith.select %29, %18, %30 : vector<2x768xi1>, vector<2x768xf32>
    %32 = tpu.concatenate %25, %31 in 1 : vector<2x768xf32>, vector<2x768xf32> -> vector<2x1536xf32>
    %33 = arith.truncf %32 : vector<2x1536xf32> to vector<2x1536xbf16>
    %c0_13 = arith.constant 0 : index
    %c0_14 = arith.constant 0 : index
    %34 = vector.load %arg4[%c0_13, %c0_14] : memref<1536x768xbf16, #tpu.memory_space<vmem>>, vector<1536x768xbf16>
    %cst_15 = arith.constant dense<0.000000e+00> : vector<2x768xf32>
    %35 = tpu.matmul %33, %34, %cst_15 {dimension_numbers = #tpu.dot_dimension_numbers<[1], [0], [0], [1], [0, 0, 1, 1], [], []>} : vector<2x1536xbf16>, vector<1536x768xbf16>, vector<2x768xf32> -> vector<2x768xf32>
    %c1 = arith.constant 1 : index
    %c0_16 = arith.constant 0 : index
    %36 = vector.load %arg5[%c1, %c0_16] : memref<3x768xf32, #tpu.memory_space<vmem>>, vector<2x768xf32>
    %37 = arith.addf %35, %36 : vector<2x768xf32>
    %cst_17 = arith.constant 0.000000e+00 : f32
    %38 = vector.broadcast %cst_17 : f32 to vector<2x768xf32>
    %39 = arith.maximumf %37, %38 : vector<2x768xf32>
    %40 = arith.addf %39, %18 : vector<2x768xf32>
    %41 = vector.extract_strided_slice %40 {offsets = [0, 0], sizes = [1, 768], strides = [1, 1]} : vector<2x768xf32> to vector<1x768xf32>
    %42 = vector.extract_strided_slice %40 {offsets = [1, 0], sizes = [1, 768], strides = [1, 1]} : vector<2x768xf32> to vector<1x768xf32>
    %43 = arith.mulf %41, %42 : vector<1x768xf32>
    %44 = vector.shape_cast %43 : vector<1x768xf32> to vector<1x1x768xf32>
    %cst_18 = arith.constant dense<0.000000e+00> : vector<1xf32>
    %45 = vector.multi_reduction <add>, %44, %cst_18 [1, 2] : vector<1x1x768xf32> to vector<1xf32>
    %46 = vector.shape_cast %45 : vector<1xf32> to vector<1x1x1xf32>
    %47 = vector.extract %46[0, 0, 0] : f32 from vector<1x1x1xf32>
    %48 = vector.broadcast %47 : f32 to vector<1x1xf32>
    %49 = arith.mulf %41, %41 : vector<1x768xf32>
    %50 = vector.shape_cast %49 : vector<1x768xf32> to vector<1x1x768xf32>
    %cst_19 = arith.constant dense<0.000000e+00> : vector<1xf32>
    %51 = vector.multi_reduction <add>, %50, %cst_19 [1, 2] : vector<1x1x768xf32> to vector<1xf32>
    %52 = vector.shape_cast %51 : vector<1xf32> to vector<1x1x1xf32>
    %53 = vector.extract %52[0, 0, 0] : f32 from vector<1x1x1xf32>
    %54 = vector.broadcast %53 : f32 to vector<1x1xf32>
    %55 = arith.mulf %42, %42 : vector<1x768xf32>
    %56 = vector.shape_cast %55 : vector<1x768xf32> to vector<1x1x768xf32>
    %cst_20 = arith.constant dense<0.000000e+00> : vector<1xf32>
    %57 = vector.multi_reduction <add>, %56, %cst_20 [1, 2] : vector<1x1x768xf32> to vector<1xf32>
    %58 = vector.shape_cast %57 : vector<1xf32> to vector<1x1x1xf32>
    %59 = vector.extract %58[0, 0, 0] : f32 from vector<1x1x1xf32>
    %60 = vector.broadcast %59 : f32 to vector<1x1xf32>
    %61 = arith.mulf %54, %60 : vector<1x1xf32>
    %62 = math.sqrt %61 : vector<1x1xf32>
    %cst_21 = arith.constant 9.99999997E-7 : f32
    %63 = vector.broadcast %cst_21 : f32 to vector<1x1xf32>
    %64 = arith.maximumf %62, %63 : vector<1x1xf32>
    %65 = arith.divf %48, %64 : vector<1x1xf32>
    %c0_22 = arith.constant 0 : index
    %c0_23 = arith.constant 0 : index
    %c0_24 = arith.constant 0 : index
    %66 = vector.load %arg6[%c0_22, %c0_23, %c0_24] : memref<1x1x1xf32, #tpu.memory_space<vmem>>, vector<1x1x1xf32>
    %67 = vector.shape_cast %66 : vector<1x1x1xf32> to vector<1x1xf32>
    %68 = vector.shape_cast %65 : vector<1x1xf32> to vector<1x1x1xf32>
    tpu.vector_store %arg6[%c0_22, %c0_23, %c0_24], %68 {strides = array<i32>} : memref<1x1x1xf32, #tpu.memory_space<vmem>>, vector<1x1x1xf32>,
    return
  }
  func.func @transform_0(%arg0: i32) -> (i32, i32, i32) {
    %c0_i32 = arith.constant 0 : i32
    %c0_i32_0 = arith.constant 0 : i32
    %c0_i32_1 = arith.constant 0 : i32
    return %arg0, %c0_i32, %c0_i32_0 : i32, i32, i32
  }
  func.func @transform_1(%arg0: i32) -> (i32, i32) {
    %c0_i32 = arith.constant 0 : i32
    %c0_i32_0 = arith.constant 0 : i32
    %c0_i32_1 = arith.constant 0 : i32
    return %c0_i32, %c0_i32_0 : i32, i32
  }
  func.func @transform_2(%arg0: i32) -> (i32, i32) {
    %c0_i32 = arith.constant 0 : i32
    %c0_i32_0 = arith.constant 0 : i32
    %c0_i32_1 = arith.constant 0 : i32
    return %c0_i32, %c0_i32_0 : i32, i32
  }
  func.func @transform_3(%arg0: i32) -> (i32, i32) {
    %c0_i32 = arith.constant 0 : i32
    %c0_i32_0 = arith.constant 0 : i32
    %c0_i32_1 = arith.constant 0 : i32
    return %c0_i32, %c0_i32_0 : i32, i32
  }
  func.func @transform_4(%arg0: i32) -> (i32, i32) {
    %c0_i32 = arith.constant 0 : i32
    %c0_i32_0 = arith.constant 0 : i32
    %c0_i32_1 = arith.constant 0 : i32
    return %c0_i32, %c0_i32_0 : i32, i32
  }
  func.func @transform_5(%arg0: i32) -> (i32, i32, i32) {
    %c0_i32 = arith.constant 0 : i32
    %c0_i32_0 = arith.constant 0 : i32
    %c0_i32_1 = arith.constant 0 : i32
    return %arg0, %c0_i32, %c0_i32_0 : i32, i32, i32
  }
}

</mosaic_0001>

<llo_original>
// kernel: tpu_custom_call.1
$region0: #{tpu_custom_call.1}
  #allocation0 [shape = 'u32[]', space=smem, size = 0x4, offset = 0x4, fixed_abs, tag = 'smem constant byte address 0x4 - core index']
  #allocation1 [shape = 'u32[144,128]{1,0:T(1,128)}', space=vmem, size = 0x12000, scoped, tag = 'internal scratch']
  %s0 = inlined_call_operand.hbm [shape: f32[4,2,1024], index: 0, kind: input, shape index: {}]
  %s1 = inlined_call_operand.hbm [shape: bf16[1024,768], index: 1, kind: input, shape index: {}]
  %s2 = inlined_call_operand.hbm [shape: bf16[768,768], index: 2, kind: input, shape index: {}]
  %s3 = inlined_call_operand.hbm [shape: bf16[1536,768], index: 3, kind: input, shape index: {}]
  %s4 = inlined_call_operand.hbm [shape: f32[3,768], index: 4, kind: input, shape index: {}]
  %s5 = inlined_call_operand.vmem [shape: f32[4,1,1], index: 5, kind: output, shape index: {}]
  %s6 = sld [smem:[#allocation0]]
  $region73: #{tpu_custom_call.1} parent=0
    _
  %s8 = ssub.s32 1, %s6
  %s9 = scalar_select 0, %s8, %s6
  $region1: #{tpu_custom_call.1} parent=0
    #allocation2 [shape = 'u8[16384]{0}', space=vmem, size = 0x4000, scoped, tag = 'input window, operand 0']
    #allocation3 [shape = 's32[2]{0}', space=sflag, size = 0x8, scoped, tag = 'scoped memory for tpu_custom_call.1']
    #allocation4 [shape = 'u8[1572864]{0}', space=vmem, size = 0x180000, scoped, tag = 'input window, operand 1, single buffered']
    #allocation5 [shape = 's32[1]{0}', space=sflag, size = 0x4, scoped, tag = 'scoped memory for tpu_custom_call.1']
    #allocation6 [shape = 'u8[1179648]{0}', space=vmem, size = 0x120000, scoped, tag = 'input window, operand 2, single buffered']
    #allocation7 [shape = 'u8[2359296]{0}', space=vmem, size = 0x240000, scoped, tag = 'input window, operand 3, single buffered']
    #allocation8 [shape = 's32[1]{0}', space=sflag, size = 0x4, scoped, tag = 'scoped memory for tpu_custom_call.1']
    #allocation9 [shape = 'u8[12288]{0}', space=vmem, size = 0x3000, scoped, tag = 'input window, operand 4, single buffered']
    %10 = vsyncpa [#allocation3], 0
    %s11 = scalar_lea.sflag [#allocation3], 1
    %12 = vsyncpa %s11, 0
    %13 = vsyncpa [#allocation5], 0
    %14 = vsyncpa [#allocation8], 0
    loop: start=0, step=1, limit=6
    $region2: #{tpu_custom_call.1} parent=1 // loop_pre_header
      _
    $region3: #{tpu_custom_call.1} parent=1 // loop_header
      %s16 = sphi 0, %s20
      %p17 = scmp.ge.s32.totalorder %s16, 6
      %s26 = sphi 0, %s28
      %s29 = sphi 0, %s26
      %s30 = sphi 0, %s29
      %s46 = sphi 0, %s30
      %s50 = sphi 0, %s50
      %s52 = sphi 0, %s50
      %s53 = sphi 0, %s52
      %s67 = sphi 0, %s53
      %s71 = sphi 0, %s71
      %s73 = sphi 0, %s71
      %s74 = sphi 0, %s73
      %s88 = sphi 0, %s74
      %s92 = sphi 0, %s92
      %s94 = sphi 0, %s92
      %s95 = sphi 0, %s94
      %s109 = sphi 0, %s95
      %s113 = sphi 0, %s113
      %s115 = sphi 0, %s113
      %s116 = sphi 0, %s115
      %s130 = sphi 0, %s116
      %s136 = sphi 0, %s138
      %s139 = sphi 0, %s136
      %s140 = sphi 0, %s139
      %s156 = sphi 0, %s140
    $region4: #{tpu_custom_call.1} parent=1 // loop_header_branch
      %19 = sbr.rel (%p17) target = $region8
    $region5: #{tpu_custom_call.1} parent=1 // loop_body
      %s21 = ssub.s32 %s16, 1
      %s22 = ssub.s32 %s16, 2
      %s23 = sadd.s32 %s16, 1
      %s24 = ssub.s32 %s16, %s23
      %p25 = scmp.eq.s32.totalorder %s24, 0
      %s27 = sadd.s32 %s26, 1
      %s28 = scalar_select %p25, %s26, %s27
      %p31 = pneg %p25
      %p32 = scmp.eq.s32.totalorder %s16, 3
      %p33 = por %p31, %p32
      %p34 = scmp.ne.s32.totalorder %s26, %s29
      %p35 = scmp.eq.s32.totalorder %s16, 0
      %p36 = por %p34, %p35
      %p37 = scmp.ne.s32.totalorder %s26, %s29
      %p38 = scmp.eq.s32.totalorder %s21, 3
      %p39 = por %p37, %p38
      %p40 = scmp.ne.s32.totalorder %s29, %s30
      %p41 = scmp.eq.s32.totalorder %s21, 0
      %p42 = por %p40, %p41
      %p43 = scmp.ne.s32.totalorder %s29, %s30
      %p44 = scmp.eq.s32.totalorder %s22, 3
      %p45 = por %p43, %p44
      %p47 = scmp.ne.s32.totalorder %s30, %s46
      %p48 = scmp.eq.s32.totalorder %s22, 0
      %p49 = por %p47, %p48
      %s51 = sadd.s32 %s50, 1
      %p54 = scmp.eq.s32.totalorder %s16, 3
      %p55 = scmp.ne.s32.totalorder %s50, %s52
      %p56 = scmp.eq.s32.totalorder %s16, 0
      %p57 = por %p55, %p56
      %p58 = scmp.ne.s32.totalorder %s50, %s52
      %p59 = scmp.eq.s32.totalorder %s21, 3
      %p60 = por %p58, %p59
      %p61 = scmp.ne.s32.totalorder %s52, %s53
      %p62 = scmp.eq.s32.totalorder %s21, 0
      %p63 = por %p61, %p62
      %p64 = scmp.ne.s32.totalorder %s52, %s53
      %p65 = scmp.eq.s32.totalorder %s22, 3
      %p66 = por %p64, %p65
      %p68 = scmp.ne.s32.totalorder %s53, %s67
      %p69 = scmp.eq.s32.totalorder %s22, 0
      %p70 = por %p68, %p69
      %s72 = sadd.s32 %s71, 1
      %p75 = scmp.eq.s32.totalorder %s16, 3
      %p76 = scmp.ne.s32.totalorder %s71, %s73
      %p77 = scmp.eq.s32.totalorder %s16, 0
      %p78 = por %p76, %p77
      %p79 = scmp.ne.s32.totalorder %s71, %s73
      %p80 = scmp.eq.s32.totalorder %s21, 3
      %p81 = por %p79, %p80
      %p82 = scmp.ne.s32.totalorder %s73, %s74
      %p83 = scmp.eq.s32.totalorder %s21, 0
      %p84 = por %p82, %p83
      %p85 = scmp.ne.s32.totalorder %s73, %s74
      %p86 = scmp.eq.s32.totalorder %s22, 3
      %p87 = por %p85, %p86
      %p89 = scmp.ne.s32.totalorder %s74, %s88
      %p90 = scmp.eq.s32.totalorder %s22, 0
      %p91 = por %p89, %p90
      %s93 = sadd.s32 %s92, 1
      %p96 = scmp.eq.s32.totalorder %s16, 3
      %p97 = scmp.ne.s32.totalorder %s92, %s94
      %p98 = scmp.eq.s32.totalorder %s16, 0
      %p99 = por %p97, %p98
      %p100 = scmp.ne.s32.totalorder %s92, %s94
      %p101 = scmp.eq.s32.totalorder %s21, 3
      %p102 = por %p100, %p101
      %p103 = scmp.ne.s32.totalorder %s94, %s95
      %p104 = scmp.eq.s32.totalorder %s21, 0
      %p105 = por %p103, %p104
      %p106 = scmp.ne.s32.totalorder %s94, %s95
      %p107 = scmp.eq.s32.totalorder %s22, 3
      %p108 = por %p106, %p107
      %p110 = scmp.ne.s32.totalorder %s95, %s109
      %p111 = scmp.eq.s32.totalorder %s22, 0
      %p112 = por %p110, %p111
      %s114 = sadd.s32 %s113, 1
      %p117 = scmp.eq.s32.totalorder %s16, 3
      %p118 = scmp.ne.s32.totalorder %s113, %s115
      %p119 = scmp.eq.s32.totalorder %s16, 0
      %p120 = por %p118, %p119
      %p121 = scmp.ne.s32.totalorder %s113, %s115
      %p122 = scmp.eq.s32.totalorder %s21, 3
      %p123 = por %p121, %p122
      %p124 = scmp.ne.s32.totalorder %s115, %s116
      %p125 = scmp.eq.s32.totalorder %s21, 0
      %p126 = por %p124, %p125
      %p127 = scmp.ne.s32.totalorder %s115, %s116
      %p128 = scmp.eq.s32.totalorder %s22, 3
      %p129 = por %p127, %p128
      %p131 = scmp.ne.s32.totalorder %s116, %s130
      %p132 = scmp.eq.s32.totalorder %s22, 0
      %p133 = por %p131, %p132
      %s134 = ssub.s32 %s16, %s23
      %p135 = scmp.eq.s32.totalorder %s134, 0
      %s137 = sadd.s32 %s136, 1
      %s138 = scalar_select %p135, %s136, %s137
      %p141 = pneg %p135
      %p142 = scmp.eq.s32.totalorder %s16, 3
      %p143 = por %p141, %p142
      %p144 = scmp.ne.s32.totalorder %s136, %s139
      %p145 = scmp.eq.s32.totalorder %s16, 0
      %p146 = por %p144, %p145
      %p147 = scmp.ne.s32.totalorder %s136, %s139
      %p148 = scmp.eq.s32.totalorder %s21, 3
      %p149 = por %p147, %p148
      %p150 = scmp.ne.s32.totalorder %s139, %s140
      %p151 = scmp.eq.s32.totalorder %s21, 0
      %p152 = por %p150, %p151
      %p153 = scmp.ne.s32.totalorder %s139, %s140
      %p154 = scmp.eq.s32.totalorder %s22, 3
      %p155 = por %p153, %p154
      %p157 = scmp.ne.s32.totalorder %s140, %s156
      %p158 = scmp.eq.s32.totalorder %s22, 0
      %p159 = por %p157, %p158
      %p160 = scmp.le.s32.totalorder 1, %s16
      %p161 = scmp.lt.s32.totalorder %s16, 5
      %p162 = pnand %p160, %p161
      %p163 = pneg %p162
      // Predicated region
      $region9: #{tpu_custom_call.1} parent=5 // pred_check
        _
      $region10: #{tpu_custom_call.1} parent=5 // pred_check_branch
        %165 = sbr.rel (%p162) target = $region12
      $region11: #{tpu_custom_call.1} parent=5 // pred_region
        %s166 = ssub.s32 %s16, 1
        // Predicated region
        $region13: #{tpu_custom_call.1} parent=11 // pred_check
          %p167 = pneg %p63
        $region14: #{tpu_custom_call.1} parent=11 // pred_check_branch
          %169 = sbr.rel (%p167) target = $region16
        $region15: #{tpu_custom_call.1} parent=11 // pred_region
          %s171 = ssub.s32 49152, 49152
          %172 = vsyncadd [#allocation5], %s171
          %s173 = sshll.u32 [#allocation4], 4
          %s174 = int_to_ptr.vmem [resolvable:$true] %s173
          %179 = dma.hbm_to_vmem [thread:$0]  %s1, 49152, %s174, [#allocation5], 384, 384, 24
        $region16: #{tpu_custom_call.1} parent=11 // pred_fallthru
          _
        // Predicated region
        $region17: #{tpu_custom_call.1} parent=11 // pred_check
          %p180 = pneg %p84
        $region18: #{tpu_custom_call.1} parent=11 // pred_check_branch
          %182 = sbr.rel (%p180) target = $region20
        $region19: #{tpu_custom_call.1} parent=11 // pred_region
          %s184 = ssub.s32 36864, 36864
          %185 = vsyncadd [#allocation5], %s184
          %s186 = sshll.u32 [#allocation6], 4
          %s187 = int_to_ptr.vmem [resolvable:$true] %s186
          %192 = dma.hbm_to_vmem [thread:$0]  %s2, 36864, %s187, [#allocation5], 384, 384, 24
        $region20: #{tpu_custom_call.1} parent=11 // pred_fallthru
          _
        // Predicated region
        $region21: #{tpu_custom_call.1} parent=11 // pred_check
          %p193 = pneg %p105
        $region22: #{tpu_custom_call.1} parent=11 // pred_check_branch
          %195 = sbr.rel (%p193) target = $region24
        $region23: #{tpu_custom_call.1} parent=11 // pred_region
          %s197 = ssub.s32 73728, 73728
          %198 = vsyncadd [#allocation8], %s197
          %s199 = sshll.u32 [#allocation7], 4
          %s200 = int_to_ptr.vmem [resolvable:$true] %s199
          %205 = dma.hbm_to_vmem [thread:$0]  %s3, 73728, %s200, [#allocation8], 384, 384, 24
        $region24: #{tpu_custom_call.1} parent=11 // pred_fallthru
          _
        // Predicated region
        $region25: #{tpu_custom_call.1} parent=11 // pred_check
          %p206 = pneg %p126
        $region26: #{tpu_custom_call.1} parent=11 // pred_check_branch
          %208 = sbr.rel (%p206) target = $region28
        $region27: #{tpu_custom_call.1} parent=11 // pred_region
          %s210 = ssub.s32 384, 384
          %211 = vsyncadd [#allocation8], %s210
          %s213 = sshll.u32 [#allocation9], 4
          %s214 = int_to_ptr.vmem [resolvable:$true] %s213
          %216 = dma.hbm_to_vmem [thread:$0]  %s4, 384, %s214, [#allocation8]
        $region28: #{tpu_custom_call.1} parent=11 // pred_fallthru
          _
      $region12: #{tpu_custom_call.1} parent=5 // pred_fallthru
        _
      %p217 = scmp.lt.s32.totalorder %s16, 4
      // Predicated region
      $region29: #{tpu_custom_call.1} parent=5 // pred_check
        %p218 = pneg %p217
      $region30: #{tpu_custom_call.1} parent=5 // pred_check_branch
        %220 = sbr.rel (%p218) target = $region32
      $region31: #{tpu_custom_call.1} parent=5 // pred_region
        // Predicated region
        $region33: #{tpu_custom_call.1} parent=31 // pred_check
          %p221 = pneg %p36
        $region34: #{tpu_custom_call.1} parent=31 // pred_check_branch
          %223 = sbr.rel (%p221) target = $region36
        $region35: #{tpu_custom_call.1} parent=31 // pred_region
          %s224 = sand.u32 %s26, 1
          %s225 = scalar_lea.sflag [#allocation3], %s224
          %s226 = sand.u32 %s26, 1
          %s227 = smul.addr %s226, 16
          %s228 = scalar_lea.vmem [#allocation2], %s227
          %s230 = ssub.s32 256, 256
          %231 = vsyncadd %s225, %s230
          %s232 = smul.addr %s16, 8
          %s233 = smul.addr %s232, 32
          %s234 = scalar_lea.hbm %s0, %s233
          %s236 = sshll.u32 %s228, 4
          %s237 = int_to_ptr.vmem [resolvable:$true] %s236
          %239 = dma.hbm_to_vmem [thread:$0]  %s234, 256, %s237, %s225
        $region36: #{tpu_custom_call.1} parent=31 // pred_fallthru
          _
      $region32: #{tpu_custom_call.1} parent=5 // pred_fallthru
        _
      %p240 = scmp.le.s32.totalorder 1, %s16
      %p241 = scmp.lt.s32.totalorder %s16, 5
      %p242 = pnand %p240, %p241
      %p243 = pneg %p242
      // Predicated region
      $region37: #{tpu_custom_call.1} parent=5 // pred_check
        _
      $region38: #{tpu_custom_call.1} parent=5 // pred_check_branch
        %245 = sbr.rel (%p242) target = $region40
      $region39: #{tpu_custom_call.1} parent=5 // pred_region
        %s246 = ssub.s32 %s16, 1
        %s247 = sand.u32 %s29, 1
        %s248 = scalar_lea.sflag [#allocation3], %s247
        %s249 = sand.u32 %s29, 1
        %s250 = smul.addr %s249, 16
        %s251 = scalar_lea.vmem [#allocation2], %s250
        // Predicated region
        $region41: #{tpu_custom_call.1} parent=39 // pred_check
          %p252 = pneg %p42
        $region42: #{tpu_custom_call.1} parent=39 // pred_check_branch
          %254 = sbr.rel (%p252) target = $region44
        $region43: #{tpu_custom_call.1} parent=39 // pred_region
          %255 = dma.done %s248, 256
        $region44: #{tpu_custom_call.1} parent=39 // pred_fallthru
          _
        // Predicated region
        $region45: #{tpu_custom_call.1} parent=39 // pred_check
          %p256 = pneg %p63
        $region46: #{tpu_custom_call.1} parent=39 // pred_check_branch
          %258 = sbr.rel (%p256) target = $region48
        $region47: #{tpu_custom_call.1} parent=39 // pred_region
          %259 = dma.done [#allocation5], 49152
        $region48: #{tpu_custom_call.1} parent=39 // pred_fallthru
          _
        // Predicated region
        $region49: #{tpu_custom_call.1} parent=39 // pred_check
          %p260 = pneg %p84
        $region50: #{tpu_custom_call.1} parent=39 // pred_check_branch
          %262 = sbr.rel (%p260) target = $region52
        $region51: #{tpu_custom_call.1} parent=39 // pred_region
          %263 = dma.done [#allocation5], 36864
        $region52: #{tpu_custom_call.1} parent=39 // pred_fallthru
          _
        // Predicated region
        $region53: #{tpu_custom_call.1} parent=39 // pred_check
          %p264 = pneg %p105
        $region54: #{tpu_custom_call.1} parent=39 // pred_check_branch
          %266 = sbr.rel (%p264) target = $region56
        $region55: #{tpu_custom_call.1} parent=39 // pred_region
          %267 = dma.done [#allocation8], 73728
        $region56: #{tpu_custom_call.1} parent=39 // pred_fallthru
          _
        // Predicated region
        $region57: #{tpu_custom_call.1} parent=39 // pred_check
          %p268 = pneg %p126
        $region58: #{tpu_custom_call.1} parent=39 // pred_check_branch
          %270 = sbr.rel (%p268) target = $region60
        $region59: #{tpu_custom_call.1} parent=39 // pred_region
          %271 = dma.done [#allocation8], 384
        $region60: #{tpu_custom_call.1} parent=39 // pred_fallthru
          _
        %s272 = sand.u32 %s29, 1
        %s273 = scalar_lea.sflag [#allocation3], %s272
        %s274 = sand.u32 %s29, 1
        %s275 = smul.addr %s274, 16
        %s276 = scalar_lea.vmem [#allocation2], %s275
        %p277 = pneg %p42
        %p278 = pneg %p39
        %p279 = pneg %p63
        %p280 = pneg %p60
        %p281 = pneg %p84
        %p282 = pneg %p81
        %p283 = pneg %p105
        %p284 = pneg %p102
        %p285 = pneg %p126
        %p286 = pneg %p123
        %p287 = pneg %p152
        %p288 = pneg %p149
        %p289 = scmp.lt.s32.totalorder %s21, 3
        %s290 = scalar_select %p289, %s21, 3
        %s291 = scalar_lea.vmem %s5, %s290
        %p292 = scmp.lt.s32.totalorder %s21, 3
        %s293 = scalar_select %p292, %s21, 3
        %s294 = scalar_lea.vmem %s5, %s293
        %v295 = vld [vmem:[%s251] sm:$0xff]
        %v296 = vld [vmem:[%s251 + $0x8] sm:$0xff]
        %v299 = vcombine.high %v295, %v295
        %v301 = vunpack.c.l.s4 1983009808
        %v302 = vunpack.c.0.s8 %v301
        %v303 = vlaneseq
        %v304 = vshrl.u32 %v303, 7
        %v305 = vsub.s32 %v302, %v304
        %v306 = vrot.slane %v295, %v305
        %v308 = vunpack.c.l.s4 1983009808
        %v309 = vunpack.c.0.s8 %v308
        %v310 = vlaneseq
        %v311 = vshrl.u32 %v310, 7
        %v312 = vsub.s32 %v309, %v311
        %v313 = vrot.slane %v299, %v312
        %v314 = vcombine.high %v306, %v306
        %v315 = vcombine.high %v313, %v313
        %v316 = vcombine.high %v296, %v296
        %v318 = vunpack.c.l.s4 1983009808
        %v319 = vunpack.c.0.s8 %v318
        %v320 = vlaneseq
        %v321 = vshrl.u32 %v320, 7
        %v322 = vsub.s32 %v319, %v321
        %v323 = vrot.slane %v296, %v322
        %v325 = vunpack.c.l.s4 1983009808
        %v326 = vunpack.c.0.s8 %v325
        %v327 = vlaneseq
        %v328 = vshrl.u32 %v327, 7
        %v329 = vsub.s32 %v326, %v328
        %v330 = vrot.slane %v316, %v329
        %v331 = vcombine.high %v323, %v323
        %v332 = vcombine.high %v330, %v330
        %v341 = vpack.c.bf16 %v306, %v306
        %v342 = vpack.c.bf16 %v314, %v314
        %v343 = vpack.c.bf16 %v313, %v313
        %v344 = vpack.c.bf16 %v315, %v315
        %v345 = vpack.c.bf16 %v323, %v323
        %v346 = vpack.c.bf16 %v331, %v331
        %v347 = vpack.c.bf16 %v330, %v330
        %v348 = vpack.c.bf16 %v332, %v332
        %v349 = vld [vmem:[#allocation4] sm:$0xff]
        %v350 = vld [vmem:[#allocation4 + $0x8] sm:$0xff]
        %v351 = vld [vmem:[#allocation4 + $0x10] sm:$0xff]
        %v352 = vld [vmem:[#allocation4 + $0x18] sm:$0xff]
        %v353 = vld [vmem:[#allocation4 + $0x20] sm:$0xff]
        %v354 = vld [vmem:[#allocation4 + $0x28] sm:$0xff]
        %v355 = vld [vmem:[#allocation4 + $0x30] sm:$0xff]
        %v356 = vld [vmem:[#allocation4 + $0x38] sm:$0xff]
        %v357 = vld [vmem:[#allocation4 + $0x40] sm:$0xff]
        %v358 = vld [vmem:[#allocation4 + $0x48] sm:$0xff]
        %v359 = vld [vmem:[#allocation4 + $0x50] sm:$0xff]
        %v360 = vld [vmem:[#allocation4 + $0x58] sm:$0xff]
        %v361 = vld [vmem:[#allocation4 + $0x60] sm:$0xff]
        %v362 = vld [vmem:[#allocation4 + $0x68] sm:$0xff]
        %v363 = vld [vmem:[#allocation4 + $0x70] sm:$0xff]
        %v364 = vld [vmem:[#allocation4 + $0x78] sm:$0xff]
        %v365 = vld [vmem:[#allocation4 + $0x80] sm:$0xff]
        %v366 = vld [vmem:[#allocation4 + $0x88] sm:$0xff]
        %v367 = vld [vmem:[#allocation4 + $0x90] sm:$0xff]
        %v368 = vld [vmem:[#allocation4 + $0x98] sm:$0xff]
        %v369 = vld [vmem:[#allocation4 + $0xa0] sm:$0xff]
        %v370 = vld [vmem:[#allocation4 + $0xa8] sm:$0xff]
        %v371 = vld [vmem:[#allocation4 + $0xb0] sm:$0xff]
        %v372 = vld [vmem:[#allocation4 + $0xb8] sm:$0xff]
        %v373 = vld [vmem:[#allocation4 + $0xc0] sm:$0xff]
        %v374 = vld [vmem:[#allocation4 + $0xc8] sm:$0xff]
        %v375 = vld [vmem:[#allocation4 + $0xd0] sm:$0xff]
        %v376 = vld [vmem:[#allocation4 + $0xd8] sm:$0xff]
        %v377 = vld [vmem:[#allocation4 + $0xe0] sm:$0xff]
        %v378 = vld [vmem:[#allocation4 + $0xe8] sm:$0xff]
        %v379 = vld [vmem:[#allocation4 + $0xf0] sm:$0xff]
        %v380 = vld [vmem:[#allocation4 + $0xf8] sm:$0xff]
        %v381 = vld [vmem:[#allocation4 + $0x100] sm:$0xff]
        %v382 = vld [vmem:[#allocation4 + $0x108] sm:$0xff]
        %v383 = vld [vmem:[#allocation4 + $0x110] sm:$0xff]
        %v384 = vld [vmem:[#allocation4 + $0x118] sm:$0xff]
        %v385 = vld [vmem:[#allocation4 + $0x120] sm:$0xff]
        %v386 = vld [vmem:[#allocation4 + $0x128] sm:$0xff]
        %v387 = vld [vmem:[#allocation4 + $0x130] sm:$0xff]
        %v388 = vld [vmem:[#allocation4 + $0x138] sm:$0xff]
        %v389 = vld [vmem:[#allocation4 + $0x140] sm:$0xff]
        %v390 = vld [vmem:[#allocation4 + $0x148] sm:$0xff]
        %v391 = vld [vmem:[#allocation4 + $0x150] sm:$0xff]
        %v392 = vld [vmem:[#allocation4 + $0x158] sm:$0xff]
        %v393 = vld [vmem:[#allocation4 + $0x160] sm:$0xff]
        %v394 = vld [vmem:[#allocation4 + $0x168] sm:$0xff]
        %v395 = vld [vmem:[#allocation4 + $0x170] sm:$0xff]
        %v396 = vld [vmem:[#allocation4 + $0x178] sm:$0xff]
        %v397 = vld [vmem:[#allocation4 + $0x180] sm:$0xff]
        %v398 = vld [vmem:[#allocation4 + $0x188] sm:$0xff]
        %v399 = vld [vmem:[#allocation4 + $0x190] sm:$0xff]
        %v400 = vld [vmem:[#allocation4 + $0x198] sm:$0xff]
        %v401 = vld [vmem:[#allocation4 + $0x1a0] sm:$0xff]
        %v402 = vld [vmem:[#allocation4 + $0x1a8] sm:$0xff]
        %v403 = vld [vmem:[#allocation4 + $0x1b0] sm:$0xff]
        %v404 = vld [vmem:[#allocation4 + $0x1b8] sm:$0xff]
        %v405 = vld [vmem:[#allocation4 + $0x1c0] sm:$0xff]
        %v406 = vld [vmem:[#allocation4 + $0x1c8] sm:$0xff]
        %v407 = vld [vmem:[#allocation4 + $0x1d0] sm:$0xff]
        %v408 = vld [vmem:[#allocation4 + $0x1d8] sm:$0xff]
        %v409 = vld [vmem:[#allocation4 + $0x1e0] sm:$0xff]
        %v410 = vld [vmem:[#allocation4 + $0x1e8] sm:$0xff]
        %v411 = vld [vmem:[#allocation4 + $0x1f0] sm:$0xff]
        %v412 = vld [vmem:[#allocation4 + $0x1f8] sm:$0xff]
        %v413 = vld [vmem:[#allocation4 + $0x200] sm:$0xff]
        %v414 = vld [vmem:[#allocation4 + $0x208] sm:$0xff]
        %v415 = vld [vmem:[#allocation4 + $0x210] sm:$0xff]
        %v416 = vld [vmem:[#allocation4 + $0x218] sm:$0xff]
        %v417 = vld [vmem:[#allocation4 + $0x220] sm:$0xff]
        %v418 = vld [vmem:[#allocation4 + $0x228] sm:$0xff]
        %v419 = vld [vmem:[#allocation4 + $0x230] sm:$0xff]
        %v420 = vld [vmem:[#allocation4 + $0x238] sm:$0xff]
        %v421 = vld [vmem:[#allocation4 + $0x240] sm:$0xff]
        %v422 = vld [vmem:[#allocation4 + $0x248] sm:$0xff]
        %v423 = vld [vmem:[#allocation4 + $0x250] sm:$0xff]
        %v424 = vld [vmem:[#allocation4 + $0x258] sm:$0xff]
        %v425 = vld [vmem:[#allocation4 + $0x260] sm:$0xff]
        %v426 = vld [vmem:[#allocation4 + $0x268] sm:$0xff]
        %v427 = vld [vmem:[#allocation4 + $0x270] sm:$0xff]
        %v428 = vld [vmem:[#allocation4 + $0x278] sm:$0xff]
        %v429 = vld [vmem:[#allocation4 + $0x280] sm:$0xff]
        %v430 = vld [vmem:[#allocation4 + $0x288] sm:$0xff]
        %v431 = vld [vmem:[#allocation4 + $0x290] sm:$0xff]
        %v432 = vld [vmem:[#allocation4 + $0x298] sm:$0xff]
        %v433 = vld [vmem:[#allocation4 + $0x2a0] sm:$0xff]
        %v434 = vld [vmem:[#allocation4 + $0x2a8] sm:$0xff]
        %v435 = vld [vmem:[#allocation4 + $0x2b0] sm:$0xff]
        %v436 = vld [vmem:[#allocation4 + $0x2b8] sm:$0xff]
        %v437 = vld [vmem:[#allocation4 + $0x2c0] sm:$0xff]
        %v438 = vld [vmem:[#allocation4 + $0x2c8] sm:$0xff]
        %v439 = vld [vmem:[#allocation4 + $0x2d0] sm:$0xff]
        %v440 = vld [vmem:[#allocation4 + $0x2d8] sm:$0xff]
        %v441 = vld [vmem:[#allocation4 + $0x2e0] sm:$0xff]
        %v442 = vld [vmem:[#allocation4 + $0x2e8] sm:$0xff]
        %v443 = vld [vmem:[#allocation4 + $0x2f0] sm:$0xff]
        %v444 = vld [vmem:[#allocation4 + $0x2f8] sm:$0xff]
        %v445 = vld [vmem:[#allocation4 + $0x300] sm:$0xff]
        %v446 = vld [vmem:[#allocation4 + $0x308] sm:$0xff]
        %v447 = vld [vmem:[#allocation4 + $0x310] sm:$0xff]
        %v448 = vld [vmem:[#allocation4 + $0x318] sm:$0xff]
        %v449 = vld [vmem:[#allocation4 + $0x320] sm:$0xff]
        %v450 = vld [vmem:[#allocation4 + $0x328] sm:$0xff]
        %v451 = vld [vmem:[#allocation4 + $0x330] sm:$0xff]
        %v452 = vld [vmem:[#allocation4 + $0x338] sm:$0xff]
        %v453 = vld [vmem:[#allocation4 + $0x340] sm:$0xff]
        %v454 = vld [vmem:[#allocation4 + $0x348] sm:$0xff]
        %v455 = vld [vmem:[#allocation4 + $0x350] sm:$0xff]
        %v456 = vld [vmem:[#allocation4 + $0x358] sm:$0xff]
        %v457 = vld [vmem:[#allocation4 + $0x360] sm:$0xff]
        %v458 = vld [vmem:[#allocation4 + $0x368] sm:$0xff]
        %v459 = vld [vmem:[#allocation4 + $0x370] sm:$0xff]
        %v460 = vld [vmem:[#allocation4 + $0x378] sm:$0xff]
        %v461 = vld [vmem:[#allocation4 + $0x380] sm:$0xff]
        %v462 = vld [vmem:[#allocation4 + $0x388] sm:$0xff]
        %v463 = vld [vmem:[#allocation4 + $0x390] sm:$0xff]
        %v464 = vld [vmem:[#allocation4 + $0x398] sm:$0xff]
        %v465 = vld [vmem:[#allocation4 + $0x3a0] sm:$0xff]
        %v466 = vld [vmem:[#allocation4 + $0x3a8] sm:$0xff]
        %v467 = vld [vmem:[#allocation4 + $0x3b0] sm:$0xff]
        %v468 = vld [vmem:[#allocation4 + $0x3b8] sm:$0xff]
        %v469 = vld [vmem:[#allocation4 + $0x3c0] sm:$0xff]
        %v470 = vld [vmem:[#allocation4 + $0x3c8] sm:$0xff]
        %v471 = vld [vmem:[#allocation4 + $0x3d0] sm:$0xff]
        %v472 = vld [vmem:[#allocation4 + $0x3d8] sm:$0xff]
        %v473 = vld [vmem:[#allocation4 + $0x3e0] sm:$0xff]
        %v474 = vld [vmem:[#allocation4 + $0x3e8] sm:$0xff]
        %v475 = vld [vmem:[#allocation4 + $0x3f0] sm:$0xff]
        %v476 = vld [vmem:[#allocation4 + $0x3f8] sm:$0xff]
        %v477 = vld [vmem:[#allocation4 + $0x400] sm:$0xff]
        %v478 = vld [vmem:[#allocation4 + $0x408] sm:$0xff]
        %v479 = vld [vmem:[#allocation4 + $0x410] sm:$0xff]
        %v480 = vld [vmem:[#allocation4 + $0x418] sm:$0xff]
        %v481 = vld [vmem:[#allocation4 + $0x420] sm:$0xff]
        %v482 = vld [vmem:[#allocation4 + $0x428] sm:$0xff]
        %v483 = vld [vmem:[#allocation4 + $0x430] sm:$0xff]
        %v484 = vld [vmem:[#allocation4 + $0x438] sm:$0xff]
        %v485 = vld [vmem:[#allocation4 + $0x440] sm:$0xff]
        %v486 = vld [vmem:[#allocation4 + $0x448] sm:$0xff]
        %v487 = vld [vmem:[#allocation4 + $0x450] sm:$0xff]
        %v488 = vld [vmem:[#allocation4 + $0x458] sm:$0xff]
        %v489 = vld [vmem:[#allocation4 + $0x460] sm:$0xff]
        %v490 = vld [vmem:[#allocation4 + $0x468] sm:$0xff]
        %v491 = vld [vmem:[#allocation4 + $0x470] sm:$0xff]
        %v492 = vld [vmem:[#allocation4 + $0x478] sm:$0xff]
        %v493 = vld [vmem:[#allocation4 + $0x480] sm:$0xff]
        %v494 = vld [vmem:[#allocation4 + $0x488] sm:$0xff]
        %v495 = vld [vmem:[#allocation4 + $0x490] sm:$0xff]
        %v496 = vld [vmem:[#allocation4 + $0x498] sm:$0xff]
        %v497 = vld [vmem:[#allocation4 + $0x4a0] sm:$0xff]
        %v498 = vld [vmem:[#allocation4 + $0x4a8] sm:$0xff]
        %v499 = vld [vmem:[#allocation4 + $0x4b0] sm:$0xff]
        %v500 = vld [vmem:[#allocation4 + $0x4b8] sm:$0xff]
        %v501 = vld [vmem:[#allocation4 + $0x4c0] sm:$0xff]
        %v502 = vld [vmem:[#allocation4 + $0x4c8] sm:$0xff]
        %v503 = vld [vmem:[#allocation4 + $0x4d0] sm:$0xff]
        %v504 = vld [vmem:[#allocation4 + $0x4d8] sm:$0xff]
        %v505 = vld [vmem:[#allocation4 + $0x4e0] sm:$0xff]
        %v506 = vld [vmem:[#allocation4 + $0x4e8] sm:$0xff]
        %v507 = vld [vmem:[#allocation4 + $0x4f0] sm:$0xff]
        %v508 = vld [vmem:[#allocation4 + $0x4f8] sm:$0xff]
        %v509 = vld [vmem:[#allocation4 + $0x500] sm:$0xff]
        %v510 = vld [vmem:[#allocation4 + $0x508] sm:$0xff]
        %v511 = vld [vmem:[#allocation4 + $0x510] sm:$0xff]
        %v512 = vld [vmem:[#allocation4 + $0x518] sm:$0xff]
        %v513 = vld [vmem:[#allocation4 + $0x520] sm:$0xff]
        %v514 = vld [vmem:[#allocation4 + $0x528] sm:$0xff]
        %v515 = vld [vmem:[#allocation4 + $0x530] sm:$0xff]
        %v516 = vld [vmem:[#allocation4 + $0x538] sm:$0xff]
        %v517 = vld [vmem:[#allocation4 + $0x540] sm:$0xff]
        %v518 = vld [vmem:[#allocation4 + $0x548] sm:$0xff]
        %v519 = vld [vmem:[#allocation4 + $0x550] sm:$0xff]
        %v520 = vld [vmem:[#allocation4 + $0x558] sm:$0xff]
        %v521 = vld [vmem:[#allocation4 + $0x560] sm:$0xff]
        %v522 = vld [vmem:[#allocation4 + $0x568] sm:$0xff]
        %v523 = vld [vmem:[#allocation4 + $0x570] sm:$0xff]
        %v524 = vld [vmem:[#allocation4 + $0x578] sm:$0xff]
        %v525 = vld [vmem:[#allocation4 + $0x580] sm:$0xff]
        %v526 = vld [vmem:[#allocation4 + $0x588] sm:$0xff]
        %v527 = vld [vmem:[#allocation4 + $0x590] sm:$0xff]
        %v528 = vld [vmem:[#allocation4 + $0x598] sm:$0xff]
        %v529 = vld [vmem:[#allocation4 + $0x5a0] sm:$0xff]
        %v530 = vld [vmem:[#allocation4 + $0x5a8] sm:$0xff]
        %v531 = vld [vmem:[#allocation4 + $0x5b0] sm:$0xff]
        %v532 = vld [vmem:[#allocation4 + $0x5b8] sm:$0xff]
        %v533 = vld [vmem:[#allocation4 + $0x5c0] sm:$0xff]
        %v534 = vld [vmem:[#allocation4 + $0x5c8] sm:$0xff]
        %v535 = vld [vmem:[#allocation4 + $0x5d0] sm:$0xff]
        %v536 = vld [vmem:[#allocation4 + $0x5d8] sm:$0xff]
        %v537 = vld [vmem:[#allocation4 + $0x5e0] sm:$0xff]
        %v538 = vld [vmem:[#allocation4 + $0x5e8] sm:$0xff]
        %v539 = vld [vmem:[#allocation4 + $0x5f0] sm:$0xff]
        %v540 = vld [vmem:[#allocation4 + $0x5f8] sm:$0xff]
        %v541 = vld [vmem:[#allocation4 + $0x600] sm:$0xff]
        %v542 = vld [vmem:[#allocation4 + $0x608] sm:$0xff]
        %v543 = vld [vmem:[#allocation4 + $0x610] sm:$0xff]
        %v544 = vld [vmem:[#allocation4 + $0x618] sm:$0xff]
        %v545 = vld [vmem:[#allocation4 + $0x620] sm:$0xff]
        %v546 = vld [vmem:[#allocation4 + $0x628] sm:$0xff]
        %v547 = vld [vmem:[#allocation4 + $0x630] sm:$0xff]
        %v548 = vld [vmem:[#allocation4 + $0x638] sm:$0xff]
        %v549 = vld [vmem:[#allocation4 + $0x640] sm:$0xff]
        %v550 = vld [vmem:[#allocation4 + $0x648] sm:$0xff]
        %v551 = vld [vmem:[#allocation4 + $0x650] sm:$0xff]
        %v552 = vld [vmem:[#allocation4 + $0x658] sm:$0xff]
        %v553 = vld [vmem:[#allocation4 + $0x660] sm:$0xff]
        %v554 = vld [vmem:[#allocation4 + $0x668] sm:$0xff]
        %v555 = vld [vmem:[#allocation4 + $0x670] sm:$0xff]
        %v556 = vld [vmem:[#allocation4 + $0x678] sm:$0xff]
        %v557 = vld [vmem:[#allocation4 + $0x680] sm:$0xff]
        %v558 = vld [vmem:[#allocation4 + $0x688] sm:$0xff]
        %v559 = vld [vmem:[#allocation4 + $0x690] sm:$0xff]
        %v560 = vld [vmem:[#allocation4 + $0x698] sm:$0xff]
        %v561 = vld [vmem:[#allocation4 + $0x6a0] sm:$0xff]
        %v562 = vld [vmem:[#allocation4 + $0x6a8] sm:$0xff]
        %v563 = vld [vmem:[#allocation4 + $0x6b0] sm:$0xff]
        %v564 = vld [vmem:[#allocation4 + $0x6b8] sm:$0xff]
        %v565 = vld [vmem:[#allocation4 + $0x6c0] sm:$0xff]
        %v566 = vld [vmem:[#allocation4 + $0x6c8] sm:$0xff]
        %v567 = vld [vmem:[#allocation4 + $0x6d0] sm:$0xff]
        %v568 = vld [vmem:[#allocation4 + $0x6d8] sm:$0xff]
        %v569 = vld [vmem:[#allocation4 + $0x6e0] sm:$0xff]
        %v570 = vld [vmem:[#allocation4 + $0x6e8] sm:$0xff]
        %v571 = vld [vmem:[#allocation4 + $0x6f0] sm:$0xff]
        %v572 = vld [vmem:[#allocation4 + $0x6f8] sm:$0xff]
        %v573 = vld [vmem:[#allocation4 + $0x700] sm:$0xff]
        %v574 = vld [vmem:[#allocation4 + $0x708] sm:$0xff]
        %v575 = vld [vmem:[#allocation4 + $0x710] sm:$0xff]
        %v576 = vld [vmem:[#allocation4 + $0x718] sm:$0xff]
        %v577 = vld [vmem:[#allocation4 + $0x720] sm:$0xff]
        %v578 = vld [vmem:[#allocation4 + $0x728] sm:$0xff]
        %v579 = vld [vmem:[#allocation4 + $0x730] sm:$0xff]
        %v580 = vld [vmem:[#allocation4 + $0x738] sm:$0xff]
        %v581 = vld [vmem:[#allocation4 + $0x740] sm:$0xff]
        %v582 = vld [vmem:[#allocation4 + $0x748] sm:$0xff]
        %v583 = vld [vmem:[#allocation4 + $0x750] sm:$0xff]
        %v584 = vld [vmem:[#allocation4 + $0x758] sm:$0xff]
        %v585 = vld [vmem:[#allocation4 + $0x760] sm:$0xff]
        %v586 = vld [vmem:[#allocation4 + $0x768] sm:$0xff]
        %v587 = vld [vmem:[#allocation4 + $0x770] sm:$0xff]
        %v588 = vld [vmem:[#allocation4 + $0x778] sm:$0xff]
        %v589 = vld [vmem:[#allocation4 + $0x780] sm:$0xff]
        %v590 = vld [vmem:[#allocation4 + $0x788] sm:$0xff]
        %v591 = vld [vmem:[#allocation4 + $0x790] sm:$0xff]
        %v592 = vld [vmem:[#allocation4 + $0x798] sm:$0xff]
        %v593 = vld [vmem:[#allocation4 + $0x7a0] sm:$0xff]
        %v594 = vld [vmem:[#allocation4 + $0x7a8] sm:$0xff]
        %v595 = vld [vmem:[#allocation4 + $0x7b0] sm:$0xff]
        %v596 = vld [vmem:[#allocation4 + $0x7b8] sm:$0xff]
        %v597 = vld [vmem:[#allocation4 + $0x7c0] sm:$0xff]
        %v598 = vld [vmem:[#allocation4 + $0x7c8] sm:$0xff]
        %v599 = vld [vmem:[#allocation4 + $0x7d0] sm:$0xff]
        %v600 = vld [vmem:[#allocation4 + $0x7d8] sm:$0xff]
        %v601 = vld [vmem:[#allocation4 + $0x7e0] sm:$0xff]
        %v602 = vld [vmem:[#allocation4 + $0x7e8] sm:$0xff]
        %v603 = vld [vmem:[#allocation4 + $0x7f0] sm:$0xff]
        %v604 = vld [vmem:[#allocation4 + $0x7f8] sm:$0xff]
        %v605 = vld [vmem:[#allocation4 + $0x800] sm:$0xff]
        %v606 = vld [vmem:[#allocation4 + $0x808] sm:$0xff]
        %v607 = vld [vmem:[#allocation4 + $0x810] sm:$0xff]
        %v608 = vld [vmem:[#allocation4 + $0x818] sm:$0xff]
        %v609 = vld [vmem:[#allocation4 + $0x820] sm:$0xff]
        %v610 = vld [vmem:[#allocation4 + $0x828] sm:$0xff]
        %v611 = vld [vmem:[#allocation4 + $0x830] sm:$0xff]
        %v612 = vld [vmem:[#allocation4 + $0x838] sm:$0xff]
        %v613 = vld [vmem:[#allocation4 + $0x840] sm:$0xff]
        %v614 = vld [vmem:[#allocation4 + $0x848] sm:$0xff]
        %v615 = vld [vmem:[#allocation4 + $0x850] sm:$0xff]
        %v616 = vld [vmem:[#allocation4 + $0x858] sm:$0xff]
        %v617 = vld [vmem:[#allocation4 + $0x860] sm:$0xff]
        %v618 = vld [vmem:[#allocation4 + $0x868] sm:$0xff]
        %v619 = vld [vmem:[#allocation4 + $0x870] sm:$0xff]
        %v620 = vld [vmem:[#allocation4 + $0x878] sm:$0xff]
        %v621 = vld [vmem:[#allocation4 + $0x880] sm:$0xff]
        %v622 = vld [vmem:[#allocation4 + $0x888] sm:$0xff]
        %v623 = vld [vmem:[#allocation4 + $0x890] sm:$0xff]
        %v624 = vld [vmem:[#allocation4 + $0x898] sm:$0xff]
        %v625 = vld [vmem:[#allocation4 + $0x8a0] sm:$0xff]
        %v626 = vld [vmem:[#allocation4 + $0x8a8] sm:$0xff]
        %v627 = vld [vmem:[#allocation4 + $0x8b0] sm:$0xff]
        %v628 = vld [vmem:[#allocation4 + $0x8b8] sm:$0xff]
        %v629 = vld [vmem:[#allocation4 + $0x8c0] sm:$0xff]
        %v630 = vld [vmem:[#allocation4 + $0x8c8] sm:$0xff]
        %v631 = vld [vmem:[#allocation4 + $0x8d0] sm:$0xff]
        %v632 = vld [vmem:[#allocation4 + $0x8d8] sm:$0xff]
        %v633 = vld [vmem:[#allocation4 + $0x8e0] sm:$0xff]
        %v634 = vld [vmem:[#allocation4 + $0x8e8] sm:$0xff]
        %v635 = vld [vmem:[#allocation4 + $0x8f0] sm:$0xff]
        %v636 = vld [vmem:[#allocation4 + $0x8f8] sm:$0xff]
        %v637 = vld [vmem:[#allocation4 + $0x900] sm:$0xff]
        %v638 = vld [vmem:[#allocation4 + $0x908] sm:$0xff]
        %v639 = vld [vmem:[#allocation4 + $0x910] sm:$0xff]
        %v640 = vld [vmem:[#allocation4 + $0x918] sm:$0xff]
        %v641 = vld [vmem:[#allocation4 + $0x920] sm:$0xff]
        %v642 = vld [vmem:[#allocation4 + $0x928] sm:$0xff]
        %v643 = vld [vmem:[#allocation4 + $0x930] sm:$0xff]
        %v644 = vld [vmem:[#allocation4 + $0x938] sm:$0xff]
        %v645 = vld [vmem:[#allocation4 + $0x940] sm:$0xff]
        %v646 = vld [vmem:[#allocation4 + $0x948] sm:$0xff]
        %v647 = vld [vmem:[#allocation4 + $0x950] sm:$0xff]
        %v648 = vld [vmem:[#allocation4 + $0x958] sm:$0xff]
        %v649 = vld [vmem:[#allocation4 + $0x960] sm:$0xff]
        %v650 = vld [vmem:[#allocation4 + $0x968] sm:$0xff]
        %v651 = vld [vmem:[#allocation4 + $0x970] sm:$0xff]
        %v652 = vld [vmem:[#allocation4 + $0x978] sm:$0xff]
        %v653 = vld [vmem:[#allocation4 + $0x980] sm:$0xff]
        %v654 = vld [vmem:[#allocation4 + $0x988] sm:$0xff]
        %v655 = vld [vmem:[#allocation4 + $0x990] sm:$0xff]
        %v656 = vld [vmem:[#allocation4 + $0x998] sm:$0xff]
        %v657 = vld [vmem:[#allocation4 + $0x9a0] sm:$0xff]
        %v658 = vld [vmem:[#allocation4 + $0x9a8] sm:$0xff]
        %v659 = vld [vmem:[#allocation4 + $0x9b0] sm:$0xff]
        %v660 = vld [vmem:[#allocation4 + $0x9b8] sm:$0xff]
        %v661 = vld [vmem:[#allocation4 + $0x9c0] sm:$0xff]
        %v662 = vld [vmem:[#allocation4 + $0x9c8] sm:$0xff]
        %v663 = vld [vmem:[#allocation4 + $0x9d0] sm:$0xff]
        %v664 = vld [vmem:[#allocation4 + $0x9d8] sm:$0xff]
        %v665 = vld [vmem:[#allocation4 + $0x9e0] sm:$0xff]
        %v666 = vld [vmem:[#allocation4 + $0x9e8] sm:$0xff]
        %v667 = vld [vmem:[#allocation4 + $0x9f0] sm:$0xff]
        %v668 = vld [vmem:[#allocation4 + $0x9f8] sm:$0xff]
        %v669 = vld [vmem:[#allocation4 + $0xa00] sm:$0xff]
        %v670 = vld [vmem:[#allocation4 + $0xa08] sm:$0xff]
        %v671 = vld [vmem:[#allocation4 + $0xa10] sm:$0xff]
        %v672 = vld [vmem:[#allocation4 + $0xa18] sm:$0xff]
        %v673 = vld [vmem:[#allocation4 + $0xa20] sm:$0xff]
        %v674 = vld [vmem:[#allocation4 + $0xa28] sm:$0xff]
        %v675 = vld [vmem:[#allocation4 + $0xa30] sm:$0xff]
        %v676 = vld [vmem:[#allocation4 + $0xa38] sm:$0xff]
        %v677 = vld [vmem:[#allocation4 + $0xa40] sm:$0xff]
        %v678 = vld [vmem:[#allocation4 + $0xa48] sm:$0xff]
        %v679 = vld [vmem:[#allocation4 + $0xa50] sm:$0xff]
        %v680 = vld [vmem:[#allocation4 + $0xa58] sm:$0xff]
        %v681 = vld [vmem:[#allocation4 + $0xa60] sm:$0xff]
        %v682 = vld [vmem:[#allocation4 + $0xa68] sm:$0xff]
        %v683 = vld [vmem:[#allocation4 + $0xa70] sm:$0xff]
        %v684 = vld [vmem:[#allocation4 + $0xa78] sm:$0xff]
        %v685 = vld [vmem:[#allocation4 + $0xa80] sm:$0xff]
        %v686 = vld [vmem:[#allocation4 + $0xa88] sm:$0xff]
        %v687 = vld [vmem:[#allocation4 + $0xa90] sm:$0xff]
        %v688 = vld [vmem:[#allocation4 + $0xa98] sm:$0xff]
        %v689 = vld [vmem:[#allocation4 + $0xaa0] sm:$0xff]
        %v690 = vld [vmem:[#allocation4 + $0xaa8] sm:$0xff]
        %v691 = vld [vmem:[#allocation4 + $0xab0] sm:$0xff]
        %v692 = vld [vmem:[#allocation4 + $0xab8] sm:$0xff]
        %v693 = vld [vmem:[#allocation4 + $0xac0] sm:$0xff]
        %v694 = vld [vmem:[#allocation4 + $0xac8] sm:$0xff]
        %v695 = vld [vmem:[#allocation4 + $0xad0] sm:$0xff]
        %v696 = vld [vmem:[#allocation4 + $0xad8] sm:$0xff]
        %v697 = vld [vmem:[#allocation4 + $0xae0] sm:$0xff]
        %v698 = vld [vmem:[#allocation4 + $0xae8] sm:$0xff]
        %v699 = vld [vmem:[#allocation4 + $0xaf0] sm:$0xff]
        %v700 = vld [vmem:[#allocation4 + $0xaf8] sm:$0xff]
        %v701 = vld [vmem:[#allocation4 + $0xb00] sm:$0xff]
        %v702 = vld [vmem:[#allocation4 + $0xb08] sm:$0xff]
        %v703 = vld [vmem:[#allocation4 + $0xb10] sm:$0xff]
        %v704 = vld [vmem:[#allocation4 + $0xb18] sm:$0xff]
        %v705 = vld [vmem:[#allocation4 + $0xb20] sm:$0xff]
        %v706 = vld [vmem:[#allocation4 + $0xb28] sm:$0xff]
        %v707 = vld [vmem:[#allocation4 + $0xb30] sm:$0xff]
        %v708 = vld [vmem:[#allocation4 + $0xb38] sm:$0xff]
        %v709 = vld [vmem:[#allocation4 + $0xb40] sm:$0xff]
        %v710 = vld [vmem:[#allocation4 + $0xb48] sm:$0xff]
        %v711 = vld [vmem:[#allocation4 + $0xb50] sm:$0xff]
        %v712 = vld [vmem:[#allocation4 + $0xb58] sm:$0xff]
        %v713 = vld [vmem:[#allocation4 + $0xb60] sm:$0xff]
        %v714 = vld [vmem:[#allocation4 + $0xb68] sm:$0xff]
        %v715 = vld [vmem:[#allocation4 + $0xb70] sm:$0xff]
        %v716 = vld [vmem:[#allocation4 + $0xb78] sm:$0xff]
        %v717 = vld [vmem:[#allocation4 + $0xb80] sm:$0xff]
        %v718 = vld [vmem:[#allocation4 + $0xb88] sm:$0xff]
        %v719 = vld [vmem:[#allocation4 + $0xb90] sm:$0xff]
        %v720 = vld [vmem:[#allocation4 + $0xb98] sm:$0xff]
        %v721 = vld [vmem:[#allocation4 + $0xba0] sm:$0xff]
        %v722 = vld [vmem:[#allocation4 + $0xba8] sm:$0xff]
        %v723 = vld [vmem:[#allocation4 + $0xbb0] sm:$0xff]
        %v724 = vld [vmem:[#allocation4 + $0xbb8] sm:$0xff]
        %v725 = vld [vmem:[#allocation4 + $0xbc0] sm:$0xff]
        %v726 = vld [vmem:[#allocation4 + $0xbc8] sm:$0xff]
        %v727 = vld [vmem:[#allocation4 + $0xbd0] sm:$0xff]
        %v728 = vld [vmem:[#allocation4 + $0xbd8] sm:$0xff]
        %v729 = vld [vmem:[#allocation4 + $0xbe0] sm:$0xff]
        %v730 = vld [vmem:[#allocation4 + $0xbe8] sm:$0xff]
        %v731 = vld [vmem:[#allocation4 + $0xbf0] sm:$0xff]
        %v732 = vld [vmem:[#allocation4 + $0xbf8] sm:$0xff]
        %v1117 = vunpack.c.l.b16 %v349
        %v1118 = vunpack.c.h.b16 %v349
        %v1119 = vunpack.c.l.b16 %v350
        %v1120 = vunpack.c.h.b16 %v350
        %v1121 = vunpack.c.l.b16 %v351
        %v1122 = vunpack.c.h.b16 %v351
        %v1123 = vunpack.c.l.b16 %v352
        %v1124 = vunpack.c.h.b16 %v352
        %v1125 = vunpack.c.l.b16 %v353
        %v1126 = vunpack.c.h.b16 %v353
        %v1127 = vunpack.c.l.b16 %v354
        %v1128 = vunpack.c.h.b16 %v354
        %v1129 = vunpack.c.l.b16 %v355
        %v1130 = vunpack.c.h.b16 %v355
        %v1131 = vunpack.c.l.b16 %v356
        %v1132 = vunpack.c.h.b16 %v356
        %v1133 = vunpack.c.l.b16 %v357
        %v1134 = vunpack.c.h.b16 %v357
        %v1135 = vunpack.c.l.b16 %v358
        %v1136 = vunpack.c.h.b16 %v358
        %v1137 = vunpack.c.l.b16 %v359
        %v1138 = vunpack.c.h.b16 %v359
        %v1139 = vunpack.c.l.b16 %v360
        %v1140 = vunpack.c.h.b16 %v360
        %v1141 = vunpack.c.l.b16 %v361
        %v1142 = vunpack.c.h.b16 %v361
        %v1143 = vunpack.c.l.b16 %v362
        %v1144 = vunpack.c.h.b16 %v362
        %v1145 = vunpack.c.l.b16 %v363
        %v1146 = vunpack.c.h.b16 %v363
        %v1147 = vunpack.c.l.b16 %v364
        %v1148 = vunpack.c.h.b16 %v364
        %v1149 = vunpack.c.l.b16 %v365
        %v1150 = vunpack.c.h.b16 %v365
        %v1151 = vunpack.c.l.b16 %v366
        %v1152 = vunpack.c.h.b16 %v366
        %v1153 = vunpack.c.l.b16 %v367
        %v1154 = vunpack.c.h.b16 %v367
        %v1155 = vunpack.c.l.b16 %v368
        %v1156 = vunpack.c.h.b16 %v368
        %v1157 = vunpack.c.l.b16 %v369
        %v1158 = vunpack.c.h.b16 %v369
        %v1159 = vunpack.c.l.b16 %v370
        %v1160 = vunpack.c.h.b16 %v370
        %v1161 = vunpack.c.l.b16 %v371
        %v1162 = vunpack.c.h.b16 %v371
        %v1163 = vunpack.c.l.b16 %v372
        %v1164 = vunpack.c.h.b16 %v372
        %v1165 = vunpack.c.l.b16 %v373
        %v1166 = vunpack.c.h.b16 %v373
        %v1167 = vunpack.c.l.b16 %v374
        %v1168 = vunpack.c.h.b16 %v374
        %v1169 = vunpack.c.l.b16 %v375
        %v1170 = vunpack.c.h.b16 %v375
        %v1171 = vunpack.c.l.b16 %v376
        %v1172 = vunpack.c.h.b16 %v376
        %v1173 = vunpack.c.l.b16 %v377
        %v1174 = vunpack.c.h.b16 %v377
        %v1175 = vunpack.c.l.b16 %v378
        %v1176 = vunpack.c.h.b16 %v378
        %v1177 = vunpack.c.l.b16 %v379
        %v1178 = vunpack.c.h.b16 %v379
        %v1179 = vunpack.c.l.b16 %v380
        %v1180 = vunpack.c.h.b16 %v380
        %v1181 = vunpack.c.l.b16 %v381
        %v1182 = vunpack.c.h.b16 %v381
        %v1183 = vunpack.c.l.b16 %v382
        %v1184 = vunpack.c.h.b16 %v382
        %v1185 = vunpack.c.l.b16 %v383
        %v1186 = vunpack.c.h.b16 %v383
        %v1187 = vunpack.c.l.b16 %v384
        %v1188 = vunpack.c.h.b16 %v384
        %v1189 = vunpack.c.l.b16 %v385
        %v1190 = vunpack.c.h.b16 %v385
        %v1191 = vunpack.c.l.b16 %v386
        %v1192 = vunpack.c.h.b16 %v386
        %v1193 = vunpack.c.l.b16 %v387
        %v1194 = vunpack.c.h.b16 %v387
        %v1195 = vunpack.c.l.b16 %v388
        %v1196 = vunpack.c.h.b16 %v388
        %v1197 = vunpack.c.l.b16 %v389
        %v1198 = vunpack.c.h.b16 %v389
        %v1199 = vunpack.c.l.b16 %v390
        %v1200 = vunpack.c.h.b16 %v390
        %v1201 = vunpack.c.l.b16 %v391
        %v1202 = vunpack.c.h.b16 %v391
        %v1203 = vunpack.c.l.b16 %v392
        %v1204 = vunpack.c.h.b16 %v392
        %v1205 = vunpack.c.l.b16 %v393
        %v1206 = vunpack.c.h.b16 %v393
        %v1207 = vunpack.c.l.b16 %v394
        %v1208 = vunpack.c.h.b16 %v394
        %v1209 = vunpack.c.l.b16 %v395
        %v1210 = vunpack.c.h.b16 %v395
        %v1211 = vunpack.c.l.b16 %v396
        %v1212 = vunpack.c.h.b16 %v396
        %v1213 = vunpack.c.l.b16 %v397
        %v1214 = vunpack.c.h.b16 %v397
        %v1215 = vunpack.c.l.b16 %v398
        %v1216 = vunpack.c.h.b16 %v398
        %v1217 = vunpack.c.l.b16 %v399
        %v1218 = vunpack.c.h.b16 %v399
        %v1219 = vunpack.c.l.b16 %v400
        %v1220 = vunpack.c.h.b16 %v400
        %v1221 = vunpack.c.l.b16 %v401
        %v1222 = vunpack.c.h.b16 %v401
        %v1223 = vunpack.c.l.b16 %v402
        %v1224 = vunpack.c.h.b16 %v402
        %v1225 = vunpack.c.l.b16 %v403
        %v1226 = vunpack.c.h.b16 %v403
        %v1227 = vunpack.c.l.b16 %v404
        %v1228 = vunpack.c.h.b16 %v404
        %v1229 = vunpack.c.l.b16 %v405
        %v1230 = vunpack.c.h.b16 %v405
        %v1231 = vunpack.c.l.b16 %v406
        %v1232 = vunpack.c.h.b16 %v406
        %v1233 = vunpack.c.l.b16 %v407
        %v1234 = vunpack.c.h.b16 %v407
        %v1235 = vunpack.c.l.b16 %v408
        %v1236 = vunpack.c.h.b16 %v408
        %v1237 = vunpack.c.l.b16 %v409
        %v1238 = vunpack.c.h.b16 %v409
        %v1239 = vunpack.c.l.b16 %v410
        %v1240 = vunpack.c.h.b16 %v410
        %v1241 = vunpack.c.l.b16 %v411
        %v1242 = vunpack.c.h.b16 %v411
        %v1243 = vunpack.c.l.b16 %v412
        %v1244 = vunpack.c.h.b16 %v412
        %v1245 = vunpack.c.l.b16 %v413
        %v1246 = vunpack.c.h.b16 %v413
        %v1247 = vunpack.c.l.b16 %v414
        %v1248 = vunpack.c.h.b16 %v414
        %v1249 = vunpack.c.l.b16 %v415
        %v1250 = vunpack.c.h.b16 %v415
        %v1251 = vunpack.c.l.b16 %v416
        %v1252 = vunpack.c.h.b16 %v416
        %v1253 = vunpack.c.l.b16 %v417
        %v1254 = vunpack.c.h.b16 %v417
        %v1255 = vunpack.c.l.b16 %v418
        %v1256 = vunpack.c.h.b16 %v418
        %v1257 = vunpack.c.l.b16 %v419
        %v1258 = vunpack.c.h.b16 %v419
        %v1259 = vunpack.c.l.b16 %v420
        %v1260 = vunpack.c.h.b16 %v420
        %v1261 = vunpack.c.l.b16 %v421
        %v1262 = vunpack.c.h.b16 %v421
        %v1263 = vunpack.c.l.b16 %v422
        %v1264 = vunpack.c.h.b16 %v422
        %v1265 = vunpack.c.l.b16 %v423
        %v1266 = vunpack.c.h.b16 %v423
        %v1267 = vunpack.c.l.b16 %v424
        %v1268 = vunpack.c.h.b16 %v424
        %v1269 = vunpack.c.l.b16 %v425
        %v1270 = vunpack.c.h.b16 %v425
        %v1271 = vunpack.c.l.b16 %v426
        %v1272 = vunpack.c.h.b16 %v426
        %v1273 = vunpack.c.l.b16 %v427
        %v1274 = vunpack.c.h.b16 %v427
        %v1275 = vunpack.c.l.b16 %v428
        %v1276 = vunpack.c.h.b16 %v428
        %v1277 = vunpack.c.l.b16 %v429
        %v1278 = vunpack.c.h.b16 %v429
        %v1279 = vunpack.c.l.b16 %v430
        %v1280 = vunpack.c.h.b16 %v430
        %v1281 = vunpack.c.l.b16 %v431
        %v1282 = vunpack.c.h.b16 %v431
        %v1283 = vunpack.c.l.b16 %v432
        %v1284 = vunpack.c.h.b16 %v432
        %v1285 = vunpack.c.l.b16 %v433
        %v1286 = vunpack.c.h.b16 %v433
        %v1287 = vunpack.c.l.b16 %v434
        %v1288 = vunpack.c.h.b16 %v434
        %v1289 = vunpack.c.l.b16 %v435
        %v1290 = vunpack.c.h.b16 %v435
        %v1291 = vunpack.c.l.b16 %v436
        %v1292 = vunpack.c.h.b16 %v436
        %v1293 = vunpack.c.l.b16 %v437
        %v1294 = vunpack.c.h.b16 %v437
        %v1295 = vunpack.c.l.b16 %v438
        %v1296 = vunpack.c.h.b16 %v438
        %v1297 = vunpack.c.l.b16 %v439
        %v1298 = vunpack.c.h.b16 %v439
        %v1299 = vunpack.c.l.b16 %v440
        %v1300 = vunpack.c.h.b16 %v440
        %v1301 = vunpack.c.l.b16 %v441
        %v1302 = vunpack.c.h.b16 %v441
        %v1303 = vunpack.c.l.b16 %v442
        %v1304 = vunpack.c.h.b16 %v442
        %v1305 = vunpack.c.l.b16 %v443
        %v1306 = vunpack.c.h.b16 %v443
        %v1307 = vunpack.c.l.b16 %v444
        %v1308 = vunpack.c.h.b16 %v444
        %v1309 = vunpack.c.l.b16 %v445
        %v1310 = vunpack.c.h.b16 %v445
        %v1311 = vunpack.c.l.b16 %v446
        %v1312 = vunpack.c.h.b16 %v446
        %v1313 = vunpack.c.l.b16 %v447
        %v1314 = vunpack.c.h.b16 %v447
        %v1315 = vunpack.c.l.b16 %v448
        %v1316 = vunpack.c.h.b16 %v448
        %v1317 = vunpack.c.l.b16 %v449
        %v1318 = vunpack.c.h.b16 %v449
        %v1319 = vunpack.c.l.b16 %v450
        %v1320 = vunpack.c.h.b16 %v450
        %v1321 = vunpack.c.l.b16 %v451
        %v1322 = vunpack.c.h.b16 %v451
        %v1323 = vunpack.c.l.b16 %v452
        %v1324 = vunpack.c.h.b16 %v452
        %v1325 = vunpack.c.l.b16 %v453
        %v1326 = vunpack.c.h.b16 %v453
        %v1327 = vunpack.c.l.b16 %v454
        %v1328 = vunpack.c.h.b16 %v454
        %v1329 = vunpack.c.l.b16 %v455
        %v1330 = vunpack.c.h.b16 %v455
        %v1331 = vunpack.c.l.b16 %v456
        %v1332 = vunpack.c.h.b16 %v456
        %v1333 = vunpack.c.l.b16 %v457
        %v1334 = vunpack.c.h.b16 %v457
        %v1335 = vunpack.c.l.b16 %v458
        %v1336 = vunpack.c.h.b16 %v458
        %v1337 = vunpack.c.l.b16 %v459
        %v1338 = vunpack.c.h.b16 %v459
        %v1339 = vunpack.c.l.b16 %v460
        %v1340 = vunpack.c.h.b16 %v460
        %v1341 = vunpack.c.l.b16 %v461
        %v1342 = vunpack.c.h.b16 %v461
        %v1343 = vunpack.c.l.b16 %v462
        %v1344 = vunpack.c.h.b16 %v462
        %v1345 = vunpack.c.l.b16 %v463
        %v1346 = vunpack.c.h.b16 %v463
        %v1347 = vunpack.c.l.b16 %v464
        %v1348 = vunpack.c.h.b16 %v464
        %v1349 = vunpack.c.l.b16 %v465
        %v1350 = vunpack.c.h.b16 %v465
        %v1351 = vunpack.c.l.b16 %v466
        %v1352 = vunpack.c.h.b16 %v466
        %v1353 = vunpack.c.l.b16 %v467
        %v1354 = vunpack.c.h.b16 %v467
        %v1355 = vunpack.c.l.b16 %v468
        %v1356 = vunpack.c.h.b16 %v468
        %v1357 = vunpack.c.l.b16 %v469
        %v1358 = vunpack.c.h.b16 %v469
        %v1359 = vunpack.c.l.b16 %v470
        %v1360 = vunpack.c.h.b16 %v470
        %v1361 = vunpack.c.l.b16 %v471
        %v1362 = vunpack.c.h.b16 %v471
        %v1363 = vunpack.c.l.b16 %v472
        %v1364 = vunpack.c.h.b16 %v472
        %v1365 = vunpack.c.l.b16 %v473
        %v1366 = vunpack.c.h.b16 %v473
        %v1367 = vunpack.c.l.b16 %v474
        %v1368 = vunpack.c.h.b16 %v474
        %v1369 = vunpack.c.l.b16 %v475
        %v1370 = vunpack.c.h.b16 %v475
        %v1371 = vunpack.c.l.b16 %v476
        %v1372 = vunpack.c.h.b16 %v476
        %v1373 = vunpack.c.l.b16 %v477
        %v1374 = vunpack.c.h.b16 %v477
        %v1375 = vunpack.c.l.b16 %v478
        %v1376 = vunpack.c.h.b16 %v478
        %v1377 = vunpack.c.l.b16 %v479
        %v1378 = vunpack.c.h.b16 %v479
        %v1379 = vunpack.c.l.b16 %v480
        %v1380 = vunpack.c.h.b16 %v480
        %v1381 = vunpack.c.l.b16 %v481
        %v1382 = vunpack.c.h.b16 %v481
        %v1383 = vunpack.c.l.b16 %v482
        %v1384 = vunpack.c.h.b16 %v482
        %v1385 = vunpack.c.l.b16 %v483
        %v1386 = vunpack.c.h.b16 %v483
        %v1387 = vunpack.c.l.b16 %v484
        %v1388 = vunpack.c.h.b16 %v484
        %v1389 = vunpack.c.l.b16 %v485
        %v1390 = vunpack.c.h.b16 %v485
        %v1391 = vunpack.c.l.b16 %v486
        %v1392 = vunpack.c.h.b16 %v486
        %v1393 = vunpack.c.l.b16 %v487
        %v1394 = vunpack.c.h.b16 %v487
        %v1395 = vunpack.c.l.b16 %v488
        %v1396 = vunpack.c.h.b16 %v488
        %v1397 = vunpack.c.l.b16 %v489
        %v1398 = vunpack.c.h.b16 %v489
        %v1399 = vunpack.c.l.b16 %v490
        %v1400 = vunpack.c.h.b16 %v490
        %v1401 = vunpack.c.l.b16 %v491
        %v1402 = vunpack.c.h.b16 %v491
        %v1403 = vunpack.c.l.b16 %v492
        %v1404 = vunpack.c.h.b16 %v492
        %v1405 = vunpack.c.l.b16 %v493
        %v1406 = vunpack.c.h.b16 %v493
        %v1407 = vunpack.c.l.b16 %v494
        %v1408 = vunpack.c.h.b16 %v494
        %v1409 = vunpack.c.l.b16 %v495
        %v1410 = vunpack.c.h.b16 %v495
        %v1411 = vunpack.c.l.b16 %v496
        %v1412 = vunpack.c.h.b16 %v496
        %v1413 = vunpack.c.l.b16 %v497
        %v1414 = vunpack.c.h.b16 %v497
        %v1415 = vunpack.c.l.b16 %v498
        %v1416 = vunpack.c.h.b16 %v498
        %v1417 = vunpack.c.l.b16 %v499
        %v1418 = vunpack.c.h.b16 %v499
        %v1419 = vunpack.c.l.b16 %v500
        %v1420 = vunpack.c.h.b16 %v500
        %v1421 = vunpack.c.l.b16 %v501
        %v1422 = vunpack.c.h.b16 %v501
        %v1423 = vunpack.c.l.b16 %v502
        %v1424 = vunpack.c.h.b16 %v502
        %v1425 = vunpack.c.l.b16 %v503
        %v1426 = vunpack.c.h.b16 %v503
        %v1427 = vunpack.c.l.b16 %v504
        %v1428 = vunpack.c.h.b16 %v504
        %v1429 = vunpack.c.l.b16 %v505
        %v1430 = vunpack.c.h.b16 %v505
        %v1431 = vunpack.c.l.b16 %v506
        %v1432 = vunpack.c.h.b16 %v506
        %v1433 = vunpack.c.l.b16 %v507
        %v1434 = vunpack.c.h.b16 %v507
        %v1435 = vunpack.c.l.b16 %v508
        %v1436 = vunpack.c.h.b16 %v508
        %v1437 = vunpack.c.l.b16 %v509
        %v1438 = vunpack.c.h.b16 %v509
        %v1439 = vunpack.c.l.b16 %v510
        %v1440 = vunpack.c.h.b16 %v510
        %v1441 = vunpack.c.l.b16 %v511
        %v1442 = vunpack.c.h.b16 %v511
        %v1443 = vunpack.c.l.b16 %v512
        %v1444 = vunpack.c.h.b16 %v512
        %v1445 = vunpack.c.l.b16 %v513
        %v1446 = vunpack.c.h.b16 %v513
        %v1447 = vunpack.c.l.b16 %v514
        %v1448 = vunpack.c.h.b16 %v514
        %v1449 = vunpack.c.l.b16 %v515
        %v1450 = vunpack.c.h.b16 %v515
        %v1451 = vunpack.c.l.b16 %v516
        %v1452 = vunpack.c.h.b16 %v516
        %v1453 = vunpack.c.l.b16 %v517
        %v1454 = vunpack.c.h.b16 %v517
        %v1455 = vunpack.c.l.b16 %v518
        %v1456 = vunpack.c.h.b16 %v518
        %v1457 = vunpack.c.l.b16 %v519
        %v1458 = vunpack.c.h.b16 %v519
        %v1459 = vunpack.c.l.b16 %v520
        %v1460 = vunpack.c.h.b16 %v520
        %v1461 = vunpack.c.l.b16 %v521
        %v1462 = vunpack.c.h.b16 %v521
        %v1463 = vunpack.c.l.b16 %v522
        %v1464 = vunpack.c.h.b16 %v522
        %v1465 = vunpack.c.l.b16 %v523
        %v1466 = vunpack.c.h.b16 %v523
        %v1467 = vunpack.c.l.b16 %v524
        %v1468 = vunpack.c.h.b16 %v524
        %v1469 = vunpack.c.l.b16 %v525
        %v1470 = vunpack.c.h.b16 %v525
        %v1471 = vunpack.c.l.b16 %v526
        %v1472 = vunpack.c.h.b16 %v526
        %v1473 = vunpack.c.l.b16 %v527
        %v1474 = vunpack.c.h.b16 %v527
        %v1475 = vunpack.c.l.b16 %v528
        %v1476 = vunpack.c.h.b16 %v528
        %v1477 = vunpack.c.l.b16 %v529
        %v1478 = vunpack.c.h.b16 %v529
        %v1479 = vunpack.c.l.b16 %v530
        %v1480 = vunpack.c.h.b16 %v530
        %v1481 = vunpack.c.l.b16 %v531
        %v1482 = vunpack.c.h.b16 %v531
        %v1483 = vunpack.c.l.b16 %v532
        %v1484 = vunpack.c.h.b16 %v532
        %v1485 = vunpack.c.l.b16 %v533
        %v1486 = vunpack.c.h.b16 %v533
        %v1487 = vunpack.c.l.b16 %v534
        %v1488 = vunpack.c.h.b16 %v534
        %v1489 = vunpack.c.l.b16 %v535
        %v1490 = vunpack.c.h.b16 %v535
        %v1491 = vunpack.c.l.b16 %v536
        %v1492 = vunpack.c.h.b16 %v536
        %v1493 = vunpack.c.l.b16 %v537
        %v1494 = vunpack.c.h.b16 %v537
        %v1495 = vunpack.c.l.b16 %v538
        %v1496 = vunpack.c.h.b16 %v538
        %v1497 = vunpack.c.l.b16 %v539
        %v1498 = vunpack.c.h.b16 %v539
        %v1499 = vunpack.c.l.b16 %v540
        %v1500 = vunpack.c.h.b16 %v540
        %v1501 = vunpack.c.l.b16 %v541
        %v1502 = vunpack.c.h.b16 %v541
        %v1503 = vunpack.c.l.b16 %v542
        %v1504 = vunpack.c.h.b16 %v542
        %v1505 = vunpack.c.l.b16 %v543
        %v1506 = vunpack.c.h.b16 %v543
        %v1507 = vunpack.c.l.b16 %v544
        %v1508 = vunpack.c.h.b16 %v544
        %v1509 = vunpack.c.l.b16 %v545
        %v1510 = vunpack.c.h.b16 %v545
        %v1511 = vunpack.c.l.b16 %v546
        %v1512 = vunpack.c.h.b16 %v546
        %v1513 = vunpack.c.l.b16 %v547
        %v1514 = vunpack.c.h.b16 %v547
        %v1515 = vunpack.c.l.b16 %v548
        %v1516 = vunpack.c.h.b16 %v548
        %v1517 = vunpack.c.l.b16 %v549
        %v1518 = vunpack.c.h.b16 %v549
        %v1519 = vunpack.c.l.b16 %v550
        %v1520 = vunpack.c.h.b16 %v550
        %v1521 = vunpack.c.l.b16 %v551
        %v1522 = vunpack.c.h.b16 %v551
        %v1523 = vunpack.c.l.b16 %v552
        %v1524 = vunpack.c.h.b16 %v552
        %v1525 = vunpack.c.l.b16 %v553
        %v1526 = vunpack.c.h.b16 %v553
        %v1527 = vunpack.c.l.b16 %v554
        %v1528 = vunpack.c.h.b16 %v554
        %v1529 = vunpack.c.l.b16 %v555
        %v1530 = vunpack.c.h.b16 %v555
        %v1531 = vunpack.c.l.b16 %v556
        %v1532 = vunpack.c.h.b16 %v556
        %v1533 = vunpack.c.l.b16 %v557
        %v1534 = vunpack.c.h.b16 %v557
        %v1535 = vunpack.c.l.b16 %v558
        %v1536 = vunpack.c.h.b16 %v558
        %v1537 = vunpack.c.l.b16 %v559
        %v1538 = vunpack.c.h.b16 %v559
        %v1539 = vunpack.c.l.b16 %v560
        %v1540 = vunpack.c.h.b16 %v560
        %v1541 = vunpack.c.l.b16 %v561
        %v1542 = vunpack.c.h.b16 %v561
        %v1543 = vunpack.c.l.b16 %v562
        %v1544 = vunpack.c.h.b16 %v562
        %v1545 = vunpack.c.l.b16 %v563
        %v1546 = vunpack.c.h.b16 %v563
        %v1547 = vunpack.c.l.b16 %v564
        %v1548 = vunpack.c.h.b16 %v564
        %v1549 = vunpack.c.l.b16 %v565
        %v1550 = vunpack.c.h.b16 %v565
        %v1551 = vunpack.c.l.b16 %v566
        %v1552 = vunpack.c.h.b16 %v566
        %v1553 = vunpack.c.l.b16 %v567
        %v1554 = vunpack.c.h.b16 %v567
        %v1555 = vunpack.c.l.b16 %v568
        %v1556 = vunpack.c.h.b16 %v568
        %v1557 = vunpack.c.l.b16 %v569
        %v1558 = vunpack.c.h.b16 %v569
        %v1559 = vunpack.c.l.b16 %v570
        %v1560 = vunpack.c.h.b16 %v570
        %v1561 = vunpack.c.l.b16 %v571
        %v1562 = vunpack.c.h.b16 %v571
        %v1563 = vunpack.c.l.b16 %v572
        %v1564 = vunpack.c.h.b16 %v572
        %v1565 = vunpack.c.l.b16 %v573
        %v1566 = vunpack.c.h.b16 %v573
        %v1567 = vunpack.c.l.b16 %v574
        %v1568 = vunpack.c.h.b16 %v574
        %v1569 = vunpack.c.l.b16 %v575
        %v1570 = vunpack.c.h.b16 %v575
        %v1571 = vunpack.c.l.b16 %v576
        %v1572 = vunpack.c.h.b16 %v576
        %v1573 = vunpack.c.l.b16 %v577
        %v1574 = vunpack.c.h.b16 %v577
        %v1575 = vunpack.c.l.b16 %v578
        %v1576 = vunpack.c.h.b16 %v578
        %v1577 = vunpack.c.l.b16 %v579
        %v1578 = vunpack.c.h.b16 %v579
        %v1579 = vunpack.c.l.b16 %v580
        %v1580 = vunpack.c.h.b16 %v580
        %v1581 = vunpack.c.l.b16 %v581
        %v1582 = vunpack.c.h.b16 %v581
        %v1583 = vunpack.c.l.b16 %v582
        %v1584 = vunpack.c.h.b16 %v582
        %v1585 = vunpack.c.l.b16 %v583
        %v1586 = vunpack.c.h.b16 %v583
        %v1587 = vunpack.c.l.b16 %v584
        %v1588 = vunpack.c.h.b16 %v584
        %v1589 = vunpack.c.l.b16 %v585
        %v1590 = vunpack.c.h.b16 %v585
        %v1591 = vunpack.c.l.b16 %v586
        %v1592 = vunpack.c.h.b16 %v586
        %v1593 = vunpack.c.l.b16 %v587
        %v1594 = vunpack.c.h.b16 %v587
        %v1595 = vunpack.c.l.b16 %v588
        %v1596 = vunpack.c.h.b16 %v588
        %v1597 = vunpack.c.l.b16 %v589
        %v1598 = vunpack.c.h.b16 %v589
        %v1599 = vunpack.c.l.b16 %v590
        %v1600 = vunpack.c.h.b16 %v590
        %v1601 = vunpack.c.l.b16 %v591
        %v1602 = vunpack.c.h.b16 %v591
        %v1603 = vunpack.c.l.b16 %v592
        %v1604 = vunpack.c.h.b16 %v592
        %v1605 = vunpack.c.l.b16 %v593
        %v1606 = vunpack.c.h.b16 %v593
        %v1607 = vunpack.c.l.b16 %v594
        %v1608 = vunpack.c.h.b16 %v594
        %v1609 = vunpack.c.l.b16 %v595
        %v1610 = vunpack.c.h.b16 %v595
        %v1611 = vunpack.c.l.b16 %v596
        %v1612 = vunpack.c.h.b16 %v596
        %v1613 = vunpack.c.l.b16 %v597
        %v1614 = vunpack.c.h.b16 %v597
        %v1615 = vunpack.c.l.b16 %v598
        %v1616 = vunpack.c.h.b16 %v598
        %v1617 = vunpack.c.l.b16 %v599
        %v1618 = vunpack.c.h.b16 %v599
        %v1619 = vunpack.c.l.b16 %v600
        %v1620 = vunpack.c.h.b16 %v600
        %v1621 = vunpack.c.l.b16 %v601
        %v1622 = vunpack.c.h.b16 %v601
        %v1623 = vunpack.c.l.b16 %v602
        %v1624 = vunpack.c.h.b16 %v602
        %v1625 = vunpack.c.l.b16 %v603
        %v1626 = vunpack.c.h.b16 %v603
        %v1627 = vunpack.c.l.b16 %v604
        %v1628 = vunpack.c.h.b16 %v604
        %v1629 = vunpack.c.l.b16 %v605
        %v1630 = vunpack.c.h.b16 %v605
        %v1631 = vunpack.c.l.b16 %v606
        %v1632 = vunpack.c.h.b16 %v606
        %v1633 = vunpack.c.l.b16 %v607
        %v1634 = vunpack.c.h.b16 %v607
        %v1635 = vunpack.c.l.b16 %v608
        %v1636 = vunpack.c.h.b16 %v608
        %v1637 = vunpack.c.l.b16 %v609
        %v1638 = vunpack.c.h.b16 %v609
        %v1639 = vunpack.c.l.b16 %v610
        %v1640 = vunpack.c.h.b16 %v610
        %v1641 = vunpack.c.l.b16 %v611
        %v1642 = vunpack.c.h.b16 %v611
        %v1643 = vunpack.c.l.b16 %v612
        %v1644 = vunpack.c.h.b16 %v612
        %v1645 = vunpack.c.l.b16 %v613
        %v1646 = vunpack.c.h.b16 %v613
        %v1647 = vunpack.c.l.b16 %v614
        %v1648 = vunpack.c.h.b16 %v614
        %v1649 = vunpack.c.l.b16 %v615
        %v1650 = vunpack.c.h.b16 %v615
        %v1651 = vunpack.c.l.b16 %v616
        %v1652 = vunpack.c.h.b16 %v616
        %v1653 = vunpack.c.l.b16 %v617
        %v1654 = vunpack.c.h.b16 %v617
        %v1655 = vunpack.c.l.b16 %v618
        %v1656 = vunpack.c.h.b16 %v618
        %v1657 = vunpack.c.l.b16 %v619
        %v1658 = vunpack.c.h.b16 %v619
        %v1659 = vunpack.c.l.b16 %v620
        %v1660 = vunpack.c.h.b16 %v620
        %v1661 = vunpack.c.l.b16 %v621
        %v1662 = vunpack.c.h.b16 %v621
        %v1663 = vunpack.c.l.b16 %v622
        %v1664 = vunpack.c.h.b16 %v622
        %v1665 = vunpack.c.l.b16 %v623
        %v1666 = vunpack.c.h.b16 %v623
        %v1667 = vunpack.c.l.b16 %v624
        %v1668 = vunpack.c.h.b16 %v624
        %v1669 = vunpack.c.l.b16 %v625
        %v1670 = vunpack.c.h.b16 %v625
        %v1671 = vunpack.c.l.b16 %v626
        %v1672 = vunpack.c.h.b16 %v626
        %v1673 = vunpack.c.l.b16 %v627
        %v1674 = vunpack.c.h.b16 %v627
        %v1675 = vunpack.c.l.b16 %v628
        %v1676 = vunpack.c.h.b16 %v628
        %v1677 = vunpack.c.l.b16 %v629
        %v1678 = vunpack.c.h.b16 %v629
        %v1679 = vunpack.c.l.b16 %v630
        %v1680 = vunpack.c.h.b16 %v630
        %v1681 = vunpack.c.l.b16 %v631
        %v1682 = vunpack.c.h.b16 %v631
        %v1683 = vunpack.c.l.b16 %v632
        %v1684 = vunpack.c.h.b16 %v632
        %v1685 = vunpack.c.l.b16 %v633
        %v1686 = vunpack.c.h.b16 %v633
        %v1687 = vunpack.c.l.b16 %v634
        %v1688 = vunpack.c.h.b16 %v634
        %v1689 = vunpack.c.l.b16 %v635
        %v1690 = vunpack.c.h.b16 %v635
        %v1691 = vunpack.c.l.b16 %v636
        %v1692 = vunpack.c.h.b16 %v636
        %v1693 = vunpack.c.l.b16 %v637
        %v1694 = vunpack.c.h.b16 %v637
        %v1695 = vunpack.c.l.b16 %v638
        %v1696 = vunpack.c.h.b16 %v638
        %v1697 = vunpack.c.l.b16 %v639
        %v1698 = vunpack.c.h.b16 %v639
        %v1699 = vunpack.c.l.b16 %v640
        %v1700 = vunpack.c.h.b16 %v640
        %v1701 = vunpack.c.l.b16 %v641
        %v1702 = vunpack.c.h.b16 %v641
        %v1703 = vunpack.c.l.b16 %v642
        %v1704 = vunpack.c.h.b16 %v642
        %v1705 = vunpack.c.l.b16 %v643
        %v1706 = vunpack.c.h.b16 %v643
        %v1707 = vunpack.c.l.b16 %v644
        %v1708 = vunpack.c.h.b16 %v644
        %v1709 = vunpack.c.l.b16 %v645
        %v1710 = vunpack.c.h.b16 %v645
        %v1711 = vunpack.c.l.b16 %v646
        %v1712 = vunpack.c.h.b16 %v646
        %v1713 = vunpack.c.l.b16 %v647
        %v1714 = vunpack.c.h.b16 %v647
        %v1715 = vunpack.c.l.b16 %v648
        %v1716 = vunpack.c.h.b16 %v648
        %v1717 = vunpack.c.l.b16 %v649
        %v1718 = vunpack.c.h.b16 %v649
        %v1719 = vunpack.c.l.b16 %v650
        %v1720 = vunpack.c.h.b16 %v650
        %v1721 = vunpack.c.l.b16 %v651
        %v1722 = vunpack.c.h.b16 %v651
        %v1723 = vunpack.c.l.b16 %v652
        %v1724 = vunpack.c.h.b16 %v652
        %v1725 = vunpack.c.l.b16 %v653
        %v1726 = vunpack.c.h.b16 %v653
        %v1727 = vunpack.c.l.b16 %v654
        %v1728 = vunpack.c.h.b16 %v654
        %v1729 = vunpack.c.l.b16 %v655
        %v1730 = vunpack.c.h.b16 %v655
        %v1731 = vunpack.c.l.b16 %v656
        %v1732 = vunpack.c.h.b16 %v656
        %v1733 = vunpack.c.l.b16 %v657
        %v1734 = vunpack.c.h.b16 %v657
        %v1735 = vunpack.c.l.b16 %v658
        %v1736 = vunpack.c.h.b16 %v658
        %v1737 = vunpack.c.l.b16 %v659
        %v1738 = vunpack.c.h.b16 %v659
        %v1739 = vunpack.c.l.b16 %v660
        %v1740 = vunpack.c.h.b16 %v660
        %v1741 = vunpack.c.l.b16 %v661
        %v1742 = vunpack.c.h.b16 %v661
        %v1743 = vunpack.c.l.b16 %v662
        %v1744 = vunpack.c.h.b16 %v662
        %v1745 = vunpack.c.l.b16 %v663
        %v1746 = vunpack.c.h.b16 %v663
        %v1747 = vunpack.c.l.b16 %v664
        %v1748 = vunpack.c.h.b16 %v664
        %v1749 = vunpack.c.l.b16 %v665
        %v1750 = vunpack.c.h.b16 %v665
        %v1751 = vunpack.c.l.b16 %v666
        %v1752 = vunpack.c.h.b16 %v666
        %v1753 = vunpack.c.l.b16 %v667
        %v1754 = vunpack.c.h.b16 %v667
        %v1755 = vunpack.c.l.b16 %v668
        %v1756 = vunpack.c.h.b16 %v668
        %v1757 = vunpack.c.l.b16 %v669
        %v1758 = vunpack.c.h.b16 %v669
        %v1759 = vunpack.c.l.b16 %v670
        %v1760 = vunpack.c.h.b16 %v670
        %v1761 = vunpack.c.l.b16 %v671
        %v1762 = vunpack.c.h.b16 %v671
        %v1763 = vunpack.c.l.b16 %v672
        %v1764 = vunpack.c.h.b16 %v672
        %v1765 = vunpack.c.l.b16 %v673
        %v1766 = vunpack.c.h.b16 %v673
        %v1767 = vunpack.c.l.b16 %v674
        %v1768 = vunpack.c.h.b16 %v674
        %v1769 = vunpack.c.l.b16 %v675
        %v1770 = vunpack.c.h.b16 %v675
        %v1771 = vunpack.c.l.b16 %v676
        %v1772 = vunpack.c.h.b16 %v676
        %v1773 = vunpack.c.l.b16 %v677
        %v1774 = vunpack.c.h.b16 %v677
        %v1775 = vunpack.c.l.b16 %v678
        %v1776 = vunpack.c.h.b16 %v678
        %v1777 = vunpack.c.l.b16 %v679
        %v1778 = vunpack.c.h.b16 %v679
        %v1779 = vunpack.c.l.b16 %v680
        %v1780 = vunpack.c.h.b16 %v680
        %v1781 = vunpack.c.l.b16 %v681
        %v1782 = vunpack.c.h.b16 %v681
        %v1783 = vunpack.c.l.b16 %v682
        %v1784 = vunpack.c.h.b16 %v682
        %v1785 = vunpack.c.l.b16 %v683
        %v1786 = vunpack.c.h.b16 %v683
        %v1787 = vunpack.c.l.b16 %v684
        %v1788 = vunpack.c.h.b16 %v684
        %v1789 = vunpack.c.l.b16 %v685
        %v1790 = vunpack.c.h.b16 %v685
        %v1791 = vunpack.c.l.b16 %v686
        %v1792 = vunpack.c.h.b16 %v686
        %v1793 = vunpack.c.l.b16 %v687
        %v1794 = vunpack.c.h.b16 %v687
        %v1795 = vunpack.c.l.b16 %v688
        %v1796 = vunpack.c.h.b16 %v688
        %v1797 = vunpack.c.l.b16 %v689
        %v1798 = vunpack.c.h.b16 %v689
        %v1799 = vunpack.c.l.b16 %v690
        %v1800 = vunpack.c.h.b16 %v690
        %v1801 = vunpack.c.l.b16 %v691
        %v1802 = vunpack.c.h.b16 %v691
        %v1803 = vunpack.c.l.b16 %v692
        %v1804 = vunpack.c.h.b16 %v692
        %v1805 = vunpack.c.l.b16 %v693
        %v1806 = vunpack.c.h.b16 %v693
        %v1807 = vunpack.c.l.b16 %v694
        %v1808 = vunpack.c.h.b16 %v694
        %v1809 = vunpack.c.l.b16 %v695
        %v1810 = vunpack.c.h.b16 %v695
        %v1811 = vunpack.c.l.b16 %v696
        %v1812 = vunpack.c.h.b16 %v696
        %v1813 = vunpack.c.l.b16 %v697
        %v1814 = vunpack.c.h.b16 %v697
        %v1815 = vunpack.c.l.b16 %v698
        %v1816 = vunpack.c.h.b16 %v698
        %v1817 = vunpack.c.l.b16 %v699
        %v1818 = vunpack.c.h.b16 %v699
        %v1819 = vunpack.c.l.b16 %v700
        %v1820 = vunpack.c.h.b16 %v700
        %v1821 = vunpack.c.l.b16 %v701
        %v1822 = vunpack.c.h.b16 %v701
        %v1823 = vunpack.c.l.b16 %v702
        %v1824 = vunpack.c.h.b16 %v702
        %v1825 = vunpack.c.l.b16 %v703
        %v1826 = vunpack.c.h.b16 %v703
        %v1827 = vunpack.c.l.b16 %v704
        %v1828 = vunpack.c.h.b16 %v704
        %v1829 = vunpack.c.l.b16 %v705
        %v1830 = vunpack.c.h.b16 %v705
        %v1831 = vunpack.c.l.b16 %v706
        %v1832 = vunpack.c.h.b16 %v706
        %v1833 = vunpack.c.l.b16 %v707
        %v1834 = vunpack.c.h.b16 %v707
        %v1835 = vunpack.c.l.b16 %v708
        %v1836 = vunpack.c.h.b16 %v708
        %v1837 = vunpack.c.l.b16 %v709
        %v1838 = vunpack.c.h.b16 %v709
        %v1839 = vunpack.c.l.b16 %v710
        %v1840 = vunpack.c.h.b16 %v710
        %v1841 = vunpack.c.l.b16 %v711
        %v1842 = vunpack.c.h.b16 %v711
        %v1843 = vunpack.c.l.b16 %v712
        %v1844 = vunpack.c.h.b16 %v712
        %v1845 = vunpack.c.l.b16 %v713
        %v1846 = vunpack.c.h.b16 %v713
        %v1847 = vunpack.c.l.b16 %v714
        %v1848 = vunpack.c.h.b16 %v714
        %v1849 = vunpack.c.l.b16 %v715
        %v1850 = vunpack.c.h.b16 %v715
        %v1851 = vunpack.c.l.b16 %v716
        %v1852 = vunpack.c.h.b16 %v716
        %v1853 = vunpack.c.l.b16 %v717
        %v1854 = vunpack.c.h.b16 %v717
        %v1855 = vunpack.c.l.b16 %v718
        %v1856 = vunpack.c.h.b16 %v718
        %v1857 = vunpack.c.l.b16 %v719
        %v1858 = vunpack.c.h.b16 %v719
        %v1859 = vunpack.c.l.b16 %v720
        %v1860 = vunpack.c.h.b16 %v720
        %v1861 = vunpack.c.l.b16 %v721
        %v1862 = vunpack.c.h.b16 %v721
        %v1863 = vunpack.c.l.b16 %v722
        %v1864 = vunpack.c.h.b16 %v722
        %v1865 = vunpack.c.l.b16 %v723
        %v1866 = vunpack.c.h.b16 %v723
        %v1867 = vunpack.c.l.b16 %v724
        %v1868 = vunpack.c.h.b16 %v724
        %v1869 = vunpack.c.l.b16 %v725
        %v1870 = vunpack.c.h.b16 %v725
        %v1871 = vunpack.c.l.b16 %v726
        %v1872 = vunpack.c.h.b16 %v726
        %v1873 = vunpack.c.l.b16 %v727
        %v1874 = vunpack.c.h.b16 %v727
        %v1875 = vunpack.c.l.b16 %v728
        %v1876 = vunpack.c.h.b16 %v728
        %v1877 = vunpack.c.l.b16 %v729
        %v1878 = vunpack.c.h.b16 %v729
        %v1879 = vunpack.c.l.b16 %v730
        %v1880 = vunpack.c.h.b16 %v730
        %v1881 = vunpack.c.l.b16 %v731
        %v1882 = vunpack.c.h.b16 %v731
        %v1883 = vunpack.c.l.b16 %v732
        %v1884 = vunpack.c.h.b16 %v732
        %v1885 = vpack.c.b16 %v1123, %v1117
        %v1886 = vpack.c.b16 %v1124, %v1118
        %v1887 = vpack.c.b16 %v1125, %v1119
        %v1888 = vpack.c.b16 %v1126, %v1120
        %v1889 = vpack.c.b16 %v1127, %v1121
        %v1890 = vpack.c.b16 %v1128, %v1122
        %v1891 = vpack.c.b16 %v1135, %v1129
        %v1892 = vpack.c.b16 %v1136, %v1130
        %v1893 = vpack.c.b16 %v1137, %v1131
        %v1894 = vpack.c.b16 %v1138, %v1132
        %v1895 = vpack.c.b16 %v1139, %v1133
        %v1896 = vpack.c.b16 %v1140, %v1134
        %v1897 = vpack.c.b16 %v1147, %v1141
        %v1898 = vpack.c.b16 %v1148, %v1142
        %v1899 = vpack.c.b16 %v1149, %v1143
        %v1900 = vpack.c.b16 %v1150, %v1144
        %v1901 = vpack.c.b16 %v1151, %v1145
        %v1902 = vpack.c.b16 %v1152, %v1146
        %v1903 = vpack.c.b16 %v1159, %v1153
        %v1904 = vpack.c.b16 %v1160, %v1154
        %v1905 = vpack.c.b16 %v1161, %v1155
        %v1906 = vpack.c.b16 %v1162, %v1156
        %v1907 = vpack.c.b16 %v1163, %v1157
        %v1908 = vpack.c.b16 %v1164, %v1158
        %v1909 = vpack.c.b16 %v1171, %v1165
        %v1910 = vpack.c.b16 %v1172, %v1166
        %v1911 = vpack.c.b16 %v1173, %v1167
        %v1912 = vpack.c.b16 %v1174, %v1168
        %v1913 = vpack.c.b16 %v1175, %v1169
        %v1914 = vpack.c.b16 %v1176, %v1170
        %v1915 = vpack.c.b16 %v1183, %v1177
        %v1916 = vpack.c.b16 %v1184, %v1178
        %v1917 = vpack.c.b16 %v1185, %v1179
        %v1918 = vpack.c.b16 %v1186, %v1180
        %v1919 = vpack.c.b16 %v1187, %v1181
        %v1920 = vpack.c.b16 %v1188, %v1182
        %v1921 = vpack.c.b16 %v1195, %v1189
        %v1922 = vpack.c.b16 %v1196, %v1190
        %v1923 = vpack.c.b16 %v1197, %v1191
        %v1924 = vpack.c.b16 %v1198, %v1192
        %v1925 = vpack.c.b16 %v1199, %v1193
        %v1926 = vpack.c.b16 %v1200, %v1194
        %v1927 = vpack.c.b16 %v1207, %v1201
        %v1928 = vpack.c.b16 %v1208, %v1202
        %v1929 = vpack.c.b16 %v1209, %v1203
        %v1930 = vpack.c.b16 %v1210, %v1204
        %v1931 = vpack.c.b16 %v1211, %v1205
        %v1932 = vpack.c.b16 %v1212, %v1206
        %v1933 = vpack.c.b16 %v1219, %v1213
        %v1934 = vpack.c.b16 %v1220, %v1214
        %v1935 = vpack.c.b16 %v1221, %v1215
        %v1936 = vpack.c.b16 %v1222, %v1216
        %v1937 = vpack.c.b16 %v1223, %v1217
        %v1938 = vpack.c.b16 %v1224, %v1218
        %v1939 = vpack.c.b16 %v1231, %v1225
        %v1940 = vpack.c.b16 %v1232, %v1226
        %v1941 = vpack.c.b16 %v1233, %v1227
        %v1942 = vpack.c.b16 %v1234, %v1228
        %v1943 = vpack.c.b16 %v1235, %v1229
        %v1944 = vpack.c.b16 %v1236, %v1230
        %v1945 = vpack.c.b16 %v1243, %v1237
        %v1946 = vpack.c.b16 %v1244, %v1238
        %v1947 = vpack.c.b16 %v1245, %v1239
        %v1948 = vpack.c.b16 %v1246, %v1240
        %v1949 = vpack.c.b16 %v1247, %v1241
        %v1950 = vpack.c.b16 %v1248, %v1242
        %v1951 = vpack.c.b16 %v1255, %v1249
        %v1952 = vpack.c.b16 %v1256, %v1250
        %v1953 = vpack.c.b16 %v1257, %v1251
        %v1954 = vpack.c.b16 %v1258, %v1252
        %v1955 = vpack.c.b16 %v1259, %v1253
        %v1956 = vpack.c.b16 %v1260, %v1254
        %v1957 = vpack.c.b16 %v1267, %v1261
        %v1958 = vpack.c.b16 %v1268, %v1262
        %v1959 = vpack.c.b16 %v1269, %v1263
        %v1960 = vpack.c.b16 %v1270, %v1264
        %v1961 = vpack.c.b16 %v1271, %v1265
        %v1962 = vpack.c.b16 %v1272, %v1266
        %v1963 = vpack.c.b16 %v1279, %v1273
        %v1964 = vpack.c.b16 %v1280, %v1274
        %v1965 = vpack.c.b16 %v1281, %v1275
        %v1966 = vpack.c.b16 %v1282, %v1276
        %v1967 = vpack.c.b16 %v1283, %v1277
        %v1968 = vpack.c.b16 %v1284, %v1278
        %v1969 = vpack.c.b16 %v1291, %v1285
        %v1970 = vpack.c.b16 %v1292, %v1286
        %v1971 = vpack.c.b16 %v1293, %v1287
        %v1972 = vpack.c.b16 %v1294, %v1288
        %v1973 = vpack.c.b16 %v1295, %v1289
        %v1974 = vpack.c.b16 %v1296, %v1290
        %v1975 = vpack.c.b16 %v1303, %v1297
        %v1976 = vpack.c.b16 %v1304, %v1298
        %v1977 = vpack.c.b16 %v1305, %v1299
        %v1978 = vpack.c.b16 %v1306, %v1300
        %v1979 = vpack.c.b16 %v1307, %v1301
        %v1980 = vpack.c.b16 %v1308, %v1302
        %v1981 = vpack.c.b16 %v1315, %v1309
        %v1982 = vpack.c.b16 %v1316, %v1310
        %v1983 = vpack.c.b16 %v1317, %v1311
        %v1984 = vpack.c.b16 %v1318, %v1312
        %v1985 = vpack.c.b16 %v1319, %v1313
        %v1986 = vpack.c.b16 %v1320, %v1314
        %v1987 = vpack.c.b16 %v1327, %v1321
        %v1988 = vpack.c.b16 %v1328, %v1322
        %v1989 = vpack.c.b16 %v1329, %v1323
        %v1990 = vpack.c.b16 %v1330, %v1324
        %v1991 = vpack.c.b16 %v1331, %v1325
        %v1992 = vpack.c.b16 %v1332, %v1326
        %v1993 = vpack.c.b16 %v1339, %v1333
        %v1994 = vpack.c.b16 %v1340, %v1334
        %v1995 = vpack.c.b16 %v1341, %v1335
        %v1996 = vpack.c.b16 %v1342, %v1336
        %v1997 = vpack.c.b16 %v1343, %v1337
        %v1998 = vpack.c.b16 %v1344, %v1338
        %v1999 = vpack.c.b16 %v1351, %v1345
        %v2000 = vpack.c.b16 %v1352, %v1346
        %v2001 = vpack.c.b16 %v1353, %v1347
        %v2002 = vpack.c.b16 %v1354, %v1348
        %v2003 = vpack.c.b16 %v1355, %v1349
        %v2004 = vpack.c.b16 %v1356, %v1350
        %v2005 = vpack.c.b16 %v1363, %v1357
        %v2006 = vpack.c.b16 %v1364, %v1358
        %v2007 = vpack.c.b16 %v1365, %v1359
        %v2008 = vpack.c.b16 %v1366, %v1360
        %v2009 = vpack.c.b16 %v1367, %v1361
        %v2010 = vpack.c.b16 %v1368, %v1362
        %v2011 = vpack.c.b16 %v1375, %v1369
        %v2012 = vpack.c.b16 %v1376, %v1370
        %v2013 = vpack.c.b16 %v1377, %v1371
        %v2014 = vpack.c.b16 %v1378, %v1372
        %v2015 = vpack.c.b16 %v1379, %v1373
        %v2016 = vpack.c.b16 %v1380, %v1374
        %v2017 = vpack.c.b16 %v1387, %v1381
        %v2018 = vpack.c.b16 %v1388, %v1382
        %v2019 = vpack.c.b16 %v1389, %v1383
        %v2020 = vpack.c.b16 %v1390, %v1384
        %v2021 = vpack.c.b16 %v1391, %v1385
        %v2022 = vpack.c.b16 %v1392, %v1386
        %v2023 = vpack.c.b16 %v1399, %v1393
        %v2024 = vpack.c.b16 %v1400, %v1394
        %v2025 = vpack.c.b16 %v1401, %v1395
        %v2026 = vpack.c.b16 %v1402, %v1396
        %v2027 = vpack.c.b16 %v1403, %v1397
        %v2028 = vpack.c.b16 %v1404, %v1398
        %v2029 = vpack.c.b16 %v1411, %v1405
        %v2030 = vpack.c.b16 %v1412, %v1406
        %v2031 = vpack.c.b16 %v1413, %v1407
        %v2032 = vpack.c.b16 %v1414, %v1408
        %v2033 = vpack.c.b16 %v1415, %v1409
        %v2034 = vpack.c.b16 %v1416, %v1410
        %v2035 = vpack.c.b16 %v1423, %v1417
        %v2036 = vpack.c.b16 %v1424, %v1418
        %v2037 = vpack.c.b16 %v1425, %v1419
        %v2038 = vpack.c.b16 %v1426, %v1420
        %v2039 = vpack.c.b16 %v1427, %v1421
        %v2040 = vpack.c.b16 %v1428, %v1422
        %v2041 = vpack.c.b16 %v1435, %v1429
        %v2042 = vpack.c.b16 %v1436, %v1430
        %v2043 = vpack.c.b16 %v1437, %v1431
        %v2044 = vpack.c.b16 %v1438, %v1432
        %v2045 = vpack.c.b16 %v1439, %v1433
        %v2046 = vpack.c.b16 %v1440, %v1434
        %v2047 = vpack.c.b16 %v1447, %v1441
        %v2048 = vpack.c.b16 %v1448, %v1442
        %v2049 = vpack.c.b16 %v1449, %v1443
        %v2050 = vpack.c.b16 %v1450, %v1444
        %v2051 = vpack.c.b16 %v1451, %v1445
        %v2052 = vpack.c.b16 %v1452, %v1446
        %v2053 = vpack.c.b16 %v1459, %v1453
        %v2054 = vpack.c.b16 %v1460, %v1454
        %v2055 = vpack.c.b16 %v1461, %v1455
        %v2056 = vpack.c.b16 %v1462, %v1456
        %v2057 = vpack.c.b16 %v1463, %v1457
        %v2058 = vpack.c.b16 %v1464, %v1458
        %v2059 = vpack.c.b16 %v1471, %v1465
        %v2060 = vpack.c.b16 %v1472, %v1466
        %v2061 = vpack.c.b16 %v1473, %v1467
        %v2062 = vpack.c.b16 %v1474, %v1468
        %v2063 = vpack.c.b16 %v1475, %v1469
        %v2064 = vpack.c.b16 %v1476, %v1470
        %v2065 = vpack.c.b16 %v1483, %v1477
        %v2066 = vpack.c.b16 %v1484, %v1478
        %v2067 = vpack.c.b16 %v1485, %v1479
        %v2068 = vpack.c.b16 %v1486, %v1480
        %v2069 = vpack.c.b16 %v1487, %v1481
        %v2070 = vpack.c.b16 %v1488, %v1482
        %v2071 = vpack.c.b16 %v1495, %v1489
        %v2072 = vpack.c.b16 %v1496, %v1490
        %v2073 = vpack.c.b16 %v1497, %v1491
        %v2074 = vpack.c.b16 %v1498, %v1492
        %v2075 = vpack.c.b16 %v1499, %v1493
        %v2076 = vpack.c.b16 %v1500, %v1494
        %v2077 = vpack.c.b16 %v1507, %v1501
        %v2078 = vpack.c.b16 %v1508, %v1502
        %v2079 = vpack.c.b16 %v1509, %v1503
        %v2080 = vpack.c.b16 %v1510, %v1504
        %v2081 = vpack.c.b16 %v1511, %v1505
        %v2082 = vpack.c.b16 %v1512, %v1506
        %v2083 = vpack.c.b16 %v1519, %v1513
        %v2084 = vpack.c.b16 %v1520, %v1514
        %v2085 = vpack.c.b16 %v1521, %v1515
        %v2086 = vpack.c.b16 %v1522, %v1516
        %v2087 = vpack.c.b16 %v1523, %v1517
        %v2088 = vpack.c.b16 %v1524, %v1518
        %v2089 = vpack.c.b16 %v1531, %v1525
        %v2090 = vpack.c.b16 %v1532, %v1526
        %v2091 = vpack.c.b16 %v1533, %v1527
        %v2092 = vpack.c.b16 %v1534, %v1528
        %v2093 = vpack.c.b16 %v1535, %v1529
        %v2094 = vpack.c.b16 %v1536, %v1530
        %v2095 = vpack.c.b16 %v1543, %v1537
        %v2096 = vpack.c.b16 %v1544, %v1538
        %v2097 = vpack.c.b16 %v1545, %v1539
        %v2098 = vpack.c.b16 %v1546, %v1540
        %v2099 = vpack.c.b16 %v1547, %v1541
        %v2100 = vpack.c.b16 %v1548, %v1542
        %v2101 = vpack.c.b16 %v1555, %v1549
        %v2102 = vpack.c.b16 %v1556, %v1550
        %v2103 = vpack.c.b16 %v1557, %v1551
        %v2104 = vpack.c.b16 %v1558, %v1552
        %v2105 = vpack.c.b16 %v1559, %v1553
        %v2106 = vpack.c.b16 %v1560, %v1554
        %v2107 = vpack.c.b16 %v1567, %v1561
        %v2108 = vpack.c.b16 %v1568, %v1562
        %v2109 = vpack.c.b16 %v1569, %v1563
        %v2110 = vpack.c.b16 %v1570, %v1564
        %v2111 = vpack.c.b16 %v1571, %v1565
        %v2112 = vpack.c.b16 %v1572, %v1566
        %v2113 = vpack.c.b16 %v1579, %v1573
        %v2114 = vpack.c.b16 %v1580, %v1574
        %v2115 = vpack.c.b16 %v1581, %v1575
        %v2116 = vpack.c.b16 %v1582, %v1576
        %v2117 = vpack.c.b16 %v1583, %v1577
        %v2118 = vpack.c.b16 %v1584, %v1578
        %v2119 = vpack.c.b16 %v1591, %v1585
        %v2120 = vpack.c.b16 %v1592, %v1586
        %v2121 = vpack.c.b16 %v1593, %v1587
        %v2122 = vpack.c.b16 %v1594, %v1588
        %v2123 = vpack.c.b16 %v1595, %v1589
        %v2124 = vpack.c.b16 %v1596, %v1590
        %v2125 = vpack.c.b16 %v1603, %v1597
        %v2126 = vpack.c.b16 %v1604, %v1598
        %v2127 = vpack.c.b16 %v1605, %v1599
        %v2128 = vpack.c.b16 %v1606, %v1600
        %v2129 = vpack.c.b16 %v1607, %v1601
        %v2130 = vpack.c.b16 %v1608, %v1602
        %v2131 = vpack.c.b16 %v1615, %v1609
        %v2132 = vpack.c.b16 %v1616, %v1610
        %v2133 = vpack.c.b16 %v1617, %v1611
        %v2134 = vpack.c.b16 %v1618, %v1612
        %v2135 = vpack.c.b16 %v1619, %v1613
        %v2136 = vpack.c.b16 %v1620, %v1614
        %v2137 = vpack.c.b16 %v1627, %v1621
        %v2138 = vpack.c.b16 %v1628, %v1622
        %v2139 = vpack.c.b16 %v1629, %v1623
        %v2140 = vpack.c.b16 %v1630, %v1624
        %v2141 = vpack.c.b16 %v1631, %v1625
        %v2142 = vpack.c.b16 %v1632, %v1626
        %v2143 = vpack.c.b16 %v1639, %v1633
        %v2144 = vpack.c.b16 %v1640, %v1634
        %v2145 = vpack.c.b16 %v1641, %v1635
        %v2146 = vpack.c.b16 %v1642, %v1636
        %v2147 = vpack.c.b16 %v1643, %v1637
        %v2148 = vpack.c.b16 %v1644, %v1638
        %v2149 = vpack.c.b16 %v1651, %v1645
        %v2150 = vpack.c.b16 %v1652, %v1646
        %v2151 = vpack.c.b16 %v1653, %v1647
        %v2152 = vpack.c.b16 %v1654, %v1648
        %v2153 = vpack.c.b16 %v1655, %v1649
        %v2154 = vpack.c.b16 %v1656, %v1650
        %v2155 = vpack.c.b16 %v1663, %v1657
        %v2156 = vpack.c.b16 %v1664, %v1658
        %v2157 = vpack.c.b16 %v1665, %v1659
        %v2158 = vpack.c.b16 %v1666, %v1660
        %v2159 = vpack.c.b16 %v1667, %v1661
        %v2160 = vpack.c.b16 %v1668, %v1662
        %v2161 = vpack.c.b16 %v1675, %v1669
        %v2162 = vpack.c.b16 %v1676, %v1670
        %v2163 = vpack.c.b16 %v1677, %v1671
        %v2164 = vpack.c.b16 %v1678, %v1672
        %v2165 = vpack.c.b16 %v1679, %v1673
        %v2166 = vpack.c.b16 %v1680, %v1674
        %v2167 = vpack.c.b16 %v1687, %v1681
        %v2168 = vpack.c.b16 %v1688, %v1682
        %v2169 = vpack.c.b16 %v1689, %v1683
        %v2170 = vpack.c.b16 %v1690, %v1684
        %v2171 = vpack.c.b16 %v1691, %v1685
        %v2172 = vpack.c.b16 %v1692, %v1686
        %v2173 = vpack.c.b16 %v1699, %v1693
        %v2174 = vpack.c.b16 %v1700, %v1694
        %v2175 = vpack.c.b16 %v1701, %v1695
        %v2176 = vpack.c.b16 %v1702, %v1696
        %v2177 = vpack.c.b16 %v1703, %v1697
        %v2178 = vpack.c.b16 %v1704, %v1698
        %v2179 = vpack.c.b16 %v1711, %v1705
        %v2180 = vpack.c.b16 %v1712, %v1706
        %v2181 = vpack.c.b16 %v1713, %v1707
        %v2182 = vpack.c.b16 %v1714, %v1708
        %v2183 = vpack.c.b16 %v1715, %v1709
        %v2184 = vpack.c.b16 %v1716, %v1710
        %v2185 = vpack.c.b16 %v1723, %v1717
        %v2186 = vpack.c.b16 %v1724, %v1718
        %v2187 = vpack.c.b16 %v1725, %v1719
        %v2188 = vpack.c.b16 %v1726, %v1720
        %v2189 = vpack.c.b16 %v1727, %v1721
        %v2190 = vpack.c.b16 %v1728, %v1722
        %v2191 = vpack.c.b16 %v1735, %v1729
        %v2192 = vpack.c.b16 %v1736, %v1730
        %v2193 = vpack.c.b16 %v1737, %v1731
        %v2194 = vpack.c.b16 %v1738, %v1732
        %v2195 = vpack.c.b16 %v1739, %v1733
        %v2196 = vpack.c.b16 %v1740, %v1734
        %v2197 = vpack.c.b16 %v1747, %v1741
        %v2198 = vpack.c.b16 %v1748, %v1742
        %v2199 = vpack.c.b16 %v1749, %v1743
        %v2200 = vpack.c.b16 %v1750, %v1744
        %v2201 = vpack.c.b16 %v1751, %v1745
        %v2202 = vpack.c.b16 %v1752, %v1746
        %v2203 = vpack.c.b16 %v1759, %v1753
        %v2204 = vpack.c.b16 %v1760, %v1754
        %v2205 = vpack.c.b16 %v1761, %v1755
        %v2206 = vpack.c.b16 %v1762, %v1756
        %v2207 = vpack.c.b16 %v1763, %v1757
        %v2208 = vpack.c.b16 %v1764, %v1758
        %v2209 = vpack.c.b16 %v1771, %v1765
        %v2210 = vpack.c.b16 %v1772, %v1766
        %v2211 = vpack.c.b16 %v1773, %v1767
        %v2212 = vpack.c.b16 %v1774, %v1768
        %v2213 = vpack.c.b16 %v1775, %v1769
        %v2214 = vpack.c.b16 %v1776, %v1770
        %v2215 = vpack.c.b16 %v1783, %v1777
        %v2216 = vpack.c.b16 %v1784, %v1778
        %v2217 = vpack.c.b16 %v1785, %v1779
        %v2218 = vpack.c.b16 %v1786, %v1780
        %v2219 = vpack.c.b16 %v1787, %v1781
        %v2220 = vpack.c.b16 %v1788, %v1782
        %v2221 = vpack.c.b16 %v1795, %v1789
        %v2222 = vpack.c.b16 %v1796, %v1790
        %v2223 = vpack.c.b16 %v1797, %v1791
        %v2224 = vpack.c.b16 %v1798, %v1792
        %v2225 = vpack.c.b16 %v1799, %v1793
        %v2226 = vpack.c.b16 %v1800, %v1794
        %v2227 = vpack.c.b16 %v1807, %v1801
        %v2228 = vpack.c.b16 %v1808, %v1802
        %v2229 = vpack.c.b16 %v1809, %v1803
        %v2230 = vpack.c.b16 %v1810, %v1804
        %v2231 = vpack.c.b16 %v1811, %v1805
        %v2232 = vpack.c.b16 %v1812, %v1806
        %v2233 = vpack.c.b16 %v1819, %v1813
        %v2234 = vpack.c.b16 %v1820, %v1814
        %v2235 = vpack.c.b16 %v1821, %v1815
        %v2236 = vpack.c.b16 %v1822, %v1816
        %v2237 = vpack.c.b16 %v1823, %v1817
        %v2238 = vpack.c.b16 %v1824, %v1818
        %v2239 = vpack.c.b16 %v1831, %v1825
        %v2240 = vpack.c.b16 %v1832, %v1826
        %v2241 = vpack.c.b16 %v1833, %v1827
        %v2242 = vpack.c.b16 %v1834, %v1828
        %v2243 = vpack.c.b16 %v1835, %v1829
        %v2244 = vpack.c.b16 %v1836, %v1830
        %v2245 = vpack.c.b16 %v1843, %v1837
        %v2246 = vpack.c.b16 %v1844, %v1838
        %v2247 = vpack.c.b16 %v1845, %v1839
        %v2248 = vpack.c.b16 %v1846, %v1840
        %v2249 = vpack.c.b16 %v1847, %v1841
        %v2250 = vpack.c.b16 %v1848, %v1842
        %v2251 = vpack.c.b16 %v1855, %v1849
        %v2252 = vpack.c.b16 %v1856, %v1850
        %v2253 = vpack.c.b16 %v1857, %v1851
        %v2254 = vpack.c.b16 %v1858, %v1852
        %v2255 = vpack.c.b16 %v1859, %v1853
        %v2256 = vpack.c.b16 %v1860, %v1854
        %v2257 = vpack.c.b16 %v1867, %v1861
        %v2258 = vpack.c.b16 %v1868, %v1862
        %v2259 = vpack.c.b16 %v1869, %v1863
        %v2260 = vpack.c.b16 %v1870, %v1864
        %v2261 = vpack.c.b16 %v1871, %v1865
        %v2262 = vpack.c.b16 %v1872, %v1866
        %v2263 = vpack.c.b16 %v1879, %v1873
        %v2264 = vpack.c.b16 %v1880, %v1874
        %v2265 = vpack.c.b16 %v1881, %v1875
        %v2266 = vpack.c.b16 %v1882, %v1876
        %v2267 = vpack.c.b16 %v1883, %v1877
        %v2268 = vpack.c.b16 %v1884, %v1878
        %2653 = vmatprep.subr.bf16.mxu0 %v1886
        %2654 = vmatpush1.bf16.msra.mxu0 %v1885
        %2655 = vmatprep.subr.bf16.mxu0 %v1892
        %2656 = vmatpush1.bf16.msra.mxu0 %v1891
        %2657 = vmatprep.subr.bf16.mxu0 %v1898
        %2658 = vmatpush1.bf16.msra.mxu0 %v1897
        %2659 = vmatprep.subr.bf16.mxu0 %v1904
        %2660 = vmatpush1.bf16.msra.mxu0 %v1903
        %2661 = vmatprep.subr.bf16.mxu0 %v1910
        %2662 = vmatpush1.bf16.msra.mxu0 %v1909
        %2663 = vmatprep.subr.bf16.mxu0 %v1916
        %2664 = vmatpush1.bf16.msra.mxu0 %v1915
        %2665 = vmatprep.subr.bf16.mxu0 %v1922
        %2666 = vmatpush1.bf16.msra.mxu0 %v1921
        %2667 = vmatprep.subr.bf16.mxu0 %v1928
        %2668 = vmatpush1.bf16.msra.mxu0 %v1927
        %2669 = vmatprep.subr.bf16.mxu0 %v1934
        %2670 = vmatpush1.bf16.msra.mxu0 %v1933
        %2671 = vmatprep.subr.bf16.mxu0 %v1940
        %2672 = vmatpush1.bf16.msra.mxu0 %v1939
        %2673 = vmatprep.subr.bf16.mxu0 %v1946
        %2674 = vmatpush1.bf16.msra.mxu0 %v1945
        %2675 = vmatprep.subr.bf16.mxu0 %v1952
        %2676 = vmatpush1.bf16.msra.mxu0 %v1951
        %2677 = vmatprep.subr.bf16.mxu0 %v1958
        %2678 = vmatpush1.bf16.msra.mxu0 %v1957
        %2679 = vmatprep.subr.bf16.mxu0 %v1964
        %2680 = vmatpush1.bf16.msra.mxu0 %v1963
        %2681 = vmatprep.subr.bf16.mxu0 %v1970
        %2682 = vmatpush1.bf16.msra.mxu0 %v1969
        %2683 = vmatprep.subr.bf16.mxu0 %v1976
        %2684 = vmatpush1.bf16.msra.mxu0 %v1975
        %2685 = vmatprep.mubr.bf16.mxu0 %v342
        %2686 = vmatmul.mubr.bf16.gmra.mrb[0].mxu0 %v341
        %v2687 = vpop.f32.mrb[0].mxu0
        %v2688 = vadd.f32 0.0, %v2687
        %v2689 = vpop.f32.mrb[0].mxu0
        %v2690 = vadd.f32 0.0, %v2689
        %v2691 = vpop.f32.mrb[0].mxu0
        %v2692 = vpop.f32.mrb[0].mxu0
        %2693 = vdwg.mxu0
        %2694 = vmatprep.subr.bf16.mxu0 %v1982
        %2695 = vmatpush1.bf16.msra.mxu0 %v1981
        %2696 = vmatprep.subr.bf16.mxu0 %v1988
        %2697 = vmatpush1.bf16.msra.mxu0 %v1987
        %2698 = vmatprep.subr.bf16.mxu0 %v1994
        %2699 = vmatpush1.bf16.msra.mxu0 %v1993
        %2700 = vmatprep.subr.bf16.mxu0 %v2000
        %2701 = vmatpush1.bf16.msra.mxu0 %v1999
        %2702 = vmatprep.subr.bf16.mxu0 %v2006
        %2703 = vmatpush1.bf16.msra.mxu0 %v2005
        %2704 = vmatprep.subr.bf16.mxu0 %v2012
        %2705 = vmatpush1.bf16.msra.mxu0 %v2011
        %2706 = vmatprep.subr.bf16.mxu0 %v2018
        %2707 = vmatpush1.bf16.msra.mxu0 %v2017
        %2708 = vmatprep.subr.bf16.mxu0 %v2024
        %2709 = vmatpush1.bf16.msra.mxu0 %v2023
        %2710 = vmatprep.subr.bf16.mxu0 %v2030
        %2711 = vmatpush1.bf16.msra.mxu0 %v2029
        %2712 = vmatprep.subr.bf16.mxu0 %v2036
        %2713 = vmatpush1.bf16.msra.mxu0 %v2035
        %2714 = vmatprep.subr.bf16.mxu0 %v2042
        %2715 = vmatpush1.bf16.msra.mxu0 %v2041
        %2716 = vmatprep.subr.bf16.mxu0 %v2048
        %2717 = vmatpush1.bf16.msra.mxu0 %v2047
        %2718 = vmatprep.subr.bf16.mxu0 %v2054
        %2719 = vmatpush1.bf16.msra.mxu0 %v2053
        %2720 = vmatprep.subr.bf16.mxu0 %v2060
        %2721 = vmatpush1.bf16.msra.mxu0 %v2059
        %2722 = vmatprep.subr.bf16.mxu0 %v2066
        %2723 = vmatpush1.bf16.msra.mxu0 %v2065
        %2724 = vmatprep.subr.bf16.mxu0 %v2072
        %2725 = vmatpush1.bf16.msra.mxu0 %v2071
        %2726 = vmatprep.mubr.bf16.mxu0 %v344
        %2727 = vmatmul.mubr.bf16.gmra.mrb[0].mxu0 %v343
        %v2728 = vpop.f32.mrb[0].mxu0
        %v2729 = vadd.f32 %v2688, %v2728
        %v2730 = vpop.f32.mrb[0].mxu0
        %v2731 = vadd.f32 %v2690, %v2730
        %v2732 = vpop.f32.mrb[0].mxu0
        %v2733 = vpop.f32.mrb[0].mxu0
        %2734 = vdwg.mxu0
        %2735 = vmatprep.subr.bf16.mxu0 %v2078
        %2736 = vmatpush1.bf16.msra.mxu0 %v2077
        %2737 = vmatprep.subr.bf16.mxu0 %v2084
        %2738 = vmatpush1.bf16.msra.mxu0 %v2083
        %2739 = vmatprep.subr.bf16.mxu0 %v2090
        %2740 = vmatpush1.bf16.msra.mxu0 %v2089
        %2741 = vmatprep.subr.bf16.mxu0 %v2096
        %2742 = vmatpush1.bf16.msra.mxu0 %v2095
        %2743 = vmatprep.subr.bf16.mxu0 %v2102
        %2744 = vmatpush1.bf16.msra.mxu0 %v2101
        %2745 = vmatprep.subr.bf16.mxu0 %v2108
        %2746 = vmatpush1.bf16.msra.mxu0 %v2107
        %2747 = vmatprep.subr.bf16.mxu0 %v2114
        %2748 = vmatpush1.bf16.msra.mxu0 %v2113
        %2749 = vmatprep.subr.bf16.mxu0 %v2120
        %2750 = vmatpush1.bf16.msra.mxu0 %v2119
        %2751 = vmatprep.subr.bf16.mxu0 %v2126
        %2752 = vmatpush1.bf16.msra.mxu0 %v2125
        %2753 = vmatprep.subr.bf16.mxu0 %v2132
        %2754 = vmatpush1.bf16.msra.mxu0 %v2131
        %2755 = vmatprep.subr.bf16.mxu0 %v2138
        %2756 = vmatpush1.bf16.msra.mxu0 %v2137
        %2757 = vmatprep.subr.bf16.mxu0 %v2144
        %2758 = vmatpush1.bf16.msra.mxu0 %v2143
        %2759 = vmatprep.subr.bf16.mxu0 %v2150
        %2760 = vmatpush1.bf16.msra.mxu0 %v2149
        %2761 = vmatprep.subr.bf16.mxu0 %v2156
        %2762 = vmatpush1.bf16.msra.mxu0 %v2155
        %2763 = vmatprep.subr.bf16.mxu0 %v2162
        %2764 = vmatpush1.bf16.msra.mxu0 %v2161
        %2765 = vmatprep.subr.bf16.mxu0 %v2168
        %2766 = vmatpush1.bf16.msra.mxu0 %v2167
        %2767 = vmatprep.mubr.bf16.mxu0 %v346
        %2768 = vmatmul.mubr.bf16.gmra.mrb[0].mxu0 %v345
        %v2769 = vpop.f32.mrb[0].mxu0
        %v2770 = vadd.f32 %v2729, %v2769
        %v2771 = vpop.f32.mrb[0].mxu0
        %v2772 = vadd.f32 %v2731, %v2771
        %v2773 = vpop.f32.mrb[0].mxu0
        %v2774 = vpop.f32.mrb[0].mxu0
        %2775 = vdwg.mxu0
        %2776 = vmatprep.subr.bf16.mxu0 %v2174
        %2777 = vmatpush1.bf16.msra.mxu0 %v2173
        %2778 = vmatprep.subr.bf16.mxu0 %v2180
        %2779 = vmatpush1.bf16.msra.mxu0 %v2179
        %2780 = vmatprep.subr.bf16.mxu0 %v2186
        %2781 = vmatpush1.bf16.msra.mxu0 %v2185
        %2782 = vmatprep.subr.bf16.mxu0 %v2192
        %2783 = vmatpush1.bf16.msra.mxu0 %v2191
        %2784 = vmatprep.subr.bf16.mxu0 %v2198
        %2785 = vmatpush1.bf16.msra.mxu0 %v2197
        %2786 = vmatprep.subr.bf16.mxu0 %v2204
        %2787 = vmatpush1.bf16.msra.mxu0 %v2203
        %2788 = vmatprep.subr.bf16.mxu0 %v2210
        %2789 = vmatpush1.bf16.msra.mxu0 %v2209
        %2790 = vmatprep.subr.bf16.mxu0 %v2216
        %2791 = vmatpush1.bf16.msra.mxu0 %v2215
        %2792 = vmatprep.subr.bf16.mxu0 %v2222
        %2793 = vmatpush1.bf16.msra.mxu0 %v2221
        %2794 = vmatprep.subr.bf16.mxu0 %v2228
        %2795 = vmatpush1.bf16.msra.mxu0 %v2227
        %2796 = vmatprep.subr.bf16.mxu0 %v2234
        %2797 = vmatpush1.bf16.msra.mxu0 %v2233
        %2798 = vmatprep.subr.bf16.mxu0 %v2240
        %2799 = vmatpush1.bf16.msra.mxu0 %v2239
        %2800 = vmatprep.subr.bf16.mxu0 %v2246
        %2801 = vmatpush1.bf16.msra.mxu0 %v2245
        %2802 = vmatprep.subr.bf16.mxu0 %v2252
        %2803 = vmatpush1.bf16.msra.mxu0 %v2251
        %2804 = vmatprep.subr.bf16.mxu0 %v2258
        %2805 = vmatpush1.bf16.msra.mxu0 %v2257
        %2806 = vmatprep.subr.bf16.mxu0 %v2264
        %2807 = vmatpush1.bf16.msra.mxu0 %v2263
        %2808 = vmatprep.mubr.bf16.mxu0 %v348
        %2809 = vmatmul.mubr.bf16.gmra.mrb[0].mxu0 %v347
        %v2810 = vpop.f32.mrb[0].mxu0
        %v2811 = vadd.f32 %v2770, %v2810
        %v2812 = vpop.f32.mrb[0].mxu0
        %v2813 = vadd.f32 %v2772, %v2812
        %v2814 = vpop.f32.mrb[0].mxu0
        %v2815 = vpop.f32.mrb[0].mxu0
        %2816 = vdwg.mxu0
        %2817 = vmatprep.subr.bf16.mxu0 %v1888
        %2818 = vmatpush1.bf16.msra.mxu0 %v1887
        %2819 = vmatprep.subr.bf16.mxu0 %v1894
        %2820 = vmatpush1.bf16.msra.mxu0 %v1893
        %2821 = vmatprep.subr.bf16.mxu0 %v1900
        %2822 = vmatpush1.bf16.msra.mxu0 %v1899
        %2823 = vmatprep.subr.bf16.mxu0 %v1906
        %2824 = vmatpush1.bf16.msra.mxu0 %v1905
        %2825 = vmatprep.subr.bf16.mxu0 %v1912
        %2826 = vmatpush1.bf16.msra.mxu0 %v1911
        %2827 = vmatprep.subr.bf16.mxu0 %v1918
        %2828 = vmatpush1.bf16.msra.mxu0 %v1917
        %2829 = vmatprep.subr.bf16.mxu0 %v1924
        %2830 = vmatpush1.bf16.msra.mxu0 %v1923
        %2831 = vmatprep.subr.bf16.mxu0 %v1930
        %2832 = vmatpush1.bf16.msra.mxu0 %v1929
        %2833 = vmatprep.subr.bf16.mxu0 %v1936
        %2834 = vmatpush1.bf16.msra.mxu0 %v1935
        %2835 = vmatprep.subr.bf16.mxu0 %v1942
        %2836 = vmatpush1.bf16.msra.mxu0 %v1941
        %2837 = vmatprep.subr.bf16.mxu0 %v1948
        %2838 = vmatpush1.bf16.msra.mxu0 %v1947
        %2839 = vmatprep.subr.bf16.mxu0 %v1954
        %2840 = vmatpush1.bf16.msra.mxu0 %v1953
        %2841 = vmatprep.subr.bf16.mxu0 %v1960
        %2842 = vmatpush1.bf16.msra.mxu0 %v1959
        %2843 = vmatprep.subr.bf16.mxu0 %v1966
        %2844 = vmatpush1.bf16.msra.mxu0 %v1965
        %2845 = vmatprep.subr.bf16.mxu0 %v1972
        %2846 = vmatpush1.bf16.msra.mxu0 %v1971
        %2847 = vmatprep.subr.bf16.mxu0 %v1978
        %2848 = vmatpush1.bf16.msra.mxu0 %v1977
        %2849 = vmatprep.mubr.bf16.mxu0 %v342
        %2850 = vmatmul.mubr.bf16.gmra.mrb[0].mxu0 %v341
        %v2851 = vpop.f32.mrb[0].mxu0
        %v2852 = vadd.f32 0.0, %v2851
        %v2853 = vpop.f32.mrb[0].mxu0
        %v2854 = vadd.f32 0.0, %v2853
        %v2855 = vpop.f32.mrb[0].mxu0
        %v2856 = vpop.f32.mrb[0].mxu0
        %2857 = vdwg.mxu0
        %2858 = vmatprep.subr.bf16.mxu0 %v1984
        %2859 = vmatpush1.bf16.msra.mxu0 %v1983
        %2860 = vmatprep.subr.bf16.mxu0 %v1990
        %2861 = vmatpush1.bf16.msra.mxu0 %v1989
        %2862 = vmatprep.subr.bf16.mxu0 %v1996
        %2863 = vmatpush1.bf16.msra.mxu0 %v1995
        %2864 = vmatprep.subr.bf16.mxu0 %v2002
        %2865 = vmatpush1.bf16.msra.mxu0 %v2001
        %2866 = vmatprep.subr.bf16.mxu0 %v2008
        %2867 = vmatpush1.bf16.msra.mxu0 %v2007
        %2868 = vmatprep.subr.bf16.mxu0 %v2014
        %2869 = vmatpush1.bf16.msra.mxu0 %v2013
        %2870 = vmatprep.subr.bf16.mxu0 %v2020
        %2871 = vmatpush1.bf16.msra.mxu0 %v2019
        %2872 = vmatprep.subr.bf16.mxu0 %v2026
        %2873 = vmatpush1.bf16.msra.mxu0 %v2025
        %2874 = vmatprep.subr.bf16.mxu0 %v2032
        %2875 = vmatpush1.bf16.msra.mxu0 %v2031
        %2876 = vmatprep.subr.bf16.mxu0 %v2038
        %2877 = vmatpush1.bf16.msra.mxu0 %v2037
        %2878 = vmatprep.subr.bf16.mxu0 %v2044
        %2879 = vmatpush1.bf16.msra.mxu0 %v2043
        %2880 = vmatprep.subr.bf16.mxu0 %v2050
        %2881 = vmatpush1.bf16.msra.mxu0 %v2049
        %2882 = vmatprep.subr.bf16.mxu0 %v2056
        %2883 = vmatpush1.bf16.msra.mxu0 %v2055
        %2884 = vmatprep.subr.bf16.mxu0 %v2062
        %2885 = vmatpush1.bf16.msra.mxu0 %v2061
        %2886 = vmatprep.subr.bf16.mxu0 %v2068
        %2887 = vmatpush1.bf16.msra.mxu0 %v2067
        %2888 = vmatprep.subr.bf16.mxu0 %v2074
        %2889 = vmatpush1.bf16.msra.mxu0 %v2073
        %2890 = vmatprep.mubr.bf16.mxu0 %v344
        %2891 = vmatmul.mubr.bf16.gmra.mrb[0].mxu0 %v343
        %v2892 = vpop.f32.mrb[0].mxu0
        %v2893 = vadd.f32 %v2852, %v2892
        %v2894 = vpop.f32.mrb[0].mxu0
        %v2895 = vadd.f32 %v2854, %v2894
        %v2896 = vpop.f32.mrb[0].mxu0
        %v2897 = vpop.f32.mrb[0].mxu0
        %2898 = vdwg.mxu0
        %2899 = vmatprep.subr.bf16.mxu0 %v2080
        %2900 = vmatpush1.bf16.msra.mxu0 %v2079
        %2901 = vmatprep.subr.bf16.mxu0 %v2086
        %2902 = vmatpush1.bf16.msra.mxu0 %v2085
        %2903 = vmatprep.subr.bf16.mxu0 %v2092
        %2904 = vmatpush1.bf16.msra.mxu0 %v2091
        %2905 = vmatprep.subr.bf16.mxu0 %v2098
        %2906 = vmatpush1.bf16.msra.mxu0 %v2097
        %2907 = vmatprep.subr.bf16.mxu0 %v2104
        %2908 = vmatpush1.bf16.msra.mxu0 %v2103
        %2909 = vmatprep.subr.bf16.mxu0 %v2110
        %2910 = vmatpush1.bf16.msra.mxu0 %v2109
        %2911 = vmatprep.subr.bf16.mxu0 %v2116
        %2912 = vmatpush1.bf16.msra.mxu0 %v2115
        %2913 = vmatprep.subr.bf16.mxu0 %v2122
        %2914 = vmatpush1.bf16.msra.mxu0 %v2121
        %2915 = vmatprep.subr.bf16.mxu0 %v2128
        %2916 = vmatpush1.bf16.msra.mxu0 %v2127
        %2917 = vmatprep.subr.bf16.mxu0 %v2134
        %2918 = vmatpush1.bf16.msra.mxu0 %v2133
        %2919 = vmatprep.subr.bf16.mxu0 %v2140
        %2920 = vmatpush1.bf16.msra.mxu0 %v2139
        %2921 = vmatprep.subr.bf16.mxu0 %v2146
        %2922 = vmatpush1.bf16.msra.mxu0 %v2145
        %2923 = vmatprep.subr.bf16.mxu0 %v2152
        %2924 = vmatpush1.bf16.msra.mxu0 %v2151
        %2925 = vmatprep.subr.bf16.mxu0 %v2158
        %2926 = vmatpush1.bf16.msra.mxu0 %v2157
        %2927 = vmatprep.subr.bf16.mxu0 %v2164
        %2928 = vmatpush1.bf16.msra.mxu0 %v2163
        %2929 = vmatprep.subr.bf16.mxu0 %v2170
        %2930 = vmatpush1.bf16.msra.mxu0 %v2169
        %2931 = vmatprep.mubr.bf16.mxu0 %v346
        %2932 = vmatmul.mubr.bf16.gmra.mrb[0].mxu0 %v345
        %v2933 = vpop.f32.mrb[0].mxu0
        %v2934 = vadd.f32 %v2893, %v2933
        %v2935 = vpop.f32.mrb[0].mxu0
        %v2936 = vadd.f32 %v2895, %v2935
        %v2937 = vpop.f32.mrb[0].mxu0
        %v2938 = vpop.f32.mrb[0].mxu0
        %2939 = vdwg.mxu0
        %2940 = vmatprep.subr.bf16.mxu0 %v2176
        %2941 = vmatpush1.bf16.msra.mxu0 %v2175
        %2942 = vmatprep.subr.bf16.mxu0 %v2182
        %2943 = vmatpush1.bf16.msra.mxu0 %v2181
        %2944 = vmatprep.subr.bf16.mxu0 %v2188
        %2945 = vmatpush1.bf16.msra.mxu0 %v2187
        %2946 = vmatprep.subr.bf16.mxu0 %v2194
        %2947 = vmatpush1.bf16.msra.mxu0 %v2193
        %2948 = vmatprep.subr.bf16.mxu0 %v2200
        %2949 = vmatpush1.bf16.msra.mxu0 %v2199
        %2950 = vmatprep.subr.bf16.mxu0 %v2206
        %2951 = vmatpush1.bf16.msra.mxu0 %v2205
        %2952 = vmatprep.subr.bf16.mxu0 %v2212
        %2953 = vmatpush1.bf16.msra.mxu0 %v2211
        %2954 = vmatprep.subr.bf16.mxu0 %v2218
        %2955 = vmatpush1.bf16.msra.mxu0 %v2217
        %2956 = vmatprep.subr.bf16.mxu0 %v2224
        %2957 = vmatpush1.bf16.msra.mxu0 %v2223
        %2958 = vmatprep.subr.bf16.mxu0 %v2230
        %2959 = vmatpush1.bf16.msra.mxu0 %v2229
        %2960 = vmatprep.subr.bf16.mxu0 %v2236
        %2961 = vmatpush1.bf16.msra.mxu0 %v2235
        %2962 = vmatprep.subr.bf16.mxu0 %v2242
        %2963 = vmatpush1.bf16.msra.mxu0 %v2241
        %2964 = vmatprep.subr.bf16.mxu0 %v2248
        %2965 = vmatpush1.bf16.msra.mxu0 %v2247
        %2966 = vmatprep.subr.bf16.mxu0 %v2254
        %2967 = vmatpush1.bf16.msra.mxu0 %v2253
        %2968 = vmatprep.subr.bf16.mxu0 %v2260
        %2969 = vmatpush1.bf16.msra.mxu0 %v2259
        %2970 = vmatprep.subr.bf16.mxu0 %v2266
        %2971 = vmatpush1.bf16.msra.mxu0 %v2265
        %2972 = vmatprep.mubr.bf16.mxu0 %v348
        %2973 = vmatmul.mubr.bf16.gmra.mrb[0].mxu0 %v347
        %v2974 = vpop.f32.mrb[0].mxu0
        %v2975 = vadd.f32 %v2934, %v2974
        %v2976 = vpop.f32.mrb[0].mxu0
        %v2977 = vadd.f32 %v2936, %v2976
        %v2978 = vpop.f32.mrb[0].mxu0
        %v2979 = vpop.f32.mrb[0].mxu0
        %2980 = vdwg.mxu0
        %2981 = vmatprep.subr.bf16.mxu0 %v1890
        %2982 = vmatpush1.bf16.msra.mxu0 %v1889
        %2983 = vmatprep.subr.bf16.mxu0 %v1896
        %2984 = vmatpush1.bf16.msra.mxu0 %v1895
        %2985 = vmatprep.subr.bf16.mxu0 %v1902
        %2986 = vmatpush1.bf16.msra.mxu0 %v1901
        %2987 = vmatprep.subr.bf16.mxu0 %v1908
        %2988 = vmatpush1.bf16.msra.mxu0 %v1907
        %2989 = vmatprep.subr.bf16.mxu0 %v1914
        %2990 = vmatpush1.bf16.msra.mxu0 %v1913
        %2991 = vmatprep.subr.bf16.mxu0 %v1920
        %2992 = vmatpush1.bf16.msra.mxu0 %v1919
        %2993 = vmatprep.subr.bf16.mxu0 %v1926
        %2994 = vmatpush1.bf16.msra.mxu0 %v1925
        %2995 = vmatprep.subr.bf16.mxu0 %v1932
        %2996 = vmatpush1.bf16.msra.mxu0 %v1931
        %2997 = vmatprep.subr.bf16.mxu0 %v1938
        %2998 = vmatpush1.bf16.msra.mxu0 %v1937
        %2999 = vmatprep.subr.bf16.mxu0 %v1944
        %3000 = vmatpush1.bf16.msra.mxu0 %v1943
        %3001 = vmatprep.subr.bf16.mxu0 %v1950
        %3002 = vmatpush1.bf16.msra.mxu0 %v1949
        %3003 = vmatprep.subr.bf16.mxu0 %v1956
        %3004 = vmatpush1.bf16.msra.mxu0 %v1955
        %3005 = vmatprep.subr.bf16.mxu0 %v1962
        %3006 = vmatpush1.bf16.msra.mxu0 %v1961
        %3007 = vmatprep.subr.bf16.mxu0 %v1968
        %3008 = vmatpush1.bf16.msra.mxu0 %v1967
        %3009 = vmatprep.subr.bf16.mxu0 %v1974
        %3010 = vmatpush1.bf16.msra.mxu0 %v1973
        %3011 = vmatprep.subr.bf16.mxu0 %v1980
        %3012 = vmatpush1.bf16.msra.mxu0 %v1979
        %3013 = vmatprep.mubr.bf16.mxu0 %v342
        %3014 = vmatmul.mubr.bf16.gmra.mrb[0].mxu0 %v341
        %v3015 = vpop.f32.mrb[0].mxu0
        %v3016 = vadd.f32 0.0, %v3015
        %v3017 = vpop.f32.mrb[0].mxu0
        %v3018 = vadd.f32 0.0, %v3017
        %v3019 = vpop.f32.mrb[0].mxu0
        %v3020 = vpop.f32.mrb[0].mxu0
        %3021 = vdwg.mxu0
        %3022 = vmatprep.subr.bf16.mxu0 %v1986
        %3023 = vmatpush1.bf16.msra.mxu0 %v1985
        %3024 = vmatprep.subr.bf16.mxu0 %v1992
        %3025 = vmatpush1.bf16.msra.mxu0 %v1991
        %3026 = vmatprep.subr.bf16.mxu0 %v1998
        %3027 = vmatpush1.bf16.msra.mxu0 %v1997
        %3028 = vmatprep.subr.bf16.mxu0 %v2004
        %3029 = vmatpush1.bf16.msra.mxu0 %v2003
        %3030 = vmatprep.subr.bf16.mxu0 %v2010
        %3031 = vmatpush1.bf16.msra.mxu0 %v2009
        %3032 = vmatprep.subr.bf16.mxu0 %v2016
        %3033 = vmatpush1.bf16.msra.mxu0 %v2015
        %3034 = vmatprep.subr.bf16.mxu0 %v2022
        %3035 = vmatpush1.bf16.msra.mxu0 %v2021
        %3036 = vmatprep.subr.bf16.mxu0 %v2028
        %3037 = vmatpush1.bf16.msra.mxu0 %v2027
        %3038 = vmatprep.subr.bf16.mxu0 %v2034
        %3039 = vmatpush1.bf16.msra.mxu0 %v2033
        %3040 = vmatprep.subr.bf16.mxu0 %v2040
        %3041 = vmatpush1.bf16.msra.mxu0 %v2039
        %3042 = vmatprep.subr.bf16.mxu0 %v2046
        %3043 = vmatpush1.bf16.msra.mxu0 %v2045
        %3044 = vmatprep.subr.bf16.mxu0 %v2052
        %3045 = vmatpush1.bf16.msra.mxu0 %v2051
        %3046 = vmatprep.subr.bf16.mxu0 %v2058
        %3047 = vmatpush1.bf16.msra.mxu0 %v2057
        %3048 = vmatprep.subr.bf16.mxu0 %v2064
        %3049 = vmatpush1.bf16.msra.mxu0 %v2063
        %3050 = vmatprep.subr.bf16.mxu0 %v2070
        %3051 = vmatpush1.bf16.msra.mxu0 %v2069
        %3052 = vmatprep.subr.bf16.mxu0 %v2076
        %3053 = vmatpush1.bf16.msra.mxu0 %v2075
        %3054 = vmatprep.mubr.bf16.mxu0 %v344
        %3055 = vmatmul.mubr.bf16.gmra.mrb[0].mxu0 %v343
        %v3056 = vpop.f32.mrb[0].mxu0
        %v3057 = vadd.f32 %v3016, %v3056
        %v3058 = vpop.f32.mrb[0].mxu0
        %v3059 = vadd.f32 %v3018, %v3058
        %v3060 = vpop.f32.mrb[0].mxu0
        %v3061 = vpop.f32.mrb[0].mxu0
        %3062 = vdwg.mxu0
        %3063 = vmatprep.subr.bf16.mxu0 %v2082
        %3064 = vmatpush1.bf16.msra.mxu0 %v2081
        %3065 = vmatprep.subr.bf16.mxu0 %v2088
        %3066 = vmatpush1.bf16.msra.mxu0 %v2087
        %3067 = vmatprep.subr.bf16.mxu0 %v2094
        %3068 = vmatpush1.bf16.msra.mxu0 %v2093
        %3069 = vmatprep.subr.bf16.mxu0 %v2100
        %3070 = vmatpush1.bf16.msra.mxu0 %v2099
        %3071 = vmatprep.subr.bf16.mxu0 %v2106
        %3072 = vmatpush1.bf16.msra.mxu0 %v2105
        %3073 = vmatprep.subr.bf16.mxu0 %v2112
        %3074 = vmatpush1.bf16.msra.mxu0 %v2111
        %3075 = vmatprep.subr.bf16.mxu0 %v2118
        %3076 = vmatpush1.bf16.msra.mxu0 %v2117
        %3077 = vmatprep.subr.bf16.mxu0 %v2124
        %3078 = vmatpush1.bf16.msra.mxu0 %v2123
        %3079 = vmatprep.subr.bf16.mxu0 %v2130
        %3080 = vmatpush1.bf16.msra.mxu0 %v2129
        %3081 = vmatprep.subr.bf16.mxu0 %v2136
        %3082 = vmatpush1.bf16.msra.mxu0 %v2135
        %3083 = vmatprep.subr.bf16.mxu0 %v2142
        %3084 = vmatpush1.bf16.msra.mxu0 %v2141
        %3085 = vmatprep.subr.bf16.mxu0 %v2148
        %3086 = vmatpush1.bf16.msra.mxu0 %v2147
        %3087 = vmatprep.subr.bf16.mxu0 %v2154
        %3088 = vmatpush1.bf16.msra.mxu0 %v2153
        %3089 = vmatprep.subr.bf16.mxu0 %v2160
        %3090 = vmatpush1.bf16.msra.mxu0 %v2159
        %3091 = vmatprep.subr.bf16.mxu0 %v2166
        %3092 = vmatpush1.bf16.msra.mxu0 %v2165
        %3093 = vmatprep.subr.bf16.mxu0 %v2172
        %3094 = vmatpush1.bf16.msra.mxu0 %v2171
        %3095 = vmatprep.mubr.bf16.mxu0 %v346
        %3096 = vmatmul.mubr.bf16.gmra.mrb[0].mxu0 %v345
        %v3097 = vpop.f32.mrb[0].mxu0
        %v3098 = vadd.f32 %v3057, %v3097
        %v3099 = vpop.f32.mrb[0].mxu0
        %v3100 = vadd.f32 %v3059, %v3099
        %v3101 = vpop.f32.mrb[0].mxu0
        %v3102 = vpop.f32.mrb[0].mxu0
        %3103 = vdwg.mxu0
        %3104 = vmatprep.subr.bf16.mxu0 %v2178
        %3105 = vmatpush1.bf16.msra.mxu0 %v2177
        %3106 = vmatprep.subr.bf16.mxu0 %v2184
        %3107 = vmatpush1.bf16.msra.mxu0 %v2183
        %3108 = vmatprep.subr.bf16.mxu0 %v2190
        %3109 = vmatpush1.bf16.msra.mxu0 %v2189
        %3110 = vmatprep.subr.bf16.mxu0 %v2196
        %3111 = vmatpush1.bf16.msra.mxu0 %v2195
        %3112 = vmatprep.subr.bf16.mxu0 %v2202
        %3113 = vmatpush1.bf16.msra.mxu0 %v2201
        %3114 = vmatprep.subr.bf16.mxu0 %v2208
        %3115 = vmatpush1.bf16.msra.mxu0 %v2207
        %3116 = vmatprep.subr.bf16.mxu0 %v2214
        %3117 = vmatpush1.bf16.msra.mxu0 %v2213
        %3118 = vmatprep.subr.bf16.mxu0 %v2220
        %3119 = vmatpush1.bf16.msra.mxu0 %v2219
        %3120 = vmatprep.subr.bf16.mxu0 %v2226
        %3121 = vmatpush1.bf16.msra.mxu0 %v2225
        %3122 = vmatprep.subr.bf16.mxu0 %v2232
        %3123 = vmatpush1.bf16.msra.mxu0 %v2231
        %3124 = vmatprep.subr.bf16.mxu0 %v2238
        %3125 = vmatpush1.bf16.msra.mxu0 %v2237
        %3126 = vmatprep.subr.bf16.mxu0 %v2244
        %3127 = vmatpush1.bf16.msra.mxu0 %v2243
        %3128 = vmatprep.subr.bf16.mxu0 %v2250
        %3129 = vmatpush1.bf16.msra.mxu0 %v2249
        %3130 = vmatprep.subr.bf16.mxu0 %v2256
        %3131 = vmatpush1.bf16.msra.mxu0 %v2255
        %3132 = vmatprep.subr.bf16.mxu0 %v2262
        %3133 = vmatpush1.bf16.msra.mxu0 %v2261
        %3134 = vmatprep.subr.bf16.mxu0 %v2268
        %3135 = vmatpush1.bf16.msra.mxu0 %v2267
        %3136 = vmatprep.mubr.bf16.mxu0 %v348
        %3137 = vmatmul.mubr.bf16.gmra.mrb[0].mxu0 %v347
        %v3138 = vpop.f32.mrb[0].mxu0
        %v3139 = vadd.f32 %v3098, %v3138
        %v3140 = vpop.f32.mrb[0].mxu0
        %v3141 = vadd.f32 %v3100, %v3140
        %v3142 = vpop.f32.mrb[0].mxu0
        %v3143 = vpop.f32.mrb[0].mxu0
        %3144 = vdwg.mxu0
        %vm3145 = vcmask 1041408
        %v3146 = vsel %vm3145, %v306, 0.0
        %v3147 = vsel %vm3145, %v314, 0.0
        %v3148 = vadd.f32 %v3146, %v3147
        %v3149 = vsel %vm3145, %v313, 0.0
        %v3150 = vadd.f32 %v3148, %v3149
        %v3151 = vsel %vm3145, %v315, 0.0
        %v3152 = vadd.f32 %v3150, %v3151
        %v3153 = vsel %vm3145, %v323, 0.0
        %v3154 = vadd.f32 %v3152, %v3153
        %v3155 = vsel %vm3145, %v331, 0.0
        %v3156 = vadd.f32 %v3154, %v3155
        %v3157 = vsel %vm3145, %v330, 0.0
        %v3158 = vadd.f32 %v3156, %v3157
        %v3159 = vsel %vm3145, %v332, 0.0
        %v3160 = vadd.f32 %v3158, %v3159
        %3161 = vadd.xlane.f32.xlu0 %v3160
        %v3162 = vpop.xlane.xlu0 %3161
        %v3163 = vmax.f32 %v3162, 1.0
        %v3164 = vrcp.pop %v3163
        %v3165 = vmul.f32 %v2811, %v3164
        %v3166 = vmul.f32 %v2813, %v3164
        %v3167 = vmul.f32 %v2975, %v3164
        %v3168 = vmul.f32 %v2977, %v3164
        %v3169 = vmul.f32 %v3139, %v3164
        %v3170 = vmul.f32 %v3141, %v3164
        %v3171 = vpack.c.bf16 %v3165, %v3165
        %v3172 = vpack.c.bf16 %v3166, %v3166
        %v3173 = vpack.c.bf16 %v3167, %v3167
        %v3174 = vpack.c.bf16 %v3168, %v3168
        %v3175 = vpack.c.bf16 %v3169, %v3169
        %v3176 = vpack.c.bf16 %v3170, %v3170
        %v3177 = vld [vmem:[#allocation6] sm:$0xff]
        %v3178 = vld [vmem:[#allocation6 + $0x8] sm:$0xff]
        %v3179 = vld [vmem:[#allocation6 + $0x10] sm:$0xff]
        %v3180 = vld [vmem:[#allocation6 + $0x18] sm:$0xff]
        %v3181 = vld [vmem:[#allocation6 + $0x20] sm:$0xff]
        %v3182 = vld [vmem:[#allocation6 + $0x28] sm:$0xff]
        %v3183 = vld [vmem:[#allocation6 + $0x30] sm:$0xff]
        %v3184 = vld [vmem:[#allocation6 + $0x38] sm:$0xff]
        %v3185 = vld [vmem:[#allocation6 + $0x40] sm:$0xff]
        %v3186 = vld [vmem:[#allocation6 + $0x48] sm:$0xff]
        %v3187 = vld [vmem:[#allocation6 + $0x50] sm:$0xff]
        %v3188 = vld [vmem:[#allocation6 + $0x58] sm:$0xff]
        %v3189 = vld [vmem:[#allocation6 + $0x60] sm:$0xff]
        %v3190 = vld [vmem:[#allocation6 + $0x68] sm:$0xff]
        %v3191 = vld [vmem:[#allocation6 + $0x70] sm:$0xff]
        %v3192 = vld [vmem:[#allocation6 + $0x78] sm:$0xff]
        %v3193 = vld [vmem:[#allocation6 + $0x80] sm:$0xff]
        %v3194 = vld [vmem:[#allocation6 + $0x88] sm:$0xff]
        %v3195 = vld [vmem:[#allocation6 + $0x90] sm:$0xff]
        %v3196 = vld [vmem:[#allocation6 + $0x98] sm:$0xff]
        %v3197 = vld [vmem:[#allocation6 + $0xa0] sm:$0xff]
        %v3198 = vld [vmem:[#allocation6 + $0xa8] sm:$0xff]
        %v3199 = vld [vmem:[#allocation6 + $0xb0] sm:$0xff]
        %v3200 = vld [vmem:[#allocation6 + $0xb8] sm:$0xff]
        %v3201 = vld [vmem:[#allocation6 + $0xc0] sm:$0xff]
        %v3202 = vld [vmem:[#allocation6 + $0xc8] sm:$0xff]
        %v3203 = vld [vmem:[#allocation6 + $0xd0] sm:$0xff]
        %v3204 = vld [vmem:[#allocation6 + $0xd8] sm:$0xff]
        %v3205 = vld [vmem:[#allocation6 + $0xe0] sm:$0xff]
        %v3206 = vld [vmem:[#allocation6 + $0xe8] sm:$0xff]
        %v3207 = vld [vmem:[#allocation6 + $0xf0] sm:$0xff]
        %v3208 = vld [vmem:[#allocation6 + $0xf8] sm:$0xff]
        %v3209 = vld [vmem:[#allocation6 + $0x100] sm:$0xff]
        %v3210 = vld [vmem:[#allocation6 + $0x108] sm:$0xff]
        %v3211 = vld [vmem:[#allocation6 + $0x110] sm:$0xff]
        %v3212 = vld [vmem:[#allocation6 + $0x118] sm:$0xff]
        %v3213 = vld [vmem:[#allocation6 + $0x120] sm:$0xff]
        %v3214 = vld [vmem:[#allocation6 + $0x128] sm:$0xff]
        %v3215 = vld [vmem:[#allocation6 + $0x130] sm:$0xff]
        %v3216 = vld [vmem:[#allocation6 + $0x138] sm:$0xff]
        %v3217 = vld [vmem:[#allocation6 + $0x140] sm:$0xff]
        %v3218 = vld [vmem:[#allocation6 + $0x148] sm:$0xff]
        %v3219 = vld [vmem:[#allocation6 + $0x150] sm:$0xff]
        %v3220 = vld [vmem:[#allocation6 + $0x158] sm:$0xff]
        %v3221 = vld [vmem:[#allocation6 + $0x160] sm:$0xff]
        %v3222 = vld [vmem:[#allocation6 + $0x168] sm:$0xff]
        %v3223 = vld [vmem:[#allocation6 + $0x170] sm:$0xff]
        %v3224 = vld [vmem:[#allocation6 + $0x178] sm:$0xff]
        %v3225 = vld [vmem:[#allocation6 + $0x180] sm:$0xff]
        %v3226 = vld [vmem:[#allocation6 + $0x188] sm:$0xff]
        %v3227 = vld [vmem:[#allocation6 + $0x190] sm:$0xff]
        %v3228 = vld [vmem:[#allocation6 + $0x198] sm:$0xff]
        %v3229 = vld [vmem:[#allocation6 + $0x1a0] sm:$0xff]
        %v3230 = vld [vmem:[#allocation6 + $0x1a8] sm:$0xff]
        %v3231 = vld [vmem:[#allocation6 + $0x1b0] sm:$0xff]
        %v3232 = vld [vmem:[#allocation6 + $0x1b8] sm:$0xff]
        %v3233 = vld [vmem:[#allocation6 + $0x1c0] sm:$0xff]
        %v3234 = vld [vmem:[#allocation6 + $0x1c8] sm:$0xff]
        %v3235 = vld [vmem:[#allocation6 + $0x1d0] sm:$0xff]
        %v3236 = vld [vmem:[#allocation6 + $0x1d8] sm:$0xff]
        %v3237 = vld [vmem:[#allocation6 + $0x1e0] sm:$0xff]
        %v3238 = vld [vmem:[#allocation6 + $0x1e8] sm:$0xff]
        %v3239 = vld [vmem:[#allocation6 + $0x1f0] sm:$0xff]
        %v3240 = vld [vmem:[#allocation6 + $0x1f8] sm:$0xff]
        %v3241 = vld [vmem:[#allocation6 + $0x200] sm:$0xff]
        %v3242 = vld [vmem:[#allocation6 + $0x208] sm:$0xff]
        %v3243 = vld [vmem:[#allocation6 + $0x210] sm:$0xff]
        %v3244 = vld [vmem:[#allocation6 + $0x218] sm:$0xff]
        %v3245 = vld [vmem:[#allocation6 + $0x220] sm:$0xff]
        %v3246 = vld [vmem:[#allocation6 + $0x228] sm:$0xff]
        %v3247 = vld [vmem:[#allocation6 + $0x230] sm:$0xff]
        %v3248 = vld [vmem:[#allocation6 + $0x238] sm:$0xff]
        %v3249 = vld [vmem:[#allocation6 + $0x240] sm:$0xff]
        %v3250 = vld [vmem:[#allocation6 + $0x248] sm:$0xff]
        %v3251 = vld [vmem:[#allocation6 + $0x250] sm:$0xff]
        %v3252 = vld [vmem:[#allocation6 + $0x258] sm:$0xff]
        %v3253 = vld [vmem:[#allocation6 + $0x260] sm:$0xff]
        %v3254 = vld [vmem:[#allocation6 + $0x268] sm:$0xff]
        %v3255 = vld [vmem:[#allocation6 + $0x270] sm:$0xff]
        %v3256 = vld [vmem:[#allocation6 + $0x278] sm:$0xff]
        %v3257 = vld [vmem:[#allocation6 + $0x280] sm:$0xff]
        %v3258 = vld [vmem:[#allocation6 + $0x288] sm:$0xff]
        %v3259 = vld [vmem:[#allocation6 + $0x290] sm:$0xff]
        %v3260 = vld [vmem:[#allocation6 + $0x298] sm:$0xff]
        %v3261 = vld [vmem:[#allocation6 + $0x2a0] sm:$0xff]
        %v3262 = vld [vmem:[#allocation6 + $0x2a8] sm:$0xff]
        %v3263 = vld [vmem:[#allocation6 + $0x2b0] sm:$0xff]
        %v3264 = vld [vmem:[#allocation6 + $0x2b8] sm:$0xff]
        %v3265 = vld [vmem:[#allocation6 + $0x2c0] sm:$0xff]
        %v3266 = vld [vmem:[#allocation6 + $0x2c8] sm:$0xff]
        %v3267 = vld [vmem:[#allocation6 + $0x2d0] sm:$0xff]
        %v3268 = vld [vmem:[#allocation6 + $0x2d8] sm:$0xff]
        %v3269 = vld [vmem:[#allocation6 + $0x2e0] sm:$0xff]
        %v3270 = vld [vmem:[#allocation6 + $0x2e8] sm:$0xff]
        %v3271 = vld [vmem:[#allocation6 + $0x2f0] sm:$0xff]
        %v3272 = vld [vmem:[#allocation6 + $0x2f8] sm:$0xff]
        %v3273 = vld [vmem:[#allocation6 + $0x300] sm:$0xff]
        %v3274 = vld [vmem:[#allocation6 + $0x308] sm:$0xff]
        %v3275 = vld [vmem:[#allocation6 + $0x310] sm:$0xff]
        %v3276 = vld [vmem:[#allocation6 + $0x318] sm:$0xff]
        %v3277 = vld [vmem:[#allocation6 + $0x320] sm:$0xff]
        %v3278 = vld [vmem:[#allocation6 + $0x328] sm:$0xff]
        %v3279 = vld [vmem:[#allocation6 + $0x330] sm:$0xff]
        %v3280 = vld [vmem:[#allocation6 + $0x338] sm:$0xff]
        %v3281 = vld [vmem:[#allocation6 + $0x340] sm:$0xff]
        %v3282 = vld [vmem:[#allocation6 + $0x348] sm:$0xff]
        %v3283 = vld [vmem:[#allocation6 + $0x350] sm:$0xff]
        %v3284 = vld [vmem:[#allocation6 + $0x358] sm:$0xff]
        %v3285 = vld [vmem:[#allocation6 + $0x360] sm:$0xff]
        %v3286 = vld [vmem:[#allocation6 + $0x368] sm:$0xff]
        %v3287 = vld [vmem:[#allocation6 + $0x370] sm:$0xff]
        %v3288 = vld [vmem:[#allocation6 + $0x378] sm:$0xff]
        %v3289 = vld [vmem:[#allocation6 + $0x380] sm:$0xff]
        %v3290 = vld [vmem:[#allocation6 + $0x388] sm:$0xff]
        %v3291 = vld [vmem:[#allocation6 + $0x390] sm:$0xff]
        %v3292 = vld [vmem:[#allocation6 + $0x398] sm:$0xff]
        %v3293 = vld [vmem:[#allocation6 + $0x3a0] sm:$0xff]
        %v3294 = vld [vmem:[#allocation6 + $0x3a8] sm:$0xff]
        %v3295 = vld [vmem:[#allocation6 + $0x3b0] sm:$0xff]
        %v3296 = vld [vmem:[#allocation6 + $0x3b8] sm:$0xff]
        %v3297 = vld [vmem:[#allocation6 + $0x3c0] sm:$0xff]
        %v3298 = vld [vmem:[#allocation6 + $0x3c8] sm:$0xff]
        %v3299 = vld [vmem:[#allocation6 + $0x3d0] sm:$0xff]
        %v3300 = vld [vmem:[#allocation6 + $0x3d8] sm:$0xff]
        %v3301 = vld [vmem:[#allocation6 + $0x3e0] sm:$0xff]
        %v3302 = vld [vmem:[#allocation6 + $0x3e8] sm:$0xff]
        %v3303 = vld [vmem:[#allocation6 + $0x3f0] sm:$0xff]
        %v3304 = vld [vmem:[#allocation6 + $0x3f8] sm:$0xff]
        %v3305 = vld [vmem:[#allocation6 + $0x400] sm:$0xff]
        %v3306 = vld [vmem:[#allocation6 + $0x408] sm:$0xff]
        %v3307 = vld [vmem:[#allocation6 + $0x410] sm:$0xff]
        %v3308 = vld [vmem:[#allocation6 + $0x418] sm:$0xff]
        %v3309 = vld [vmem:[#allocation6 + $0x420] sm:$0xff]
        %v3310 = vld [vmem:[#allocation6 + $0x428] sm:$0xff]
        %v3311 = vld [vmem:[#allocation6 + $0x430] sm:$0xff]
        %v3312 = vld [vmem:[#allocation6 + $0x438] sm:$0xff]
        %v3313 = vld [vmem:[#allocation6 + $0x440] sm:$0xff]
        %v3314 = vld [vmem:[#allocation6 + $0x448] sm:$0xff]
        %v3315 = vld [vmem:[#allocation6 + $0x450] sm:$0xff]
        %v3316 = vld [vmem:[#allocation6 + $0x458] sm:$0xff]
        %v3317 = vld [vmem:[#allocation6 + $0x460] sm:$0xff]
        %v3318 = vld [vmem:[#allocation6 + $0x468] sm:$0xff]
        %v3319 = vld [vmem:[#allocation6 + $0x470] sm:$0xff]
        %v3320 = vld [vmem:[#allocation6 + $0x478] sm:$0xff]
        %v3321 = vld [vmem:[#allocation6 + $0x480] sm:$0xff]
        %v3322 = vld [vmem:[#allocation6 + $0x488] sm:$0xff]
        %v3323 = vld [vmem:[#allocation6 + $0x490] sm:$0xff]
        %v3324 = vld [vmem:[#allocation6 + $0x498] sm:$0xff]
        %v3325 = vld [vmem:[#allocation6 + $0x4a0] sm:$0xff]
        %v3326 = vld [vmem:[#allocation6 + $0x4a8] sm:$0xff]
        %v3327 = vld [vmem:[#allocation6 + $0x4b0] sm:$0xff]
        %v3328 = vld [vmem:[#allocation6 + $0x4b8] sm:$0xff]
        %v3329 = vld [vmem:[#allocation6 + $0x4c0] sm:$0xff]
        %v3330 = vld [vmem:[#allocation6 + $0x4c8] sm:$0xff]
        %v3331 = vld [vmem:[#allocation6 + $0x4d0] sm:$0xff]
        %v3332 = vld [vmem:[#allocation6 + $0x4d8] sm:$0xff]
        %v3333 = vld [vmem:[#allocation6 + $0x4e0] sm:$0xff]
        %v3334 = vld [vmem:[#allocation6 + $0x4e8] sm:$0xff]
        %v3335 = vld [vmem:[#allocation6 + $0x4f0] sm:$0xff]
        %v3336 = vld [vmem:[#allocation6 + $0x4f8] sm:$0xff]
        %v3337 = vld [vmem:[#allocation6 + $0x500] sm:$0xff]
        %v3338 = vld [vmem:[#allocation6 + $0x508] sm:$0xff]
        %v3339 = vld [vmem:[#allocation6 + $0x510] sm:$0xff]
        %v3340 = vld [vmem:[#allocation6 + $0x518] sm:$0xff]
        %v3341 = vld [vmem:[#allocation6 + $0x520] sm:$0xff]
        %v3342 = vld [vmem:[#allocation6 + $0x528] sm:$0xff]
        %v3343 = vld [vmem:[#allocation6 + $0x530] sm:$0xff]
        %v3344 = vld [vmem:[#allocation6 + $0x538] sm:$0xff]
        %v3345 = vld [vmem:[#allocation6 + $0x540] sm:$0xff]
        %v3346 = vld [vmem:[#allocation6 + $0x548] sm:$0xff]
        %v3347 = vld [vmem:[#allocation6 + $0x550] sm:$0xff]
        %v3348 = vld [vmem:[#allocation6 + $0x558] sm:$0xff]
        %v3349 = vld [vmem:[#allocation6 + $0x560] sm:$0xff]
        %v3350 = vld [vmem:[#allocation6 + $0x568] sm:$0xff]
        %v3351 = vld [vmem:[#allocation6 + $0x570] sm:$0xff]
        %v3352 = vld [vmem:[#allocation6 + $0x578] sm:$0xff]
        %v3353 = vld [vmem:[#allocation6 + $0x580] sm:$0xff]
        %v3354 = vld [vmem:[#allocation6 + $0x588] sm:$0xff]
        %v3355 = vld [vmem:[#allocation6 + $0x590] sm:$0xff]
        %v3356 = vld [vmem:[#allocation6 + $0x598] sm:$0xff]
        %v3357 = vld [vmem:[#allocation6 + $0x5a0] sm:$0xff]
        %v3358 = vld [vmem:[#allocation6 + $0x5a8] sm:$0xff]
        %v3359 = vld [vmem:[#allocation6 + $0x5b0] sm:$0xff]
        %v3360 = vld [vmem:[#allocation6 + $0x5b8] sm:$0xff]
        %v3361 = vld [vmem:[#allocation6 + $0x5c0] sm:$0xff]
        %v3362 = vld [vmem:[#allocation6 + $0x5c8] sm:$0xff]
        %v3363 = vld [vmem:[#allocation6 + $0x5d0] sm:$0xff]
        %v3364 = vld [vmem:[#allocation6 + $0x5d8] sm:$0xff]
        %v3365 = vld [vmem:[#allocation6 + $0x5e0] sm:$0xff]
        %v3366 = vld [vmem:[#allocation6 + $0x5e8] sm:$0xff]
        %v3367 = vld [vmem:[#allocation6 + $0x5f0] sm:$0xff]
        %v3368 = vld [vmem:[#allocation6 + $0x5f8] sm:$0xff]
        %v3369 = vld [vmem:[#allocation6 + $0x600] sm:$0xff]
        %v3370 = vld [vmem:[#allocation6 + $0x608] sm:$0xff]
        %v3371 = vld [vmem:[#allocation6 + $0x610] sm:$0xff]
        %v3372 = vld [vmem:[#allocation6 + $0x618] sm:$0xff]
        %v3373 = vld [vmem:[#allocation6 + $0x620] sm:$0xff]
        %v3374 = vld [vmem:[#allocation6 + $0x628] sm:$0xff]
        %v3375 = vld [vmem:[#allocation6 + $0x630] sm:$0xff]
        %v3376 = vld [vmem:[#allocation6 + $0x638] sm:$0xff]
        %v3377 = vld [vmem:[#allocation6 + $0x640] sm:$0xff]
        %v3378 = vld [vmem:[#allocation6 + $0x648] sm:$0xff]
        %v3379 = vld [vmem:[#allocation6 + $0x650] sm:$0xff]
        %v3380 = vld [vmem:[#allocation6 + $0x658] sm:$0xff]
        %v3381 = vld [vmem:[#allocation6 + $0x660] sm:$0xff]
        %v3382 = vld [vmem:[#allocation6 + $0x668] sm:$0xff]
        %v3383 = vld [vmem:[#allocation6 + $0x670] sm:$0xff]
        %v3384 = vld [vmem:[#allocation6 + $0x678] sm:$0xff]
        %v3385 = vld [vmem:[#allocation6 + $0x680] sm:$0xff]
        %v3386 = vld [vmem:[#allocation6 + $0x688] sm:$0xff]
        %v3387 = vld [vmem:[#allocation6 + $0x690] sm:$0xff]
        %v3388 = vld [vmem:[#allocation6 + $0x698] sm:$0xff]
        %v3389 = vld [vmem:[#allocation6 + $0x6a0] sm:$0xff]
        %v3390 = vld [vmem:[#allocation6 + $0x6a8] sm:$0xff]
        %v3391 = vld [vmem:[#allocation6 + $0x6b0] sm:$0xff]
        %v3392 = vld [vmem:[#allocation6 + $0x6b8] sm:$0xff]
        %v3393 = vld [vmem:[#allocation6 + $0x6c0] sm:$0xff]
        %v3394 = vld [vmem:[#allocation6 + $0x6c8] sm:$0xff]
        %v3395 = vld [vmem:[#allocation6 + $0x6d0] sm:$0xff]
        %v3396 = vld [vmem:[#allocation6 + $0x6d8] sm:$0xff]
        %v3397 = vld [vmem:[#allocation6 + $0x6e0] sm:$0xff]
        %v3398 = vld [vmem:[#allocation6 + $0x6e8] sm:$0xff]
        %v3399 = vld [vmem:[#allocation6 + $0x6f0] sm:$0xff]
        %v3400 = vld [vmem:[#allocation6 + $0x6f8] sm:$0xff]
        %v3401 = vld [vmem:[#allocation6 + $0x700] sm:$0xff]
        %v3402 = vld [vmem:[#allocation6 + $0x708] sm:$0xff]
        %v3403 = vld [vmem:[#allocation6 + $0x710] sm:$0xff]
        %v3404 = vld [vmem:[#allocation6 + $0x718] sm:$0xff]
        %v3405 = vld [vmem:[#allocation6 + $0x720] sm:$0xff]
        %v3406 = vld [vmem:[#allocation6 + $0x728] sm:$0xff]
        %v3407 = vld [vmem:[#allocation6 + $0x730] sm:$0xff]
        %v3408 = vld [vmem:[#allocation6 + $0x738] sm:$0xff]
        %v3409 = vld [vmem:[#allocation6 + $0x740] sm:$0xff]
        %v3410 = vld [vmem:[#allocation6 + $0x748] sm:$0xff]
        %v3411 = vld [vmem:[#allocation6 + $0x750] sm:$0xff]
        %v3412 = vld [vmem:[#allocation6 + $0x758] sm:$0xff]
        %v3413 = vld [vmem:[#allocation6 + $0x760] sm:$0xff]
        %v3414 = vld [vmem:[#allocation6 + $0x768] sm:$0xff]
        %v3415 = vld [vmem:[#allocation6 + $0x770] sm:$0xff]
        %v3416 = vld [vmem:[#allocation6 + $0x778] sm:$0xff]
        %v3417 = vld [vmem:[#allocation6 + $0x780] sm:$0xff]
        %v3418 = vld [vmem:[#allocation6 + $0x788] sm:$0xff]
        %v3419 = vld [vmem:[#allocation6 + $0x790] sm:$0xff]
        %v3420 = vld [vmem:[#allocation6 + $0x798] sm:$0xff]
        %v3421 = vld [vmem:[#allocation6 + $0x7a0] sm:$0xff]
        %v3422 = vld [vmem:[#allocation6 + $0x7a8] sm:$0xff]
        %v3423 = vld [vmem:[#allocation6 + $0x7b0] sm:$0xff]
        %v3424 = vld [vmem:[#allocation6 + $0x7b8] sm:$0xff]
        %v3425 = vld [vmem:[#allocation6 + $0x7c0] sm:$0xff]
        %v3426 = vld [vmem:[#allocation6 + $0x7c8] sm:$0xff]
        %v3427 = vld [vmem:[#allocation6 + $0x7d0] sm:$0xff]
        %v3428 = vld [vmem:[#allocation6 + $0x7d8] sm:$0xff]
        %v3429 = vld [vmem:[#allocation6 + $0x7e0] sm:$0xff]
        %v3430 = vld [vmem:[#allocation6 + $0x7e8] sm:$0xff]
        %v3431 = vld [vmem:[#allocation6 + $0x7f0] sm:$0xff]
        %v3432 = vld [vmem:[#allocation6 + $0x7f8] sm:$0xff]
        %v3433 = vld [vmem:[#allocation6 + $0x800] sm:$0xff]
        %v3434 = vld [vmem:[#allocation6 + $0x808] sm:$0xff]
        %v3435 = vld [vmem:[#allocation6 + $0x810] sm:$0xff]
        %v3436 = vld [vmem:[#allocation6 + $0x818] sm:$0xff]
        %v3437 = vld [vmem:[#allocation6 + $0x820] sm:$0xff]
        %v3438 = vld [vmem:[#allocation6 + $0x828] sm:$0xff]
        %v3439 = vld [vmem:[#allocation6 + $0x830] sm:$0xff]
        %v3440 = vld [vmem:[#allocation6 + $0x838] sm:$0xff]
        %v3441 = vld [vmem:[#allocation6 + $0x840] sm:$0xff]
        %v3442 = vld [vmem:[#allocation6 + $0x848] sm:$0xff]
        %v3443 = vld [vmem:[#allocation6 + $0x850] sm:$0xff]
        %v3444 = vld [vmem:[#allocation6 + $0x858] sm:$0xff]
        %v3445 = vld [vmem:[#allocation6 + $0x860] sm:$0xff]
        %v3446 = vld [vmem:[#allocation6 + $0x868] sm:$0xff]
        %v3447 = vld [vmem:[#allocation6 + $0x870] sm:$0xff]
        %v3448 = vld [vmem:[#allocation6 + $0x878] sm:$0xff]
        %v3449 = vld [vmem:[#allocation6 + $0x880] sm:$0xff]
        %v3450 = vld [vmem:[#allocation6 + $0x888] sm:$0xff]
        %v3451 = vld [vmem:[#allocation6 + $0x890] sm:$0xff]
        %v3452 = vld [vmem:[#allocation6 + $0x898] sm:$0xff]
        %v3453 = vld [vmem:[#allocation6 + $0x8a0] sm:$0xff]
        %v3454 = vld [vmem:[#allocation6 + $0x8a8] sm:$0xff]
        %v3455 = vld [vmem:[#allocation6 + $0x8b0] sm:$0xff]
        %v3456 = vld [vmem:[#allocation6 + $0x8b8] sm:$0xff]
        %v3457 = vld [vmem:[#allocation6 + $0x8c0] sm:$0xff]
        %v3458 = vld [vmem:[#allocation6 + $0x8c8] sm:$0xff]
        %v3459 = vld [vmem:[#allocation6 + $0x8d0] sm:$0xff]
        %v3460 = vld [vmem:[#allocation6 + $0x8d8] sm:$0xff]
        %v3461 = vld [vmem:[#allocation6 + $0x8e0] sm:$0xff]
        %v3462 = vld [vmem:[#allocation6 + $0x8e8] sm:$0xff]
        %v3463 = vld [vmem:[#allocation6 + $0x8f0] sm:$0xff]
        %v3464 = vld [vmem:[#allocation6 + $0x8f8] sm:$0xff]
        %v3465 = vld [vmem:[#allocation9] ss:$4 sm:$0x3f]
        %v3467 = vlaneseq
        %v3468 = vshrl.u32 %v3467, 7
        %v3469 = vsub.s32 0, %v3468
        %v3470 = vrot.slane %v3465, %v3469
        %v3471 = vlaneseq
        %v3472 = vshrl.u32 %v3471, 7
        %v3473 = vsub.s32 1, %v3472
        %v3474 = vrot.slane %v3465, %v3473
        %v3475 = vlaneseq
        %v3476 = vshrl.u32 %v3475, 7
        %v3477 = vsub.s32 2, %v3476
        %v3478 = vrot.slane %v3465, %v3477
        %v3479 = vlaneseq
        %v3480 = vshrl.u32 %v3479, 7
        %v3481 = vsub.s32 3, %v3480
        %v3482 = vrot.slane %v3465, %v3481
        %v3483 = vlaneseq
        %v3484 = vshrl.u32 %v3483, 7
        %v3485 = vsub.s32 4, %v3484
        %v3486 = vrot.slane %v3465, %v3485
        %v3487 = vlaneseq
        %v3488 = vshrl.u32 %v3487, 7
        %v3489 = vsub.s32 5, %v3488
        %v3490 = vrot.slane %v3465, %v3489
        %v3785 = vunpack.c.l.b16 %v3177
        %v3786 = vunpack.c.h.b16 %v3177
        %v3787 = vunpack.c.l.b16 %v3178
        %v3788 = vunpack.c.h.b16 %v3178
        %v3789 = vunpack.c.l.b16 %v3179
        %v3790 = vunpack.c.h.b16 %v3179
        %v3791 = vunpack.c.l.b16 %v3180
        %v3792 = vunpack.c.h.b16 %v3180
        %v3793 = vunpack.c.l.b16 %v3181
        %v3794 = vunpack.c.h.b16 %v3181
        %v3795 = vunpack.c.l.b16 %v3182
        %v3796 = vunpack.c.h.b16 %v3182
        %v3797 = vunpack.c.l.b16 %v3183
        %v3798 = vunpack.c.h.b16 %v3183
        %v3799 = vunpack.c.l.b16 %v3184
        %v3800 = vunpack.c.h.b16 %v3184
        %v3801 = vunpack.c.l.b16 %v3185
        %v3802 = vunpack.c.h.b16 %v3185
        %v3803 = vunpack.c.l.b16 %v3186
        %v3804 = vunpack.c.h.b16 %v3186
        %v3805 = vunpack.c.l.b16 %v3187
        %v3806 = vunpack.c.h.b16 %v3187
        %v3807 = vunpack.c.l.b16 %v3188
        %v3808 = vunpack.c.h.b16 %v3188
        %v3809 = vunpack.c.l.b16 %v3189
        %v3810 = vunpack.c.h.b16 %v3189
        %v3811 = vunpack.c.l.b16 %v3190
        %v3812 = vunpack.c.h.b16 %v3190
        %v3813 = vunpack.c.l.b16 %v3191
        %v3814 = vunpack.c.h.b16 %v3191
        %v3815 = vunpack.c.l.b16 %v3192
        %v3816 = vunpack.c.h.b16 %v3192
        %v3817 = vunpack.c.l.b16 %v3193
        %v3818 = vunpack.c.h.b16 %v3193
        %v3819 = vunpack.c.l.b16 %v3194
        %v3820 = vunpack.c.h.b16 %v3194
        %v3821 = vunpack.c.l.b16 %v3195
        %v3822 = vunpack.c.h.b16 %v3195
        %v3823 = vunpack.c.l.b16 %v3196
        %v3824 = vunpack.c.h.b16 %v3196
        %v3825 = vunpack.c.l.b16 %v3197
        %v3826 = vunpack.c.h.b16 %v3197
        %v3827 = vunpack.c.l.b16 %v3198
        %v3828 = vunpack.c.h.b16 %v3198
        %v3829 = vunpack.c.l.b16 %v3199
        %v3830 = vunpack.c.h.b16 %v3199
        %v3831 = vunpack.c.l.b16 %v3200
        %v3832 = vunpack.c.h.b16 %v3200
        %v3833 = vunpack.c.l.b16 %v3201
        %v3834 = vunpack.c.h.b16 %v3201
        %v3835 = vunpack.c.l.b16 %v3202
        %v3836 = vunpack.c.h.b16 %v3202
        %v3837 = vunpack.c.l.b16 %v3203
        %v3838 = vunpack.c.h.b16 %v3203
        %v3839 = vunpack.c.l.b16 %v3204
        %v3840 = vunpack.c.h.b16 %v3204
        %v3841 = vunpack.c.l.b16 %v3205
        %v3842 = vunpack.c.h.b16 %v3205
        %v3843 = vunpack.c.l.b16 %v3206
        %v3844 = vunpack.c.h.b16 %v3206
        %v3845 = vunpack.c.l.b16 %v3207
        %v3846 = vunpack.c.h.b16 %v3207
        %v3847 = vunpack.c.l.b16 %v3208
        %v3848 = vunpack.c.h.b16 %v3208
        %v3849 = vunpack.c.l.b16 %v3209
        %v3850 = vunpack.c.h.b16 %v3209
        %v3851 = vunpack.c.l.b16 %v3210
        %v3852 = vunpack.c.h.b16 %v3210
        %v3853 = vunpack.c.l.b16 %v3211
        %v3854 = vunpack.c.h.b16 %v3211
        %v3855 = vunpack.c.l.b16 %v3212
        %v3856 = vunpack.c.h.b16 %v3212
        %v3857 = vunpack.c.l.b16 %v3213
        %v3858 = vunpack.c.h.b16 %v3213
        %v3859 = vunpack.c.l.b16 %v3214
        %v3860 = vunpack.c.h.b16 %v3214
        %v3861 = vunpack.c.l.b16 %v3215
        %v3862 = vunpack.c.h.b16 %v3215
        %v3863 = vunpack.c.l.b16 %v3216
        %v3864 = vunpack.c.h.b16 %v3216
        %v3865 = vunpack.c.l.b16 %v3217
        %v3866 = vunpack.c.h.b16 %v3217
        %v3867 = vunpack.c.l.b16 %v3218
        %v3868 = vunpack.c.h.b16 %v3218
        %v3869 = vunpack.c.l.b16 %v3219
        %v3870 = vunpack.c.h.b16 %v3219
        %v3871 = vunpack.c.l.b16 %v3220
        %v3872 = vunpack.c.h.b16 %v3220
        %v3873 = vunpack.c.l.b16 %v3221
        %v3874 = vunpack.c.h.b16 %v3221
        %v3875 = vunpack.c.l.b16 %v3222
        %v3876 = vunpack.c.h.b16 %v3222
        %v3877 = vunpack.c.l.b16 %v3223
        %v3878 = vunpack.c.h.b16 %v3223
        %v3879 = vunpack.c.l.b16 %v3224
        %v3880 = vunpack.c.h.b16 %v3224
        %v3881 = vunpack.c.l.b16 %v3225
        %v3882 = vunpack.c.h.b16 %v3225
        %v3883 = vunpack.c.l.b16 %v3226
        %v3884 = vunpack.c.h.b16 %v3226
        %v3885 = vunpack.c.l.b16 %v3227
        %v3886 = vunpack.c.h.b16 %v3227
        %v3887 = vunpack.c.l.b16 %v3228
        %v3888 = vunpack.c.h.b16 %v3228
        %v3889 = vunpack.c.l.b16 %v3229
        %v3890 = vunpack.c.h.b16 %v3229
        %v3891 = vunpack.c.l.b16 %v3230
        %v3892 = vunpack.c.h.b16 %v3230
        %v3893 = vunpack.c.l.b16 %v3231
        %v3894 = vunpack.c.h.b16 %v3231
        %v3895 = vunpack.c.l.b16 %v3232
        %v3896 = vunpack.c.h.b16 %v3232
        %v3897 = vunpack.c.l.b16 %v3233
        %v3898 = vunpack.c.h.b16 %v3233
        %v3899 = vunpack.c.l.b16 %v3234
        %v3900 = vunpack.c.h.b16 %v3234
        %v3901 = vunpack.c.l.b16 %v3235
        %v3902 = vunpack.c.h.b16 %v3235
        %v3903 = vunpack.c.l.b16 %v3236
        %v3904 = vunpack.c.h.b16 %v3236
        %v3905 = vunpack.c.l.b16 %v3237
        %v3906 = vunpack.c.h.b16 %v3237
        %v3907 = vunpack.c.l.b16 %v3238
        %v3908 = vunpack.c.h.b16 %v3238
        %v3909 = vunpack.c.l.b16 %v3239
        %v3910 = vunpack.c.h.b16 %v3239
        %v3911 = vunpack.c.l.b16 %v3240
        %v3912 = vunpack.c.h.b16 %v3240
        %v3913 = vunpack.c.l.b16 %v3241
        %v3914 = vunpack.c.h.b16 %v3241
        %v3915 = vunpack.c.l.b16 %v3242
        %v3916 = vunpack.c.h.b16 %v3242
        %v3917 = vunpack.c.l.b16 %v3243
        %v3918 = vunpack.c.h.b16 %v3243
        %v3919 = vunpack.c.l.b16 %v3244
        %v3920 = vunpack.c.h.b16 %v3244
        %v3921 = vunpack.c.l.b16 %v3245
        %v3922 = vunpack.c.h.b16 %v3245
        %v3923 = vunpack.c.l.b16 %v3246
        %v3924 = vunpack.c.h.b16 %v3246
        %v3925 = vunpack.c.l.b16 %v3247
        %v3926 = vunpack.c.h.b16 %v3247
        %v3927 = vunpack.c.l.b16 %v3248
        %v3928 = vunpack.c.h.b16 %v3248
        %v3929 = vunpack.c.l.b16 %v3249
        %v3930 = vunpack.c.h.b16 %v3249
        %v3931 = vunpack.c.l.b16 %v3250
        %v3932 = vunpack.c.h.b16 %v3250
        %v3933 = vunpack.c.l.b16 %v3251
        %v3934 = vunpack.c.h.b16 %v3251
        %v3935 = vunpack.c.l.b16 %v3252
        %v3936 = vunpack.c.h.b16 %v3252
        %v3937 = vunpack.c.l.b16 %v3253
        %v3938 = vunpack.c.h.b16 %v3253
        %v3939 = vunpack.c.l.b16 %v3254
        %v3940 = vunpack.c.h.b16 %v3254
        %v3941 = vunpack.c.l.b16 %v3255
        %v3942 = vunpack.c.h.b16 %v3255
        %v3943 = vunpack.c.l.b16 %v3256
        %v3944 = vunpack.c.h.b16 %v3256
        %v3945 = vunpack.c.l.b16 %v3257
        %v3946 = vunpack.c.h.b16 %v3257
        %v3947 = vunpack.c.l.b16 %v3258
        %v3948 = vunpack.c.h.b16 %v3258
        %v3949 = vunpack.c.l.b16 %v3259
        %v3950 = vunpack.c.h.b16 %v3259
        %v3951 = vunpack.c.l.b16 %v3260
        %v3952 = vunpack.c.h.b16 %v3260
        %v3953 = vunpack.c.l.b16 %v3261
        %v3954 = vunpack.c.h.b16 %v3261
        %v3955 = vunpack.c.l.b16 %v3262
        %v3956 = vunpack.c.h.b16 %v3262
        %v3957 = vunpack.c.l.b16 %v3263
        %v3958 = vunpack.c.h.b16 %v3263
        %v3959 = vunpack.c.l.b16 %v3264
        %v3960 = vunpack.c.h.b16 %v3264
        %v3961 = vunpack.c.l.b16 %v3265
        %v3962 = vunpack.c.h.b16 %v3265
        %v3963 = vunpack.c.l.b16 %v3266
        %v3964 = vunpack.c.h.b16 %v3266
        %v3965 = vunpack.c.l.b16 %v3267
        %v3966 = vunpack.c.h.b16 %v3267
        %v3967 = vunpack.c.l.b16 %v3268
        %v3968 = vunpack.c.h.b16 %v3268
        %v3969 = vunpack.c.l.b16 %v3269
        %v3970 = vunpack.c.h.b16 %v3269
        %v3971 = vunpack.c.l.b16 %v3270
        %v3972 = vunpack.c.h.b16 %v3270
        %v3973 = vunpack.c.l.b16 %v3271
        %v3974 = vunpack.c.h.b16 %v3271
        %v3975 = vunpack.c.l.b16 %v3272
        %v3976 = vunpack.c.h.b16 %v3272
        %v3977 = vunpack.c.l.b16 %v3273
        %v3978 = vunpack.c.h.b16 %v3273
        %v3979 = vunpack.c.l.b16 %v3274
        %v3980 = vunpack.c.h.b16 %v3274
        %v3981 = vunpack.c.l.b16 %v3275
        %v3982 = vunpack.c.h.b16 %v3275
        %v3983 = vunpack.c.l.b16 %v3276
        %v3984 = vunpack.c.h.b16 %v3276
        %v3985 = vunpack.c.l.b16 %v3277
        %v3986 = vunpack.c.h.b16 %v3277
        %v3987 = vunpack.c.l.b16 %v3278
        %v3988 = vunpack.c.h.b16 %v3278
        %v3989 = vunpack.c.l.b16 %v3279
        %v3990 = vunpack.c.h.b16 %v3279
        %v3991 = vunpack.c.l.b16 %v3280
        %v3992 = vunpack.c.h.b16 %v3280
        %v3993 = vunpack.c.l.b16 %v3281
        %v3994 = vunpack.c.h.b16 %v3281
        %v3995 = vunpack.c.l.b16 %v3282
        %v3996 = vunpack.c.h.b16 %v3282
        %v3997 = vunpack.c.l.b16 %v3283
        %v3998 = vunpack.c.h.b16 %v3283
        %v3999 = vunpack.c.l.b16 %v3284
        %v4000 = vunpack.c.h.b16 %v3284
        %v4001 = vunpack.c.l.b16 %v3285
        %v4002 = vunpack.c.h.b16 %v3285
        %v4003 = vunpack.c.l.b16 %v3286
        %v4004 = vunpack.c.h.b16 %v3286
        %v4005 = vunpack.c.l.b16 %v3287
        %v4006 = vunpack.c.h.b16 %v3287
        %v4007 = vunpack.c.l.b16 %v3288
        %v4008 = vunpack.c.h.b16 %v3288
        %v4009 = vunpack.c.l.b16 %v3289
        %v4010 = vunpack.c.h.b16 %v3289
        %v4011 = vunpack.c.l.b16 %v3290
        %v4012 = vunpack.c.h.b16 %v3290
        %v4013 = vunpack.c.l.b16 %v3291
        %v4014 = vunpack.c.h.b16 %v3291
        %v4015 = vunpack.c.l.b16 %v3292
        %v4016 = vunpack.c.h.b16 %v3292
        %v4017 = vunpack.c.l.b16 %v3293
        %v4018 = vunpack.c.h.b16 %v3293
        %v4019 = vunpack.c.l.b16 %v3294
        %v4020 = vunpack.c.h.b16 %v3294
        %v4021 = vunpack.c.l.b16 %v3295
        %v4022 = vunpack.c.h.b16 %v3295
        %v4023 = vunpack.c.l.b16 %v3296
        %v4024 = vunpack.c.h.b16 %v3296
        %v4025 = vunpack.c.l.b16 %v3297
        %v4026 = vunpack.c.h.b16 %v3297
        %v4027 = vunpack.c.l.b16 %v3298
        %v4028 = vunpack.c.h.b16 %v3298
        %v4029 = vunpack.c.l.b16 %v3299
        %v4030 = vunpack.c.h.b16 %v3299
        %v4031 = vunpack.c.l.b16 %v3300
        %v4032 = vunpack.c.h.b16 %v3300
        %v4033 = vunpack.c.l.b16 %v3301
        %v4034 = vunpack.c.h.b16 %v3301
        %v4035 = vunpack.c.l.b16 %v3302
        %v4036 = vunpack.c.h.b16 %v3302
        %v4037 = vunpack.c.l.b16 %v3303
        %v4038 = vunpack.c.h.b16 %v3303
        %v4039 = vunpack.c.l.b16 %v3304
        %v4040 = vunpack.c.h.b16 %v3304
        %v4041 = vunpack.c.l.b16 %v3305
        %v4042 = vunpack.c.h.b16 %v3305
        %v4043 = vunpack.c.l.b16 %v3306
        %v4044 = vunpack.c.h.b16 %v3306
        %v4045 = vunpack.c.l.b16 %v3307
        %v4046 = vunpack.c.h.b16 %v3307
        %v4047 = vunpack.c.l.b16 %v3308
        %v4048 = vunpack.c.h.b16 %v3308
        %v4049 = vunpack.c.l.b16 %v3309
        %v4050 = vunpack.c.h.b16 %v3309
        %v4051 = vunpack.c.l.b16 %v3310
        %v4052 = vunpack.c.h.b16 %v3310
        %v4053 = vunpack.c.l.b16 %v3311
        %v4054 = vunpack.c.h.b16 %v3311
        %v4055 = vunpack.c.l.b16 %v3312
        %v4056 = vunpack.c.h.b16 %v3312
        %v4057 = vunpack.c.l.b16 %v3313
        %v4058 = vunpack.c.h.b16 %v3313
        %v4059 = vunpack.c.l.b16 %v3314
        %v4060 = vunpack.c.h.b16 %v3314
        %v4061 = vunpack.c.l.b16 %v3315
        %v4062 = vunpack.c.h.b16 %v3315
        %v4063 = vunpack.c.l.b16 %v3316
        %v4064 = vunpack.c.h.b16 %v3316
        %v4065 = vunpack.c.l.b16 %v3317
        %v4066 = vunpack.c.h.b16 %v3317
        %v4067 = vunpack.c.l.b16 %v3318
        %v4068 = vunpack.c.h.b16 %v3318
        %v4069 = vunpack.c.l.b16 %v3319
        %v4070 = vunpack.c.h.b16 %v3319
        %v4071 = vunpack.c.l.b16 %v3320
        %v4072 = vunpack.c.h.b16 %v3320
        %v4073 = vunpack.c.l.b16 %v3321
        %v4074 = vunpack.c.h.b16 %v3321
        %v4075 = vunpack.c.l.b16 %v3322
        %v4076 = vunpack.c.h.b16 %v3322
        %v4077 = vunpack.c.l.b16 %v3323
        %v4078 = vunpack.c.h.b16 %v3323
        %v4079 = vunpack.c.l.b16 %v3324
        %v4080 = vunpack.c.h.b16 %v3324
        %v4081 = vunpack.c.l.b16 %v3325
        %v4082 = vunpack.c.h.b16 %v3325
        %v4083 = vunpack.c.l.b16 %v3326
        %v4084 = vunpack.c.h.b16 %v3326
        %v4085 = vunpack.c.l.b16 %v3327
        %v4086 = vunpack.c.h.b16 %v3327
        %v4087 = vunpack.c.l.b16 %v3328
        %v4088 = vunpack.c.h.b16 %v3328
        %v4089 = vunpack.c.l.b16 %v3329
        %v4090 = vunpack.c.h.b16 %v3329
        %v4091 = vunpack.c.l.b16 %v3330
        %v4092 = vunpack.c.h.b16 %v3330
        %v4093 = vunpack.c.l.b16 %v3331
        %v4094 = vunpack.c.h.b16 %v3331
        %v4095 = vunpack.c.l.b16 %v3332
        %v4096 = vunpack.c.h.b16 %v3332
        %v4097 = vunpack.c.l.b16 %v3333
        %v4098 = vunpack.c.h.b16 %v3333
        %v4099 = vunpack.c.l.b16 %v3334
        %v4100 = vunpack.c.h.b16 %v3334
        %v4101 = vunpack.c.l.b16 %v3335
        %v4102 = vunpack.c.h.b16 %v3335
        %v4103 = vunpack.c.l.b16 %v3336
        %v4104 = vunpack.c.h.b16 %v3336
        %v4105 = vunpack.c.l.b16 %v3337
        %v4106 = vunpack.c.h.b16 %v3337
        %v4107 = vunpack.c.l.b16 %v3338
        %v4108 = vunpack.c.h.b16 %v3338
        %v4109 = vunpack.c.l.b16 %v3339
        %v4110 = vunpack.c.h.b16 %v3339
        %v4111 = vunpack.c.l.b16 %v3340
        %v4112 = vunpack.c.h.b16 %v3340
        %v4113 = vunpack.c.l.b16 %v3341
        %v4114 = vunpack.c.h.b16 %v3341
        %v4115 = vunpack.c.l.b16 %v3342
        %v4116 = vunpack.c.h.b16 %v3342
        %v4117 = vunpack.c.l.b16 %v3343
        %v4118 = vunpack.c.h.b16 %v3343
        %v4119 = vunpack.c.l.b16 %v3344
        %v4120 = vunpack.c.h.b16 %v3344
        %v4121 = vunpack.c.l.b16 %v3345
        %v4122 = vunpack.c.h.b16 %v3345
        %v4123 = vunpack.c.l.b16 %v3346
        %v4124 = vunpack.c.h.b16 %v3346
        %v4125 = vunpack.c.l.b16 %v3347
        %v4126 = vunpack.c.h.b16 %v3347
        %v4127 = vunpack.c.l.b16 %v3348
        %v4128 = vunpack.c.h.b16 %v3348
        %v4129 = vunpack.c.l.b16 %v3349
        %v4130 = vunpack.c.h.b16 %v3349
        %v4131 = vunpack.c.l.b16 %v3350
        %v4132 = vunpack.c.h.b16 %v3350
        %v4133 = vunpack.c.l.b16 %v3351
        %v4134 = vunpack.c.h.b16 %v3351
        %v4135 = vunpack.c.l.b16 %v3352
        %v4136 = vunpack.c.h.b16 %v3352
        %v4137 = vunpack.c.l.b16 %v3353
        %v4138 = vunpack.c.h.b16 %v3353
        %v4139 = vunpack.c.l.b16 %v3354
        %v4140 = vunpack.c.h.b16 %v3354
        %v4141 = vunpack.c.l.b16 %v3355
        %v4142 = vunpack.c.h.b16 %v3355
        %v4143 = vunpack.c.l.b16 %v3356
        %v4144 = vunpack.c.h.b16 %v3356
        %v4145 = vunpack.c.l.b16 %v3357
        %v4146 = vunpack.c.h.b16 %v3357
        %v4147 = vunpack.c.l.b16 %v3358
        %v4148 = vunpack.c.h.b16 %v3358
        %v4149 = vunpack.c.l.b16 %v3359
        %v4150 = vunpack.c.h.b16 %v3359
        %v4151 = vunpack.c.l.b16 %v3360
        %v4152 = vunpack.c.h.b16 %v3360
        %v4153 = vunpack.c.l.b16 %v3361
        %v4154 = vunpack.c.h.b16 %v3361
        %v4155 = vunpack.c.l.b16 %v3362
        %v4156 = vunpack.c.h.b16 %v3362
        %v4157 = vunpack.c.l.b16 %v3363
        %v4158 = vunpack.c.h.b16 %v3363
        %v4159 = vunpack.c.l.b16 %v3364
        %v4160 = vunpack.c.h.b16 %v3364
        %v4161 = vunpack.c.l.b16 %v3365
        %v4162 = vunpack.c.h.b16 %v3365
        %v4163 = vunpack.c.l.b16 %v3366
        %v4164 = vunpack.c.h.b16 %v3366
        %v4165 = vunpack.c.l.b16 %v3367
        %v4166 = vunpack.c.h.b16 %v3367
        %v4167 = vunpack.c.l.b16 %v3368
        %v4168 = vunpack.c.h.b16 %v3368
        %v4169 = vunpack.c.l.b16 %v3369
        %v4170 = vunpack.c.h.b16 %v3369
        %v4171 = vunpack.c.l.b16 %v3370
        %v4172 = vunpack.c.h.b16 %v3370
        %v4173 = vunpack.c.l.b16 %v3371
        %v4174 = vunpack.c.h.b16 %v3371
        %v4175 = vunpack.c.l.b16 %v3372
        %v4176 = vunpack.c.h.b16 %v3372
        %v4177 = vunpack.c.l.b16 %v3373
        %v4178 = vunpack.c.h.b16 %v3373
        %v4179 = vunpack.c.l.b16 %v3374
        %v4180 = vunpack.c.h.b16 %v3374
        %v4181 = vunpack.c.l.b16 %v3375
        %v4182 = vunpack.c.h.b16 %v3375
        %v4183 = vunpack.c.l.b16 %v3376
        %v4184 = vunpack.c.h.b16 %v3376
        %v4185 = vunpack.c.l.b16 %v3377
        %v4186 = vunpack.c.h.b16 %v3377
        %v4187 = vunpack.c.l.b16 %v3378
        %v4188 = vunpack.c.h.b16 %v3378
        %v4189 = vunpack.c.l.b16 %v3379
        %v4190 = vunpack.c.h.b16 %v3379
        %v4191 = vunpack.c.l.b16 %v3380
        %v4192 = vunpack.c.h.b16 %v3380
        %v4193 = vunpack.c.l.b16 %v3381
        %v4194 = vunpack.c.h.b16 %v3381
        %v4195 = vunpack.c.l.b16 %v3382
        %v4196 = vunpack.c.h.b16 %v3382
        %v4197 = vunpack.c.l.b16 %v3383
        %v4198 = vunpack.c.h.b16 %v3383
        %v4199 = vunpack.c.l.b16 %v3384
        %v4200 = vunpack.c.h.b16 %v3384
        %v4201 = vunpack.c.l.b16 %v3385
        %v4202 = vunpack.c.h.b16 %v3385
        %v4203 = vunpack.c.l.b16 %v3386
        %v4204 = vunpack.c.h.b16 %v3386
        %v4205 = vunpack.c.l.b16 %v3387
        %v4206 = vunpack.c.h.b16 %v3387
        %v4207 = vunpack.c.l.b16 %v3388
        %v4208 = vunpack.c.h.b16 %v3388
        %v4209 = vunpack.c.l.b16 %v3389
        %v4210 = vunpack.c.h.b16 %v3389
        %v4211 = vunpack.c.l.b16 %v3390
        %v4212 = vunpack.c.h.b16 %v3390
        %v4213 = vunpack.c.l.b16 %v3391
        %v4214 = vunpack.c.h.b16 %v3391
        %v4215 = vunpack.c.l.b16 %v3392
        %v4216 = vunpack.c.h.b16 %v3392
        %v4217 = vunpack.c.l.b16 %v3393
        %v4218 = vunpack.c.h.b16 %v3393
        %v4219 = vunpack.c.l.b16 %v3394
        %v4220 = vunpack.c.h.b16 %v3394
        %v4221 = vunpack.c.l.b16 %v3395
        %v4222 = vunpack.c.h.b16 %v3395
        %v4223 = vunpack.c.l.b16 %v3396
        %v4224 = vunpack.c.h.b16 %v3396
        %v4225 = vunpack.c.l.b16 %v3397
        %v4226 = vunpack.c.h.b16 %v3397
        %v4227 = vunpack.c.l.b16 %v3398
        %v4228 = vunpack.c.h.b16 %v3398
        %v4229 = vunpack.c.l.b16 %v3399
        %v4230 = vunpack.c.h.b16 %v3399
        %v4231 = vunpack.c.l.b16 %v3400
        %v4232 = vunpack.c.h.b16 %v3400
        %v4233 = vunpack.c.l.b16 %v3401
        %v4234 = vunpack.c.h.b16 %v3401
        %v4235 = vunpack.c.l.b16 %v3402
        %v4236 = vunpack.c.h.b16 %v3402
        %v4237 = vunpack.c.l.b16 %v3403
        %v4238 = vunpack.c.h.b16 %v3403
        %v4239 = vunpack.c.l.b16 %v3404
        %v4240 = vunpack.c.h.b16 %v3404
        %v4241 = vunpack.c.l.b16 %v3405
        %v4242 = vunpack.c.h.b16 %v3405
        %v4243 = vunpack.c.l.b16 %v3406
        %v4244 = vunpack.c.h.b16 %v3406
        %v4245 = vunpack.c.l.b16 %v3407
        %v4246 = vunpack.c.h.b16 %v3407
        %v4247 = vunpack.c.l.b16 %v3408
        %v4248 = vunpack.c.h.b16 %v3408
        %v4249 = vunpack.c.l.b16 %v3409
        %v4250 = vunpack.c.h.b16 %v3409
        %v4251 = vunpack.c.l.b16 %v3410
        %v4252 = vunpack.c.h.b16 %v3410
        %v4253 = vunpack.c.l.b16 %v3411
        %v4254 = vunpack.c.h.b16 %v3411
        %v4255 = vunpack.c.l.b16 %v3412
        %v4256 = vunpack.c.h.b16 %v3412
        %v4257 = vunpack.c.l.b16 %v3413
        %v4258 = vunpack.c.h.b16 %v3413
        %v4259 = vunpack.c.l.b16 %v3414
        %v4260 = vunpack.c.h.b16 %v3414
        %v4261 = vunpack.c.l.b16 %v3415
        %v4262 = vunpack.c.h.b16 %v3415
        %v4263 = vunpack.c.l.b16 %v3416
        %v4264 = vunpack.c.h.b16 %v3416
        %v4265 = vunpack.c.l.b16 %v3417
        %v4266 = vunpack.c.h.b16 %v3417
        %v4267 = vunpack.c.l.b16 %v3418
        %v4268 = vunpack.c.h.b16 %v3418
        %v4269 = vunpack.c.l.b16 %v3419
        %v4270 = vunpack.c.h.b16 %v3419
        %v4271 = vunpack.c.l.b16 %v3420
        %v4272 = vunpack.c.h.b16 %v3420
        %v4273 = vunpack.c.l.b16 %v3421
        %v4274 = vunpack.c.h.b16 %v3421
        %v4275 = vunpack.c.l.b16 %v3422
        %v4276 = vunpack.c.h.b16 %v3422
        %v4277 = vunpack.c.l.b16 %v3423
        %v4278 = vunpack.c.h.b16 %v3423
        %v4279 = vunpack.c.l.b16 %v3424
        %v4280 = vunpack.c.h.b16 %v3424
        %v4281 = vunpack.c.l.b16 %v3425
        %v4282 = vunpack.c.h.b16 %v3425
        %v4283 = vunpack.c.l.b16 %v3426
        %v4284 = vunpack.c.h.b16 %v3426
        %v4285 = vunpack.c.l.b16 %v3427
        %v4286 = vunpack.c.h.b16 %v3427
        %v4287 = vunpack.c.l.b16 %v3428
        %v4288 = vunpack.c.h.b16 %v3428
        %v4289 = vunpack.c.l.b16 %v3429
        %v4290 = vunpack.c.h.b16 %v3429
        %v4291 = vunpack.c.l.b16 %v3430
        %v4292 = vunpack.c.h.b16 %v3430
        %v4293 = vunpack.c.l.b16 %v3431
        %v4294 = vunpack.c.h.b16 %v3431
        %v4295 = vunpack.c.l.b16 %v3432
        %v4296 = vunpack.c.h.b16 %v3432
        %v4297 = vunpack.c.l.b16 %v3433
        %v4298 = vunpack.c.h.b16 %v3433
        %v4299 = vunpack.c.l.b16 %v3434
        %v4300 = vunpack.c.h.b16 %v3434
        %v4301 = vunpack.c.l.b16 %v3435
        %v4302 = vunpack.c.h.b16 %v3435
        %v4303 = vunpack.c.l.b16 %v3436
        %v4304 = vunpack.c.h.b16 %v3436
        %v4305 = vunpack.c.l.b16 %v3437
        %v4306 = vunpack.c.h.b16 %v3437
        %v4307 = vunpack.c.l.b16 %v3438
        %v4308 = vunpack.c.h.b16 %v3438
        %v4309 = vunpack.c.l.b16 %v3439
        %v4310 = vunpack.c.h.b16 %v3439
        %v4311 = vunpack.c.l.b16 %v3440
        %v4312 = vunpack.c.h.b16 %v3440
        %v4313 = vunpack.c.l.b16 %v3441
        %v4314 = vunpack.c.h.b16 %v3441
        %v4315 = vunpack.c.l.b16 %v3442
        %v4316 = vunpack.c.h.b16 %v3442
        %v4317 = vunpack.c.l.b16 %v3443
        %v4318 = vunpack.c.h.b16 %v3443
        %v4319 = vunpack.c.l.b16 %v3444
        %v4320 = vunpack.c.h.b16 %v3444
        %v4321 = vunpack.c.l.b16 %v3445
        %v4322 = vunpack.c.h.b16 %v3445
        %v4323 = vunpack.c.l.b16 %v3446
        %v4324 = vunpack.c.h.b16 %v3446
        %v4325 = vunpack.c.l.b16 %v3447
        %v4326 = vunpack.c.h.b16 %v3447
        %v4327 = vunpack.c.l.b16 %v3448
        %v4328 = vunpack.c.h.b16 %v3448
        %v4329 = vunpack.c.l.b16 %v3449
        %v4330 = vunpack.c.h.b16 %v3449
        %v4331 = vunpack.c.l.b16 %v3450
        %v4332 = vunpack.c.h.b16 %v3450
        %v4333 = vunpack.c.l.b16 %v3451
        %v4334 = vunpack.c.h.b16 %v3451
        %v4335 = vunpack.c.l.b16 %v3452
        %v4336 = vunpack.c.h.b16 %v3452
        %v4337 = vunpack.c.l.b16 %v3453
        %v4338 = vunpack.c.h.b16 %v3453
        %v4339 = vunpack.c.l.b16 %v3454
        %v4340 = vunpack.c.h.b16 %v3454
        %v4341 = vunpack.c.l.b16 %v3455
        %v4342 = vunpack.c.h.b16 %v3455
        %v4343 = vunpack.c.l.b16 %v3456
        %v4344 = vunpack.c.h.b16 %v3456
        %v4345 = vunpack.c.l.b16 %v3457
        %v4346 = vunpack.c.h.b16 %v3457
        %v4347 = vunpack.c.l.b16 %v3458
        %v4348 = vunpack.c.h.b16 %v3458
        %v4349 = vunpack.c.l.b16 %v3459
        %v4350 = vunpack.c.h.b16 %v3459
        %v4351 = vunpack.c.l.b16 %v3460
        %v4352 = vunpack.c.h.b16 %v3460
        %v4353 = vunpack.c.l.b16 %v3461
        %v4354 = vunpack.c.h.b16 %v3461
        %v4355 = vunpack.c.l.b16 %v3462
        %v4356 = vunpack.c.h.b16 %v3462
        %v4357 = vunpack.c.l.b16 %v3463
        %v4358 = vunpack.c.h.b16 %v3463
        %v4359 = vunpack.c.l.b16 %v3464
        %v4360 = vunpack.c.h.b16 %v3464
        %v4361 = vpack.c.b16 %v3791, %v3785
        %v4362 = vpack.c.b16 %v3792, %v3786
        %v4363 = vpack.c.b16 %v3793, %v3787
        %v4364 = vpack.c.b16 %v3794, %v3788
        %v4365 = vpack.c.b16 %v3795, %v3789
        %v4366 = vpack.c.b16 %v3796, %v3790
        %v4367 = vpack.c.b16 %v3803, %v3797
        %v4368 = vpack.c.b16 %v3804, %v3798
        %v4369 = vpack.c.b16 %v3805, %v3799
        %v4370 = vpack.c.b16 %v3806, %v3800
        %v4371 = vpack.c.b16 %v3807, %v3801
        %v4372 = vpack.c.b16 %v3808, %v3802
        %v4373 = vpack.c.b16 %v3815, %v3809
        %v4374 = vpack.c.b16 %v3816, %v3810
        %v4375 = vpack.c.b16 %v3817, %v3811
        %v4376 = vpack.c.b16 %v3818, %v3812
        %v4377 = vpack.c.b16 %v3819, %v3813
        %v4378 = vpack.c.b16 %v3820, %v3814
        %v4379 = vpack.c.b16 %v3827, %v3821
        %v4380 = vpack.c.b16 %v3828, %v3822
        %v4381 = vpack.c.b16 %v3829, %v3823
        %v4382 = vpack.c.b16 %v3830, %v3824
        %v4383 = vpack.c.b16 %v3831, %v3825
        %v4384 = vpack.c.b16 %v3832, %v3826
        %v4385 = vpack.c.b16 %v3839, %v3833
        %v4386 = vpack.c.b16 %v3840, %v3834
        %v4387 = vpack.c.b16 %v3841, %v3835
        %v4388 = vpack.c.b16 %v3842, %v3836
        %v4389 = vpack.c.b16 %v3843, %v3837
        %v4390 = vpack.c.b16 %v3844, %v3838
        %v4391 = vpack.c.b16 %v3851, %v3845
        %v4392 = vpack.c.b16 %v3852, %v3846
        %v4393 = vpack.c.b16 %v3853, %v3847
        %v4394 = vpack.c.b16 %v3854, %v3848
        %v4395 = vpack.c.b16 %v3855, %v3849
        %v4396 = vpack.c.b16 %v3856, %v3850
        %v4397 = vpack.c.b16 %v3863, %v3857
        %v4398 = vpack.c.b16 %v3864, %v3858
        %v4399 = vpack.c.b16 %v3865, %v3859
        %v4400 = vpack.c.b16 %v3866, %v3860
        %v4401 = vpack.c.b16 %v3867, %v3861
        %v4402 = vpack.c.b16 %v3868, %v3862
        %v4403 = vpack.c.b16 %v3875, %v3869
        %v4404 = vpack.c.b16 %v3876, %v3870
        %v4405 = vpack.c.b16 %v3877, %v3871
        %v4406 = vpack.c.b16 %v3878, %v3872
        %v4407 = vpack.c.b16 %v3879, %v3873
        %v4408 = vpack.c.b16 %v3880, %v3874
        %v4409 = vpack.c.b16 %v3887, %v3881
        %v4410 = vpack.c.b16 %v3888, %v3882
        %v4411 = vpack.c.b16 %v3889, %v3883
        %v4412 = vpack.c.b16 %v3890, %v3884
        %v4413 = vpack.c.b16 %v3891, %v3885
        %v4414 = vpack.c.b16 %v3892, %v3886
        %v4415 = vpack.c.b16 %v3899, %v3893
        %v4416 = vpack.c.b16 %v3900, %v3894
        %v4417 = vpack.c.b16 %v3901, %v3895
        %v4418 = vpack.c.b16 %v3902, %v3896
        %v4419 = vpack.c.b16 %v3903, %v3897
        %v4420 = vpack.c.b16 %v3904, %v3898
        %v4421 = vpack.c.b16 %v3911, %v3905
        %v4422 = vpack.c.b16 %v3912, %v3906
        %v4423 = vpack.c.b16 %v3913, %v3907
        %v4424 = vpack.c.b16 %v3914, %v3908
        %v4425 = vpack.c.b16 %v3915, %v3909
        %v4426 = vpack.c.b16 %v3916, %v3910
        %v4427 = vpack.c.b16 %v3923, %v3917
        %v4428 = vpack.c.b16 %v3924, %v3918
        %v4429 = vpack.c.b16 %v3925, %v3919
        %v4430 = vpack.c.b16 %v3926, %v3920
        %v4431 = vpack.c.b16 %v3927, %v3921
        %v4432 = vpack.c.b16 %v3928, %v3922
        %v4433 = vpack.c.b16 %v3935, %v3929
        %v4434 = vpack.c.b16 %v3936, %v3930
        %v4435 = vpack.c.b16 %v3937, %v3931
        %v4436 = vpack.c.b16 %v3938, %v3932
        %v4437 = vpack.c.b16 %v3939, %v3933
        %v4438 = vpack.c.b16 %v3940, %v3934
        %v4439 = vpack.c.b16 %v3947, %v3941
        %v4440 = vpack.c.b16 %v3948, %v3942
        %v4441 = vpack.c.b16 %v3949, %v3943
        %v4442 = vpack.c.b16 %v3950, %v3944
        %v4443 = vpack.c.b16 %v3951, %v3945
        %v4444 = vpack.c.b16 %v3952, %v3946
        %v4445 = vpack.c.b16 %v3959, %v3953
        %v4446 = vpack.c.b16 %v3960, %v3954
        %v4447 = vpack.c.b16 %v3961, %v3955
        %v4448 = vpack.c.b16 %v3962, %v3956
        %v4449 = vpack.c.b16 %v3963, %v3957
        %v4450 = vpack.c.b16 %v3964, %v3958
        %v4451 = vpack.c.b16 %v3971, %v3965
        %v4452 = vpack.c.b16 %v3972, %v3966
        %v4453 = vpack.c.b16 %v3973, %v3967
        %v4454 = vpack.c.b16 %v3974, %v3968
        %v4455 = vpack.c.b16 %v3975, %v3969
        %v4456 = vpack.c.b16 %v3976, %v3970
        %v4457 = vpack.c.b16 %v3983, %v3977
        %v4458 = vpack.c.b16 %v3984, %v3978
        %v4459 = vpack.c.b16 %v3985, %v3979
        %v4460 = vpack.c.b16 %v3986, %v3980
        %v4461 = vpack.c.b16 %v3987, %v3981
        %v4462 = vpack.c.b16 %v3988, %v3982
        %v4463 = vpack.c.b16 %v3995, %v3989
        %v4464 = vpack.c.b16 %v3996, %v3990
        %v4465 = vpack.c.b16 %v3997, %v3991
        %v4466 = vpack.c.b16 %v3998, %v3992
        %v4467 = vpack.c.b16 %v3999, %v3993
        %v4468 = vpack.c.b16 %v4000, %v3994
        %v4469 = vpack.c.b16 %v4007, %v4001
        %v4470 = vpack.c.b16 %v4008, %v4002
        %v4471 = vpack.c.b16 %v4009, %v4003
        %v4472 = vpack.c.b16 %v4010, %v4004
        %v4473 = vpack.c.b16 %v4011, %v4005
        %v4474 = vpack.c.b16 %v4012, %v4006
        %v4475 = vpack.c.b16 %v4019, %v4013
        %v4476 = vpack.c.b16 %v4020, %v4014
        %v4477 = vpack.c.b16 %v4021, %v4015
        %v4478 = vpack.c.b16 %v4022, %v4016
        %v4479 = vpack.c.b16 %v4023, %v4017
        %v4480 = vpack.c.b16 %v4024, %v4018
        %v4481 = vpack.c.b16 %v4031, %v4025
        %v4482 = vpack.c.b16 %v4032, %v4026
        %v4483 = vpack.c.b16 %v4033, %v4027
        %v4484 = vpack.c.b16 %v4034, %v4028
        %v4485 = vpack.c.b16 %v4035, %v4029
        %v4486 = vpack.c.b16 %v4036, %v4030
        %v4487 = vpack.c.b16 %v4043, %v4037
        %v4488 = vpack.c.b16 %v4044, %v4038
        %v4489 = vpack.c.b16 %v4045, %v4039
        %v4490 = vpack.c.b16 %v4046, %v4040
        %v4491 = vpack.c.b16 %v4047, %v4041
        %v4492 = vpack.c.b16 %v4048, %v4042
        %v4493 = vpack.c.b16 %v4055, %v4049
        %v4494 = vpack.c.b16 %v4056, %v4050
        %v4495 = vpack.c.b16 %v4057, %v4051
        %v4496 = vpack.c.b16 %v4058, %v4052
        %v4497 = vpack.c.b16 %v4059, %v4053
        %v4498 = vpack.c.b16 %v4060, %v4054
        %v4499 = vpack.c.b16 %v4067, %v4061
        %v4500 = vpack.c.b16 %v4068, %v4062
        %v4501 = vpack.c.b16 %v4069, %v4063
        %v4502 = vpack.c.b16 %v4070, %v4064
        %v4503 = vpack.c.b16 %v4071, %v4065
        %v4504 = vpack.c.b16 %v4072, %v4066
        %v4505 = vpack.c.b16 %v4079, %v4073
        %v4506 = vpack.c.b16 %v4080, %v4074
        %v4507 = vpack.c.b16 %v4081, %v4075
        %v4508 = vpack.c.b16 %v4082, %v4076
        %v4509 = vpack.c.b16 %v4083, %v4077
        %v4510 = vpack.c.b16 %v4084, %v4078
        %v4511 = vpack.c.b16 %v4091, %v4085
        %v4512 = vpack.c.b16 %v4092, %v4086
        %v4513 = vpack.c.b16 %v4093, %v4087
        %v4514 = vpack.c.b16 %v4094, %v4088
        %v4515 = vpack.c.b16 %v4095, %v4089
        %v4516 = vpack.c.b16 %v4096, %v4090
        %v4517 = vpack.c.b16 %v4103, %v4097
        %v4518 = vpack.c.b16 %v4104, %v4098
        %v4519 = vpack.c.b16 %v4105, %v4099
        %v4520 = vpack.c.b16 %v4106, %v4100
        %v4521 = vpack.c.b16 %v4107, %v4101
        %v4522 = vpack.c.b16 %v4108, %v4102
        %v4523 = vpack.c.b16 %v4115, %v4109
        %v4524 = vpack.c.b16 %v4116, %v4110
        %v4525 = vpack.c.b16 %v4117, %v4111
        %v4526 = vpack.c.b16 %v4118, %v4112
        %v4527 = vpack.c.b16 %v4119, %v4113
        %v4528 = vpack.c.b16 %v4120, %v4114
        %v4529 = vpack.c.b16 %v4127, %v4121
        %v4530 = vpack.c.b16 %v4128, %v4122
        %v4531 = vpack.c.b16 %v4129, %v4123
        %v4532 = vpack.c.b16 %v4130, %v4124
        %v4533 = vpack.c.b16 %v4131, %v4125
        %v4534 = vpack.c.b16 %v4132, %v4126
        %v4535 = vpack.c.b16 %v4139, %v4133
        %v4536 = vpack.c.b16 %v4140, %v4134
        %v4537 = vpack.c.b16 %v4141, %v4135
        %v4538 = vpack.c.b16 %v4142, %v4136
        %v4539 = vpack.c.b16 %v4143, %v4137
        %v4540 = vpack.c.b16 %v4144, %v4138
        %v4541 = vpack.c.b16 %v4151, %v4145
        %v4542 = vpack.c.b16 %v4152, %v4146
        %v4543 = vpack.c.b16 %v4153, %v4147
        %v4544 = vpack.c.b16 %v4154, %v4148
        %v4545 = vpack.c.b16 %v4155, %v4149
        %v4546 = vpack.c.b16 %v4156, %v4150
        %v4547 = vpack.c.b16 %v4163, %v4157
        %v4548 = vpack.c.b16 %v4164, %v4158
        %v4549 = vpack.c.b16 %v4165, %v4159
        %v4550 = vpack.c.b16 %v4166, %v4160
        %v4551 = vpack.c.b16 %v4167, %v4161
        %v4552 = vpack.c.b16 %v4168, %v4162
        %v4553 = vpack.c.b16 %v4175, %v4169
        %v4554 = vpack.c.b16 %v4176, %v4170
        %v4555 = vpack.c.b16 %v4177, %v4171
        %v4556 = vpack.c.b16 %v4178, %v4172
        %v4557 = vpack.c.b16 %v4179, %v4173
        %v4558 = vpack.c.b16 %v4180, %v4174
        %v4559 = vpack.c.b16 %v4187, %v4181
        %v4560 = vpack.c.b16 %v4188, %v4182
        %v4561 = vpack.c.b16 %v4189, %v4183
        %v4562 = vpack.c.b16 %v4190, %v4184
        %v4563 = vpack.c.b16 %v4191, %v4185
        %v4564 = vpack.c.b16 %v4192, %v4186
        %v4565 = vpack.c.b16 %v4199, %v4193
        %v4566 = vpack.c.b16 %v4200, %v4194
        %v4567 = vpack.c.b16 %v4201, %v4195
        %v4568 = vpack.c.b16 %v4202, %v4196
        %v4569 = vpack.c.b16 %v4203, %v4197
        %v4570 = vpack.c.b16 %v4204, %v4198
        %v4571 = vpack.c.b16 %v4211, %v4205
        %v4572 = vpack.c.b16 %v4212, %v4206
        %v4573 = vpack.c.b16 %v4213, %v4207
        %v4574 = vpack.c.b16 %v4214, %v4208
        %v4575 = vpack.c.b16 %v4215, %v4209
        %v4576 = vpack.c.b16 %v4216, %v4210
        %v4577 = vpack.c.b16 %v4223, %v4217
        %v4578 = vpack.c.b16 %v4224, %v4218
        %v4579 = vpack.c.b16 %v4225, %v4219
        %v4580 = vpack.c.b16 %v4226, %v4220
        %v4581 = vpack.c.b16 %v4227, %v4221
        %v4582 = vpack.c.b16 %v4228, %v4222
        %v4583 = vpack.c.b16 %v4235, %v4229
        %v4584 = vpack.c.b16 %v4236, %v4230
        %v4585 = vpack.c.b16 %v4237, %v4231
        %v4586 = vpack.c.b16 %v4238, %v4232
        %v4587 = vpack.c.b16 %v4239, %v4233
        %v4588 = vpack.c.b16 %v4240, %v4234
        %v4589 = vpack.c.b16 %v4247, %v4241
        %v4590 = vpack.c.b16 %v4248, %v4242
        %v4591 = vpack.c.b16 %v4249, %v4243
        %v4592 = vpack.c.b16 %v4250, %v4244
        %v4593 = vpack.c.b16 %v4251, %v4245
        %v4594 = vpack.c.b16 %v4252, %v4246
        %v4595 = vpack.c.b16 %v4259, %v4253
        %v4596 = vpack.c.b16 %v4260, %v4254
        %v4597 = vpack.c.b16 %v4261, %v4255
        %v4598 = vpack.c.b16 %v4262, %v4256
        %v4599 = vpack.c.b16 %v4263, %v4257
        %v4600 = vpack.c.b16 %v4264, %v4258
        %v4601 = vpack.c.b16 %v4271, %v4265
        %v4602 = vpack.c.b16 %v4272, %v4266
        %v4603 = vpack.c.b16 %v4273, %v4267
        %v4604 = vpack.c.b16 %v4274, %v4268
        %v4605 = vpack.c.b16 %v4275, %v4269
        %v4606 = vpack.c.b16 %v4276, %v4270
        %v4607 = vpack.c.b16 %v4283, %v4277
        %v4608 = vpack.c.b16 %v4284, %v4278
        %v4609 = vpack.c.b16 %v4285, %v4279
        %v4610 = vpack.c.b16 %v4286, %v4280
        %v4611 = vpack.c.b16 %v4287, %v4281
        %v4612 = vpack.c.b16 %v4288, %v4282
        %v4613 = vpack.c.b16 %v4295, %v4289
        %v4614 = vpack.c.b16 %v4296, %v4290
        %v4615 = vpack.c.b16 %v4297, %v4291
        %v4616 = vpack.c.b16 %v4298, %v4292
        %v4617 = vpack.c.b16 %v4299, %v4293
        %v4618 = vpack.c.b16 %v4300, %v4294
        %v4619 = vpack.c.b16 %v4307, %v4301
        %v4620 = vpack.c.b16 %v4308, %v4302
        %v4621 = vpack.c.b16 %v4309, %v4303
        %v4622 = vpack.c.b16 %v4310, %v4304
        %v4623 = vpack.c.b16 %v4311, %v4305
        %v4624 = vpack.c.b16 %v4312, %v4306
        %v4625 = vpack.c.b16 %v4319, %v4313
        %v4626 = vpack.c.b16 %v4320, %v4314
        %v4627 = vpack.c.b16 %v4321, %v4315
        %v4628 = vpack.c.b16 %v4322, %v4316
        %v4629 = vpack.c.b16 %v4323, %v4317
        %v4630 = vpack.c.b16 %v4324, %v4318
        %v4631 = vpack.c.b16 %v4331, %v4325
        %v4632 = vpack.c.b16 %v4332, %v4326
        %v4633 = vpack.c.b16 %v4333, %v4327
        %v4634 = vpack.c.b16 %v4334, %v4328
        %v4635 = vpack.c.b16 %v4335, %v4329
        %v4636 = vpack.c.b16 %v4336, %v4330
        %v4637 = vpack.c.b16 %v4343, %v4337
        %v4638 = vpack.c.b16 %v4344, %v4338
        %v4639 = vpack.c.b16 %v4345, %v4339
        %v4640 = vpack.c.b16 %v4346, %v4340
        %v4641 = vpack.c.b16 %v4347, %v4341
        %v4642 = vpack.c.b16 %v4348, %v4342
        %v4643 = vpack.c.b16 %v4355, %v4349
        %v4644 = vpack.c.b16 %v4356, %v4350
        %v4645 = vpack.c.b16 %v4357, %v4351
        %v4646 = vpack.c.b16 %v4358, %v4352
        %v4647 = vpack.c.b16 %v4359, %v4353
        %v4648 = vpack.c.b16 %v4360, %v4354
        %4937 = vmatprep.subr.bf16.mxu0 %v4362
        %4938 = vmatpush1.bf16.msra.mxu0 %v4361
        %4939 = vmatprep.subr.bf16.mxu0 %v4368
        %4940 = vmatpush1.bf16.msra.mxu0 %v4367
        %4941 = vmatprep.subr.bf16.mxu0 %v4374
        %4942 = vmatpush1.bf16.msra.mxu0 %v4373
        %4943 = vmatprep.subr.bf16.mxu0 %v4380
        %4944 = vmatpush1.bf16.msra.mxu0 %v4379
        %4945 = vmatprep.subr.bf16.mxu0 %v4386
        %4946 = vmatpush1.bf16.msra.mxu0 %v4385
        %4947 = vmatprep.subr.bf16.mxu0 %v4392
        %4948 = vmatpush1.bf16.msra.mxu0 %v4391
        %4949 = vmatprep.subr.bf16.mxu0 %v4398
        %4950 = vmatpush1.bf16.msra.mxu0 %v4397
        %4951 = vmatprep.subr.bf16.mxu0 %v4404
        %4952 = vmatpush1.bf16.msra.mxu0 %v4403
        %4953 = vmatprep.subr.bf16.mxu0 %v4410
        %4954 = vmatpush1.bf16.msra.mxu0 %v4409
        %4955 = vmatprep.subr.bf16.mxu0 %v4416
        %4956 = vmatpush1.bf16.msra.mxu0 %v4415
        %4957 = vmatprep.subr.bf16.mxu0 %v4422
        %4958 = vmatpush1.bf16.msra.mxu0 %v4421
        %4959 = vmatprep.subr.bf16.mxu0 %v4428
        %4960 = vmatpush1.bf16.msra.mxu0 %v4427
        %4961 = vmatprep.subr.bf16.mxu0 %v4434
        %4962 = vmatpush1.bf16.msra.mxu0 %v4433
        %4963 = vmatprep.subr.bf16.mxu0 %v4440
        %4964 = vmatpush1.bf16.msra.mxu0 %v4439
        %4965 = vmatprep.subr.bf16.mxu0 %v4446
        %4966 = vmatpush1.bf16.msra.mxu0 %v4445
        %4967 = vmatprep.subr.bf16.mxu0 %v4452
        %4968 = vmatpush1.bf16.msra.mxu0 %v4451
        %4969 = vmatprep.mubr.bf16.mxu0 %v3172
        %4970 = vmatmul.mubr.bf16.gmra.mrb[0].mxu0 %v3171
        %v4971 = vpop.f32.mrb[0].mxu0
        %v4972 = vadd.f32 %v3470, %v4971
        %v4973 = vpop.f32.mrb[0].mxu0
        %v4974 = vadd.f32 %v3474, %v4973
        %v4975 = vpop.f32.mrb[0].mxu0
        %v4976 = vpop.f32.mrb[0].mxu0
        %4977 = vdwg.mxu0
        %4978 = vmatprep.subr.bf16.mxu0 %v4458
        %4979 = vmatpush1.bf16.msra.mxu0 %v4457
        %4980 = vmatprep.subr.bf16.mxu0 %v4464
        %4981 = vmatpush1.bf16.msra.mxu0 %v4463
        %4982 = vmatprep.subr.bf16.mxu0 %v4470
        %4983 = vmatpush1.bf16.msra.mxu0 %v4469
        %4984 = vmatprep.subr.bf16.mxu0 %v4476
        %4985 = vmatpush1.bf16.msra.mxu0 %v4475
        %4986 = vmatprep.subr.bf16.mxu0 %v4482
        %4987 = vmatpush1.bf16.msra.mxu0 %v4481
        %4988 = vmatprep.subr.bf16.mxu0 %v4488
        %4989 = vmatpush1.bf16.msra.mxu0 %v4487
        %4990 = vmatprep.subr.bf16.mxu0 %v4494
        %4991 = vmatpush1.bf16.msra.mxu0 %v4493
        %4992 = vmatprep.subr.bf16.mxu0 %v4500
        %4993 = vmatpush1.bf16.msra.mxu0 %v4499
        %4994 = vmatprep.subr.bf16.mxu0 %v4506
        %4995 = vmatpush1.bf16.msra.mxu0 %v4505
        %4996 = vmatprep.subr.bf16.mxu0 %v4512
        %4997 = vmatpush1.bf16.msra.mxu0 %v4511
        %4998 = vmatprep.subr.bf16.mxu0 %v4518
        %4999 = vmatpush1.bf16.msra.mxu0 %v4517
        %5000 = vmatprep.subr.bf16.mxu0 %v4524
        %5001 = vmatpush1.bf16.msra.mxu0 %v4523
        %5002 = vmatprep.subr.bf16.mxu0 %v4530
        %5003 = vmatpush1.bf16.msra.mxu0 %v4529
        %5004 = vmatprep.subr.bf16.mxu0 %v4536
        %5005 = vmatpush1.bf16.msra.mxu0 %v4535
        %5006 = vmatprep.subr.bf16.mxu0 %v4542
        %5007 = vmatpush1.bf16.msra.mxu0 %v4541
        %5008 = vmatprep.subr.bf16.mxu0 %v4548
        %5009 = vmatpush1.bf16.msra.mxu0 %v4547
        %5010 = vmatprep.mubr.bf16.mxu0 %v3174
        %5011 = vmatmul.mubr.bf16.gmra.mrb[0].mxu0 %v3173
        %v5012 = vpop.f32.mrb[0].mxu0
        %v5013 = vadd.f32 %v4972, %v5012
        %v5014 = vpop.f32.mrb[0].mxu0
        %v5015 = vadd.f32 %v4974, %v5014
        %v5016 = vpop.f32.mrb[0].mxu0
        %v5017 = vpop.f32.mrb[0].mxu0
        %5018 = vdwg.mxu0
        %5019 = vmatprep.subr.bf16.mxu0 %v4554
        %5020 = vmatpush1.bf16.msra.mxu0 %v4553
        %5021 = vmatprep.subr.bf16.mxu0 %v4560
        %5022 = vmatpush1.bf16.msra.mxu0 %v4559
        %5023 = vmatprep.subr.bf16.mxu0 %v4566
        %5024 = vmatpush1.bf16.msra.mxu0 %v4565
        %5025 = vmatprep.subr.bf16.mxu0 %v4572
        %5026 = vmatpush1.bf16.msra.mxu0 %v4571
        %5027 = vmatprep.subr.bf16.mxu0 %v4578
        %5028 = vmatpush1.bf16.msra.mxu0 %v4577
        %5029 = vmatprep.subr.bf16.mxu0 %v4584
        %5030 = vmatpush1.bf16.msra.mxu0 %v4583
        %5031 = vmatprep.subr.bf16.mxu0 %v4590
        %5032 = vmatpush1.bf16.msra.mxu0 %v4589
        %5033 = vmatprep.subr.bf16.mxu0 %v4596
        %5034 = vmatpush1.bf16.msra.mxu0 %v4595
        %5035 = vmatprep.subr.bf16.mxu0 %v4602
        %5036 = vmatpush1.bf16.msra.mxu0 %v4601
        %5037 = vmatprep.subr.bf16.mxu0 %v4608
        %5038 = vmatpush1.bf16.msra.mxu0 %v4607
        %5039 = vmatprep.subr.bf16.mxu0 %v4614
        %5040 = vmatpush1.bf16.msra.mxu0 %v4613
        %5041 = vmatprep.subr.bf16.mxu0 %v4620
        %5042 = vmatpush1.bf16.msra.mxu0 %v4619
        %5043 = vmatprep.subr.bf16.mxu0 %v4626
        %5044 = vmatpush1.bf16.msra.mxu0 %v4625
        %5045 = vmatprep.subr.bf16.mxu0 %v4632
        %5046 = vmatpush1.bf16.msra.mxu0 %v4631
        %5047 = vmatprep.subr.bf16.mxu0 %v4638
        %5048 = vmatpush1.bf16.msra.mxu0 %v4637
        %5049 = vmatprep.subr.bf16.mxu0 %v4644
        %5050 = vmatpush1.bf16.msra.mxu0 %v4643
        %5051 = vmatprep.mubr.bf16.mxu0 %v3176
        %5052 = vmatmul.mubr.bf16.gmra.mrb[0].mxu0 %v3175
        %v5053 = vpop.f32.mrb[0].mxu0
        %v5054 = vadd.f32 %v5013, %v5053
        %v5055 = vpop.f32.mrb[0].mxu0
        %v5056 = vadd.f32 %v5015, %v5055
        %v5057 = vpop.f32.mrb[0].mxu0
        %v5058 = vpop.f32.mrb[0].mxu0
        %5059 = vdwg.mxu0
        %5060 = vmatprep.subr.bf16.mxu0 %v4364
        %5061 = vmatpush1.bf16.msra.mxu0 %v4363
        %5062 = vmatprep.subr.bf16.mxu0 %v4370
        %5063 = vmatpush1.bf16.msra.mxu0 %v4369
        %5064 = vmatprep.subr.bf16.mxu0 %v4376
        %5065 = vmatpush1.bf16.msra.mxu0 %v4375
        %5066 = vmatprep.subr.bf16.mxu0 %v4382
        %5067 = vmatpush1.bf16.msra.mxu0 %v4381
        %5068 = vmatprep.subr.bf16.mxu0 %v4388
        %5069 = vmatpush1.bf16.msra.mxu0 %v4387
        %5070 = vmatprep.subr.bf16.mxu0 %v4394
        %5071 = vmatpush1.bf16.msra.mxu0 %v4393
        %5072 = vmatprep.subr.bf16.mxu0 %v4400
        %5073 = vmatpush1.bf16.msra.mxu0 %v4399
        %5074 = vmatprep.subr.bf16.mxu0 %v4406
        %5075 = vmatpush1.bf16.msra.mxu0 %v4405
        %5076 = vmatprep.subr.bf16.mxu0 %v4412
        %5077 = vmatpush1.bf16.msra.mxu0 %v4411
        %5078 = vmatprep.subr.bf16.mxu0 %v4418
        %5079 = vmatpush1.bf16.msra.mxu0 %v4417
        %5080 = vmatprep.subr.bf16.mxu0 %v4424
        %5081 = vmatpush1.bf16.msra.mxu0 %v4423
        %5082 = vmatprep.subr.bf16.mxu0 %v4430
        %5083 = vmatpush1.bf16.msra.mxu0 %v4429
        %5084 = vmatprep.subr.bf16.mxu0 %v4436
        %5085 = vmatpush1.bf16.msra.mxu0 %v4435
        %5086 = vmatprep.subr.bf16.mxu0 %v4442
        %5087 = vmatpush1.bf16.msra.mxu0 %v4441
        %5088 = vmatprep.subr.bf16.mxu0 %v4448
        %5089 = vmatpush1.bf16.msra.mxu0 %v4447
        %5090 = vmatprep.subr.bf16.mxu0 %v4454
        %5091 = vmatpush1.bf16.msra.mxu0 %v4453
        %5092 = vmatprep.mubr.bf16.mxu0 %v3172
        %5093 = vmatmul.mubr.bf16.gmra.mrb[0].mxu0 %v3171
        %v5094 = vpop.f32.mrb[0].mxu0
        %v5095 = vadd.f32 %v3478, %v5094
        %v5096 = vpop.f32.mrb[0].mxu0
        %v5097 = vadd.f32 %v3482, %v5096
        %v5098 = vpop.f32.mrb[0].mxu0
        %v5099 = vpop.f32.mrb[0].mxu0
        %5100 = vdwg.mxu0
        %5101 = vmatprep.subr.bf16.mxu0 %v4460
        %5102 = vmatpush1.bf16.msra.mxu0 %v4459
        %5103 = vmatprep.subr.bf16.mxu0 %v4466
        %5104 = vmatpush1.bf16.msra.mxu0 %v4465
        %5105 = vmatprep.subr.bf16.mxu0 %v4472
        %5106 = vmatpush1.bf16.msra.mxu0 %v4471
        %5107 = vmatprep.subr.bf16.mxu0 %v4478
        %5108 = vmatpush1.bf16.msra.mxu0 %v4477
        %5109 = vmatprep.subr.bf16.mxu0 %v4484
        %5110 = vmatpush1.bf16.msra.mxu0 %v4483
        %5111 = vmatprep.subr.bf16.mxu0 %v4490
        %5112 = vmatpush1.bf16.msra.mxu0 %v4489
        %5113 = vmatprep.subr.bf16.mxu0 %v4496
        %5114 = vmatpush1.bf16.msra.mxu0 %v4495
        %5115 = vmatprep.subr.bf16.mxu0 %v4502
        %5116 = vmatpush1.bf16.msra.mxu0 %v4501
        %5117 = vmatprep.subr.bf16.mxu0 %v4508
        %5118 = vmatpush1.bf16.msra.mxu0 %v4507
        %5119 = vmatprep.subr.bf16.mxu0 %v4514
        %5120 = vmatpush1.bf16.msra.mxu0 %v4513
        %5121 = vmatprep.subr.bf16.mxu0 %v4520
        %5122 = vmatpush1.bf16.msra.mxu0 %v4519
        %5123 = vmatprep.subr.bf16.mxu0 %v4526
        %5124 = vmatpush1.bf16.msra.mxu0 %v4525
        %5125 = vmatprep.subr.bf16.mxu0 %v4532
        %5126 = vmatpush1.bf16.msra.mxu0 %v4531
        %5127 = vmatprep.subr.bf16.mxu0 %v4538
        %5128 = vmatpush1.bf16.msra.mxu0 %v4537
        %5129 = vmatprep.subr.bf16.mxu0 %v4544
        %5130 = vmatpush1.bf16.msra.mxu0 %v4543
        %5131 = vmatprep.subr.bf16.mxu0 %v4550
        %5132 = vmatpush1.bf16.msra.mxu0 %v4549
        %5133 = vmatprep.mubr.bf16.mxu0 %v3174
        %5134 = vmatmul.mubr.bf16.gmra.mrb[0].mxu0 %v3173
        %v5135 = vpop.f32.mrb[0].mxu0
        %v5136 = vadd.f32 %v5095, %v5135
        %v5137 = vpop.f32.mrb[0].mxu0
        %v5138 = vadd.f32 %v5097, %v5137
        %v5139 = vpop.f32.mrb[0].mxu0
        %v5140 = vpop.f32.mrb[0].mxu0
        %5141 = vdwg.mxu0
        %5142 = vmatprep.subr.bf16.mxu0 %v4556
        %5143 = vmatpush1.bf16.msra.mxu0 %v4555
        %5144 = vmatprep.subr.bf16.mxu0 %v4562
        %5145 = vmatpush1.bf16.msra.mxu0 %v4561
        %5146 = vmatprep.subr.bf16.mxu0 %v4568
        %5147 = vmatpush1.bf16.msra.mxu0 %v4567
        %5148 = vmatprep.subr.bf16.mxu0 %v4574
        %5149 = vmatpush1.bf16.msra.mxu0 %v4573
        %5150 = vmatprep.subr.bf16.mxu0 %v4580
        %5151 = vmatpush1.bf16.msra.mxu0 %v4579
        %5152 = vmatprep.subr.bf16.mxu0 %v4586
        %5153 = vmatpush1.bf16.msra.mxu0 %v4585
        %5154 = vmatprep.subr.bf16.mxu0 %v4592
        %5155 = vmatpush1.bf16.msra.mxu0 %v4591
        %5156 = vmatprep.subr.bf16.mxu0 %v4598
        %5157 = vmatpush1.bf16.msra.mxu0 %v4597
        %5158 = vmatprep.subr.bf16.mxu0 %v4604
        %5159 = vmatpush1.bf16.msra.mxu0 %v4603
        %5160 = vmatprep.subr.bf16.mxu0 %v4610
        %5161 = vmatpush1.bf16.msra.mxu0 %v4609
        %5162 = vmatprep.subr.bf16.mxu0 %v4616
        %5163 = vmatpush1.bf16.msra.mxu0 %v4615
        %5164 = vmatprep.subr.bf16.mxu0 %v4622
        %5165 = vmatpush1.bf16.msra.mxu0 %v4621
        %5166 = vmatprep.subr.bf16.mxu0 %v4628
        %5167 = vmatpush1.bf16.msra.mxu0 %v4627
        %5168 = vmatprep.subr.bf16.mxu0 %v4634
        %5169 = vmatpush1.bf16.msra.mxu0 %v4633
        %5170 = vmatprep.subr.bf16.mxu0 %v4640
        %5171 = vmatpush1.bf16.msra.mxu0 %v4639
        %5172 = vmatprep.subr.bf16.mxu0 %v4646
        %5173 = vmatpush1.bf16.msra.mxu0 %v4645
        %5174 = vmatprep.mubr.bf16.mxu0 %v3176
        %5175 = vmatmul.mubr.bf16.gmra.mrb[0].mxu0 %v3175
        %v5176 = vpop.f32.mrb[0].mxu0
        %v5177 = vadd.f32 %v5136, %v5176
        %v5178 = vpop.f32.mrb[0].mxu0
        %v5179 = vadd.f32 %v5138, %v5178
        %v5180 = vpop.f32.mrb[0].mxu0
        %v5181 = vpop.f32.mrb[0].mxu0
        %5182 = vdwg.mxu0
        %5183 = vmatprep.subr.bf16.mxu0 %v4366
        %5184 = vmatpush1.bf16.msra.mxu0 %v4365
        %5185 = vmatprep.subr.bf16.mxu0 %v4372
        %5186 = vmatpush1.bf16.msra.mxu0 %v4371
        %5187 = vmatprep.subr.bf16.mxu0 %v4378
        %5188 = vmatpush1.bf16.msra.mxu0 %v4377
        %5189 = vmatprep.subr.bf16.mxu0 %v4384
        %5190 = vmatpush1.bf16.msra.mxu0 %v4383
        %5191 = vmatprep.subr.bf16.mxu0 %v4390
        %5192 = vmatpush1.bf16.msra.mxu0 %v4389
        %5193 = vmatprep.subr.bf16.mxu0 %v4396
        %5194 = vmatpush1.bf16.msra.mxu0 %v4395
        %5195 = vmatprep.subr.bf16.mxu0 %v4402
        %5196 = vmatpush1.bf16.msra.mxu0 %v4401
        %5197 = vmatprep.subr.bf16.mxu0 %v4408
        %5198 = vmatpush1.bf16.msra.mxu0 %v4407
        %5199 = vmatprep.subr.bf16.mxu0 %v4414
        %5200 = vmatpush1.bf16.msra.mxu0 %v4413
        %5201 = vmatprep.subr.bf16.mxu0 %v4420
        %5202 = vmatpush1.bf16.msra.mxu0 %v4419
        %5203 = vmatprep.subr.bf16.mxu0 %v4426
        %5204 = vmatpush1.bf16.msra.mxu0 %v4425
        %5205 = vmatprep.subr.bf16.mxu0 %v4432
        %5206 = vmatpush1.bf16.msra.mxu0 %v4431
        %5207 = vmatprep.subr.bf16.mxu0 %v4438
        %5208 = vmatpush1.bf16.msra.mxu0 %v4437
        %5209 = vmatprep.subr.bf16.mxu0 %v4444
        %5210 = vmatpush1.bf16.msra.mxu0 %v4443
        %5211 = vmatprep.subr.bf16.mxu0 %v4450
        %5212 = vmatpush1.bf16.msra.mxu0 %v4449
        %5213 = vmatprep.subr.bf16.mxu0 %v4456
        %5214 = vmatpush1.bf16.msra.mxu0 %v4455
        %5215 = vmatprep.mubr.bf16.mxu0 %v3172
        %5216 = vmatmul.mubr.bf16.gmra.mrb[0].mxu0 %v3171
        %v5217 = vpop.f32.mrb[0].mxu0
        %v5218 = vadd.f32 %v3486, %v5217
        %v5219 = vpop.f32.mrb[0].mxu0
        %v5220 = vadd.f32 %v3490, %v5219
        %v5221 = vpop.f32.mrb[0].mxu0
        %v5222 = vpop.f32.mrb[0].mxu0
        %5223 = vdwg.mxu0
        %5224 = vmatprep.subr.bf16.mxu0 %v4462
        %5225 = vmatpush1.bf16.msra.mxu0 %v4461
        %5226 = vmatprep.subr.bf16.mxu0 %v4468
        %5227 = vmatpush1.bf16.msra.mxu0 %v4467
        %5228 = vmatprep.subr.bf16.mxu0 %v4474
        %5229 = vmatpush1.bf16.msra.mxu0 %v4473
        %5230 = vmatprep.subr.bf16.mxu0 %v4480
        %5231 = vmatpush1.bf16.msra.mxu0 %v4479
        %5232 = vmatprep.subr.bf16.mxu0 %v4486
        %5233 = vmatpush1.bf16.msra.mxu0 %v4485
        %5234 = vmatprep.subr.bf16.mxu0 %v4492
        %5235 = vmatpush1.bf16.msra.mxu0 %v4491
        %5236 = vmatprep.subr.bf16.mxu0 %v4498
        %5237 = vmatpush1.bf16.msra.mxu0 %v4497
        %5238 = vmatprep.subr.bf16.mxu0 %v4504
        %5239 = vmatpush1.bf16.msra.mxu0 %v4503
        %5240 = vmatprep.subr.bf16.mxu0 %v4510
        %5241 = vmatpush1.bf16.msra.mxu0 %v4509
        %5242 = vmatprep.subr.bf16.mxu0 %v4516
        %5243 = vmatpush1.bf16.msra.mxu0 %v4515
        %5244 = vmatprep.subr.bf16.mxu0 %v4522
        %5245 = vmatpush1.bf16.msra.mxu0 %v4521
        %5246 = vmatprep.subr.bf16.mxu0 %v4528
        %5247 = vmatpush1.bf16.msra.mxu0 %v4527
        %5248 = vmatprep.subr.bf16.mxu0 %v4534
        %5249 = vmatpush1.bf16.msra.mxu0 %v4533
        %5250 = vmatprep.subr.bf16.mxu0 %v4540
        %5251 = vmatpush1.bf16.msra.mxu0 %v4539
        %5252 = vmatprep.subr.bf16.mxu0 %v4546
        %5253 = vmatpush1.bf16.msra.mxu0 %v4545
        %5254 = vmatprep.subr.bf16.mxu0 %v4552
        %5255 = vmatpush1.bf16.msra.mxu0 %v4551
        %5256 = vmatprep.mubr.bf16.mxu0 %v3174
        %5257 = vmatmul.mubr.bf16.gmra.mrb[0].mxu0 %v3173
        %v5258 = vpop.f32.mrb[0].mxu0
        %v5259 = vadd.f32 %v5218, %v5258
        %v5260 = vpop.f32.mrb[0].mxu0
        %v5261 = vadd.f32 %v5220, %v5260
        %v5262 = vpop.f32.mrb[0].mxu0
        %v5263 = vpop.f32.mrb[0].mxu0
        %5264 = vdwg.mxu0
        %5265 = vmatprep.subr.bf16.mxu0 %v4558
        %5266 = vmatpush1.bf16.msra.mxu0 %v4557
        %5267 = vmatprep.subr.bf16.mxu0 %v4564
        %5268 = vmatpush1.bf16.msra.mxu0 %v4563
        %5269 = vmatprep.subr.bf16.mxu0 %v4570
        %5270 = vmatpush1.bf16.msra.mxu0 %v4569
        %5271 = vmatprep.subr.bf16.mxu0 %v4576
        %5272 = vmatpush1.bf16.msra.mxu0 %v4575
        %5273 = vmatprep.subr.bf16.mxu0 %v4582
        %5274 = vmatpush1.bf16.msra.mxu0 %v4581
        %5275 = vmatprep.subr.bf16.mxu0 %v4588
        %5276 = vmatpush1.bf16.msra.mxu0 %v4587
        %5277 = vmatprep.subr.bf16.mxu0 %v4594
        %5278 = vmatpush1.bf16.msra.mxu0 %v4593
        %5279 = vmatprep.subr.bf16.mxu0 %v4600
        %5280 = vmatpush1.bf16.msra.mxu0 %v4599
        %5281 = vmatprep.subr.bf16.mxu0 %v4606
        %5282 = vmatpush1.bf16.msra.mxu0 %v4605
        %5283 = vmatprep.subr.bf16.mxu0 %v4612
        %5284 = vmatpush1.bf16.msra.mxu0 %v4611
        %5285 = vmatprep.subr.bf16.mxu0 %v4618
        %5286 = vmatpush1.bf16.msra.mxu0 %v4617
        %5287 = vmatprep.subr.bf16.mxu0 %v4624
        %5288 = vmatpush1.bf16.msra.mxu0 %v4623
        %5289 = vmatprep.subr.bf16.mxu0 %v4630
        %5290 = vmatpush1.bf16.msra.mxu0 %v4629
        %5291 = vmatprep.subr.bf16.mxu0 %v4636
        %5292 = vmatpush1.bf16.msra.mxu0 %v4635
        %5293 = vmatprep.subr.bf16.mxu0 %v4642
        %5294 = vmatpush1.bf16.msra.mxu0 %v4641
        %5295 = vmatprep.subr.bf16.mxu0 %v4648
        %5296 = vmatpush1.bf16.msra.mxu0 %v4647
        %5297 = vmatprep.mubr.bf16.mxu0 %v3176
        %5298 = vmatmul.mubr.bf16.gmra.mrb[0].mxu0 %v3175
        %v5299 = vpop.f32.mrb[0].mxu0
        %v5300 = vadd.f32 %v5259, %v5299
        %v5301 = vpop.f32.mrb[0].mxu0
        %v5302 = vadd.f32 %v5261, %v5301
        %v5303 = vpop.f32.mrb[0].mxu0
        %v5304 = vpop.f32.mrb[0].mxu0
        %5305 = vdwg.mxu0
        %v5306 = vtanh.pop %v5054
        %v5307 = vtanh.pop %v5056
        %v5308 = vtanh.pop %v5177
        %v5309 = vtanh.pop %v5179
        %v5310 = vtanh.pop %v5300
        %v5311 = vtanh.pop %v5302
        %v5312 = vlaneseq
        %v5313 = vshrl.u32 %v5312, 7
        %vm5314 = vcmp.eq.s32.totalorder %v5313, 0
        %v5315 = vsel %vm5314, 1, 0
        %vm5316 = vcmp.eq.s32.totalorder %v5315, 1
        %v5317 = vsel %vm5316, %v5306, 0.0
        %v5318 = vsel %vm5316, %v5307, 0.0
        %v5319 = vsel %vm5316, %v5308, 0.0
        %v5320 = vsel %vm5316, %v5309, 0.0
        %v5321 = vsel %vm5316, %v5310, 0.0
        %v5322 = vsel %vm5316, %v5311, 0.0
        %vm5323 = vcmp.eq.s32.totalorder %v5313, 1
        %v5324 = vsel %vm5323, 1, 0
        %vm5325 = vcmp.eq.s32.totalorder %v5324, 1
        %v5326 = vsel %vm5325, %v5306, 0.0
        %v5327 = vsel %vm5325, %v5307, 0.0
        %v5328 = vsel %vm5325, %v5308, 0.0
        %v5329 = vsel %vm5325, %v5309, 0.0
        %v5330 = vsel %vm5325, %v5310, 0.0
        %v5331 = vsel %vm5325, %v5311, 0.0
        %v5332 = vpack.c.bf16 %v5317, %v5317
        %v5333 = vpack.c.bf16 %v5318, %v5318
        %v5334 = vpack.c.bf16 %v5319, %v5319
        %v5335 = vpack.c.bf16 %v5320, %v5320
        %v5336 = vpack.c.bf16 %v5321, %v5321
        %v5337 = vpack.c.bf16 %v5322, %v5322
        %v5338 = vpack.c.bf16 %v5326, %v5326
        %v5339 = vpack.c.bf16 %v5327, %v5327
        %v5340 = vpack.c.bf16 %v5328, %v5328
        %v5341 = vpack.c.bf16 %v5329, %v5329
        %v5342 = vpack.c.bf16 %v5330, %v5330
        %v5343 = vpack.c.bf16 %v5331, %v5331
        %v5344 = vld [vmem:[#allocation7] sm:$0xff]
        %v5345 = vld [vmem:[#allocation7 + $0x8] sm:$0xff]
        %v5346 = vld [vmem:[#allocation7 + $0x10] sm:$0xff]
        %v5347 = vld [vmem:[#allocation7 + $0x18] sm:$0xff]
        %v5348 = vld [vmem:[#allocation7 + $0x20] sm:$0xff]
        %v5349 = vld [vmem:[#allocation7 + $0x28] sm:$0xff]
        %v5350 = vld [vmem:[#allocation7 + $0x30] sm:$0xff]
        %v5351 = vld [vmem:[#allocation7 + $0x38] sm:$0xff]
        %v5352 = vld [vmem:[#allocation7 + $0x40] sm:$0xff]
        %v5353 = vld [vmem:[#allocation7 + $0x48] sm:$0xff]
        %v5354 = vld [vmem:[#allocation7 + $0x50] sm:$0xff]
        %v5355 = vld [vmem:[#allocation7 + $0x58] sm:$0xff]
        %v5356 = vld [vmem:[#allocation7 + $0x60] sm:$0xff]
        %v5357 = vld [vmem:[#allocation7 + $0x68] sm:$0xff]
        %v5358 = vld [vmem:[#allocation7 + $0x70] sm:$0xff]
        %v5359 = vld [vmem:[#allocation7 + $0x78] sm:$0xff]
        %v5360 = vld [vmem:[#allocation7 + $0x80] sm:$0xff]
        %v5361 = vld [vmem:[#allocation7 + $0x88] sm:$0xff]
        %v5362 = vld [vmem:[#allocation7 + $0x90] sm:$0xff]
        %v5363 = vld [vmem:[#allocation7 + $0x98] sm:$0xff]
        %v5364 = vld [vmem:[#allocation7 + $0xa0] sm:$0xff]
        %v5365 = vld [vmem:[#allocation7 + $0xa8] sm:$0xff]
        %v5366 = vld [vmem:[#allocation7 + $0xb0] sm:$0xff]
        %v5367 = vld [vmem:[#allocation7 + $0xb8] sm:$0xff]
        %v5368 = vld [vmem:[#allocation7 + $0xc0] sm:$0xff]
        %v5369 = vld [vmem:[#allocation7 + $0xc8] sm:$0xff]
        %v5370 = vld [vmem:[#allocation7 + $0xd0] sm:$0xff]
        %v5371 = vld [vmem:[#allocation7 + $0xd8] sm:$0xff]
        %v5372 = vld [vmem:[#allocation7 + $0xe0] sm:$0xff]
        %v5373 = vld [vmem:[#allocation7 + $0xe8] sm:$0xff]
        %v5374 = vld [vmem:[#allocation7 + $0xf0] sm:$0xff]
        %v5375 = vld [vmem:[#allocation7 + $0xf8] sm:$0xff]
        %v5376 = vld [vmem:[#allocation7 + $0x100] sm:$0xff]
        %v5377 = vld [vmem:[#allocation7 + $0x108] sm:$0xff]
        %v5378 = vld [vmem:[#allocation7 + $0x110] sm:$0xff]
        %v5379 = vld [vmem:[#allocation7 + $0x118] sm:$0xff]
        %v5380 = vld [vmem:[#allocation7 + $0x120] sm:$0xff]
        %v5381 = vld [vmem:[#allocation7 + $0x128] sm:$0xff]
        %v5382 = vld [vmem:[#allocation7 + $0x130] sm:$0xff]
        %v5383 = vld [vmem:[#allocation7 + $0x138] sm:$0xff]
        %v5384 = vld [vmem:[#allocation7 + $0x140] sm:$0xff]
        %v5385 = vld [vmem:[#allocation7 + $0x148] sm:$0xff]
        %v5386 = vld [vmem:[#allocation7 + $0x150] sm:$0xff]
        %v5387 = vld [vmem:[#allocation7 + $0x158] sm:$0xff]
        %v5388 = vld [vmem:[#allocation7 + $0x160] sm:$0xff]
        %v5389 = vld [vmem:[#allocation7 + $0x168] sm:$0xff]
        %v5390 = vld [vmem:[#allocation7 + $0x170] sm:$0xff]
        %v5391 = vld [vmem:[#allocation7 + $0x178] sm:$0xff]
        %v5392 = vld [vmem:[#allocation7 + $0x180] sm:$0xff]
        %v5393 = vld [vmem:[#allocation7 + $0x188] sm:$0xff]
        %v5394 = vld [vmem:[#allocation7 + $0x190] sm:$0xff]
        %v5395 = vld [vmem:[#allocation7 + $0x198] sm:$0xff]
        %v5396 = vld [vmem:[#allocation7 + $0x1a0] sm:$0xff]
        %v5397 = vld [vmem:[#allocation7 + $0x1a8] sm:$0xff]
        %v5398 = vld [vmem:[#allocation7 + $0x1b0] sm:$0xff]
        %v5399 = vld [vmem:[#allocation7 + $0x1b8] sm:$0xff]
        %v5400 = vld [vmem:[#allocation7 + $0x1c0] sm:$0xff]
        %v5401 = vld [vmem:[#allocation7 + $0x1c8] sm:$0xff]
        %v5402 = vld [vmem:[#allocation7 + $0x1d0] sm:$0xff]
        %v5403 = vld [vmem:[#allocation7 + $0x1d8] sm:$0xff]
        %v5404 = vld [vmem:[#allocation7 + $0x1e0] sm:$0xff]
        %v5405 = vld [vmem:[#allocation7 + $0x1e8] sm:$0xff]
        %v5406 = vld [vmem:[#allocation7 + $0x1f0] sm:$0xff]
        %v5407 = vld [vmem:[#allocation7 + $0x1f8] sm:$0xff]
        %v5408 = vld [vmem:[#allocation7 + $0x200] sm:$0xff]
        %v5409 = vld [vmem:[#allocation7 + $0x208] sm:$0xff]
        %v5410 = vld [vmem:[#allocation7 + $0x210] sm:$0xff]
        %v5411 = vld [vmem:[#allocation7 + $0x218] sm:$0xff]
        %v5412 = vld [vmem:[#allocation7 + $0x220] sm:$0xff]
        %v5413 = vld [vmem:[#allocation7 + $0x228] sm:$0xff]
        %v5414 = vld [vmem:[#allocation7 + $0x230] sm:$0xff]
        %v5415 = vld [vmem:[#allocation7 + $0x238] sm:$0xff]
        %v5416 = vld [vmem:[#allocation7 + $0x240] sm:$0xff]
        %v5417 = vld [vmem:[#allocation7 + $0x248] sm:$0xff]
        %v5418 = vld [vmem:[#allocation7 + $0x250] sm:$0xff]
        %v5419 = vld [vmem:[#allocation7 + $0x258] sm:$0xff]
        %v5420 = vld [vmem:[#allocation7 + $0x260] sm:$0xff]
        %v5421 = vld [vmem:[#allocation7 + $0x268] sm:$0xff]
        %v5422 = vld [vmem:[#allocation7 + $0x270] sm:$0xff]
        %v5423 = vld [vmem:[#allocation7 + $0x278] sm:$0xff]
        %v5424 = vld [vmem:[#allocation7 + $0x280] sm:$0xff]
        %v5425 = vld [vmem:[#allocation7 + $0x288] sm:$0xff]
        %v5426 = vld [vmem:[#allocation7 + $0x290] sm:$0xff]
        %v5427 = vld [vmem:[#allocation7 + $0x298] sm:$0xff]
        %v5428 = vld [vmem:[#allocation7 + $0x2a0] sm:$0xff]
        %v5429 = vld [vmem:[#allocation7 + $0x2a8] sm:$0xff]
        %v5430 = vld [vmem:[#allocation7 + $0x2b0] sm:$0xff]
        %v5431 = vld [vmem:[#allocation7 + $0x2b8] sm:$0xff]
        %v5432 = vld [vmem:[#allocation7 + $0x2c0] sm:$0xff]
        %v5433 = vld [vmem:[#allocation7 + $0x2c8] sm:$0xff]
        %v5434 = vld [vmem:[#allocation7 + $0x2d0] sm:$0xff]
        %v5435 = vld [vmem:[#allocation7 + $0x2d8] sm:$0xff]
        %v5436 = vld [vmem:[#allocation7 + $0x2e0] sm:$0xff]
        %v5437 = vld [vmem:[#allocation7 + $0x2e8] sm:$0xff]
        %v5438 = vld [vmem:[#allocation7 + $0x2f0] sm:$0xff]
        %v5439 = vld [vmem:[#allocation7 + $0x2f8] sm:$0xff]
        %v5440 = vld [vmem:[#allocation7 + $0x300] sm:$0xff]
        %v5441 = vld [vmem:[#allocation7 + $0x308] sm:$0xff]
        %v5442 = vld [vmem:[#allocation7 + $0x310] sm:$0xff]
        %v5443 = vld [vmem:[#allocation7 + $0x318] sm:$0xff]
        %v5444 = vld [vmem:[#allocation7 + $0x320] sm:$0xff]
        %v5445 = vld [vmem:[#allocation7 + $0x328] sm:$0xff]
        %v5446 = vld [vmem:[#allocation7 + $0x330] sm:$0xff]
        %v5447 = vld [vmem:[#allocation7 + $0x338] sm:$0xff]
        %v5448 = vld [vmem:[#allocation7 + $0x340] sm:$0xff]
        %v5449 = vld [vmem:[#allocation7 + $0x348] sm:$0xff]
        %v5450 = vld [vmem:[#allocation7 + $0x350] sm:$0xff]
        %v5451 = vld [vmem:[#allocation7 + $0x358] sm:$0xff]
        %v5452 = vld [vmem:[#allocation7 + $0x360] sm:$0xff]
        %v5453 = vld [vmem:[#allocation7 + $0x368] sm:$0xff]
        %v5454 = vld [vmem:[#allocation7 + $0x370] sm:$0xff]
        %v5455 = vld [vmem:[#allocation7 + $0x378] sm:$0xff]
        %v5456 = vld [vmem:[#allocation7 + $0x380] sm:$0xff]
        %v5457 = vld [vmem:[#allocation7 + $0x388] sm:$0xff]
        %v5458 = vld [vmem:[#allocation7 + $0x390] sm:$0xff]
        %v5459 = vld [vmem:[#allocation7 + $0x398] sm:$0xff]
        %v5460 = vld [vmem:[#allocation7 + $0x3a0] sm:$0xff]
        %v5461 = vld [vmem:[#allocation7 + $0x3a8] sm:$0xff]
        %v5462 = vld [vmem:[#allocation7 + $0x3b0] sm:$0xff]
        %v5463 = vld [vmem:[#allocation7 + $0x3b8] sm:$0xff]
        %v5464 = vld [vmem:[#allocation7 + $0x3c0] sm:$0xff]
        %v5465 = vld [vmem:[#allocation7 + $0x3c8] sm:$0xff]
        %v5466 = vld [vmem:[#allocation7 + $0x3d0] sm:$0xff]
        %v5467 = vld [vmem:[#allocation7 + $0x3d8] sm:$0xff]
        %v5468 = vld [vmem:[#allocation7 + $0x3e0] sm:$0xff]
        %v5469 = vld [vmem:[#allocation7 + $0x3e8] sm:$0xff]
        %v5470 = vld [vmem:[#allocation7 + $0x3f0] sm:$0xff]
        %v5471 = vld [vmem:[#allocation7 + $0x3f8] sm:$0xff]
        %v5472 = vld [vmem:[#allocation7 + $0x400] sm:$0xff]
        %v5473 = vld [vmem:[#allocation7 + $0x408] sm:$0xff]
        %v5474 = vld [vmem:[#allocation7 + $0x410] sm:$0xff]
        %v5475 = vld [vmem:[#allocation7 + $0x418] sm:$0xff]
        %v5476 = vld [vmem:[#allocation7 + $0x420] sm:$0xff]
        %v5477 = vld [vmem:[#allocation7 + $0x428] sm:$0xff]
        %v5478 = vld [vmem:[#allocation7 + $0x430] sm:$0xff]
        %v5479 = vld [vmem:[#allocation7 + $0x438] sm:$0xff]
        %v5480 = vld [vmem:[#allocation7 + $0x440] sm:$0xff]
        %v5481 = vld [vmem:[#allocation7 + $0x448] sm:$0xff]
        %v5482 = vld [vmem:[#allocation7 + $0x450] sm:$0xff]
        %v5483 = vld [vmem:[#allocation7 + $0x458] sm:$0xff]
        %v5484 = vld [vmem:[#allocation7 + $0x460] sm:$0xff]
        %v5485 = vld [vmem:[#allocation7 + $0x468] sm:$0xff]
        %v5486 = vld [vmem:[#allocation7 + $0x470] sm:$0xff]
        %v5487 = vld [vmem:[#allocation7 + $0x478] sm:$0xff]
        %v5488 = vld [vmem:[#allocation7 + $0x480] sm:$0xff]
        %v5489 = vld [vmem:[#allocation7 + $0x488] sm:$0xff]
        %v5490 = vld [vmem:[#allocation7 + $0x490] sm:$0xff]
        %v5491 = vld [vmem:[#allocation7 + $0x498] sm:$0xff]
        %v5492 = vld [vmem:[#allocation7 + $0x4a0] sm:$0xff]
        %v5493 = vld [vmem:[#allocation7 + $0x4a8] sm:$0xff]
        %v5494 = vld [vmem:[#allocation7 + $0x4b0] sm:$0xff]
        %v5495 = vld [vmem:[#allocation7 + $0x4b8] sm:$0xff]
        %v5496 = vld [vmem:[#allocation7 + $0x4c0] sm:$0xff]
        %v5497 = vld [vmem:[#allocation7 + $0x4c8] sm:$0xff]
        %v5498 = vld [vmem:[#allocation7 + $0x4d0] sm:$0xff]
        %v5499 = vld [vmem:[#allocation7 + $0x4d8] sm:$0xff]
        %v5500 = vld [vmem:[#allocation7 + $0x4e0] sm:$0xff]
        %v5501 = vld [vmem:[#allocation7 + $0x4e8] sm:$0xff]
        %v5502 = vld [vmem:[#allocation7 + $0x4f0] sm:$0xff]
        %v5503 = vld [vmem:[#allocation7 + $0x4f8] sm:$0xff]
        %v5504 = vld [vmem:[#allocation7 + $0x500] sm:$0xff]
        %v5505 = vld [vmem:[#allocation7 + $0x508] sm:$0xff]
        %v5506 = vld [vmem:[#allocation7 + $0x510] sm:$0xff]
        %v5507 = vld [vmem:[#allocation7 + $0x518] sm:$0xff]
        %v5508 = vld [vmem:[#allocation7 + $0x520] sm:$0xff]
        %v5509 = vld [vmem:[#allocation7 + $0x528] sm:$0xff]
        %v5510 = vld [vmem:[#allocation7 + $0x530] sm:$0xff]
        %v5511 = vld [vmem:[#allocation7 + $0x538] sm:$0xff]
        %v5512 = vld [vmem:[#allocation7 + $0x540] sm:$0xff]
        %v5513 = vld [vmem:[#allocation7 + $0x548] sm:$0xff]
        %v5514 = vld [vmem:[#allocation7 + $0x550] sm:$0xff]
        %v5515 = vld [vmem:[#allocation7 + $0x558] sm:$0xff]
        %v5516 = vld [vmem:[#allocation7 + $0x560] sm:$0xff]
        %v5517 = vld [vmem:[#allocation7 + $0x568] sm:$0xff]
        %v5518 = vld [vmem:[#allocation7 + $0x570] sm:$0xff]
        %v5519 = vld [vmem:[#allocation7 + $0x578] sm:$0xff]
        %v5520 = vld [vmem:[#allocation7 + $0x580] sm:$0xff]
        %v5521 = vld [vmem:[#allocation7 + $0x588] sm:$0xff]
        %v5522 = vld [vmem:[#allocation7 + $0x590] sm:$0xff]
        %v5523 = vld [vmem:[#allocation7 + $0x598] sm:$0xff]
        %v5524 = vld [vmem:[#allocation7 + $0x5a0] sm:$0xff]
        %v5525 = vld [vmem:[#allocation7 + $0x5a8] sm:$0xff]
        %v5526 = vld [vmem:[#allocation7 + $0x5b0] sm:$0xff]
        %v5527 = vld [vmem:[#allocation7 + $0x5b8] sm:$0xff]
        %v5528 = vld [vmem:[#allocation7 + $0x5c0] sm:$0xff]
        %v5529 = vld [vmem:[#allocation7 + $0x5c8] sm:$0xff]
        %v5530 = vld [vmem:[#allocation7 + $0x5d0] sm:$0xff]
        %v5531 = vld [vmem:[#allocation7 + $0x5d8] sm:$0xff]
        %v5532 = vld [vmem:[#allocation7 + $0x5e0] sm:$0xff]
        %v5533 = vld [vmem:[#allocation7 + $0x5e8] sm:$0xff]
        %v5534 = vld [vmem:[#allocation7 + $0x5f0] sm:$0xff]
        %v5535 = vld [vmem:[#allocation7 + $0x5f8] sm:$0xff]
        %v5536 = vld [vmem:[#allocation7 + $0x600] sm:$0xff]
        %v5537 = vld [vmem:[#allocation7 + $0x608] sm:$0xff]
        %v5538 = vld [vmem:[#allocation7 + $0x610] sm:$0xff]
        %v5539 = vld [vmem:[#allocation7 + $0x618] sm:$0xff]
        %v5540 = vld [vmem:[#allocation7 + $0x620] sm:$0xff]
        %v5541 = vld [vmem:[#allocation7 + $0x628] sm:$0xff]
        %v5542 = vld [vmem:[#allocation7 + $0x630] sm:$0xff]
        %v5543 = vld [vmem:[#allocation7 + $0x638] sm:$0xff]
        %v5544 = vld [vmem:[#allocation7 + $0x640] sm:$0xff]
        %v5545 = vld [vmem:[#allocation7 + $0x648] sm:$0xff]
        %v5546 = vld [vmem:[#allocation7 + $0x650] sm:$0xff]
        %v5547 = vld [vmem:[#allocation7 + $0x658] sm:$0xff]
        %v5548 = vld [vmem:[#allocation7 + $0x660] sm:$0xff]
        %v5549 = vld [vmem:[#allocation7 + $0x668] sm:$0xff]
        %v5550 = vld [vmem:[#allocation7 + $0x670] sm:$0xff]
        %v5551 = vld [vmem:[#allocation7 + $0x678] sm:$0xff]
        %v5552 = vld [vmem:[#allocation7 + $0x680] sm:$0xff]
        %v5553 = vld [vmem:[#allocation7 + $0x688] sm:$0xff]
        %v5554 = vld [vmem:[#allocation7 + $0x690] sm:$0xff]
        %v5555 = vld [vmem:[#allocation7 + $0x698] sm:$0xff]
        %v5556 = vld [vmem:[#allocation7 + $0x6a0] sm:$0xff]
        %v5557 = vld [vmem:[#allocation7 + $0x6a8] sm:$0xff]
        %v5558 = vld [vmem:[#allocation7 + $0x6b0] sm:$0xff]
        %v5559 = vld [vmem:[#allocation7 + $0x6b8] sm:$0xff]
        %v5560 = vld [vmem:[#allocation7 + $0x6c0] sm:$0xff]
        %v5561 = vld [vmem:[#allocation7 + $0x6c8] sm:$0xff]
        %v5562 = vld [vmem:[#allocation7 + $0x6d0] sm:$0xff]
        %v5563 = vld [vmem:[#allocation7 + $0x6d8] sm:$0xff]
        %v5564 = vld [vmem:[#allocation7 + $0x6e0] sm:$0xff]
        %v5565 = vld [vmem:[#allocation7 + $0x6e8] sm:$0xff]
        %v5566 = vld [vmem:[#allocation7 + $0x6f0] sm:$0xff]
        %v5567 = vld [vmem:[#allocation7 + $0x6f8] sm:$0xff]
        %v5568 = vld [vmem:[#allocation7 + $0x700] sm:$0xff]
        %v5569 = vld [vmem:[#allocation7 + $0x708] sm:$0xff]
        %v5570 = vld [vmem:[#allocation7 + $0x710] sm:$0xff]
        %v5571 = vld [vmem:[#allocation7 + $0x718] sm:$0xff]
        %v5572 = vld [vmem:[#allocation7 + $0x720] sm:$0xff]
        %v5573 = vld [vmem:[#allocation7 + $0x728] sm:$0xff]
        %v5574 = vld [vmem:[#allocation7 + $0x730] sm:$0xff]
        %v5575 = vld [vmem:[#allocation7 + $0x738] sm:$0xff]
        %v5576 = vld [vmem:[#allocation7 + $0x740] sm:$0xff]
        %v5577 = vld [vmem:[#allocation7 + $0x748] sm:$0xff]
        %v5578 = vld [vmem:[#allocation7 + $0x750] sm:$0xff]
        %v5579 = vld [vmem:[#allocation7 + $0x758] sm:$0xff]
        %v5580 = vld [vmem:[#allocation7 + $0x760] sm:$0xff]
        %v5581 = vld [vmem:[#allocation7 + $0x768] sm:$0xff]
        %v5582 = vld [vmem:[#allocation7 + $0x770] sm:$0xff]
        %v5583 = vld [vmem:[#allocation7 + $0x778] sm:$0xff]
        %v5584 = vld [vmem:[#allocation7 + $0x780] sm:$0xff]
        %v5585 = vld [vmem:[#allocation7 + $0x788] sm:$0xff]
        %v5586 = vld [vmem:[#allocation7 + $0x790] sm:$0xff]
        %v5587 = vld [vmem:[#allocation7 + $0x798] sm:$0xff]
        %v5588 = vld [vmem:[#allocation7 + $0x7a0] sm:$0xff]
        %v5589 = vld [vmem:[#allocation7 + $0x7a8] sm:$0xff]
        %v5590 = vld [vmem:[#allocation7 + $0x7b0] sm:$0xff]
        %v5591 = vld [vmem:[#allocation7 + $0x7b8] sm:$0xff]
        %v5592 = vld [vmem:[#allocation7 + $0x7c0] sm:$0xff]
        %v5593 = vld [vmem:[#allocation7 + $0x7c8] sm:$0xff]
        %v5594 = vld [vmem:[#allocation7 + $0x7d0] sm:$0xff]
        %v5595 = vld [vmem:[#allocation7 + $0x7d8] sm:$0xff]
        %v5596 = vld [vmem:[#allocation7 + $0x7e0] sm:$0xff]
        %v5597 = vld [vmem:[#allocation7 + $0x7e8] sm:$0xff]
        %v5598 = vld [vmem:[#allocation7 + $0x7f0] sm:$0xff]
        %v5599 = vld [vmem:[#allocation7 + $0x7f8] sm:$0xff]
        %v5600 = vld [vmem:[#allocation7 + $0x800] sm:$0xff]
        %v5601 = vld [vmem:[#allocation7 + $0x808] sm:$0xff]
        %v5602 = vld [vmem:[#allocation7 + $0x810] sm:$0xff]
        %v5603 = vld [vmem:[#allocation7 + $0x818] sm:$0xff]
        %v5604 = vld [vmem:[#allocation7 + $0x820] sm:$0xff]
        %v5605 = vld [vmem:[#allocation7 + $0x828] sm:$0xff]
        %v5606 = vld [vmem:[#allocation7 + $0x830] sm:$0xff]
        %v5607 = vld [vmem:[#allocation7 + $0x838] sm:$0xff]
        %v5608 = vld [vmem:[#allocation7 + $0x840] sm:$0xff]
        %v5609 = vld [vmem:[#allocation7 + $0x848] sm:$0xff]
        %v5610 = vld [vmem:[#allocation7 + $0x850] sm:$0xff]
        %v5611 = vld [vmem:[#allocation7 + $0x858] sm:$0xff]
        %v5612 = vld [vmem:[#allocation7 + $0x860] sm:$0xff]
        %v5613 = vld [vmem:[#allocation7 + $0x868] sm:$0xff]
        %v5614 = vld [vmem:[#allocation7 + $0x870] sm:$0xff]
        %v5615 = vld [vmem:[#allocation7 + $0x878] sm:$0xff]
        %v5616 = vld [vmem:[#allocation7 + $0x880] sm:$0xff]
        %v5617 = vld [vmem:[#allocation7 + $0x888] sm:$0xff]
        %v5618 = vld [vmem:[#allocation7 + $0x890] sm:$0xff]
        %v5619 = vld [vmem:[#allocation7 + $0x898] sm:$0xff]
        %v5620 = vld [vmem:[#allocation7 + $0x8a0] sm:$0xff]
        %v5621 = vld [vmem:[#allocation7 + $0x8a8] sm:$0xff]
        %v5622 = vld [vmem:[#allocation7 + $0x8b0] sm:$0xff]
        %v5623 = vld [vmem:[#allocation7 + $0x8b8] sm:$0xff]
        %v5624 = vld [vmem:[#allocation7 + $0x8c0] sm:$0xff]
        %v5625 = vld [vmem:[#allocation7 + $0x8c8] sm:$0xff]
        %v5626 = vld [vmem:[#allocation7 + $0x8d0] sm:$0xff]
        %v5627 = vld [vmem:[#allocation7 + $0x8d8] sm:$0xff]
        %v5628 = vld [vmem:[#allocation7 + $0x8e0] sm:$0xff]
        %v5629 = vld [vmem:[#allocation7 + $0x8e8] sm:$0xff]
        %v5630 = vld [vmem:[#allocation7 + $0x8f0] sm:$0xff]
        %v5631 = vld [vmem:[#allocation7 + $0x8f8] sm:$0xff]
        %v5632 = vld [vmem:[#allocation7 + $0x900] sm:$0xff]
        %v5633 = vld [vmem:[#allocation7 + $0x908] sm:$0xff]
        %v5634 = vld [vmem:[#allocation7 + $0x910] sm:$0xff]
        %v5635 = vld [vmem:[#allocation7 + $0x918] sm:$0xff]
        %v5636 = vld [vmem:[#allocation7 + $0x920] sm:$0xff]
        %v5637 = vld [vmem:[#allocation7 + $0x928] sm:$0xff]
        %v5638 = vld [vmem:[#allocation7 + $0x930] sm:$0xff]
        %v5639 = vld [vmem:[#allocation7 + $0x938] sm:$0xff]
        %v5640 = vld [vmem:[#allocation7 + $0x940] sm:$0xff]
        %v5641 = vld [vmem:[#allocation7 + $0x948] sm:$0xff]
        %v5642 = vld [vmem:[#allocation7 + $0x950] sm:$0xff]
        %v5643 = vld [vmem:[#allocation7 + $0x958] sm:$0xff]
        %v5644 = vld [vmem:[#allocation7 + $0x960] sm:$0xff]
        %v5645 = vld [vmem:[#allocation7 + $0x968] sm:$0xff]
        %v5646 = vld [vmem:[#allocation7 + $0x970] sm:$0xff]
        %v5647 = vld [vmem:[#allocation7 + $0x978] sm:$0xff]
        %v5648 = vld [vmem:[#allocation7 + $0x980] sm:$0xff]
        %v5649 = vld [vmem:[#allocation7 + $0x988] sm:$0xff]
        %v5650 = vld [vmem:[#allocation7 + $0x990] sm:$0xff]
        %v5651 = vld [vmem:[#allocation7 + $0x998] sm:$0xff]
        %v5652 = vld [vmem:[#allocation7 + $0x9a0] sm:$0xff]
        %v5653 = vld [vmem:[#allocation7 + $0x9a8] sm:$0xff]
        %v5654 = vld [vmem:[#allocation7 + $0x9b0] sm:$0xff]
        %v5655 = vld [vmem:[#allocation7 + $0x9b8] sm:$0xff]
        %v5656 = vld [vmem:[#allocation7 + $0x9c0] sm:$0xff]
        %v5657 = vld [vmem:[#allocation7 + $0x9c8] sm:$0xff]
        %v5658 = vld [vmem:[#allocation7 + $0x9d0] sm:$0xff]
        %v5659 = vld [vmem:[#allocation7 + $0x9d8] sm:$0xff]
        %v5660 = vld [vmem:[#allocation7 + $0x9e0] sm:$0xff]
        %v5661 = vld [vmem:[#allocation7 + $0x9e8] sm:$0xff]
        %v5662 = vld [vmem:[#allocation7 + $0x9f0] sm:$0xff]
        %v5663 = vld [vmem:[#allocation7 + $0x9f8] sm:$0xff]
        %v5664 = vld [vmem:[#allocation7 + $0xa00] sm:$0xff]
        %v5665 = vld [vmem:[#allocation7 + $0xa08] sm:$0xff]
        %v5666 = vld [vmem:[#allocation7 + $0xa10] sm:$0xff]
        %v5667 = vld [vmem:[#allocation7 + $0xa18] sm:$0xff]
        %v5668 = vld [vmem:[#allocation7 + $0xa20] sm:$0xff]
        %v5669 = vld [vmem:[#allocation7 + $0xa28] sm:$0xff]
        %v5670 = vld [vmem:[#allocation7 + $0xa30] sm:$0xff]
        %v5671 = vld [vmem:[#allocation7 + $0xa38] sm:$0xff]
        %v5672 = vld [vmem:[#allocation7 + $0xa40] sm:$0xff]
        %v5673 = vld [vmem:[#allocation7 + $0xa48] sm:$0xff]
        %v5674 = vld [vmem:[#allocation7 + $0xa50] sm:$0xff]
        %v5675 = vld [vmem:[#allocation7 + $0xa58] sm:$0xff]
        %v5676 = vld [vmem:[#allocation7 + $0xa60] sm:$0xff]
        %v5677 = vld [vmem:[#allocation7 + $0xa68] sm:$0xff]
        %v5678 = vld [vmem:[#allocation7 + $0xa70] sm:$0xff]
        %v5679 = vld [vmem:[#allocation7 + $0xa78] sm:$0xff]
        %v5680 = vld [vmem:[#allocation7 + $0xa80] sm:$0xff]
        %v5681 = vld [vmem:[#allocation7 + $0xa88] sm:$0xff]
        %v5682 = vld [vmem:[#allocation7 + $0xa90] sm:$0xff]
        %v5683 = vld [vmem:[#allocation7 + $0xa98] sm:$0xff]
        %v5684 = vld [vmem:[#allocation7 + $0xaa0] sm:$0xff]
        %v5685 = vld [vmem:[#allocation7 + $0xaa8] sm:$0xff]
        %v5686 = vld [vmem:[#allocation7 + $0xab0] sm:$0xff]
        %v5687 = vld [vmem:[#allocation7 + $0xab8] sm:$0xff]
        %v5688 = vld [vmem:[#allocation7 + $0xac0] sm:$0xff]
        %v5689 = vld [vmem:[#allocation7 + $0xac8] sm:$0xff]
        %v5690 = vld [vmem:[#allocation7 + $0xad0] sm:$0xff]
        %v5691 = vld [vmem:[#allocation7 + $0xad8] sm:$0xff]
        %v5692 = vld [vmem:[#allocation7 + $0xae0] sm:$0xff]
        %v5693 = vld [vmem:[#allocation7 + $0xae8] sm:$0xff]
        %v5694 = vld [vmem:[#allocation7 + $0xaf0] sm:$0xff]
        %v5695 = vld [vmem:[#allocation7 + $0xaf8] sm:$0xff]
        %v5696 = vld [vmem:[#allocation7 + $0xb00] sm:$0xff]
        %v5697 = vld [vmem:[#allocation7 + $0xb08] sm:$0xff]
        %v5698 = vld [vmem:[#allocation7 + $0xb10] sm:$0xff]
        %v5699 = vld [vmem:[#allocation7 + $0xb18] sm:$0xff]
        %v5700 = vld [vmem:[#allocation7 + $0xb20] sm:$0xff]
        %v5701 = vld [vmem:[#allocation7 + $0xb28] sm:$0xff]
        %v5702 = vld [vmem:[#allocation7 + $0xb30] sm:$0xff]
        %v5703 = vld [vmem:[#allocation7 + $0xb38] sm:$0xff]
        %v5704 = vld [vmem:[#allocation7 + $0xb40] sm:$0xff]
        %v5705 = vld [vmem:[#allocation7 + $0xb48] sm:$0xff]
        %v5706 = vld [vmem:[#allocation7 + $0xb50] sm:$0xff]
        %v5707 = vld [vmem:[#allocation7 + $0xb58] sm:$0xff]
        %v5708 = vld [vmem:[#allocation7 + $0xb60] sm:$0xff]
        %v5709 = vld [vmem:[#allocation7 + $0xb68] sm:$0xff]
        %v5710 = vld [vmem:[#allocation7 + $0xb70] sm:$0xff]
        %v5711 = vld [vmem:[#allocation7 + $0xb78] sm:$0xff]
        %v5712 = vld [vmem:[#allocation7 + $0xb80] sm:$0xff]
        %v5713 = vld [vmem:[#allocation7 + $0xb88] sm:$0xff]
        %v5714 = vld [vmem:[#allocation7 + $0xb90] sm:$0xff]
        %v5715 = vld [vmem:[#allocation7 + $0xb98] sm:$0xff]
        %v5716 = vld [vmem:[#allocation7 + $0xba0] sm:$0xff]
        %v5717 = vld [vmem:[#allocation7 + $0xba8] sm:$0xff]
        %v5718 = vld [vmem:[#allocation7 + $0xbb0] sm:$0xff]
        %v5719 = vld [vmem:[#allocation7 + $0xbb8] sm:$0xff]
        %v5720 = vld [vmem:[#allocation7 + $0xbc0] sm:$0xff]
        %v5721 = vld [vmem:[#allocation7 + $0xbc8] sm:$0xff]
        %v5722 = vld [vmem:[#allocation7 + $0xbd0] sm:$0xff]
        %v5723 = vld [vmem:[#allocation7 + $0xbd8] sm:$0xff]
        %v5724 = vld [vmem:[#allocation7 + $0xbe0] sm:$0xff]
        %v5725 = vld [vmem:[#allocation7 + $0xbe8] sm:$0xff]
        %v5726 = vld [vmem:[#allocation7 + $0xbf0] sm:$0xff]
        %v5727 = vld [vmem:[#allocation7 + $0xbf8] sm:$0xff]
        %v5728 = vld [vmem:[#allocation7 + $0xc00] sm:$0xff]
        %v5729 = vld [vmem:[#allocation7 + $0xc08] sm:$0xff]
        %v5730 = vld [vmem:[#allocation7 + $0xc10] sm:$0xff]
        %v5731 = vld [vmem:[#allocation7 + $0xc18] sm:$0xff]
        %v5732 = vld [vmem:[#allocation7 + $0xc20] sm:$0xff]
        %v5733 = vld [vmem:[#allocation7 + $0xc28] sm:$0xff]
        %v5734 = vld [vmem:[#allocation7 + $0xc30] sm:$0xff]
        %v5735 = vld [vmem:[#allocation7 + $0xc38] sm:$0xff]
        %v5736 = vld [vmem:[#allocation7 + $0xc40] sm:$0xff]
        %v5737 = vld [vmem:[#allocation7 + $0xc48] sm:$0xff]
        %v5738 = vld [vmem:[#allocation7 + $0xc50] sm:$0xff]
        %v5739 = vld [vmem:[#allocation7 + $0xc58] sm:$0xff]
        %v5740 = vld [vmem:[#allocation7 + $0xc60] sm:$0xff]
        %v5741 = vld [vmem:[#allocation7 + $0xc68] sm:$0xff]
        %v5742 = vld [vmem:[#allocation7 + $0xc70] sm:$0xff]
        %v5743 = vld [vmem:[#allocation7 + $0xc78] sm:$0xff]
        %v5744 = vld [vmem:[#allocation7 + $0xc80] sm:$0xff]
        %v5745 = vld [vmem:[#allocation7 + $0xc88] sm:$0xff]
        %v5746 = vld [vmem:[#allocation7 + $0xc90] sm:$0xff]
        %v5747 = vld [vmem:[#allocation7 + $0xc98] sm:$0xff]
        %v5748 = vld [vmem:[#allocation7 + $0xca0] sm:$0xff]
        %v5749 = vld [vmem:[#allocation7 + $0xca8] sm:$0xff]
        %v5750 = vld [vmem:[#allocation7 + $0xcb0] sm:$0xff]
        %v5751 = vld [vmem:[#allocation7 + $0xcb8] sm:$0xff]
        %v5752 = vld [vmem:[#allocation7 + $0xcc0] sm:$0xff]
        %v5753 = vld [vmem:[#allocation7 + $0xcc8] sm:$0xff]
        %v5754 = vld [vmem:[#allocation7 + $0xcd0] sm:$0xff]
        %v5755 = vld [vmem:[#allocation7 + $0xcd8] sm:$0xff]
        %v5756 = vld [vmem:[#allocation7 + $0xce0] sm:$0xff]
        %v5757 = vld [vmem:[#allocation7 + $0xce8] sm:$0xff]
        %v5758 = vld [vmem:[#allocation7 + $0xcf0] sm:$0xff]
        %v5759 = vld [vmem:[#allocation7 + $0xcf8] sm:$0xff]
        %v5760 = vld [vmem:[#allocation7 + $0xd00] sm:$0xff]
        %v5761 = vld [vmem:[#allocation7 + $0xd08] sm:$0xff]
        %v5762 = vld [vmem:[#allocation7 + $0xd10] sm:$0xff]
        %v5763 = vld [vmem:[#allocation7 + $0xd18] sm:$0xff]
        %v5764 = vld [vmem:[#allocation7 + $0xd20] sm:$0xff]
        %v5765 = vld [vmem:[#allocation7 + $0xd28] sm:$0xff]
        %v5766 = vld [vmem:[#allocation7 + $0xd30] sm:$0xff]
        %v5767 = vld [vmem:[#allocation7 + $0xd38] sm:$0xff]
        %v5768 = vld [vmem:[#allocation7 + $0xd40] sm:$0xff]
        %v5769 = vld [vmem:[#allocation7 + $0xd48] sm:$0xff]
        %v5770 = vld [vmem:[#allocation7 + $0xd50] sm:$0xff]
        %v5771 = vld [vmem:[#allocation7 + $0xd58] sm:$0xff]
        %v5772 = vld [vmem:[#allocation7 + $0xd60] sm:$0xff]
        %v5773 = vld [vmem:[#allocation7 + $0xd68] sm:$0xff]
        %v5774 = vld [vmem:[#allocation7 + $0xd70] sm:$0xff]
        %v5775 = vld [vmem:[#allocation7 + $0xd78] sm:$0xff]
        %v5776 = vld [vmem:[#allocation7 + $0xd80] sm:$0xff]
        %v5777 = vld [vmem:[#allocation7 + $0xd88] sm:$0xff]
        %v5778 = vld [vmem:[#allocation7 + $0xd90] sm:$0xff]
        %v5779 = vld [vmem:[#allocation7 + $0xd98] sm:$0xff]
        %v5780 = vld [vmem:[#allocation7 + $0xda0] sm:$0xff]
        %v5781 = vld [vmem:[#allocation7 + $0xda8] sm:$0xff]
        %v5782 = vld [vmem:[#allocation7 + $0xdb0] sm:$0xff]
        %v5783 = vld [vmem:[#allocation7 + $0xdb8] sm:$0xff]
        %v5784 = vld [vmem:[#allocation7 + $0xdc0] sm:$0xff]
        %v5785 = vld [vmem:[#allocation7 + $0xdc8] sm:$0xff]
        %v5786 = vld [vmem:[#allocation7 + $0xdd0] sm:$0xff]
        %v5787 = vld [vmem:[#allocation7 + $0xdd8] sm:$0xff]
        %v5788 = vld [vmem:[#allocation7 + $0xde0] sm:$0xff]
        %v5789 = vld [vmem:[#allocation7 + $0xde8] sm:$0xff]
        %v5790 = vld [vmem:[#allocation7 + $0xdf0] sm:$0xff]
        %v5791 = vld [vmem:[#allocation7 + $0xdf8] sm:$0xff]
        %v5792 = vld [vmem:[#allocation7 + $0xe00] sm:$0xff]
        %v5793 = vld [vmem:[#allocation7 + $0xe08] sm:$0xff]
        %v5794 = vld [vmem:[#allocation7 + $0xe10] sm:$0xff]
        %v5795 = vld [vmem:[#allocation7 + $0xe18] sm:$0xff]
        %v5796 = vld [vmem:[#allocation7 + $0xe20] sm:$0xff]
        %v5797 = vld [vmem:[#allocation7 + $0xe28] sm:$0xff]
        %v5798 = vld [vmem:[#allocation7 + $0xe30] sm:$0xff]
        %v5799 = vld [vmem:[#allocation7 + $0xe38] sm:$0xff]
        %v5800 = vld [vmem:[#allocation7 + $0xe40] sm:$0xff]
        %v5801 = vld [vmem:[#allocation7 + $0xe48] sm:$0xff]
        %v5802 = vld [vmem:[#allocation7 + $0xe50] sm:$0xff]
        %v5803 = vld [vmem:[#allocation7 + $0xe58] sm:$0xff]
        %v5804 = vld [vmem:[#allocation7 + $0xe60] sm:$0xff]
        %v5805 = vld [vmem:[#allocation7 + $0xe68] sm:$0xff]
        %v5806 = vld [vmem:[#allocation7 + $0xe70] sm:$0xff]
        %v5807 = vld [vmem:[#allocation7 + $0xe78] sm:$0xff]
        %v5808 = vld [vmem:[#allocation7 + $0xe80] sm:$0xff]
        %v5809 = vld [vmem:[#allocation7 + $0xe88] sm:$0xff]
        %v5810 = vld [vmem:[#allocation7 + $0xe90] sm:$0xff]
        %v5811 = vld [vmem:[#allocation7 + $0xe98] sm:$0xff]
        %v5812 = vld [vmem:[#allocation7 + $0xea0] sm:$0xff]
        %v5813 = vld [vmem:[#allocation7 + $0xea8] sm:$0xff]
        %v5814 = vld [vmem:[#allocation7 + $0xeb0] sm:$0xff]
        %v5815 = vld [vmem:[#allocation7 + $0xeb8] sm:$0xff]
        %v5816 = vld [vmem:[#allocation7 + $0xec0] sm:$0xff]
        %v5817 = vld [vmem:[#allocation7 + $0xec8] sm:$0xff]
        %v5818 = vld [vmem:[#allocation7 + $0xed0] sm:$0xff]
        %v5819 = vld [vmem:[#allocation7 + $0xed8] sm:$0xff]
        %v5820 = vld [vmem:[#allocation7 + $0xee0] sm:$0xff]
        %v5821 = vld [vmem:[#allocation7 + $0xee8] sm:$0xff]
        %v5822 = vld [vmem:[#allocation7 + $0xef0] sm:$0xff]
        %v5823 = vld [vmem:[#allocation7 + $0xef8] sm:$0xff]
        %v5824 = vld [vmem:[#allocation7 + $0xf00] sm:$0xff]
        %v5825 = vld [vmem:[#allocation7 + $0xf08] sm:$0xff]
        %v5826 = vld [vmem:[#allocation7 + $0xf10] sm:$0xff]
        %v5827 = vld [vmem:[#allocation7 + $0xf18] sm:$0xff]
        %v5828 = vld [vmem:[#allocation7 + $0xf20] sm:$0xff]
        %v5829 = vld [vmem:[#allocation7 + $0xf28] sm:$0xff]
        %v5830 = vld [vmem:[#allocation7 + $0xf30] sm:$0xff]
        %v5831 = vld [vmem:[#allocation7 + $0xf38] sm:$0xff]
        %v5832 = vld [vmem:[#allocation7 + $0xf40] sm:$0xff]
        %v5833 = vld [vmem:[#allocation7 + $0xf48] sm:$0xff]
        %v5834 = vld [vmem:[#allocation7 + $0xf50] sm:$0xff]
        %v5835 = vld [vmem:[#allocation7 + $0xf58] sm:$0xff]
        %v5836 = vld [vmem:[#allocation7 + $0xf60] sm:$0xff]
        %v5837 = vld [vmem:[#allocation7 + $0xf68] sm:$0xff]
        %v5838 = vld [vmem:[#allocation7 + $0xf70] sm:$0xff]
        %v5839 = vld [vmem:[#allocation7 + $0xf78] sm:$0xff]
        %v5840 = vld [vmem:[#allocation7 + $0xf80] sm:$0xff]
        %v5841 = vld [vmem:[#allocation7 + $0xf88] sm:$0xff]
        %v5842 = vld [vmem:[#allocation7 + $0xf90] sm:$0xff]
        %v5843 = vld [vmem:[#allocation7 + $0xf98] sm:$0xff]
        %v5844 = vld [vmem:[#allocation7 + $0xfa0] sm:$0xff]
        %v5845 = vld [vmem:[#allocation7 + $0xfa8] sm:$0xff]
        %v5846 = vld [vmem:[#allocation7 + $0xfb0] sm:$0xff]
        %v5847 = vld [vmem:[#allocation7 + $0xfb8] sm:$0xff]
        %v5848 = vld [vmem:[#allocation7 + $0xfc0] sm:$0xff]
        %v5849 = vld [vmem:[#allocation7 + $0xfc8] sm:$0xff]
        %v5850 = vld [vmem:[#allocation7 + $0xfd0] sm:$0xff]
        %v5851 = vld [vmem:[#allocation7 + $0xfd8] sm:$0xff]
        %v5852 = vld [vmem:[#allocation7 + $0xfe0] sm:$0xff]
        %v5853 = vld [vmem:[#allocation7 + $0xfe8] sm:$0xff]
        %v5854 = vld [vmem:[#allocation7 + $0xff0] sm:$0xff]
        %v5855 = vld [vmem:[#allocation7 + $0xff8] sm:$0xff]
        %v5856 = vld [vmem:[#allocation7 + $0x1000] sm:$0xff]
        %v5857 = vld [vmem:[#allocation7 + $0x1008] sm:$0xff]
        %v5858 = vld [vmem:[#allocation7 + $0x1010] sm:$0xff]
        %v5859 = vld [vmem:[#allocation7 + $0x1018] sm:$0xff]
        %v5860 = vld [vmem:[#allocation7 + $0x1020] sm:$0xff]
        %v5861 = vld [vmem:[#allocation7 + $0x1028] sm:$0xff]
        %v5862 = vld [vmem:[#allocation7 + $0x1030] sm:$0xff]
        %v5863 = vld [vmem:[#allocation7 + $0x1038] sm:$0xff]
        %v5864 = vld [vmem:[#allocation7 + $0x1040] sm:$0xff]
        %v5865 = vld [vmem:[#allocation7 + $0x1048] sm:$0xff]
        %v5866 = vld [vmem:[#allocation7 + $0x1050] sm:$0xff]
        %v5867 = vld [vmem:[#allocation7 + $0x1058] sm:$0xff]
        %v5868 = vld [vmem:[#allocation7 + $0x1060] sm:$0xff]
        %v5869 = vld [vmem:[#allocation7 + $0x1068] sm:$0xff]
        %v5870 = vld [vmem:[#allocation7 + $0x1070] sm:$0xff]
        %v5871 = vld [vmem:[#allocation7 + $0x1078] sm:$0xff]
        %v5872 = vld [vmem:[#allocation7 + $0x1080] sm:$0xff]
        %v5873 = vld [vmem:[#allocation7 + $0x1088] sm:$0xff]
        %v5874 = vld [vmem:[#allocation7 + $0x1090] sm:$0xff]
        %v5875 = vld [vmem:[#allocation7 + $0x1098] sm:$0xff]
        %v5876 = vld [vmem:[#allocation7 + $0x10a0] sm:$0xff]
        %v5877 = vld [vmem:[#allocation7 + $0x10a8] sm:$0xff]
        %v5878 = vld [vmem:[#allocation7 + $0x10b0] sm:$0xff]
        %v5879 = vld [vmem:[#allocation7 + $0x10b8] sm:$0xff]
        %v5880 = vld [vmem:[#allocation7 + $0x10c0] sm:$0xff]
        %v5881 = vld [vmem:[#allocation7 + $0x10c8] sm:$0xff]
        %v5882 = vld [vmem:[#allocation7 + $0x10d0] sm:$0xff]
        %v5883 = vld [vmem:[#allocation7 + $0x10d8] sm:$0xff]
        %v5884 = vld [vmem:[#allocation7 + $0x10e0] sm:$0xff]
        %v5885 = vld [vmem:[#allocation7 + $0x10e8] sm:$0xff]
        %v5886 = vld [vmem:[#allocation7 + $0x10f0] sm:$0xff]
        %v5887 = vld [vmem:[#allocation7 + $0x10f8] sm:$0xff]
        %v5888 = vld [vmem:[#allocation7 + $0x1100] sm:$0xff]
        %v5889 = vld [vmem:[#allocation7 + $0x1108] sm:$0xff]
        %v5890 = vld [vmem:[#allocation7 + $0x1110] sm:$0xff]
        %v5891 = vld [vmem:[#allocation7 + $0x1118] sm:$0xff]
        %v5892 = vld [vmem:[#allocation7 + $0x1120] sm:$0xff]
        %v5893 = vld [vmem:[#allocation7 + $0x1128] sm:$0xff]
        %v5894 = vld [vmem:[#allocation7 + $0x1130] sm:$0xff]
        %v5895 = vld [vmem:[#allocation7 + $0x1138] sm:$0xff]
        %v5896 = vld [vmem:[#allocation7 + $0x1140] sm:$0xff]
        %v5897 = vld [vmem:[#allocation7 + $0x1148] sm:$0xff]
        %v5898 = vld [vmem:[#allocation7 + $0x1150] sm:$0xff]
        %v5899 = vld [vmem:[#allocation7 + $0x1158] sm:$0xff]
        %v5900 = vld [vmem:[#allocation7 + $0x1160] sm:$0xff]
        %v5901 = vld [vmem:[#allocation7 + $0x1168] sm:$0xff]
        %v5902 = vld [vmem:[#allocation7 + $0x1170] sm:$0xff]
        %v5903 = vld [vmem:[#allocation7 + $0x1178] sm:$0xff]
        %v5904 = vld [vmem:[#allocation7 + $0x1180] sm:$0xff]
        %v5905 = vld [vmem:[#allocation7 + $0x1188] sm:$0xff]
        %v5906 = vld [vmem:[#allocation7 + $0x1190] sm:$0xff]
        %v5907 = vld [vmem:[#allocation7 + $0x1198] sm:$0xff]
        %v5908 = vld [vmem:[#allocation7 + $0x11a0] sm:$0xff]
        %v5909 = vld [vmem:[#allocation7 + $0x11a8] sm:$0xff]
        %v5910 = vld [vmem:[#allocation7 + $0x11b0] sm:$0xff]
        %v5911 = vld [vmem:[#allocation7 + $0x11b8] sm:$0xff]
        %v5912 = vld [vmem:[#allocation7 + $0x11c0] sm:$0xff]
        %v5913 = vld [vmem:[#allocation7 + $0x11c8] sm:$0xff]
        %v5914 = vld [vmem:[#allocation7 + $0x11d0] sm:$0xff]
        %v5915 = vld [vmem:[#allocation7 + $0x11d8] sm:$0xff]
        %v5916 = vld [vmem:[#allocation7 + $0x11e0] sm:$0xff]
        %v5917 = vld [vmem:[#allocation7 + $0x11e8] sm:$0xff]
        %v5918 = vld [vmem:[#allocation7 + $0x11f0] sm:$0xff]
        %v5919 = vld [vmem:[#allocation7 + $0x11f8] sm:$0xff]
        %v5920 = vld [vmem:[#allocation9] sm:$0x66]
        %v5921 = vld [vmem:[#allocation9 + $0x8] sm:$0x66]
        %v5922 = vld [vmem:[#allocation9 + $0x10] sm:$0x66]
        %v6499 = vunpack.c.l.b16 %v5344
        %v6500 = vunpack.c.h.b16 %v5344
        %v6501 = vunpack.c.l.b16 %v5345
        %v6502 = vunpack.c.h.b16 %v5345
        %v6503 = vunpack.c.l.b16 %v5346
        %v6504 = vunpack.c.h.b16 %v5346
        %v6505 = vunpack.c.l.b16 %v5347
        %v6506 = vunpack.c.h.b16 %v5347
        %v6507 = vunpack.c.l.b16 %v5348
        %v6508 = vunpack.c.h.b16 %v5348
        %v6509 = vunpack.c.l.b16 %v5349
        %v6510 = vunpack.c.h.b16 %v5349
        %v6511 = vunpack.c.l.b16 %v5350
        %v6512 = vunpack.c.h.b16 %v5350
        %v6513 = vunpack.c.l.b16 %v5351
        %v6514 = vunpack.c.h.b16 %v5351
        %v6515 = vunpack.c.l.b16 %v5352
        %v6516 = vunpack.c.h.b16 %v5352
        %v6517 = vunpack.c.l.b16 %v5353
        %v6518 = vunpack.c.h.b16 %v5353
        %v6519 = vunpack.c.l.b16 %v5354
        %v6520 = vunpack.c.h.b16 %v5354
        %v6521 = vunpack.c.l.b16 %v5355
        %v6522 = vunpack.c.h.b16 %v5355
        %v6523 = vunpack.c.l.b16 %v5356
        %v6524 = vunpack.c.h.b16 %v5356
        %v6525 = vunpack.c.l.b16 %v5357
        %v6526 = vunpack.c.h.b16 %v5357
        %v6527 = vunpack.c.l.b16 %v5358
        %v6528 = vunpack.c.h.b16 %v5358
        %v6529 = vunpack.c.l.b16 %v5359
        %v6530 = vunpack.c.h.b16 %v5359
        %v6531 = vunpack.c.l.b16 %v5360
        %v6532 = vunpack.c.h.b16 %v5360
        %v6533 = vunpack.c.l.b16 %v5361
        %v6534 = vunpack.c.h.b16 %v5361
        %v6535 = vunpack.c.l.b16 %v5362
        %v6536 = vunpack.c.h.b16 %v5362
        %v6537 = vunpack.c.l.b16 %v5363
        %v6538 = vunpack.c.h.b16 %v5363
        %v6539 = vunpack.c.l.b16 %v5364
        %v6540 = vunpack.c.h.b16 %v5364
        %v6541 = vunpack.c.l.b16 %v5365
        %v6542 = vunpack.c.h.b16 %v5365
        %v6543 = vunpack.c.l.b16 %v5366
        %v6544 = vunpack.c.h.b16 %v5366
        %v6545 = vunpack.c.l.b16 %v5367
        %v6546 = vunpack.c.h.b16 %v5367
        %v6547 = vunpack.c.l.b16 %v5368
        %v6548 = vunpack.c.h.b16 %v5368
        %v6549 = vunpack.c.l.b16 %v5369
        %v6550 = vunpack.c.h.b16 %v5369
        %v6551 = vunpack.c.l.b16 %v5370
        %v6552 = vunpack.c.h.b16 %v5370
        %v6553 = vunpack.c.l.b16 %v5371
        %v6554 = vunpack.c.h.b16 %v5371
        %v6555 = vunpack.c.l.b16 %v5372
        %v6556 = vunpack.c.h.b16 %v5372
        %v6557 = vunpack.c.l.b16 %v5373
        %v6558 = vunpack.c.h.b16 %v5373
        %v6559 = vunpack.c.l.b16 %v5374
        %v6560 = vunpack.c.h.b16 %v5374
        %v6561 = vunpack.c.l.b16 %v5375
        %v6562 = vunpack.c.h.b16 %v5375
        %v6563 = vunpack.c.l.b16 %v5376
        %v6564 = vunpack.c.h.b16 %v5376
        %v6565 = vunpack.c.l.b16 %v5377
        %v6566 = vunpack.c.h.b16 %v5377
        %v6567 = vunpack.c.l.b16 %v5378
        %v6568 = vunpack.c.h.b16 %v5378
        %v6569 = vunpack.c.l.b16 %v5379
        %v6570 = vunpack.c.h.b16 %v5379
        %v6571 = vunpack.c.l.b16 %v5380
        %v6572 = vunpack.c.h.b16 %v5380
        %v6573 = vunpack.c.l.b16 %v5381
        %v6574 = vunpack.c.h.b16 %v5381
        %v6575 = vunpack.c.l.b16 %v5382
        %v6576 = vunpack.c.h.b16 %v5382
        %v6577 = vunpack.c.l.b16 %v5383
        %v6578 = vunpack.c.h.b16 %v5383
        %v6579 = vunpack.c.l.b16 %v5384
        %v6580 = vunpack.c.h.b16 %v5384
        %v6581 = vunpack.c.l.b16 %v5385
        %v6582 = vunpack.c.h.b16 %v5385
        %v6583 = vunpack.c.l.b16 %v5386
        %v6584 = vunpack.c.h.b16 %v5386
        %v6585 = vunpack.c.l.b16 %v5387
        %v6586 = vunpack.c.h.b16 %v5387
        %v6587 = vunpack.c.l.b16 %v5388
        %v6588 = vunpack.c.h.b16 %v5388
        %v6589 = vunpack.c.l.b16 %v5389
        %v6590 = vunpack.c.h.b16 %v5389
        %v6591 = vunpack.c.l.b16 %v5390
        %v6592 = vunpack.c.h.b16 %v5390
        %v6593 = vunpack.c.l.b16 %v5391
        %v6594 = vunpack.c.h.b16 %v5391
        %v6595 = vunpack.c.l.b16 %v5392
        %v6596 = vunpack.c.h.b16 %v5392
        %v6597 = vunpack.c.l.b16 %v5393
        %v6598 = vunpack.c.h.b16 %v5393
        %v6599 = vunpack.c.l.b16 %v5394
        %v6600 = vunpack.c.h.b16 %v5394
        %v6601 = vunpack.c.l.b16 %v5395
        %v6602 = vunpack.c.h.b16 %v5395
        %v6603 = vunpack.c.l.b16 %v5396
        %v6604 = vunpack.c.h.b16 %v5396
        %v6605 = vunpack.c.l.b16 %v5397
        %v6606 = vunpack.c.h.b16 %v5397
        %v6607 = vunpack.c.l.b16 %v5398
        %v6608 = vunpack.c.h.b16 %v5398
        %v6609 = vunpack.c.l.b16 %v5399
        %v6610 = vunpack.c.h.b16 %v5399
        %v6611 = vunpack.c.l.b16 %v5400
        %v6612 = vunpack.c.h.b16 %v5400
        %v6613 = vunpack.c.l.b16 %v5401
        %v6614 = vunpack.c.h.b16 %v5401
        %v6615 = vunpack.c.l.b16 %v5402
        %v6616 = vunpack.c.h.b16 %v5402
        %v6617 = vunpack.c.l.b16 %v5403
        %v6618 = vunpack.c.h.b16 %v5403
        %v6619 = vunpack.c.l.b16 %v5404
        %v6620 = vunpack.c.h.b16 %v5404
        %v6621 = vunpack.c.l.b16 %v5405
        %v6622 = vunpack.c.h.b16 %v5405
        %v6623 = vunpack.c.l.b16 %v5406
        %v6624 = vunpack.c.h.b16 %v5406
        %v6625 = vunpack.c.l.b16 %v5407
        %v6626 = vunpack.c.h.b16 %v5407
        %v6627 = vunpack.c.l.b16 %v5408
        %v6628 = vunpack.c.h.b16 %v5408
        %v6629 = vunpack.c.l.b16 %v5409
        %v6630 = vunpack.c.h.b16 %v5409
        %v6631 = vunpack.c.l.b16 %v5410
        %v6632 = vunpack.c.h.b16 %v5410
        %v6633 = vunpack.c.l.b16 %v5411
        %v6634 = vunpack.c.h.b16 %v5411
        %v6635 = vunpack.c.l.b16 %v5412
        %v6636 = vunpack.c.h.b16 %v5412
        %v6637 = vunpack.c.l.b16 %v5413
        %v6638 = vunpack.c.h.b16 %v5413
        %v6639 = vunpack.c.l.b16 %v5414
        %v6640 = vunpack.c.h.b16 %v5414
        %v6641 = vunpack.c.l.b16 %v5415
        %v6642 = vunpack.c.h.b16 %v5415
        %v6643 = vunpack.c.l.b16 %v5416
        %v6644 = vunpack.c.h.b16 %v5416
        %v6645 = vunpack.c.l.b16 %v5417
        %v6646 = vunpack.c.h.b16 %v5417
        %v6647 = vunpack.c.l.b16 %v5418
        %v6648 = vunpack.c.h.b16 %v5418
        %v6649 = vunpack.c.l.b16 %v5419
        %v6650 = vunpack.c.h.b16 %v5419
        %v6651 = vunpack.c.l.b16 %v5420
        %v6652 = vunpack.c.h.b16 %v5420
        %v6653 = vunpack.c.l.b16 %v5421
        %v6654 = vunpack.c.h.b16 %v5421
        %v6655 = vunpack.c.l.b16 %v5422
        %v6656 = vunpack.c.h.b16 %v5422
        %v6657 = vunpack.c.l.b16 %v5423
        %v6658 = vunpack.c.h.b16 %v5423
        %v6659 = vunpack.c.l.b16 %v5424
        %v6660 = vunpack.c.h.b16 %v5424
        %v6661 = vunpack.c.l.b16 %v5425
        %v6662 = vunpack.c.h.b16 %v5425
        %v6663 = vunpack.c.l.b16 %v5426
        %v6664 = vunpack.c.h.b16 %v5426
        %v6665 = vunpack.c.l.b16 %v5427
        %v6666 = vunpack.c.h.b16 %v5427
        %v6667 = vunpack.c.l.b16 %v5428
        %v6668 = vunpack.c.h.b16 %v5428
        %v6669 = vunpack.c.l.b16 %v5429
        %v6670 = vunpack.c.h.b16 %v5429
        %v6671 = vunpack.c.l.b16 %v5430
        %v6672 = vunpack.c.h.b16 %v5430
        %v6673 = vunpack.c.l.b16 %v5431
        %v6674 = vunpack.c.h.b16 %v5431
        %v6675 = vunpack.c.l.b16 %v5432
        %v6676 = vunpack.c.h.b16 %v5432
        %v6677 = vunpack.c.l.b16 %v5433
        %v6678 = vunpack.c.h.b16 %v5433
        %v6679 = vunpack.c.l.b16 %v5434
        %v6680 = vunpack.c.h.b16 %v5434
        %v6681 = vunpack.c.l.b16 %v5435
        %v6682 = vunpack.c.h.b16 %v5435
        %v6683 = vunpack.c.l.b16 %v5436
        %v6684 = vunpack.c.h.b16 %v5436
        %v6685 = vunpack.c.l.b16 %v5437
        %v6686 = vunpack.c.h.b16 %v5437
        %v6687 = vunpack.c.l.b16 %v5438
        %v6688 = vunpack.c.h.b16 %v5438
        %v6689 = vunpack.c.l.b16 %v5439
        %v6690 = vunpack.c.h.b16 %v5439
        %v6691 = vunpack.c.l.b16 %v5440
        %v6692 = vunpack.c.h.b16 %v5440
        %v6693 = vunpack.c.l.b16 %v5441
        %v6694 = vunpack.c.h.b16 %v5441
        %v6695 = vunpack.c.l.b16 %v5442
        %v6696 = vunpack.c.h.b16 %v5442
        %v6697 = vunpack.c.l.b16 %v5443
        %v6698 = vunpack.c.h.b16 %v5443
        %v6699 = vunpack.c.l.b16 %v5444
        %v6700 = vunpack.c.h.b16 %v5444
        %v6701 = vunpack.c.l.b16 %v5445
        %v6702 = vunpack.c.h.b16 %v5445
        %v6703 = vunpack.c.l.b16 %v5446
        %v6704 = vunpack.c.h.b16 %v5446
        %v6705 = vunpack.c.l.b16 %v5447
        %v6706 = vunpack.c.h.b16 %v5447
        %v6707 = vunpack.c.l.b16 %v5448
        %v6708 = vunpack.c.h.b16 %v5448
        %v6709 = vunpack.c.l.b16 %v5449
        %v6710 = vunpack.c.h.b16 %v5449
        %v6711 = vunpack.c.l.b16 %v5450
        %v6712 = vunpack.c.h.b16 %v5450
        %v6713 = vunpack.c.l.b16 %v5451
        %v6714 = vunpack.c.h.b16 %v5451
        %v6715 = vunpack.c.l.b16 %v5452
        %v6716 = vunpack.c.h.b16 %v5452
        %v6717 = vunpack.c.l.b16 %v5453
        %v6718 = vunpack.c.h.b16 %v5453
        %v6719 = vunpack.c.l.b16 %v5454
        %v6720 = vunpack.c.h.b16 %v5454
        %v6721 = vunpack.c.l.b16 %v5455
        %v6722 = vunpack.c.h.b16 %v5455
        %v6723 = vunpack.c.l.b16 %v5456
        %v6724 = vunpack.c.h.b16 %v5456
        %v6725 = vunpack.c.l.b16 %v5457
        %v6726 = vunpack.c.h.b16 %v5457
        %v6727 = vunpack.c.l.b16 %v5458
        %v6728 = vunpack.c.h.b16 %v5458
        %v6729 = vunpack.c.l.b16 %v5459
        %v6730 = vunpack.c.h.b16 %v5459
        %v6731 = vunpack.c.l.b16 %v5460
        %v6732 = vunpack.c.h.b16 %v5460
        %v6733 = vunpack.c.l.b16 %v5461
        %v6734 = vunpack.c.h.b16 %v5461
        %v6735 = vunpack.c.l.b16 %v5462
        %v6736 = vunpack.c.h.b16 %v5462
        %v6737 = vunpack.c.l.b16 %v5463
        %v6738 = vunpack.c.h.b16 %v5463
        %v6739 = vunpack.c.l.b16 %v5464
        %v6740 = vunpack.c.h.b16 %v5464
        %v6741 = vunpack.c.l.b16 %v5465
        %v6742 = vunpack.c.h.b16 %v5465
        %v6743 = vunpack.c.l.b16 %v5466
        %v6744 = vunpack.c.h.b16 %v5466
        %v6745 = vunpack.c.l.b16 %v5467
        %v6746 = vunpack.c.h.b16 %v5467
        %v6747 = vunpack.c.l.b16 %v5468
        %v6748 = vunpack.c.h.b16 %v5468
        %v6749 = vunpack.c.l.b16 %v5469
        %v6750 = vunpack.c.h.b16 %v5469
        %v6751 = vunpack.c.l.b16 %v5470
        %v6752 = vunpack.c.h.b16 %v5470
        %v6753 = vunpack.c.l.b16 %v5471
        %v6754 = vunpack.c.h.b16 %v5471
        %v6755 = vunpack.c.l.b16 %v5472
        %v6756 = vunpack.c.h.b16 %v5472
        %v6757 = vunpack.c.l.b16 %v5473
        %v6758 = vunpack.c.h.b16 %v5473
        %v6759 = vunpack.c.l.b16 %v5474
        %v6760 = vunpack.c.h.b16 %v5474
        %v6761 = vunpack.c.l.b16 %v5475
        %v6762 = vunpack.c.h.b16 %v5475
        %v6763 = vunpack.c.l.b16 %v5476
        %v6764 = vunpack.c.h.b16 %v5476
        %v6765 = vunpack.c.l.b16 %v5477
        %v6766 = vunpack.c.h.b16 %v5477
        %v6767 = vunpack.c.l.b16 %v5478
        %v6768 = vunpack.c.h.b16 %v5478
        %v6769 = vunpack.c.l.b16 %v5479
        %v6770 = vunpack.c.h.b16 %v5479
        %v6771 = vunpack.c.l.b16 %v5480
        %v6772 = vunpack.c.h.b16 %v5480
        %v6773 = vunpack.c.l.b16 %v5481
        %v6774 = vunpack.c.h.b16 %v5481
        %v6775 = vunpack.c.l.b16 %v5482
        %v6776 = vunpack.c.h.b16 %v5482
        %v6777 = vunpack.c.l.b16 %v5483
        %v6778 = vunpack.c.h.b16 %v5483
        %v6779 = vunpack.c.l.b16 %v5484
        %v6780 = vunpack.c.h.b16 %v5484
        %v6781 = vunpack.c.l.b16 %v5485
        %v6782 = vunpack.c.h.b16 %v5485
        %v6783 = vunpack.c.l.b16 %v5486
        %v6784 = vunpack.c.h.b16 %v5486
        %v6785 = vunpack.c.l.b16 %v5487
        %v6786 = vunpack.c.h.b16 %v5487
        %v6787 = vunpack.c.l.b16 %v5488
        %v6788 = vunpack.c.h.b16 %v5488
        %v6789 = vunpack.c.l.b16 %v5489
        %v6790 = vunpack.c.h.b16 %v5489
        %v6791 = vunpack.c.l.b16 %v5490
        %v6792 = vunpack.c.h.b16 %v5490
        %v6793 = vunpack.c.l.b16 %v5491
        %v6794 = vunpack.c.h.b16 %v5491
        %v6795 = vunpack.c.l.b16 %v5492
        %v6796 = vunpack.c.h.b16 %v5492
        %v6797 = vunpack.c.l.b16 %v5493
        %v6798 = vunpack.c.h.b16 %v5493
        %v6799 = vunpack.c.l.b16 %v5494
        %v6800 = vunpack.c.h.b16 %v5494
        %v6801 = vunpack.c.l.b16 %v5495
        %v6802 = vunpack.c.h.b16 %v5495
        %v6803 = vunpack.c.l.b16 %v5496
        %v6804 = vunpack.c.h.b16 %v5496
        %v6805 = vunpack.c.l.b16 %v5497
        %v6806 = vunpack.c.h.b16 %v5497
        %v6807 = vunpack.c.l.b16 %v5498
        %v6808 = vunpack.c.h.b16 %v5498
        %v6809 = vunpack.c.l.b16 %v5499
        %v6810 = vunpack.c.h.b16 %v5499
        %v6811 = vunpack.c.l.b16 %v5500
        %v6812 = vunpack.c.h.b16 %v5500
        %v6813 = vunpack.c.l.b16 %v5501
        %v6814 = vunpack.c.h.b16 %v5501
        %v6815 = vunpack.c.l.b16 %v5502
        %v6816 = vunpack.c.h.b16 %v5502
        %v6817 = vunpack.c.l.b16 %v5503
        %v6818 = vunpack.c.h.b16 %v5503
        %v6819 = vunpack.c.l.b16 %v5504
        %v6820 = vunpack.c.h.b16 %v5504
        %v6821 = vunpack.c.l.b16 %v5505
        %v6822 = vunpack.c.h.b16 %v5505
        %v6823 = vunpack.c.l.b16 %v5506
        %v6824 = vunpack.c.h.b16 %v5506
        %v6825 = vunpack.c.l.b16 %v5507
        %v6826 = vunpack.c.h.b16 %v5507
        %v6827 = vunpack.c.l.b16 %v5508
        %v6828 = vunpack.c.h.b16 %v5508
        %v6829 = vunpack.c.l.b16 %v5509
        %v6830 = vunpack.c.h.b16 %v5509
        %v6831 = vunpack.c.l.b16 %v5510
        %v6832 = vunpack.c.h.b16 %v5510
        %v6833 = vunpack.c.l.b16 %v5511
        %v6834 = vunpack.c.h.b16 %v5511
        %v6835 = vunpack.c.l.b16 %v5512
        %v6836 = vunpack.c.h.b16 %v5512
        %v6837 = vunpack.c.l.b16 %v5513
        %v6838 = vunpack.c.h.b16 %v5513
        %v6839 = vunpack.c.l.b16 %v5514
        %v6840 = vunpack.c.h.b16 %v5514
        %v6841 = vunpack.c.l.b16 %v5515
        %v6842 = vunpack.c.h.b16 %v5515
        %v6843 = vunpack.c.l.b16 %v5516
        %v6844 = vunpack.c.h.b16 %v5516
        %v6845 = vunpack.c.l.b16 %v5517
        %v6846 = vunpack.c.h.b16 %v5517
        %v6847 = vunpack.c.l.b16 %v5518
        %v6848 = vunpack.c.h.b16 %v5518
        %v6849 = vunpack.c.l.b16 %v5519
        %v6850 = vunpack.c.h.b16 %v5519
        %v6851 = vunpack.c.l.b16 %v5520
        %v6852 = vunpack.c.h.b16 %v5520
        %v6853 = vunpack.c.l.b16 %v5521
        %v6854 = vunpack.c.h.b16 %v5521
        %v6855 = vunpack.c.l.b16 %v5522
        %v6856 = vunpack.c.h.b16 %v5522
        %v6857 = vunpack.c.l.b16 %v5523
        %v6858 = vunpack.c.h.b16 %v5523
        %v6859 = vunpack.c.l.b16 %v5524
        %v6860 = vunpack.c.h.b16 %v5524
        %v6861 = vunpack.c.l.b16 %v5525
        %v6862 = vunpack.c.h.b16 %v5525
        %v6863 = vunpack.c.l.b16 %v5526
        %v6864 = vunpack.c.h.b16 %v5526
        %v6865 = vunpack.c.l.b16 %v5527
        %v6866 = vunpack.c.h.b16 %v5527
        %v6867 = vunpack.c.l.b16 %v5528
        %v6868 = vunpack.c.h.b16 %v5528
        %v6869 = vunpack.c.l.b16 %v5529
        %v6870 = vunpack.c.h.b16 %v5529
        %v6871 = vunpack.c.l.b16 %v5530
        %v6872 = vunpack.c.h.b16 %v5530
        %v6873 = vunpack.c.l.b16 %v5531
        %v6874 = vunpack.c.h.b16 %v5531
        %v6875 = vunpack.c.l.b16 %v5532
        %v6876 = vunpack.c.h.b16 %v5532
        %v6877 = vunpack.c.l.b16 %v5533
        %v6878 = vunpack.c.h.b16 %v5533
        %v6879 = vunpack.c.l.b16 %v5534
        %v6880 = vunpack.c.h.b16 %v5534
        %v6881 = vunpack.c.l.b16 %v5535
        %v6882 = vunpack.c.h.b16 %v5535
        %v6883 = vunpack.c.l.b16 %v5536
        %v6884 = vunpack.c.h.b16 %v5536
        %v6885 = vunpack.c.l.b16 %v5537
        %v6886 = vunpack.c.h.b16 %v5537
        %v6887 = vunpack.c.l.b16 %v5538
        %v6888 = vunpack.c.h.b16 %v5538
        %v6889 = vunpack.c.l.b16 %v5539
        %v6890 = vunpack.c.h.b16 %v5539
        %v6891 = vunpack.c.l.b16 %v5540
        %v6892 = vunpack.c.h.b16 %v5540
        %v6893 = vunpack.c.l.b16 %v5541
        %v6894 = vunpack.c.h.b16 %v5541
        %v6895 = vunpack.c.l.b16 %v5542
        %v6896 = vunpack.c.h.b16 %v5542
        %v6897 = vunpack.c.l.b16 %v5543
        %v6898 = vunpack.c.h.b16 %v5543
        %v6899 = vunpack.c.l.b16 %v5544
        %v6900 = vunpack.c.h.b16 %v5544
        %v6901 = vunpack.c.l.b16 %v5545
        %v6902 = vunpack.c.h.b16 %v5545
        %v6903 = vunpack.c.l.b16 %v5546
        %v6904 = vunpack.c.h.b16 %v5546
        %v6905 = vunpack.c.l.b16 %v5547
        %v6906 = vunpack.c.h.b16 %v5547
        %v6907 = vunpack.c.l.b16 %v5548
        %v6908 = vunpack.c.h.b16 %v5548
        %v6909 = vunpack.c.l.b16 %v5549
        %v6910 = vunpack.c.h.b16 %v5549
        %v6911 = vunpack.c.l.b16 %v5550
        %v6912 = vunpack.c.h.b16 %v5550
        %v6913 = vunpack.c.l.b16 %v5551
        %v6914 = vunpack.c.h.b16 %v5551
        %v6915 = vunpack.c.l.b16 %v5552
        %v6916 = vunpack.c.h.b16 %v5552
        %v6917 = vunpack.c.l.b16 %v5553
        %v6918 = vunpack.c.h.b16 %v5553
        %v6919 = vunpack.c.l.b16 %v5554
        %v6920 = vunpack.c.h.b16 %v5554
        %v6921 = vunpack.c.l.b16 %v5555
        %v6922 = vunpack.c.h.b16 %v5555
        %v6923 = vunpack.c.l.b16 %v5556
        %v6924 = vunpack.c.h.b16 %v5556
        %v6925 = vunpack.c.l.b16 %v5557
        %v6926 = vunpack.c.h.b16 %v5557
        %v6927 = vunpack.c.l.b16 %v5558
        %v6928 = vunpack.c.h.b16 %v5558
        %v6929 = vunpack.c.l.b16 %v5559
        %v6930 = vunpack.c.h.b16 %v5559
        %v6931 = vunpack.c.l.b16 %v5560
        %v6932 = vunpack.c.h.b16 %v5560
        %v6933 = vunpack.c.l.b16 %v5561
        %v6934 = vunpack.c.h.b16 %v5561
        %v6935 = vunpack.c.l.b16 %v5562
        %v6936 = vunpack.c.h.b16 %v5562
        %v6937 = vunpack.c.l.b16 %v5563
        %v6938 = vunpack.c.h.b16 %v5563
        %v6939 = vunpack.c.l.b16 %v5564
        %v6940 = vunpack.c.h.b16 %v5564
        %v6941 = vunpack.c.l.b16 %v5565
        %v6942 = vunpack.c.h.b16 %v5565
        %v6943 = vunpack.c.l.b16 %v5566
        %v6944 = vunpack.c.h.b16 %v5566
        %v6945 = vunpack.c.l.b16 %v5567
        %v6946 = vunpack.c.h.b16 %v5567
        %v6947 = vunpack.c.l.b16 %v5568
        %v6948 = vunpack.c.h.b16 %v5568
        %v6949 = vunpack.c.l.b16 %v5569
        %v6950 = vunpack.c.h.b16 %v5569
        %v6951 = vunpack.c.l.b16 %v5570
        %v6952 = vunpack.c.h.b16 %v5570
        %v6953 = vunpack.c.l.b16 %v5571
        %v6954 = vunpack.c.h.b16 %v5571
        %v6955 = vunpack.c.l.b16 %v5572
        %v6956 = vunpack.c.h.b16 %v5572
        %v6957 = vunpack.c.l.b16 %v5573
        %v6958 = vunpack.c.h.b16 %v5573
        %v6959 = vunpack.c.l.b16 %v5574
        %v6960 = vunpack.c.h.b16 %v5574
        %v6961 = vunpack.c.l.b16 %v5575
        %v6962 = vunpack.c.h.b16 %v5575
        %v6963 = vunpack.c.l.b16 %v5576
        %v6964 = vunpack.c.h.b16 %v5576
        %v6965 = vunpack.c.l.b16 %v5577
        %v6966 = vunpack.c.h.b16 %v5577
        %v6967 = vunpack.c.l.b16 %v5578
        %v6968 = vunpack.c.h.b16 %v5578
        %v6969 = vunpack.c.l.b16 %v5579
        %v6970 = vunpack.c.h.b16 %v5579
        %v6971 = vunpack.c.l.b16 %v5580
        %v6972 = vunpack.c.h.b16 %v5580
        %v6973 = vunpack.c.l.b16 %v5581
        %v6974 = vunpack.c.h.b16 %v5581
        %v6975 = vunpack.c.l.b16 %v5582
        %v6976 = vunpack.c.h.b16 %v5582
        %v6977 = vunpack.c.l.b16 %v5583
        %v6978 = vunpack.c.h.b16 %v5583
        %v6979 = vunpack.c.l.b16 %v5584
        %v6980 = vunpack.c.h.b16 %v5584
        %v6981 = vunpack.c.l.b16 %v5585
        %v6982 = vunpack.c.h.b16 %v5585
        %v6983 = vunpack.c.l.b16 %v5586
        %v6984 = vunpack.c.h.b16 %v5586
        %v6985 = vunpack.c.l.b16 %v5587
        %v6986 = vunpack.c.h.b16 %v5587
        %v6987 = vunpack.c.l.b16 %v5588
        %v6988 = vunpack.c.h.b16 %v5588
        %v6989 = vunpack.c.l.b16 %v5589
        %v6990 = vunpack.c.h.b16 %v5589
        %v6991 = vunpack.c.l.b16 %v5590
        %v6992 = vunpack.c.h.b16 %v5590
        %v6993 = vunpack.c.l.b16 %v5591
        %v6994 = vunpack.c.h.b16 %v5591
        %v6995 = vunpack.c.l.b16 %v5592
        %v6996 = vunpack.c.h.b16 %v5592
        %v6997 = vunpack.c.l.b16 %v5593
        %v6998 = vunpack.c.h.b16 %v5593
        %v6999 = vunpack.c.l.b16 %v5594
        %v7000 = vunpack.c.h.b16 %v5594
        %v7001 = vunpack.c.l.b16 %v5595
        %v7002 = vunpack.c.h.b16 %v5595
        %v7003 = vunpack.c.l.b16 %v5596
        %v7004 = vunpack.c.h.b16 %v5596
        %v7005 = vunpack.c.l.b16 %v5597
        %v7006 = vunpack.c.h.b16 %v5597
        %v7007 = vunpack.c.l.b16 %v5598
        %v7008 = vunpack.c.h.b16 %v5598
        %v7009 = vunpack.c.l.b16 %v5599
        %v7010 = vunpack.c.h.b16 %v5599
        %v7011 = vunpack.c.l.b16 %v5600
        %v7012 = vunpack.c.h.b16 %v5600
        %v7013 = vunpack.c.l.b16 %v5601
        %v7014 = vunpack.c.h.b16 %v5601
        %v7015 = vunpack.c.l.b16 %v5602
        %v7016 = vunpack.c.h.b16 %v5602
        %v7017 = vunpack.c.l.b16 %v5603
        %v7018 = vunpack.c.h.b16 %v5603
        %v7019 = vunpack.c.l.b16 %v5604
        %v7020 = vunpack.c.h.b16 %v5604
        %v7021 = vunpack.c.l.b16 %v5605
        %v7022 = vunpack.c.h.b16 %v5605
        %v7023 = vunpack.c.l.b16 %v5606
        %v7024 = vunpack.c.h.b16 %v5606
        %v7025 = vunpack.c.l.b16 %v5607
        %v7026 = vunpack.c.h.b16 %v5607
        %v7027 = vunpack.c.l.b16 %v5608
        %v7028 = vunpack.c.h.b16 %v5608
        %v7029 = vunpack.c.l.b16 %v5609
        %v7030 = vunpack.c.h.b16 %v5609
        %v7031 = vunpack.c.l.b16 %v5610
        %v7032 = vunpack.c.h.b16 %v5610
        %v7033 = vunpack.c.l.b16 %v5611
        %v7034 = vunpack.c.h.b16 %v5611
        %v7035 = vunpack.c.l.b16 %v5612
        %v7036 = vunpack.c.h.b16 %v5612
        %v7037 = vunpack.c.l.b16 %v5613
        %v7038 = vunpack.c.h.b16 %v5613
        %v7039 = vunpack.c.l.b16 %v5614
        %v7040 = vunpack.c.h.b16 %v5614
        %v7041 = vunpack.c.l.b16 %v5615
        %v7042 = vunpack.c.h.b16 %v5615
        %v7043 = vunpack.c.l.b16 %v5616
        %v7044 = vunpack.c.h.b16 %v5616
        %v7045 = vunpack.c.l.b16 %v5617
        %v7046 = vunpack.c.h.b16 %v5617
        %v7047 = vunpack.c.l.b16 %v5618
        %v7048 = vunpack.c.h.b16 %v5618
        %v7049 = vunpack.c.l.b16 %v5619
        %v7050 = vunpack.c.h.b16 %v5619
        %v7051 = vunpack.c.l.b16 %v5620
        %v7052 = vunpack.c.h.b16 %v5620
        %v7053 = vunpack.c.l.b16 %v5621
        %v7054 = vunpack.c.h.b16 %v5621
        %v7055 = vunpack.c.l.b16 %v5622
        %v7056 = vunpack.c.h.b16 %v5622
        %v7057 = vunpack.c.l.b16 %v5623
        %v7058 = vunpack.c.h.b16 %v5623
        %v7059 = vunpack.c.l.b16 %v5624
        %v7060 = vunpack.c.h.b16 %v5624
        %v7061 = vunpack.c.l.b16 %v5625
        %v7062 = vunpack.c.h.b16 %v5625
        %v7063 = vunpack.c.l.b16 %v5626
        %v7064 = vunpack.c.h.b16 %v5626
        %v7065 = vunpack.c.l.b16 %v5627
        %v7066 = vunpack.c.h.b16 %v5627
        %v7067 = vunpack.c.l.b16 %v5628
        %v7068 = vunpack.c.h.b16 %v5628
        %v7069 = vunpack.c.l.b16 %v5629
        %v7070 = vunpack.c.h.b16 %v5629
        %v7071 = vunpack.c.l.b16 %v5630
        %v7072 = vunpack.c.h.b16 %v5630
        %v7073 = vunpack.c.l.b16 %v5631
        %v7074 = vunpack.c.h.b16 %v5631
        %v7075 = vunpack.c.l.b16 %v5632
        %v7076 = vunpack.c.h.b16 %v5632
        %v7077 = vunpack.c.l.b16 %v5633
        %v7078 = vunpack.c.h.b16 %v5633
        %v7079 = vunpack.c.l.b16 %v5634
        %v7080 = vunpack.c.h.b16 %v5634
        %v7081 = vunpack.c.l.b16 %v5635
        %v7082 = vunpack.c.h.b16 %v5635
        %v7083 = vunpack.c.l.b16 %v5636
        %v7084 = vunpack.c.h.b16 %v5636
        %v7085 = vunpack.c.l.b16 %v5637
        %v7086 = vunpack.c.h.b16 %v5637
        %v7087 = vunpack.c.l.b16 %v5638
        %v7088 = vunpack.c.h.b16 %v5638
        %v7089 = vunpack.c.l.b16 %v5639
        %v7090 = vunpack.c.h.b16 %v5639
        %v7091 = vunpack.c.l.b16 %v5640
        %v7092 = vunpack.c.h.b16 %v5640
        %v7093 = vunpack.c.l.b16 %v5641
        %v7094 = vunpack.c.h.b16 %v5641
        %v7095 = vunpack.c.l.b16 %v5642
        %v7096 = vunpack.c.h.b16 %v5642
        %v7097 = vunpack.c.l.b16 %v5643
        %v7098 = vunpack.c.h.b16 %v5643
        %v7099 = vunpack.c.l.b16 %v5644
        %v7100 = vunpack.c.h.b16 %v5644
        %v7101 = vunpack.c.l.b16 %v5645
        %v7102 = vunpack.c.h.b16 %v5645
        %v7103 = vunpack.c.l.b16 %v5646
        %v7104 = vunpack.c.h.b16 %v5646
        %v7105 = vunpack.c.l.b16 %v5647
        %v7106 = vunpack.c.h.b16 %v5647
        %v7107 = vunpack.c.l.b16 %v5648
        %v7108 = vunpack.c.h.b16 %v5648
        %v7109 = vunpack.c.l.b16 %v5649
        %v7110 = vunpack.c.h.b16 %v5649
        %v7111 = vunpack.c.l.b16 %v5650
        %v7112 = vunpack.c.h.b16 %v5650
        %v7113 = vunpack.c.l.b16 %v5651
        %v7114 = vunpack.c.h.b16 %v5651
        %v7115 = vunpack.c.l.b16 %v5652
        %v7116 = vunpack.c.h.b16 %v5652
        %v7117 = vunpack.c.l.b16 %v5653
        %v7118 = vunpack.c.h.b16 %v5653
        %v7119 = vunpack.c.l.b16 %v5654
        %v7120 = vunpack.c.h.b16 %v5654
        %v7121 = vunpack.c.l.b16 %v5655
        %v7122 = vunpack.c.h.b16 %v5655
        %v7123 = vunpack.c.l.b16 %v5656
        %v7124 = vunpack.c.h.b16 %v5656
        %v7125 = vunpack.c.l.b16 %v5657
        %v7126 = vunpack.c.h.b16 %v5657
        %v7127 = vunpack.c.l.b16 %v5658
        %v7128 = vunpack.c.h.b16 %v5658
        %v7129 = vunpack.c.l.b16 %v5659
        %v7130 = vunpack.c.h.b16 %v5659
        %v7131 = vunpack.c.l.b16 %v5660
        %v7132 = vunpack.c.h.b16 %v5660
        %v7133 = vunpack.c.l.b16 %v5661
        %v7134 = vunpack.c.h.b16 %v5661
        %v7135 = vunpack.c.l.b16 %v5662
        %v7136 = vunpack.c.h.b16 %v5662
        %v7137 = vunpack.c.l.b16 %v5663
        %v7138 = vunpack.c.h.b16 %v5663
        %v7139 = vunpack.c.l.b16 %v5664
        %v7140 = vunpack.c.h.b16 %v5664
        %v7141 = vunpack.c.l.b16 %v5665
        %v7142 = vunpack.c.h.b16 %v5665
        %v7143 = vunpack.c.l.b16 %v5666
        %v7144 = vunpack.c.h.b16 %v5666
        %v7145 = vunpack.c.l.b16 %v5667
        %v7146 = vunpack.c.h.b16 %v5667
        %v7147 = vunpack.c.l.b16 %v5668
        %v7148 = vunpack.c.h.b16 %v5668
        %v7149 = vunpack.c.l.b16 %v5669
        %v7150 = vunpack.c.h.b16 %v5669
        %v7151 = vunpack.c.l.b16 %v5670
        %v7152 = vunpack.c.h.b16 %v5670
        %v7153 = vunpack.c.l.b16 %v5671
        %v7154 = vunpack.c.h.b16 %v5671
        %v7155 = vunpack.c.l.b16 %v5672
        %v7156 = vunpack.c.h.b16 %v5672
        %v7157 = vunpack.c.l.b16 %v5673
        %v7158 = vunpack.c.h.b16 %v5673
        %v7159 = vunpack.c.l.b16 %v5674
        %v7160 = vunpack.c.h.b16 %v5674
        %v7161 = vunpack.c.l.b16 %v5675
        %v7162 = vunpack.c.h.b16 %v5675
        %v7163 = vunpack.c.l.b16 %v5676
        %v7164 = vunpack.c.h.b16 %v5676
        %v7165 = vunpack.c.l.b16 %v5677
        %v7166 = vunpack.c.h.b16 %v5677
        %v7167 = vunpack.c.l.b16 %v5678
        %v7168 = vunpack.c.h.b16 %v5678
        %v7169 = vunpack.c.l.b16 %v5679
        %v7170 = vunpack.c.h.b16 %v5679
        %v7171 = vunpack.c.l.b16 %v5680
        %v7172 = vunpack.c.h.b16 %v5680
        %v7173 = vunpack.c.l.b16 %v5681
        %v7174 = vunpack.c.h.b16 %v5681
        %v7175 = vunpack.c.l.b16 %v5682
        %v7176 = vunpack.c.h.b16 %v5682
        %v7177 = vunpack.c.l.b16 %v5683
        %v7178 = vunpack.c.h.b16 %v5683
        %v7179 = vunpack.c.l.b16 %v5684
        %v7180 = vunpack.c.h.b16 %v5684
        %v7181 = vunpack.c.l.b16 %v5685
        %v7182 = vunpack.c.h.b16 %v5685
        %v7183 = vunpack.c.l.b16 %v5686
        %v7184 = vunpack.c.h.b16 %v5686
        %v7185 = vunpack.c.l.b16 %v5687
        %v7186 = vunpack.c.h.b16 %v5687
        %v7187 = vunpack.c.l.b16 %v5688
        %v7188 = vunpack.c.h.b16 %v5688
        %v7189 = vunpack.c.l.b16 %v5689
        %v7190 = vunpack.c.h.b16 %v5689
        %v7191 = vunpack.c.l.b16 %v5690
        %v7192 = vunpack.c.h.b16 %v5690
        %v7193 = vunpack.c.l.b16 %v5691
        %v7194 = vunpack.c.h.b16 %v5691
        %v7195 = vunpack.c.l.b16 %v5692
        %v7196 = vunpack.c.h.b16 %v5692
        %v7197 = vunpack.c.l.b16 %v5693
        %v7198 = vunpack.c.h.b16 %v5693
        %v7199 = vunpack.c.l.b16 %v5694
        %v7200 = vunpack.c.h.b16 %v5694
        %v7201 = vunpack.c.l.b16 %v5695
        %v7202 = vunpack.c.h.b16 %v5695
        %v7203 = vunpack.c.l.b16 %v5696
        %v7204 = vunpack.c.h.b16 %v5696
        %v7205 = vunpack.c.l.b16 %v5697
        %v7206 = vunpack.c.h.b16 %v5697
        %v7207 = vunpack.c.l.b16 %v5698
        %v7208 = vunpack.c.h.b16 %v5698
        %v7209 = vunpack.c.l.b16 %v5699
        %v7210 = vunpack.c.h.b16 %v5699
        %v7211 = vunpack.c.l.b16 %v5700
        %v7212 = vunpack.c.h.b16 %v5700
        %v7213 = vunpack.c.l.b16 %v5701
        %v7214 = vunpack.c.h.b16 %v5701
        %v7215 = vunpack.c.l.b16 %v5702
        %v7216 = vunpack.c.h.b16 %v5702
        %v7217 = vunpack.c.l.b16 %v5703
        %v7218 = vunpack.c.h.b16 %v5703
        %v7219 = vunpack.c.l.b16 %v5704
        %v7220 = vunpack.c.h.b16 %v5704
        %v7221 = vunpack.c.l.b16 %v5705
        %v7222 = vunpack.c.h.b16 %v5705
        %v7223 = vunpack.c.l.b16 %v5706
        %v7224 = vunpack.c.h.b16 %v5706
        %v7225 = vunpack.c.l.b16 %v5707
        %v7226 = vunpack.c.h.b16 %v5707
        %v7227 = vunpack.c.l.b16 %v5708
        %v7228 = vunpack.c.h.b16 %v5708
        %v7229 = vunpack.c.l.b16 %v5709
        %v7230 = vunpack.c.h.b16 %v5709
        %v7231 = vunpack.c.l.b16 %v5710
        %v7232 = vunpack.c.h.b16 %v5710
        %v7233 = vunpack.c.l.b16 %v5711
        %v7234 = vunpack.c.h.b16 %v5711
        %v7235 = vunpack.c.l.b16 %v5712
        %v7236 = vunpack.c.h.b16 %v5712
        %v7237 = vunpack.c.l.b16 %v5713
        %v7238 = vunpack.c.h.b16 %v5713
        %v7239 = vunpack.c.l.b16 %v5714
        %v7240 = vunpack.c.h.b16 %v5714
        %v7241 = vunpack.c.l.b16 %v5715
        %v7242 = vunpack.c.h.b16 %v5715
        %v7243 = vunpack.c.l.b16 %v5716
        %v7244 = vunpack.c.h.b16 %v5716
        %v7245 = vunpack.c.l.b16 %v5717
        %v7246 = vunpack.c.h.b16 %v5717
        %v7247 = vunpack.c.l.b16 %v5718
        %v7248 = vunpack.c.h.b16 %v5718
        %v7249 = vunpack.c.l.b16 %v5719
        %v7250 = vunpack.c.h.b16 %v5719
        %v7251 = vunpack.c.l.b16 %v5720
        %v7252 = vunpack.c.h.b16 %v5720
        %v7253 = vunpack.c.l.b16 %v5721
        %v7254 = vunpack.c.h.b16 %v5721
        %v7255 = vunpack.c.l.b16 %v5722
        %v7256 = vunpack.c.h.b16 %v5722
        %v7257 = vunpack.c.l.b16 %v5723
        %v7258 = vunpack.c.h.b16 %v5723
        %v7259 = vunpack.c.l.b16 %v5724
        %v7260 = vunpack.c.h.b16 %v5724
        %v7261 = vunpack.c.l.b16 %v5725
        %v7262 = vunpack.c.h.b16 %v5725
        %v7263 = vunpack.c.l.b16 %v5726
        %v7264 = vunpack.c.h.b16 %v5726
        %v7265 = vunpack.c.l.b16 %v5727
        %v7266 = vunpack.c.h.b16 %v5727
        %v7267 = vunpack.c.l.b16 %v5728
        %v7268 = vunpack.c.h.b16 %v5728
        %v7269 = vunpack.c.l.b16 %v5729
        %v7270 = vunpack.c.h.b16 %v5729
        %v7271 = vunpack.c.l.b16 %v5730
        %v7272 = vunpack.c.h.b16 %v5730
        %v7273 = vunpack.c.l.b16 %v5731
        %v7274 = vunpack.c.h.b16 %v5731
        %v7275 = vunpack.c.l.b16 %v5732
        %v7276 = vunpack.c.h.b16 %v5732
        %v7277 = vunpack.c.l.b16 %v5733
        %v7278 = vunpack.c.h.b16 %v5733
        %v7279 = vunpack.c.l.b16 %v5734
        %v7280 = vunpack.c.h.b16 %v5734
        %v7281 = vunpack.c.l.b16 %v5735
        %v7282 = vunpack.c.h.b16 %v5735
        %v7283 = vunpack.c.l.b16 %v5736
        %v7284 = vunpack.c.h.b16 %v5736
        %v7285 = vunpack.c.l.b16 %v5737
        %v7286 = vunpack.c.h.b16 %v5737
        %v7287 = vunpack.c.l.b16 %v5738
        %v7288 = vunpack.c.h.b16 %v5738
        %v7289 = vunpack.c.l.b16 %v5739
        %v7290 = vunpack.c.h.b16 %v5739
        %v7291 = vunpack.c.l.b16 %v5740
        %v7292 = vunpack.c.h.b16 %v5740
        %v7293 = vunpack.c.l.b16 %v5741
        %v7294 = vunpack.c.h.b16 %v5741
        %v7295 = vunpack.c.l.b16 %v5742
        %v7296 = vunpack.c.h.b16 %v5742
        %v7297 = vunpack.c.l.b16 %v5743
        %v7298 = vunpack.c.h.b16 %v5743
        %v7299 = vunpack.c.l.b16 %v5744
        %v7300 = vunpack.c.h.b16 %v5744
        %v7301 = vunpack.c.l.b16 %v5745
        %v7302 = vunpack.c.h.b16 %v5745
        %v7303 = vunpack.c.l.b16 %v5746
        %v7304 = vunpack.c.h.b16 %v5746
        %v7305 = vunpack.c.l.b16 %v5747
        %v7306 = vunpack.c.h.b16 %v5747
        %v7307 = vunpack.c.l.b16 %v5748
        %v7308 = vunpack.c.h.b16 %v5748
        %v7309 = vunpack.c.l.b16 %v5749
        %v7310 = vunpack.c.h.b16 %v5749
        %v7311 = vunpack.c.l.b16 %v5750
        %v7312 = vunpack.c.h.b16 %v5750
        %v7313 = vunpack.c.l.b16 %v5751
        %v7314 = vunpack.c.h.b16 %v5751
        %v7315 = vunpack.c.l.b16 %v5752
        %v7316 = vunpack.c.h.b16 %v5752
        %v7317 = vunpack.c.l.b16 %v5753
        %v7318 = vunpack.c.h.b16 %v5753
        %v7319 = vunpack.c.l.b16 %v5754
        %v7320 = vunpack.c.h.b16 %v5754
        %v7321 = vunpack.c.l.b16 %v5755
        %v7322 = vunpack.c.h.b16 %v5755
        %v7323 = vunpack.c.l.b16 %v5756
        %v7324 = vunpack.c.h.b16 %v5756
        %v7325 = vunpack.c.l.b16 %v5757
        %v7326 = vunpack.c.h.b16 %v5757
        %v7327 = vunpack.c.l.b16 %v5758
        %v7328 = vunpack.c.h.b16 %v5758
        %v7329 = vunpack.c.l.b16 %v5759
        %v7330 = vunpack.c.h.b16 %v5759
        %v7331 = vunpack.c.l.b16 %v5760
        %v7332 = vunpack.c.h.b16 %v5760
        %v7333 = vunpack.c.l.b16 %v5761
        %v7334 = vunpack.c.h.b16 %v5761
        %v7335 = vunpack.c.l.b16 %v5762
        %v7336 = vunpack.c.h.b16 %v5762
        %v7337 = vunpack.c.l.b16 %v5763
        %v7338 = vunpack.c.h.b16 %v5763
        %v7339 = vunpack.c.l.b16 %v5764
        %v7340 = vunpack.c.h.b16 %v5764
        %v7341 = vunpack.c.l.b16 %v5765
        %v7342 = vunpack.c.h.b16 %v5765
        %v7343 = vunpack.c.l.b16 %v5766
        %v7344 = vunpack.c.h.b16 %v5766
        %v7345 = vunpack.c.l.b16 %v5767
        %v7346 = vunpack.c.h.b16 %v5767
        %v7347 = vunpack.c.l.b16 %v5768
        %v7348 = vunpack.c.h.b16 %v5768
        %v7349 = vunpack.c.l.b16 %v5769
        %v7350 = vunpack.c.h.b16 %v5769
        %v7351 = vunpack.c.l.b16 %v5770
        %v7352 = vunpack.c.h.b16 %v5770
        %v7353 = vunpack.c.l.b16 %v5771
        %v7354 = vunpack.c.h.b16 %v5771
        %v7355 = vunpack.c.l.b16 %v5772
        %v7356 = vunpack.c.h.b16 %v5772
        %v7357 = vunpack.c.l.b16 %v5773
        %v7358 = vunpack.c.h.b16 %v5773
        %v7359 = vunpack.c.l.b16 %v5774
        %v7360 = vunpack.c.h.b16 %v5774
        %v7361 = vunpack.c.l.b16 %v5775
        %v7362 = vunpack.c.h.b16 %v5775
        %v7363 = vunpack.c.l.b16 %v5776
        %v7364 = vunpack.c.h.b16 %v5776
        %v7365 = vunpack.c.l.b16 %v5777
        %v7366 = vunpack.c.h.b16 %v5777
        %v7367 = vunpack.c.l.b16 %v5778
        %v7368 = vunpack.c.h.b16 %v5778
        %v7369 = vunpack.c.l.b16 %v5779
        %v7370 = vunpack.c.h.b16 %v5779
        %v7371 = vunpack.c.l.b16 %v5780
        %v7372 = vunpack.c.h.b16 %v5780
        %v7373 = vunpack.c.l.b16 %v5781
        %v7374 = vunpack.c.h.b16 %v5781
        %v7375 = vunpack.c.l.b16 %v5782
        %v7376 = vunpack.c.h.b16 %v5782
        %v7377 = vunpack.c.l.b16 %v5783
        %v7378 = vunpack.c.h.b16 %v5783
        %v7379 = vunpack.c.l.b16 %v5784
        %v7380 = vunpack.c.h.b16 %v5784
        %v7381 = vunpack.c.l.b16 %v5785
        %v7382 = vunpack.c.h.b16 %v5785
        %v7383 = vunpack.c.l.b16 %v5786
        %v7384 = vunpack.c.h.b16 %v5786
        %v7385 = vunpack.c.l.b16 %v5787
        %v7386 = vunpack.c.h.b16 %v5787
        %v7387 = vunpack.c.l.b16 %v5788
        %v7388 = vunpack.c.h.b16 %v5788
        %v7389 = vunpack.c.l.b16 %v5789
        %v7390 = vunpack.c.h.b16 %v5789
        %v7391 = vunpack.c.l.b16 %v5790
        %v7392 = vunpack.c.h.b16 %v5790
        %v7393 = vunpack.c.l.b16 %v5791
        %v7394 = vunpack.c.h.b16 %v5791
        %v7395 = vunpack.c.l.b16 %v5792
        %v7396 = vunpack.c.h.b16 %v5792
        %v7397 = vunpack.c.l.b16 %v5793
        %v7398 = vunpack.c.h.b16 %v5793
        %v7399 = vunpack.c.l.b16 %v5794
        %v7400 = vunpack.c.h.b16 %v5794
        %v7401 = vunpack.c.l.b16 %v5795
        %v7402 = vunpack.c.h.b16 %v5795
        %v7403 = vunpack.c.l.b16 %v5796
        %v7404 = vunpack.c.h.b16 %v5796
        %v7405 = vunpack.c.l.b16 %v5797
        %v7406 = vunpack.c.h.b16 %v5797
        %v7407 = vunpack.c.l.b16 %v5798
        %v7408 = vunpack.c.h.b16 %v5798
        %v7409 = vunpack.c.l.b16 %v5799
        %v7410 = vunpack.c.h.b16 %v5799
        %v7411 = vunpack.c.l.b16 %v5800
        %v7412 = vunpack.c.h.b16 %v5800
        %v7413 = vunpack.c.l.b16 %v5801
        %v7414 = vunpack.c.h.b16 %v5801
        %v7415 = vunpack.c.l.b16 %v5802
        %v7416 = vunpack.c.h.b16 %v5802
        %v7417 = vunpack.c.l.b16 %v5803
        %v7418 = vunpack.c.h.b16 %v5803
        %v7419 = vunpack.c.l.b16 %v5804
        %v7420 = vunpack.c.h.b16 %v5804
        %v7421 = vunpack.c.l.b16 %v5805
        %v7422 = vunpack.c.h.b16 %v5805
        %v7423 = vunpack.c.l.b16 %v5806
        %v7424 = vunpack.c.h.b16 %v5806
        %v7425 = vunpack.c.l.b16 %v5807
        %v7426 = vunpack.c.h.b16 %v5807
        %v7427 = vunpack.c.l.b16 %v5808
        %v7428 = vunpack.c.h.b16 %v5808
        %v7429 = vunpack.c.l.b16 %v5809
        %v7430 = vunpack.c.h.b16 %v5809
        %v7431 = vunpack.c.l.b16 %v5810
        %v7432 = vunpack.c.h.b16 %v5810
        %v7433 = vunpack.c.l.b16 %v5811
        %v7434 = vunpack.c.h.b16 %v5811
        %v7435 = vunpack.c.l.b16 %v5812
        %v7436 = vunpack.c.h.b16 %v5812
        %v7437 = vunpack.c.l.b16 %v5813
        %v7438 = vunpack.c.h.b16 %v5813
        %v7439 = vunpack.c.l.b16 %v5814
        %v7440 = vunpack.c.h.b16 %v5814
        %v7441 = vunpack.c.l.b16 %v5815
        %v7442 = vunpack.c.h.b16 %v5815
        %v7443 = vunpack.c.l.b16 %v5816
        %v7444 = vunpack.c.h.b16 %v5816
        %v7445 = vunpack.c.l.b16 %v5817
        %v7446 = vunpack.c.h.b16 %v5817
        %v7447 = vunpack.c.l.b16 %v5818
        %v7448 = vunpack.c.h.b16 %v5818
        %v7449 = vunpack.c.l.b16 %v5819
        %v7450 = vunpack.c.h.b16 %v5819
        %v7451 = vunpack.c.l.b16 %v5820
        %v7452 = vunpack.c.h.b16 %v5820
        %v7453 = vunpack.c.l.b16 %v5821
        %v7454 = vunpack.c.h.b16 %v5821
        %v7455 = vunpack.c.l.b16 %v5822
        %v7456 = vunpack.c.h.b16 %v5822
        %v7457 = vunpack.c.l.b16 %v5823
        %v7458 = vunpack.c.h.b16 %v5823
        %v7459 = vunpack.c.l.b16 %v5824
        %v7460 = vunpack.c.h.b16 %v5824
        %v7461 = vunpack.c.l.b16 %v5825
        %v7462 = vunpack.c.h.b16 %v5825
        %v7463 = vunpack.c.l.b16 %v5826
        %v7464 = vunpack.c.h.b16 %v5826
        %v7465 = vunpack.c.l.b16 %v5827
        %v7466 = vunpack.c.h.b16 %v5827
        %v7467 = vunpack.c.l.b16 %v5828
        %v7468 = vunpack.c.h.b16 %v5828
        %v7469 = vunpack.c.l.b16 %v5829
        %v7470 = vunpack.c.h.b16 %v5829
        %v7471 = vunpack.c.l.b16 %v5830
        %v7472 = vunpack.c.h.b16 %v5830
        %v7473 = vunpack.c.l.b16 %v5831
        %v7474 = vunpack.c.h.b16 %v5831
        %v7475 = vunpack.c.l.b16 %v5832
        %v7476 = vunpack.c.h.b16 %v5832
        %v7477 = vunpack.c.l.b16 %v5833
        %v7478 = vunpack.c.h.b16 %v5833
        %v7479 = vunpack.c.l.b16 %v5834
        %v7480 = vunpack.c.h.b16 %v5834
        %v7481 = vunpack.c.l.b16 %v5835
        %v7482 = vunpack.c.h.b16 %v5835
        %v7483 = vunpack.c.l.b16 %v5836
        %v7484 = vunpack.c.h.b16 %v5836
        %v7485 = vunpack.c.l.b16 %v5837
        %v7486 = vunpack.c.h.b16 %v5837
        %v7487 = vunpack.c.l.b16 %v5838
        %v7488 = vunpack.c.h.b16 %v5838
        %v7489 = vunpack.c.l.b16 %v5839
        %v7490 = vunpack.c.h.b16 %v5839
        %v7491 = vunpack.c.l.b16 %v5840
        %v7492 = vunpack.c.h.b16 %v5840
        %v7493 = vunpack.c.l.b16 %v5841
        %v7494 = vunpack.c.h.b16 %v5841
        %v7495 = vunpack.c.l.b16 %v5842
        %v7496 = vunpack.c.h.b16 %v5842
        %v7497 = vunpack.c.l.b16 %v5843
        %v7498 = vunpack.c.h.b16 %v5843
        %v7499 = vunpack.c.l.b16 %v5844
        %v7500 = vunpack.c.h.b16 %v5844
        %v7501 = vunpack.c.l.b16 %v5845
        %v7502 = vunpack.c.h.b16 %v5845
        %v7503 = vunpack.c.l.b16 %v5846
        %v7504 = vunpack.c.h.b16 %v5846
        %v7505 = vunpack.c.l.b16 %v5847
        %v7506 = vunpack.c.h.b16 %v5847
        %v7507 = vunpack.c.l.b16 %v5848
        %v7508 = vunpack.c.h.b16 %v5848
        %v7509 = vunpack.c.l.b16 %v5849
        %v7510 = vunpack.c.h.b16 %v5849
        %v7511 = vunpack.c.l.b16 %v5850
        %v7512 = vunpack.c.h.b16 %v5850
        %v7513 = vunpack.c.l.b16 %v5851
        %v7514 = vunpack.c.h.b16 %v5851
        %v7515 = vunpack.c.l.b16 %v5852
        %v7516 = vunpack.c.h.b16 %v5852
        %v7517 = vunpack.c.l.b16 %v5853
        %v7518 = vunpack.c.h.b16 %v5853
        %v7519 = vunpack.c.l.b16 %v5854
        %v7520 = vunpack.c.h.b16 %v5854
        %v7521 = vunpack.c.l.b16 %v5855
        %v7522 = vunpack.c.h.b16 %v5855
        %v7523 = vunpack.c.l.b16 %v5856
        %v7524 = vunpack.c.h.b16 %v5856
        %v7525 = vunpack.c.l.b16 %v5857
        %v7526 = vunpack.c.h.b16 %v5857
        %v7527 = vunpack.c.l.b16 %v5858
        %v7528 = vunpack.c.h.b16 %v5858
        %v7529 = vunpack.c.l.b16 %v5859
        %v7530 = vunpack.c.h.b16 %v5859
        %v7531 = vunpack.c.l.b16 %v5860
        %v7532 = vunpack.c.h.b16 %v5860
        %v7533 = vunpack.c.l.b16 %v5861
        %v7534 = vunpack.c.h.b16 %v5861
        %v7535 = vunpack.c.l.b16 %v5862
        %v7536 = vunpack.c.h.b16 %v5862
        %v7537 = vunpack.c.l.b16 %v5863
        %v7538 = vunpack.c.h.b16 %v5863
        %v7539 = vunpack.c.l.b16 %v5864
        %v7540 = vunpack.c.h.b16 %v5864
        %v7541 = vunpack.c.l.b16 %v5865
        %v7542 = vunpack.c.h.b16 %v5865
        %v7543 = vunpack.c.l.b16 %v5866
        %v7544 = vunpack.c.h.b16 %v5866
        %v7545 = vunpack.c.l.b16 %v5867
        %v7546 = vunpack.c.h.b16 %v5867
        %v7547 = vunpack.c.l.b16 %v5868
        %v7548 = vunpack.c.h.b16 %v5868
        %v7549 = vunpack.c.l.b16 %v5869
        %v7550 = vunpack.c.h.b16 %v5869
        %v7551 = vunpack.c.l.b16 %v5870
        %v7552 = vunpack.c.h.b16 %v5870
        %v7553 = vunpack.c.l.b16 %v5871
        %v7554 = vunpack.c.h.b16 %v5871
        %v7555 = vunpack.c.l.b16 %v5872
        %v7556 = vunpack.c.h.b16 %v5872
        %v7557 = vunpack.c.l.b16 %v5873
        %v7558 = vunpack.c.h.b16 %v5873
        %v7559 = vunpack.c.l.b16 %v5874
        %v7560 = vunpack.c.h.b16 %v5874
        %v7561 = vunpack.c.l.b16 %v5875
        %v7562 = vunpack.c.h.b16 %v5875
        %v7563 = vunpack.c.l.b16 %v5876
        %v7564 = vunpack.c.h.b16 %v5876
        %v7565 = vunpack.c.l.b16 %v5877
        %v7566 = vunpack.c.h.b16 %v5877
        %v7567 = vunpack.c.l.b16 %v5878
        %v7568 = vunpack.c.h.b16 %v5878
        %v7569 = vunpack.c.l.b16 %v5879
        %v7570 = vunpack.c.h.b16 %v5879
        %v7571 = vunpack.c.l.b16 %v5880
        %v7572 = vunpack.c.h.b16 %v5880
        %v7573 = vunpack.c.l.b16 %v5881
        %v7574 = vunpack.c.h.b16 %v5881
        %v7575 = vunpack.c.l.b16 %v5882
        %v7576 = vunpack.c.h.b16 %v5882
        %v7577 = vunpack.c.l.b16 %v5883
        %v7578 = vunpack.c.h.b16 %v5883
        %v7579 = vunpack.c.l.b16 %v5884
        %v7580 = vunpack.c.h.b16 %v5884
        %v7581 = vunpack.c.l.b16 %v5885
        %v7582 = vunpack.c.h.b16 %v5885
        %v7583 = vunpack.c.l.b16 %v5886
        %v7584 = vunpack.c.h.b16 %v5886
        %v7585 = vunpack.c.l.b16 %v5887
        %v7586 = vunpack.c.h.b16 %v5887
        %v7587 = vunpack.c.l.b16 %v5888
        %v7588 = vunpack.c.h.b16 %v5888
        %v7589 = vunpack.c.l.b16 %v5889
        %v7590 = vunpack.c.h.b16 %v5889
        %v7591 = vunpack.c.l.b16 %v5890
        %v7592 = vunpack.c.h.b16 %v5890
        %v7593 = vunpack.c.l.b16 %v5891
        %v7594 = vunpack.c.h.b16 %v5891
        %v7595 = vunpack.c.l.b16 %v5892
        %v7596 = vunpack.c.h.b16 %v5892
        %v7597 = vunpack.c.l.b16 %v5893
        %v7598 = vunpack.c.h.b16 %v5893
        %v7599 = vunpack.c.l.b16 %v5894
        %v7600 = vunpack.c.h.b16 %v5894
        %v7601 = vunpack.c.l.b16 %v5895
        %v7602 = vunpack.c.h.b16 %v5895
        %v7603 = vunpack.c.l.b16 %v5896
        %v7604 = vunpack.c.h.b16 %v5896
        %v7605 = vunpack.c.l.b16 %v5897
        %v7606 = vunpack.c.h.b16 %v5897
        %v7607 = vunpack.c.l.b16 %v5898
        %v7608 = vunpack.c.h.b16 %v5898
        %v7609 = vunpack.c.l.b16 %v5899
        %v7610 = vunpack.c.h.b16 %v5899
        %v7611 = vunpack.c.l.b16 %v5900
        %v7612 = vunpack.c.h.b16 %v5900
        %v7613 = vunpack.c.l.b16 %v5901
        %v7614 = vunpack.c.h.b16 %v5901
        %v7615 = vunpack.c.l.b16 %v5902
        %v7616 = vunpack.c.h.b16 %v5902
        %v7617 = vunpack.c.l.b16 %v5903
        %v7618 = vunpack.c.h.b16 %v5903
        %v7619 = vunpack.c.l.b16 %v5904
        %v7620 = vunpack.c.h.b16 %v5904
        %v7621 = vunpack.c.l.b16 %v5905
        %v7622 = vunpack.c.h.b16 %v5905
        %v7623 = vunpack.c.l.b16 %v5906
        %v7624 = vunpack.c.h.b16 %v5906
        %v7625 = vunpack.c.l.b16 %v5907
        %v7626 = vunpack.c.h.b16 %v5907
        %v7627 = vunpack.c.l.b16 %v5908
        %v7628 = vunpack.c.h.b16 %v5908
        %v7629 = vunpack.c.l.b16 %v5909
        %v7630 = vunpack.c.h.b16 %v5909
        %v7631 = vunpack.c.l.b16 %v5910
        %v7632 = vunpack.c.h.b16 %v5910
        %v7633 = vunpack.c.l.b16 %v5911
        %v7634 = vunpack.c.h.b16 %v5911
        %v7635 = vunpack.c.l.b16 %v5912
        %v7636 = vunpack.c.h.b16 %v5912
        %v7637 = vunpack.c.l.b16 %v5913
        %v7638 = vunpack.c.h.b16 %v5913
        %v7639 = vunpack.c.l.b16 %v5914
        %v7640 = vunpack.c.h.b16 %v5914
        %v7641 = vunpack.c.l.b16 %v5915
        %v7642 = vunpack.c.h.b16 %v5915
        %v7643 = vunpack.c.l.b16 %v5916
        %v7644 = vunpack.c.h.b16 %v5916
        %v7645 = vunpack.c.l.b16 %v5917
        %v7646 = vunpack.c.h.b16 %v5917
        %v7647 = vunpack.c.l.b16 %v5918
        %v7648 = vunpack.c.h.b16 %v5918
        %v7649 = vunpack.c.l.b16 %v5919
        %v7650 = vunpack.c.h.b16 %v5919
        %v7651 = vpack.c.b16 %v6505, %v6499
        %v7652 = vpack.c.b16 %v6506, %v6500
        %v7653 = vpack.c.b16 %v6507, %v6501
        %v7654 = vpack.c.b16 %v6508, %v6502
        %v7655 = vpack.c.b16 %v6509, %v6503
        %v7656 = vpack.c.b16 %v6510, %v6504
        %v7657 = vpack.c.b16 %v6517, %v6511
        %v7658 = vpack.c.b16 %v6518, %v6512
        %v7659 = vpack.c.b16 %v6519, %v6513
        %v7660 = vpack.c.b16 %v6520, %v6514
        %v7661 = vpack.c.b16 %v6521, %v6515
        %v7662 = vpack.c.b16 %v6522, %v6516
        %v7663 = vpack.c.b16 %v6529, %v6523
        %v7664 = vpack.c.b16 %v6530, %v6524
        %v7665 = vpack.c.b16 %v6531, %v6525
        %v7666 = vpack.c.b16 %v6532, %v6526
        %v7667 = vpack.c.b16 %v6533, %v6527
        %v7668 = vpack.c.b16 %v6534, %v6528
        %v7669 = vpack.c.b16 %v6541, %v6535
        %v7670 = vpack.c.b16 %v6542, %v6536
        %v7671 = vpack.c.b16 %v6543, %v6537
        %v7672 = vpack.c.b16 %v6544, %v6538
        %v7673 = vpack.c.b16 %v6545, %v6539
        %v7674 = vpack.c.b16 %v6546, %v6540
        %v7675 = vpack.c.b16 %v6553, %v6547
        %v7676 = vpack.c.b16 %v6554, %v6548
        %v7677 = vpack.c.b16 %v6555, %v6549
        %v7678 = vpack.c.b16 %v6556, %v6550
        %v7679 = vpack.c.b16 %v6557, %v6551
        %v7680 = vpack.c.b16 %v6558, %v6552
        %v7681 = vpack.c.b16 %v6565, %v6559
        %v7682 = vpack.c.b16 %v6566, %v6560
        %v7683 = vpack.c.b16 %v6567, %v6561
        %v7684 = vpack.c.b16 %v6568, %v6562
        %v7685 = vpack.c.b16 %v6569, %v6563
        %v7686 = vpack.c.b16 %v6570, %v6564
        %v7687 = vpack.c.b16 %v6577, %v6571
        %v7688 = vpack.c.b16 %v6578, %v6572
        %v7689 = vpack.c.b16 %v6579, %v6573
        %v7690 = vpack.c.b16 %v6580, %v6574
        %v7691 = vpack.c.b16 %v6581, %v6575
        %v7692 = vpack.c.b16 %v6582, %v6576
        %v7693 = vpack.c.b16 %v6589, %v6583
        %v7694 = vpack.c.b16 %v6590, %v6584
        %v7695 = vpack.c.b16 %v6591, %v6585
        %v7696 = vpack.c.b16 %v6592, %v6586
        %v7697 = vpack.c.b16 %v6593, %v6587
        %v7698 = vpack.c.b16 %v6594, %v6588
        %v7699 = vpack.c.b16 %v6601, %v6595
        %v7700 = vpack.c.b16 %v6602, %v6596
        %v7701 = vpack.c.b16 %v6603, %v6597
        %v7702 = vpack.c.b16 %v6604, %v6598
        %v7703 = vpack.c.b16 %v6605, %v6599
        %v7704 = vpack.c.b16 %v6606, %v6600
        %v7705 = vpack.c.b16 %v6613, %v6607
        %v7706 = vpack.c.b16 %v6614, %v6608
        %v7707 = vpack.c.b16 %v6615, %v6609
        %v7708 = vpack.c.b16 %v6616, %v6610
        %v7709 = vpack.c.b16 %v6617, %v6611
        %v7710 = vpack.c.b16 %v6618, %v6612
        %v7711 = vpack.c.b16 %v6625, %v6619
        %v7712 = vpack.c.b16 %v6626, %v6620
        %v7713 = vpack.c.b16 %v6627, %v6621
        %v7714 = vpack.c.b16 %v6628, %v6622
        %v7715 = vpack.c.b16 %v6629, %v6623
        %v7716 = vpack.c.b16 %v6630, %v6624
        %v7717 = vpack.c.b16 %v6637, %v6631
        %v7718 = vpack.c.b16 %v6638, %v6632
        %v7719 = vpack.c.b16 %v6639, %v6633
        %v7720 = vpack.c.b16 %v6640, %v6634
        %v7721 = vpack.c.b16 %v6641, %v6635
        %v7722 = vpack.c.b16 %v6642, %v6636
        %v7723 = vpack.c.b16 %v6649, %v6643
        %v7724 = vpack.c.b16 %v6650, %v6644
        %v7725 = vpack.c.b16 %v6651, %v6645
        %v7726 = vpack.c.b16 %v6652, %v6646
        %v7727 = vpack.c.b16 %v6653, %v6647
        %v7728 = vpack.c.b16 %v6654, %v6648
        %v7729 = vpack.c.b16 %v6661, %v6655
        %v7730 = vpack.c.b16 %v6662, %v6656
        %v7731 = vpack.c.b16 %v6663, %v6657
        %v7732 = vpack.c.b16 %v6664, %v6658
        %v7733 = vpack.c.b16 %v6665, %v6659
        %v7734 = vpack.c.b16 %v6666, %v6660
        %v7735 = vpack.c.b16 %v6673, %v6667
        %v7736 = vpack.c.b16 %v6674, %v6668
        %v7737 = vpack.c.b16 %v6675, %v6669
        %v7738 = vpack.c.b16 %v6676, %v6670
        %v7739 = vpack.c.b16 %v6677, %v6671
        %v7740 = vpack.c.b16 %v6678, %v6672
        %v7741 = vpack.c.b16 %v6685, %v6679
        %v7742 = vpack.c.b16 %v6686, %v6680
        %v7743 = vpack.c.b16 %v6687, %v6681
        %v7744 = vpack.c.b16 %v6688, %v6682
        %v7745 = vpack.c.b16 %v6689, %v6683
        %v7746 = vpack.c.b16 %v6690, %v6684
        %v7747 = vpack.c.b16 %v6697, %v6691
        %v7748 = vpack.c.b16 %v6698, %v6692
        %v7749 = vpack.c.b16 %v6699, %v6693
        %v7750 = vpack.c.b16 %v6700, %v6694
        %v7751 = vpack.c.b16 %v6701, %v6695
        %v7752 = vpack.c.b16 %v6702, %v6696
        %v7753 = vpack.c.b16 %v6709, %v6703
        %v7754 = vpack.c.b16 %v6710, %v6704
        %v7755 = vpack.c.b16 %v6711, %v6705
        %v7756 = vpack.c.b16 %v6712, %v6706
        %v7757 = vpack.c.b16 %v6713, %v6707
        %v7758 = vpack.c.b16 %v6714, %v6708
        %v7759 = vpack.c.b16 %v6721, %v6715
        %v7760 = vpack.c.b16 %v6722, %v6716
        %v7761 = vpack.c.b16 %v6723, %v6717
        %v7762 = vpack.c.b16 %v6724, %v6718
        %v7763 = vpack.c.b16 %v6725, %v6719
        %v7764 = vpack.c.b16 %v6726, %v6720
        %v7765 = vpack.c.b16 %v6733, %v6727
        %v7766 = vpack.c.b16 %v6734, %v6728
        %v7767 = vpack.c.b16 %v6735, %v6729
        %v7768 = vpack.c.b16 %v6736, %v6730
        %v7769 = vpack.c.b16 %v6737, %v6731
        %v7770 = vpack.c.b16 %v6738, %v6732
        %v7771 = vpack.c.b16 %v6745, %v6739
        %v7772 = vpack.c.b16 %v6746, %v6740
        %v7773 = vpack.c.b16 %v6747, %v6741
        %v7774 = vpack.c.b16 %v6748, %v6742
        %v7775 = vpack.c.b16 %v6749, %v6743
        %v7776 = vpack.c.b16 %v6750, %v6744
        %v7777 = vpack.c.b16 %v6757, %v6751
        %v7778 = vpack.c.b16 %v6758, %v6752
        %v7779 = vpack.c.b16 %v6759, %v6753
        %v7780 = vpack.c.b16 %v6760, %v6754
        %v7781 = vpack.c.b16 %v6761, %v6755
        %v7782 = vpack.c.b16 %v6762, %v6756
        %v7783 = vpack.c.b16 %v6769, %v6763
        %v7784 = vpack.c.b16 %v6770, %v6764
        %v7785 = vpack.c.b16 %v6771, %v6765
        %v7786 = vpack.c.b16 %v6772, %v6766
        %v7787 = vpack.c.b16 %v6773, %v6767
        %v7788 = vpack.c.b16 %v6774, %v6768
        %v7789 = vpack.c.b16 %v6781, %v6775
        %v7790 = vpack.c.b16 %v6782, %v6776
        %v7791 = vpack.c.b16 %v6783, %v6777
        %v7792 = vpack.c.b16 %v6784, %v6778
        %v7793 = vpack.c.b16 %v6785, %v6779
        %v7794 = vpack.c.b16 %v6786, %v6780
        %v7795 = vpack.c.b16 %v6793, %v6787
        %v7796 = vpack.c.b16 %v6794, %v6788
        %v7797 = vpack.c.b16 %v6795, %v6789
        %v7798 = vpack.c.b16 %v6796, %v6790
        %v7799 = vpack.c.b16 %v6797, %v6791
        %v7800 = vpack.c.b16 %v6798, %v6792
        %v7801 = vpack.c.b16 %v6805, %v6799
        %v7802 = vpack.c.b16 %v6806, %v6800
        %v7803 = vpack.c.b16 %v6807, %v6801
        %v7804 = vpack.c.b16 %v6808, %v6802
        %v7805 = vpack.c.b16 %v6809, %v6803
        %v7806 = vpack.c.b16 %v6810, %v6804
        %v7807 = vpack.c.b16 %v6817, %v6811
        %v7808 = vpack.c.b16 %v6818, %v6812
        %v7809 = vpack.c.b16 %v6819, %v6813
        %v7810 = vpack.c.b16 %v6820, %v6814
        %v7811 = vpack.c.b16 %v6821, %v6815
        %v7812 = vpack.c.b16 %v6822, %v6816
        %v7813 = vpack.c.b16 %v6829, %v6823
        %v7814 = vpack.c.b16 %v6830, %v6824
        %v7815 = vpack.c.b16 %v6831, %v6825
        %v7816 = vpack.c.b16 %v6832, %v6826
        %v7817 = vpack.c.b16 %v6833, %v6827
        %v7818 = vpack.c.b16 %v6834, %v6828
        %v7819 = vpack.c.b16 %v6841, %v6835
        %v7820 = vpack.c.b16 %v6842, %v6836
        %v7821 = vpack.c.b16 %v6843, %v6837
        %v7822 = vpack.c.b16 %v6844, %v6838
        %v7823 = vpack.c.b16 %v6845, %v6839
        %v7824 = vpack.c.b16 %v6846, %v6840
        %v7825 = vpack.c.b16 %v6853, %v6847
        %v7826 = vpack.c.b16 %v6854, %v6848
        %v7827 = vpack.c.b16 %v6855, %v6849
        %v7828 = vpack.c.b16 %v6856, %v6850
        %v7829 = vpack.c.b16 %v6857, %v6851
        %v7830 = vpack.c.b16 %v6858, %v6852
        %v7831 = vpack.c.b16 %v6865, %v6859
        %v7832 = vpack.c.b16 %v6866, %v6860
        %v7833 = vpack.c.b16 %v6867, %v6861
        %v7834 = vpack.c.b16 %v6868, %v6862
        %v7835 = vpack.c.b16 %v6869, %v6863
        %v7836 = vpack.c.b16 %v6870, %v6864
        %v7837 = vpack.c.b16 %v6877, %v6871
        %v7838 = vpack.c.b16 %v6878, %v6872
        %v7839 = vpack.c.b16 %v6879, %v6873
        %v7840 = vpack.c.b16 %v6880, %v6874
        %v7841 = vpack.c.b16 %v6881, %v6875
        %v7842 = vpack.c.b16 %v6882, %v6876
        %v7843 = vpack.c.b16 %v6889, %v6883
        %v7844 = vpack.c.b16 %v6890, %v6884
        %v7845 = vpack.c.b16 %v6891, %v6885
        %v7846 = vpack.c.b16 %v6892, %v6886
        %v7847 = vpack.c.b16 %v6893, %v6887
        %v7848 = vpack.c.b16 %v6894, %v6888
        %v7849 = vpack.c.b16 %v6901, %v6895
        %v7850 = vpack.c.b16 %v6902, %v6896
        %v7851 = vpack.c.b16 %v6903, %v6897
        %v7852 = vpack.c.b16 %v6904, %v6898
        %v7853 = vpack.c.b16 %v6905, %v6899
        %v7854 = vpack.c.b16 %v6906, %v6900
        %v7855 = vpack.c.b16 %v6913, %v6907
        %v7856 = vpack.c.b16 %v6914, %v6908
        %v7857 = vpack.c.b16 %v6915, %v6909
        %v7858 = vpack.c.b16 %v6916, %v6910
        %v7859 = vpack.c.b16 %v6917, %v6911
        %v7860 = vpack.c.b16 %v6918, %v6912
        %v7861 = vpack.c.b16 %v6925, %v6919
        %v7862 = vpack.c.b16 %v6926, %v6920
        %v7863 = vpack.c.b16 %v6927, %v6921
        %v7864 = vpack.c.b16 %v6928, %v6922
        %v7865 = vpack.c.b16 %v6929, %v6923
        %v7866 = vpack.c.b16 %v6930, %v6924
        %v7867 = vpack.c.b16 %v6937, %v6931
        %v7868 = vpack.c.b16 %v6938, %v6932
        %v7869 = vpack.c.b16 %v6939, %v6933
        %v7870 = vpack.c.b16 %v6940, %v6934
        %v7871 = vpack.c.b16 %v6941, %v6935
        %v7872 = vpack.c.b16 %v6942, %v6936
        %v7873 = vpack.c.b16 %v6949, %v6943
        %v7874 = vpack.c.b16 %v6950, %v6944
        %v7875 = vpack.c.b16 %v6951, %v6945
        %v7876 = vpack.c.b16 %v6952, %v6946
        %v7877 = vpack.c.b16 %v6953, %v6947
        %v7878 = vpack.c.b16 %v6954, %v6948
        %v7879 = vpack.c.b16 %v6961, %v6955
        %v7880 = vpack.c.b16 %v6962, %v6956
        %v7881 = vpack.c.b16 %v6963, %v6957
        %v7882 = vpack.c.b16 %v6964, %v6958
        %v7883 = vpack.c.b16 %v6965, %v6959
        %v7884 = vpack.c.b16 %v6966, %v6960
        %v7885 = vpack.c.b16 %v6973, %v6967
        %v7886 = vpack.c.b16 %v6974, %v6968
        %v7887 = vpack.c.b16 %v6975, %v6969
        %v7888 = vpack.c.b16 %v6976, %v6970
        %v7889 = vpack.c.b16 %v6977, %v6971
        %v7890 = vpack.c.b16 %v6978, %v6972
        %v7891 = vpack.c.b16 %v6985, %v6979
        %v7892 = vpack.c.b16 %v6986, %v6980
        %v7893 = vpack.c.b16 %v6987, %v6981
        %v7894 = vpack.c.b16 %v6988, %v6982
        %v7895 = vpack.c.b16 %v6989, %v6983
        %v7896 = vpack.c.b16 %v6990, %v6984
        %v7897 = vpack.c.b16 %v6997, %v6991
        %v7898 = vpack.c.b16 %v6998, %v6992
        %v7899 = vpack.c.b16 %v6999, %v6993
        %v7900 = vpack.c.b16 %v7000, %v6994
        %v7901 = vpack.c.b16 %v7001, %v6995
        %v7902 = vpack.c.b16 %v7002, %v6996
        %v7903 = vpack.c.b16 %v7009, %v7003
        %v7904 = vpack.c.b16 %v7010, %v7004
        %v7905 = vpack.c.b16 %v7011, %v7005
        %v7906 = vpack.c.b16 %v7012, %v7006
        %v7907 = vpack.c.b16 %v7013, %v7007
        %v7908 = vpack.c.b16 %v7014, %v7008
        %v7909 = vpack.c.b16 %v7021, %v7015
        %v7910 = vpack.c.b16 %v7022, %v7016
        %v7911 = vpack.c.b16 %v7023, %v7017
        %v7912 = vpack.c.b16 %v7024, %v7018
        %v7913 = vpack.c.b16 %v7025, %v7019
        %v7914 = vpack.c.b16 %v7026, %v7020
        %v7915 = vpack.c.b16 %v7033, %v7027
        %v7916 = vpack.c.b16 %v7034, %v7028
        %v7917 = vpack.c.b16 %v7035, %v7029
        %v7918 = vpack.c.b16 %v7036, %v7030
        %v7919 = vpack.c.b16 %v7037, %v7031
        %v7920 = vpack.c.b16 %v7038, %v7032
        %v7921 = vpack.c.b16 %v7045, %v7039
        %v7922 = vpack.c.b16 %v7046, %v7040
        %v7923 = vpack.c.b16 %v7047, %v7041
        %v7924 = vpack.c.b16 %v7048, %v7042
        %v7925 = vpack.c.b16 %v7049, %v7043
        %v7926 = vpack.c.b16 %v7050, %v7044
        %v7927 = vpack.c.b16 %v7057, %v7051
        %v7928 = vpack.c.b16 %v7058, %v7052
        %v7929 = vpack.c.b16 %v7059, %v7053
        %v7930 = vpack.c.b16 %v7060, %v7054
        %v7931 = vpack.c.b16 %v7061, %v7055
        %v7932 = vpack.c.b16 %v7062, %v7056
        %v7933 = vpack.c.b16 %v7069, %v7063
        %v7934 = vpack.c.b16 %v7070, %v7064
        %v7935 = vpack.c.b16 %v7071, %v7065
        %v7936 = vpack.c.b16 %v7072, %v7066
        %v7937 = vpack.c.b16 %v7073, %v7067
        %v7938 = vpack.c.b16 %v7074, %v7068
        %v7939 = vpack.c.b16 %v7081, %v7075
        %v7940 = vpack.c.b16 %v7082, %v7076
        %v7941 = vpack.c.b16 %v7083, %v7077
        %v7942 = vpack.c.b16 %v7084, %v7078
        %v7943 = vpack.c.b16 %v7085, %v7079
        %v7944 = vpack.c.b16 %v7086, %v7080
        %v7945 = vpack.c.b16 %v7093, %v7087
        %v7946 = vpack.c.b16 %v7094, %v7088
        %v7947 = vpack.c.b16 %v7095, %v7089
        %v7948 = vpack.c.b16 %v7096, %v7090
        %v7949 = vpack.c.b16 %v7097, %v7091
        %v7950 = vpack.c.b16 %v7098, %v7092
        %v7951 = vpack.c.b16 %v7105, %v7099
        %v7952 = vpack.c.b16 %v7106, %v7100
        %v7953 = vpack.c.b16 %v7107, %v7101
        %v7954 = vpack.c.b16 %v7108, %v7102
        %v7955 = vpack.c.b16 %v7109, %v7103
        %v7956 = vpack.c.b16 %v7110, %v7104
        %v7957 = vpack.c.b16 %v7117, %v7111
        %v7958 = vpack.c.b16 %v7118, %v7112
        %v7959 = vpack.c.b16 %v7119, %v7113
        %v7960 = vpack.c.b16 %v7120, %v7114
        %v7961 = vpack.c.b16 %v7121, %v7115
        %v7962 = vpack.c.b16 %v7122, %v7116
        %v7963 = vpack.c.b16 %v7129, %v7123
        %v7964 = vpack.c.b16 %v7130, %v7124
        %v7965 = vpack.c.b16 %v7131, %v7125
        %v7966 = vpack.c.b16 %v7132, %v7126
        %v7967 = vpack.c.b16 %v7133, %v7127
        %v7968 = vpack.c.b16 %v7134, %v7128
        %v7969 = vpack.c.b16 %v7141, %v7135
        %v7970 = vpack.c.b16 %v7142, %v7136
        %v7971 = vpack.c.b16 %v7143, %v7137
        %v7972 = vpack.c.b16 %v7144, %v7138
        %v7973 = vpack.c.b16 %v7145, %v7139
        %v7974 = vpack.c.b16 %v7146, %v7140
        %v7975 = vpack.c.b16 %v7153, %v7147
        %v7976 = vpack.c.b16 %v7154, %v7148
        %v7977 = vpack.c.b16 %v7155, %v7149
        %v7978 = vpack.c.b16 %v7156, %v7150
        %v7979 = vpack.c.b16 %v7157, %v7151
        %v7980 = vpack.c.b16 %v7158, %v7152
        %v7981 = vpack.c.b16 %v7165, %v7159
        %v7982 = vpack.c.b16 %v7166, %v7160
        %v7983 = vpack.c.b16 %v7167, %v7161
        %v7984 = vpack.c.b16 %v7168, %v7162
        %v7985 = vpack.c.b16 %v7169, %v7163
        %v7986 = vpack.c.b16 %v7170, %v7164
        %v7987 = vpack.c.b16 %v7177, %v7171
        %v7988 = vpack.c.b16 %v7178, %v7172
        %v7989 = vpack.c.b16 %v7179, %v7173
        %v7990 = vpack.c.b16 %v7180, %v7174
        %v7991 = vpack.c.b16 %v7181, %v7175
        %v7992 = vpack.c.b16 %v7182, %v7176
        %v7993 = vpack.c.b16 %v7189, %v7183
        %v7994 = vpack.c.b16 %v7190, %v7184
        %v7995 = vpack.c.b16 %v7191, %v7185
        %v7996 = vpack.c.b16 %v7192, %v7186
        %v7997 = vpack.c.b16 %v7193, %v7187
        %v7998 = vpack.c.b16 %v7194, %v7188
        %v7999 = vpack.c.b16 %v7201, %v7195
        %v8000 = vpack.c.b16 %v7202, %v7196
        %v8001 = vpack.c.b16 %v7203, %v7197
        %v8002 = vpack.c.b16 %v7204, %v7198
        %v8003 = vpack.c.b16 %v7205, %v7199
        %v8004 = vpack.c.b16 %v7206, %v7200
        %v8005 = vpack.c.b16 %v7213, %v7207
        %v8006 = vpack.c.b16 %v7214, %v7208
        %v8007 = vpack.c.b16 %v7215, %v7209
        %v8008 = vpack.c.b16 %v7216, %v7210
        %v8009 = vpack.c.b16 %v7217, %v7211
        %v8010 = vpack.c.b16 %v7218, %v7212
        %v8011 = vpack.c.b16 %v7225, %v7219
        %v8012 = vpack.c.b16 %v7226, %v7220
        %v8013 = vpack.c.b16 %v7227, %v7221
        %v8014 = vpack.c.b16 %v7228, %v7222
        %v8015 = vpack.c.b16 %v7229, %v7223
        %v8016 = vpack.c.b16 %v7230, %v7224
        %v8017 = vpack.c.b16 %v7237, %v7231
        %v8018 = vpack.c.b16 %v7238, %v7232
        %v8019 = vpack.c.b16 %v7239, %v7233
        %v8020 = vpack.c.b16 %v7240, %v7234
        %v8021 = vpack.c.b16 %v7241, %v7235
        %v8022 = vpack.c.b16 %v7242, %v7236
        %v8023 = vpack.c.b16 %v7249, %v7243
        %v8024 = vpack.c.b16 %v7250, %v7244
        %v8025 = vpack.c.b16 %v7251, %v7245
        %v8026 = vpack.c.b16 %v7252, %v7246
        %v8027 = vpack.c.b16 %v7253, %v7247
        %v8028 = vpack.c.b16 %v7254, %v7248
        %v8029 = vpack.c.b16 %v7261, %v7255
        %v8030 = vpack.c.b16 %v7262, %v7256
        %v8031 = vpack.c.b16 %v7263, %v7257
        %v8032 = vpack.c.b16 %v7264, %v7258
        %v8033 = vpack.c.b16 %v7265, %v7259
        %v8034 = vpack.c.b16 %v7266, %v7260
        %v8035 = vpack.c.b16 %v7273, %v7267
        %v8036 = vpack.c.b16 %v7274, %v7268
        %v8037 = vpack.c.b16 %v7275, %v7269
        %v8038 = vpack.c.b16 %v7276, %v7270
        %v8039 = vpack.c.b16 %v7277, %v7271
        %v8040 = vpack.c.b16 %v7278, %v7272
        %v8041 = vpack.c.b16 %v7285, %v7279
        %v8042 = vpack.c.b16 %v7286, %v7280
        %v8043 = vpack.c.b16 %v7287, %v7281
        %v8044 = vpack.c.b16 %v7288, %v7282
        %v8045 = vpack.c.b16 %v7289, %v7283
        %v8046 = vpack.c.b16 %v7290, %v7284
        %v8047 = vpack.c.b16 %v7297, %v7291
        %v8048 = vpack.c.b16 %v7298, %v7292
        %v8049 = vpack.c.b16 %v7299, %v7293
        %v8050 = vpack.c.b16 %v7300, %v7294
        %v8051 = vpack.c.b16 %v7301, %v7295
        %v8052 = vpack.c.b16 %v7302, %v7296
        %v8053 = vpack.c.b16 %v7309, %v7303
        %v8054 = vpack.c.b16 %v7310, %v7304
        %v8055 = vpack.c.b16 %v7311, %v7305
        %v8056 = vpack.c.b16 %v7312, %v7306
        %v8057 = vpack.c.b16 %v7313, %v7307
        %v8058 = vpack.c.b16 %v7314, %v7308
        %v8059 = vpack.c.b16 %v7321, %v7315
        %v8060 = vpack.c.b16 %v7322, %v7316
        %v8061 = vpack.c.b16 %v7323, %v7317
        %v8062 = vpack.c.b16 %v7324, %v7318
        %v8063 = vpack.c.b16 %v7325, %v7319
        %v8064 = vpack.c.b16 %v7326, %v7320
        %v8065 = vpack.c.b16 %v7333, %v7327
        %v8066 = vpack.c.b16 %v7334, %v7328
        %v8067 = vpack.c.b16 %v7335, %v7329
        %v8068 = vpack.c.b16 %v7336, %v7330
        %v8069 = vpack.c.b16 %v7337, %v7331
        %v8070 = vpack.c.b16 %v7338, %v7332
        %v8071 = vpack.c.b16 %v7345, %v7339
        %v8072 = vpack.c.b16 %v7346, %v7340
        %v8073 = vpack.c.b16 %v7347, %v7341
        %v8074 = vpack.c.b16 %v7348, %v7342
        %v8075 = vpack.c.b16 %v7349, %v7343
        %v8076 = vpack.c.b16 %v7350, %v7344
        %v8077 = vpack.c.b16 %v7357, %v7351
        %v8078 = vpack.c.b16 %v7358, %v7352
        %v8079 = vpack.c.b16 %v7359, %v7353
        %v8080 = vpack.c.b16 %v7360, %v7354
        %v8081 = vpack.c.b16 %v7361, %v7355
        %v8082 = vpack.c.b16 %v7362, %v7356
        %v8083 = vpack.c.b16 %v7369, %v7363
        %v8084 = vpack.c.b16 %v7370, %v7364
        %v8085 = vpack.c.b16 %v7371, %v7365
        %v8086 = vpack.c.b16 %v7372, %v7366
        %v8087 = vpack.c.b16 %v7373, %v7367
        %v8088 = vpack.c.b16 %v7374, %v7368
        %v8089 = vpack.c.b16 %v7381, %v7375
        %v8090 = vpack.c.b16 %v7382, %v7376
        %v8091 = vpack.c.b16 %v7383, %v7377
        %v8092 = vpack.c.b16 %v7384, %v7378
        %v8093 = vpack.c.b16 %v7385, %v7379
        %v8094 = vpack.c.b16 %v7386, %v7380
        %v8095 = vpack.c.b16 %v7393, %v7387
        %v8096 = vpack.c.b16 %v7394, %v7388
        %v8097 = vpack.c.b16 %v7395, %v7389
        %v8098 = vpack.c.b16 %v7396, %v7390
        %v8099 = vpack.c.b16 %v7397, %v7391
        %v8100 = vpack.c.b16 %v7398, %v7392
        %v8101 = vpack.c.b16 %v7405, %v7399
        %v8102 = vpack.c.b16 %v7406, %v7400
        %v8103 = vpack.c.b16 %v7407, %v7401
        %v8104 = vpack.c.b16 %v7408, %v7402
        %v8105 = vpack.c.b16 %v7409, %v7403
        %v8106 = vpack.c.b16 %v7410, %v7404
        %v8107 = vpack.c.b16 %v7417, %v7411
        %v8108 = vpack.c.b16 %v7418, %v7412
        %v8109 = vpack.c.b16 %v7419, %v7413
        %v8110 = vpack.c.b16 %v7420, %v7414
        %v8111 = vpack.c.b16 %v7421, %v7415
        %v8112 = vpack.c.b16 %v7422, %v7416
        %v8113 = vpack.c.b16 %v7429, %v7423
        %v8114 = vpack.c.b16 %v7430, %v7424
        %v8115 = vpack.c.b16 %v7431, %v7425
        %v8116 = vpack.c.b16 %v7432, %v7426
        %v8117 = vpack.c.b16 %v7433, %v7427
        %v8118 = vpack.c.b16 %v7434, %v7428
        %v8119 = vpack.c.b16 %v7441, %v7435
        %v8120 = vpack.c.b16 %v7442, %v7436
        %v8121 = vpack.c.b16 %v7443, %v7437
        %v8122 = vpack.c.b16 %v7444, %v7438
        %v8123 = vpack.c.b16 %v7445, %v7439
        %v8124 = vpack.c.b16 %v7446, %v7440
        %v8125 = vpack.c.b16 %v7453, %v7447
        %v8126 = vpack.c.b16 %v7454, %v7448
        %v8127 = vpack.c.b16 %v7455, %v7449
        %v8128 = vpack.c.b16 %v7456, %v7450
        %v8129 = vpack.c.b16 %v7457, %v7451
        %v8130 = vpack.c.b16 %v7458, %v7452
        %v8131 = vpack.c.b16 %v7465, %v7459
        %v8132 = vpack.c.b16 %v7466, %v7460
        %v8133 = vpack.c.b16 %v7467, %v7461
        %v8134 = vpack.c.b16 %v7468, %v7462
        %v8135 = vpack.c.b16 %v7469, %v7463
        %v8136 = vpack.c.b16 %v7470, %v7464
        %v8137 = vpack.c.b16 %v7477, %v7471
        %v8138 = vpack.c.b16 %v7478, %v7472
        %v8139 = vpack.c.b16 %v7479, %v7473
        %v8140 = vpack.c.b16 %v7480, %v7474
        %v8141 = vpack.c.b16 %v7481, %v7475
        %v8142 = vpack.c.b16 %v7482, %v7476
        %v8143 = vpack.c.b16 %v7489, %v7483
        %v8144 = vpack.c.b16 %v7490, %v7484
        %v8145 = vpack.c.b16 %v7491, %v7485
        %v8146 = vpack.c.b16 %v7492, %v7486
        %v8147 = vpack.c.b16 %v7493, %v7487
        %v8148 = vpack.c.b16 %v7494, %v7488
        %v8149 = vpack.c.b16 %v7501, %v7495
        %v8150 = vpack.c.b16 %v7502, %v7496
        %v8151 = vpack.c.b16 %v7503, %v7497
        %v8152 = vpack.c.b16 %v7504, %v7498
        %v8153 = vpack.c.b16 %v7505, %v7499
        %v8154 = vpack.c.b16 %v7506, %v7500
        %v8155 = vpack.c.b16 %v7513, %v7507
        %v8156 = vpack.c.b16 %v7514, %v7508
        %v8157 = vpack.c.b16 %v7515, %v7509
        %v8158 = vpack.c.b16 %v7516, %v7510
        %v8159 = vpack.c.b16 %v7517, %v7511
        %v8160 = vpack.c.b16 %v7518, %v7512
        %v8161 = vpack.c.b16 %v7525, %v7519
        %v8162 = vpack.c.b16 %v7526, %v7520
        %v8163 = vpack.c.b16 %v7527, %v7521
        %v8164 = vpack.c.b16 %v7528, %v7522
        %v8165 = vpack.c.b16 %v7529, %v7523
        %v8166 = vpack.c.b16 %v7530, %v7524
        %v8167 = vpack.c.b16 %v7537, %v7531
        %v8168 = vpack.c.b16 %v7538, %v7532
        %v8169 = vpack.c.b16 %v7539, %v7533
        %v8170 = vpack.c.b16 %v7540, %v7534
        %v8171 = vpack.c.b16 %v7541, %v7535
        %v8172 = vpack.c.b16 %v7542, %v7536
        %v8173 = vpack.c.b16 %v7549, %v7543
        %v8174 = vpack.c.b16 %v7550, %v7544
        %v8175 = vpack.c.b16 %v7551, %v7545
        %v8176 = vpack.c.b16 %v7552, %v7546
        %v8177 = vpack.c.b16 %v7553, %v7547
        %v8178 = vpack.c.b16 %v7554, %v7548
        %v8179 = vpack.c.b16 %v7561, %v7555
        %v8180 = vpack.c.b16 %v7562, %v7556
        %v8181 = vpack.c.b16 %v7563, %v7557
        %v8182 = vpack.c.b16 %v7564, %v7558
        %v8183 = vpack.c.b16 %v7565, %v7559
        %v8184 = vpack.c.b16 %v7566, %v7560
        %v8185 = vpack.c.b16 %v7573, %v7567
        %v8186 = vpack.c.b16 %v7574, %v7568
        %v8187 = vpack.c.b16 %v7575, %v7569
        %v8188 = vpack.c.b16 %v7576, %v7570
        %v8189 = vpack.c.b16 %v7577, %v7571
        %v8190 = vpack.c.b16 %v7578, %v7572
        %v8191 = vpack.c.b16 %v7585, %v7579
        %v8192 = vpack.c.b16 %v7586, %v7580
        %v8193 = vpack.c.b16 %v7587, %v7581
        %v8194 = vpack.c.b16 %v7588, %v7582
        %v8195 = vpack.c.b16 %v7589, %v7583
        %v8196 = vpack.c.b16 %v7590, %v7584
        %v8197 = vpack.c.b16 %v7597, %v7591
        %v8198 = vpack.c.b16 %v7598, %v7592
        %v8199 = vpack.c.b16 %v7599, %v7593
        %v8200 = vpack.c.b16 %v7600, %v7594
        %v8201 = vpack.c.b16 %v7601, %v7595
        %v8202 = vpack.c.b16 %v7602, %v7596
        %v8203 = vpack.c.b16 %v7609, %v7603
        %v8204 = vpack.c.b16 %v7610, %v7604
        %v8205 = vpack.c.b16 %v7611, %v7605
        %v8206 = vpack.c.b16 %v7612, %v7606
        %v8207 = vpack.c.b16 %v7613, %v7607
        %v8208 = vpack.c.b16 %v7614, %v7608
        %v8209 = vpack.c.b16 %v7621, %v7615
        %v8210 = vpack.c.b16 %v7622, %v7616
        %v8211 = vpack.c.b16 %v7623, %v7617
        %v8212 = vpack.c.b16 %v7624, %v7618
        %v8213 = vpack.c.b16 %v7625, %v7619
        %v8214 = vpack.c.b16 %v7626, %v7620
        %v8215 = vpack.c.b16 %v7633, %v7627
        %v8216 = vpack.c.b16 %v7634, %v7628
        %v8217 = vpack.c.b16 %v7635, %v7629
        %v8218 = vpack.c.b16 %v7636, %v7630
        %v8219 = vpack.c.b16 %v7637, %v7631
        %v8220 = vpack.c.b16 %v7638, %v7632
        %v8221 = vpack.c.b16 %v7645, %v7639
        %v8222 = vpack.c.b16 %v7646, %v7640
        %v8223 = vpack.c.b16 %v7647, %v7641
        %v8224 = vpack.c.b16 %v7648, %v7642
        %v8225 = vpack.c.b16 %v7649, %v7643
        %v8226 = vpack.c.b16 %v7650, %v7644
        %v8806 = vcombine.high %v5920, %v5920
        %v8807 = vcombine.high %v5921, %v5921
        %v8808 = vcombine.high %v5922, %v5922
        %v8809 = vrot.slane %v5920, 1
        %v8810 = vrot.slane %v8806, 1
        %v8811 = vrot.slane %v5921, 1
        %v8812 = vrot.slane %v8807, 1
        %v8813 = vrot.slane %v5922, 1
        %v8814 = vrot.slane %v8808, 1
        %8821 = vmatprep.subr.bf16.mxu0 %v7652
        %8822 = vmatpush1.bf16.msra.mxu0 %v7651
        %8823 = vmatprep.subr.bf16.mxu0 %v7658
        %8824 = vmatpush1.bf16.msra.mxu0 %v7657
        %8825 = vmatprep.subr.bf16.mxu0 %v7664
        %8826 = vmatpush1.bf16.msra.mxu0 %v7663
        %8827 = vmatprep.subr.bf16.mxu0 %v7670
        %8828 = vmatpush1.bf16.msra.mxu0 %v7669
        %8829 = vmatprep.subr.bf16.mxu0 %v7676
        %8830 = vmatpush1.bf16.msra.mxu0 %v7675
        %8831 = vmatprep.subr.bf16.mxu0 %v7682
        %8832 = vmatpush1.bf16.msra.mxu0 %v7681
        %8833 = vmatprep.subr.bf16.mxu0 %v7688
        %8834 = vmatpush1.bf16.msra.mxu0 %v7687
        %8835 = vmatprep.subr.bf16.mxu0 %v7694
        %8836 = vmatpush1.bf16.msra.mxu0 %v7693
        %8837 = vmatprep.subr.bf16.mxu0 %v7700
        %8838 = vmatpush1.bf16.msra.mxu0 %v7699
        %8839 = vmatprep.subr.bf16.mxu0 %v7706
        %8840 = vmatpush1.bf16.msra.mxu0 %v7705
        %8841 = vmatprep.subr.bf16.mxu0 %v7712
        %8842 = vmatpush1.bf16.msra.mxu0 %v7711
        %8843 = vmatprep.subr.bf16.mxu0 %v7718
        %8844 = vmatpush1.bf16.msra.mxu0 %v7717
        %8845 = vmatprep.subr.bf16.mxu0 %v7724
        %8846 = vmatpush1.bf16.msra.mxu0 %v7723
        %8847 = vmatprep.subr.bf16.mxu0 %v7730
        %8848 = vmatpush1.bf16.msra.mxu0 %v7729
        %8849 = vmatprep.subr.bf16.mxu0 %v7736
        %8850 = vmatpush1.bf16.msra.mxu0 %v7735
        %8851 = vmatprep.subr.bf16.mxu0 %v7742
        %8852 = vmatpush1.bf16.msra.mxu0 %v7741
        %8853 = vmatprep.mubr.bf16.mxu0 %v5333
        %8854 = vmatmul.mubr.bf16.gmra.mrb[0].mxu0 %v5332
        %v8855 = vpop.f32.mrb[0].mxu0
        %v8856 = vadd.f32 %v8809, %v8855
        %v8857 = vpop.f32.mrb[0].mxu0
        %v8858 = vadd.f32 %v8810, %v8857
        %v8859 = vpop.f32.mrb[0].mxu0
        %v8860 = vpop.f32.mrb[0].mxu0
        %8861 = vdwg.mxu0
        %8862 = vmatprep.subr.bf16.mxu0 %v7748
        %8863 = vmatpush1.bf16.msra.mxu0 %v7747
        %8864 = vmatprep.subr.bf16.mxu0 %v7754
        %8865 = vmatpush1.bf16.msra.mxu0 %v7753
        %8866 = vmatprep.subr.bf16.mxu0 %v7760
        %8867 = vmatpush1.bf16.msra.mxu0 %v7759
        %8868 = vmatprep.subr.bf16.mxu0 %v7766
        %8869 = vmatpush1.bf16.msra.mxu0 %v7765
        %8870 = vmatprep.subr.bf16.mxu0 %v7772
        %8871 = vmatpush1.bf16.msra.mxu0 %v7771
        %8872 = vmatprep.subr.bf16.mxu0 %v7778
        %8873 = vmatpush1.bf16.msra.mxu0 %v7777
        %8874 = vmatprep.subr.bf16.mxu0 %v7784
        %8875 = vmatpush1.bf16.msra.mxu0 %v7783
        %8876 = vmatprep.subr.bf16.mxu0 %v7790
        %8877 = vmatpush1.bf16.msra.mxu0 %v7789
        %8878 = vmatprep.subr.bf16.mxu0 %v7796
        %8879 = vmatpush1.bf16.msra.mxu0 %v7795
        %8880 = vmatprep.subr.bf16.mxu0 %v7802
        %8881 = vmatpush1.bf16.msra.mxu0 %v7801
        %8882 = vmatprep.subr.bf16.mxu0 %v7808
        %8883 = vmatpush1.bf16.msra.mxu0 %v7807
        %8884 = vmatprep.subr.bf16.mxu0 %v7814
        %8885 = vmatpush1.bf16.msra.mxu0 %v7813
        %8886 = vmatprep.subr.bf16.mxu0 %v7820
        %8887 = vmatpush1.bf16.msra.mxu0 %v7819
        %8888 = vmatprep.subr.bf16.mxu0 %v7826
        %8889 = vmatpush1.bf16.msra.mxu0 %v7825
        %8890 = vmatprep.subr.bf16.mxu0 %v7832
        %8891 = vmatpush1.bf16.msra.mxu0 %v7831
        %8892 = vmatprep.subr.bf16.mxu0 %v7838
        %8893 = vmatpush1.bf16.msra.mxu0 %v7837
        %8894 = vmatprep.mubr.bf16.mxu0 %v5335
        %8895 = vmatmul.mubr.bf16.gmra.mrb[0].mxu0 %v5334
        %v8896 = vpop.f32.mrb[0].mxu0
        %v8897 = vadd.f32 %v8856, %v8896
        %v8898 = vpop.f32.mrb[0].mxu0
        %v8899 = vadd.f32 %v8858, %v8898
        %v8900 = vpop.f32.mrb[0].mxu0
        %v8901 = vpop.f32.mrb[0].mxu0
        %8902 = vdwg.mxu0
        %8903 = vmatprep.subr.bf16.mxu0 %v7844
        %8904 = vmatpush1.bf16.msra.mxu0 %v7843
        %8905 = vmatprep.subr.bf16.mxu0 %v7850
        %8906 = vmatpush1.bf16.msra.mxu0 %v7849
        %8907 = vmatprep.subr.bf16.mxu0 %v7856
        %8908 = vmatpush1.bf16.msra.mxu0 %v7855
        %8909 = vmatprep.subr.bf16.mxu0 %v7862
        %8910 = vmatpush1.bf16.msra.mxu0 %v7861
        %8911 = vmatprep.subr.bf16.mxu0 %v7868
        %8912 = vmatpush1.bf16.msra.mxu0 %v7867
        %8913 = vmatprep.subr.bf16.mxu0 %v7874
        %8914 = vmatpush1.bf16.msra.mxu0 %v7873
        %8915 = vmatprep.subr.bf16.mxu0 %v7880
        %8916 = vmatpush1.bf16.msra.mxu0 %v7879
        %8917 = vmatprep.subr.bf16.mxu0 %v7886
        %8918 = vmatpush1.bf16.msra.mxu0 %v7885
        %8919 = vmatprep.subr.bf16.mxu0 %v7892
        %8920 = vmatpush1.bf16.msra.mxu0 %v7891
        %8921 = vmatprep.subr.bf16.mxu0 %v7898
        %8922 = vmatpush1.bf16.msra.mxu0 %v7897
        %8923 = vmatprep.subr.bf16.mxu0 %v7904
        %8924 = vmatpush1.bf16.msra.mxu0 %v7903
        %8925 = vmatprep.subr.bf16.mxu0 %v7910
        %8926 = vmatpush1.bf16.msra.mxu0 %v7909
        %8927 = vmatprep.subr.bf16.mxu0 %v7916
        %8928 = vmatpush1.bf16.msra.mxu0 %v7915
        %8929 = vmatprep.subr.bf16.mxu0 %v7922
        %8930 = vmatpush1.bf16.msra.mxu0 %v7921
        %8931 = vmatprep.subr.bf16.mxu0 %v7928
        %8932 = vmatpush1.bf16.msra.mxu0 %v7927
        %8933 = vmatprep.subr.bf16.mxu0 %v7934
        %8934 = vmatpush1.bf16.msra.mxu0 %v7933
        %8935 = vmatprep.mubr.bf16.mxu0 %v5337
        %8936 = vmatmul.mubr.bf16.gmra.mrb[0].mxu0 %v5336
        %v8937 = vpop.f32.mrb[0].mxu0
        %v8938 = vadd.f32 %v8897, %v8937
        %v8939 = vpop.f32.mrb[0].mxu0
        %v8940 = vadd.f32 %v8899, %v8939
        %v8941 = vpop.f32.mrb[0].mxu0
        %v8942 = vpop.f32.mrb[0].mxu0
        %8943 = vdwg.mxu0
        %8944 = vmatprep.subr.bf16.mxu0 %v7940
        %8945 = vmatpush1.bf16.msra.mxu0 %v7939
        %8946 = vmatprep.subr.bf16.mxu0 %v7946
        %8947 = vmatpush1.bf16.msra.mxu0 %v7945
        %8948 = vmatprep.subr.bf16.mxu0 %v7952
        %8949 = vmatpush1.bf16.msra.mxu0 %v7951
        %8950 = vmatprep.subr.bf16.mxu0 %v7958
        %8951 = vmatpush1.bf16.msra.mxu0 %v7957
        %8952 = vmatprep.subr.bf16.mxu0 %v7964
        %8953 = vmatpush1.bf16.msra.mxu0 %v7963
        %8954 = vmatprep.subr.bf16.mxu0 %v7970
        %8955 = vmatpush1.bf16.msra.mxu0 %v7969
        %8956 = vmatprep.subr.bf16.mxu0 %v7976
        %8957 = vmatpush1.bf16.msra.mxu0 %v7975
        %8958 = vmatprep.subr.bf16.mxu0 %v7982
        %8959 = vmatpush1.bf16.msra.mxu0 %v7981
        %8960 = vmatprep.subr.bf16.mxu0 %v7988
        %8961 = vmatpush1.bf16.msra.mxu0 %v7987
        %8962 = vmatprep.subr.bf16.mxu0 %v7994
        %8963 = vmatpush1.bf16.msra.mxu0 %v7993
        %8964 = vmatprep.subr.bf16.mxu0 %v8000
        %8965 = vmatpush1.bf16.msra.mxu0 %v7999
        %8966 = vmatprep.subr.bf16.mxu0 %v8006
        %8967 = vmatpush1.bf16.msra.mxu0 %v8005
        %8968 = vmatprep.subr.bf16.mxu0 %v8012
        %8969 = vmatpush1.bf16.msra.mxu0 %v8011
        %8970 = vmatprep.subr.bf16.mxu0 %v8018
        %8971 = vmatpush1.bf16.msra.mxu0 %v8017
        %8972 = vmatprep.subr.bf16.mxu0 %v8024
        %8973 = vmatpush1.bf16.msra.mxu0 %v8023
        %8974 = vmatprep.subr.bf16.mxu0 %v8030
        %8975 = vmatpush1.bf16.msra.mxu0 %v8029
        %8976 = vmatprep.mubr.bf16.mxu0 %v5339
        %8977 = vmatmul.mubr.bf16.gmra.mrb[0].mxu0 %v5338
        %v8978 = vpop.f32.mrb[0].mxu0
        %v8979 = vadd.f32 %v8938, %v8978
        %v8980 = vpop.f32.mrb[0].mxu0
        %v8981 = vadd.f32 %v8940, %v8980
        %v8982 = vpop.f32.mrb[0].mxu0
        %v8983 = vpop.f32.mrb[0].mxu0
        %8984 = vdwg.mxu0
        %8985 = vmatprep.subr.bf16.mxu0 %v8036
        %8986 = vmatpush1.bf16.msra.mxu0 %v8035
        %8987 = vmatprep.subr.bf16.mxu0 %v8042
        %8988 = vmatpush1.bf16.msra.mxu0 %v8041
        %8989 = vmatprep.subr.bf16.mxu0 %v8048
        %8990 = vmatpush1.bf16.msra.mxu0 %v8047
        %8991 = vmatprep.subr.bf16.mxu0 %v8054
        %8992 = vmatpush1.bf16.msra.mxu0 %v8053
        %8993 = vmatprep.subr.bf16.mxu0 %v8060
        %8994 = vmatpush1.bf16.msra.mxu0 %v8059
        %8995 = vmatprep.subr.bf16.mxu0 %v8066
        %8996 = vmatpush1.bf16.msra.mxu0 %v8065
        %8997 = vmatprep.subr.bf16.mxu0 %v8072
        %8998 = vmatpush1.bf16.msra.mxu0 %v8071
        %8999 = vmatprep.subr.bf16.mxu0 %v8078
        %9000 = vmatpush1.bf16.msra.mxu0 %v8077
        %9001 = vmatprep.subr.bf16.mxu0 %v8084
        %9002 = vmatpush1.bf16.msra.mxu0 %v8083
        %9003 = vmatprep.subr.bf16.mxu0 %v8090
        %9004 = vmatpush1.bf16.msra.mxu0 %v8089
        %9005 = vmatprep.subr.bf16.mxu0 %v8096
        %9006 = vmatpush1.bf16.msra.mxu0 %v8095
        %9007 = vmatprep.subr.bf16.mxu0 %v8102
        %9008 = vmatpush1.bf16.msra.mxu0 %v8101
        %9009 = vmatprep.subr.bf16.mxu0 %v8108
        %9010 = vmatpush1.bf16.msra.mxu0 %v8107
        %9011 = vmatprep.subr.bf16.mxu0 %v8114
        %9012 = vmatpush1.bf16.msra.mxu0 %v8113
        %9013 = vmatprep.subr.bf16.mxu0 %v8120
        %9014 = vmatpush1.bf16.msra.mxu0 %v8119
        %9015 = vmatprep.subr.bf16.mxu0 %v8126
        %9016 = vmatpush1.bf16.msra.mxu0 %v8125
        %9017 = vmatprep.mubr.bf16.mxu0 %v5341
        %9018 = vmatmul.mubr.bf16.gmra.mrb[0].mxu0 %v5340
        %v9019 = vpop.f32.mrb[0].mxu0
        %v9020 = vadd.f32 %v8979, %v9019
        %v9021 = vpop.f32.mrb[0].mxu0
        %v9022 = vadd.f32 %v8981, %v9021
        %v9023 = vpop.f32.mrb[0].mxu0
        %v9024 = vpop.f32.mrb[0].mxu0
        %9025 = vdwg.mxu0
        %9026 = vmatprep.subr.bf16.mxu0 %v8132
        %9027 = vmatpush1.bf16.msra.mxu0 %v8131
        %9028 = vmatprep.subr.bf16.mxu0 %v8138
        %9029 = vmatpush1.bf16.msra.mxu0 %v8137
        %9030 = vmatprep.subr.bf16.mxu0 %v8144
        %9031 = vmatpush1.bf16.msra.mxu0 %v8143
        %9032 = vmatprep.subr.bf16.mxu0 %v8150
        %9033 = vmatpush1.bf16.msra.mxu0 %v8149
        %9034 = vmatprep.subr.bf16.mxu0 %v8156
        %9035 = vmatpush1.bf16.msra.mxu0 %v8155
        %9036 = vmatprep.subr.bf16.mxu0 %v8162
        %9037 = vmatpush1.bf16.msra.mxu0 %v8161
        %9038 = vmatprep.subr.bf16.mxu0 %v8168
        %9039 = vmatpush1.bf16.msra.mxu0 %v8167
        %9040 = vmatprep.subr.bf16.mxu0 %v8174
        %9041 = vmatpush1.bf16.msra.mxu0 %v8173
        %9042 = vmatprep.subr.bf16.mxu0 %v8180
        %9043 = vmatpush1.bf16.msra.mxu0 %v8179
        %9044 = vmatprep.subr.bf16.mxu0 %v8186
        %9045 = vmatpush1.bf16.msra.mxu0 %v8185
        %9046 = vmatprep.subr.bf16.mxu0 %v8192
        %9047 = vmatpush1.bf16.msra.mxu0 %v8191
        %9048 = vmatprep.subr.bf16.mxu0 %v8198
        %9049 = vmatpush1.bf16.msra.mxu0 %v8197
        %9050 = vmatprep.subr.bf16.mxu0 %v8204
        %9051 = vmatpush1.bf16.msra.mxu0 %v8203
        %9052 = vmatprep.subr.bf16.mxu0 %v8210
        %9053 = vmatpush1.bf16.msra.mxu0 %v8209
        %9054 = vmatprep.subr.bf16.mxu0 %v8216
        %9055 = vmatpush1.bf16.msra.mxu0 %v8215
        %9056 = vmatprep.subr.bf16.mxu0 %v8222
        %9057 = vmatpush1.bf16.msra.mxu0 %v8221
        %9058 = vmatprep.mubr.bf16.mxu0 %v5343
        %9059 = vmatmul.mubr.bf16.gmra.mrb[0].mxu0 %v5342
        %v9060 = vpop.f32.mrb[0].mxu0
        %v9061 = vadd.f32 %v9020, %v9060
        %v9062 = vpop.f32.mrb[0].mxu0
        %v9063 = vadd.f32 %v9022, %v9062
        %v9064 = vpop.f32.mrb[0].mxu0
        %v9065 = vpop.f32.mrb[0].mxu0
        %9066 = vdwg.mxu0
        %9067 = vmatprep.subr.bf16.mxu0 %v7654
        %9068 = vmatpush1.bf16.msra.mxu0 %v7653
        %9069 = vmatprep.subr.bf16.mxu0 %v7660
        %9070 = vmatpush1.bf16.msra.mxu0 %v7659
        %9071 = vmatprep.subr.bf16.mxu0 %v7666
        %9072 = vmatpush1.bf16.msra.mxu0 %v7665
        %9073 = vmatprep.subr.bf16.mxu0 %v7672
        %9074 = vmatpush1.bf16.msra.mxu0 %v7671
        %9075 = vmatprep.subr.bf16.mxu0 %v7678
        %9076 = vmatpush1.bf16.msra.mxu0 %v7677
        %9077 = vmatprep.subr.bf16.mxu0 %v7684
        %9078 = vmatpush1.bf16.msra.mxu0 %v7683
        %9079 = vmatprep.subr.bf16.mxu0 %v7690
        %9080 = vmatpush1.bf16.msra.mxu0 %v7689
        %9081 = vmatprep.subr.bf16.mxu0 %v7696
        %9082 = vmatpush1.bf16.msra.mxu0 %v7695
        %9083 = vmatprep.subr.bf16.mxu0 %v7702
        %9084 = vmatpush1.bf16.msra.mxu0 %v7701
        %9085 = vmatprep.subr.bf16.mxu0 %v7708
        %9086 = vmatpush1.bf16.msra.mxu0 %v7707
        %9087 = vmatprep.subr.bf16.mxu0 %v7714
        %9088 = vmatpush1.bf16.msra.mxu0 %v7713
        %9089 = vmatprep.subr.bf16.mxu0 %v7720
        %9090 = vmatpush1.bf16.msra.mxu0 %v7719
        %9091 = vmatprep.subr.bf16.mxu0 %v7726
        %9092 = vmatpush1.bf16.msra.mxu0 %v7725
        %9093 = vmatprep.subr.bf16.mxu0 %v7732
        %9094 = vmatpush1.bf16.msra.mxu0 %v7731
        %9095 = vmatprep.subr.bf16.mxu0 %v7738
        %9096 = vmatpush1.bf16.msra.mxu0 %v7737
        %9097 = vmatprep.subr.bf16.mxu0 %v7744
        %9098 = vmatpush1.bf16.msra.mxu0 %v7743
        %9099 = vmatprep.mubr.bf16.mxu0 %v5333
        %9100 = vmatmul.mubr.bf16.gmra.mrb[0].mxu0 %v5332
        %v9101 = vpop.f32.mrb[0].mxu0
        %v9102 = vadd.f32 %v8811, %v9101
        %v9103 = vpop.f32.mrb[0].mxu0
        %v9104 = vadd.f32 %v8812, %v9103
        %v9105 = vpop.f32.mrb[0].mxu0
        %v9106 = vpop.f32.mrb[0].mxu0
        %9107 = vdwg.mxu0
        %9108 = vmatprep.subr.bf16.mxu0 %v7750
        %9109 = vmatpush1.bf16.msra.mxu0 %v7749
        %9110 = vmatprep.subr.bf16.mxu0 %v7756
        %9111 = vmatpush1.bf16.msra.mxu0 %v7755
        %9112 = vmatprep.subr.bf16.mxu0 %v7762
        %9113 = vmatpush1.bf16.msra.mxu0 %v7761
        %9114 = vmatprep.subr.bf16.mxu0 %v7768
        %9115 = vmatpush1.bf16.msra.mxu0 %v7767
        %9116 = vmatprep.subr.bf16.mxu0 %v7774
        %9117 = vmatpush1.bf16.msra.mxu0 %v7773
        %9118 = vmatprep.subr.bf16.mxu0 %v7780
        %9119 = vmatpush1.bf16.msra.mxu0 %v7779
        %9120 = vmatprep.subr.bf16.mxu0 %v7786
        %9121 = vmatpush1.bf16.msra.mxu0 %v7785
        %9122 = vmatprep.subr.bf16.mxu0 %v7792
        %9123 = vmatpush1.bf16.msra.mxu0 %v7791
        %9124 = vmatprep.subr.bf16.mxu0 %v7798
        %9125 = vmatpush1.bf16.msra.mxu0 %v7797
        %9126 = vmatprep.subr.bf16.mxu0 %v7804
        %9127 = vmatpush1.bf16.msra.mxu0 %v7803
        %9128 = vmatprep.subr.bf16.mxu0 %v7810
        %9129 = vmatpush1.bf16.msra.mxu0 %v7809
        %9130 = vmatprep.subr.bf16.mxu0 %v7816
        %9131 = vmatpush1.bf16.msra.mxu0 %v7815
        %9132 = vmatprep.subr.bf16.mxu0 %v7822
        %9133 = vmatpush1.bf16.msra.mxu0 %v7821
        %9134 = vmatprep.subr.bf16.mxu0 %v7828
        %9135 = vmatpush1.bf16.msra.mxu0 %v7827
        %9136 = vmatprep.subr.bf16.mxu0 %v7834
        %9137 = vmatpush1.bf16.msra.mxu0 %v7833
        %9138 = vmatprep.subr.bf16.mxu0 %v7840
        %9139 = vmatpush1.bf16.msra.mxu0 %v7839
        %9140 = vmatprep.mubr.bf16.mxu0 %v5335
        %9141 = vmatmul.mubr.bf16.gmra.mrb[0].mxu0 %v5334
        %v9142 = vpop.f32.mrb[0].mxu0
        %v9143 = vadd.f32 %v9102, %v9142
        %v9144 = vpop.f32.mrb[0].mxu0
        %v9145 = vadd.f32 %v9104, %v9144
        %v9146 = vpop.f32.mrb[0].mxu0
        %v9147 = vpop.f32.mrb[0].mxu0
        %9148 = vdwg.mxu0
        %9149 = vmatprep.subr.bf16.mxu0 %v7846
        %9150 = vmatpush1.bf16.msra.mxu0 %v7845
        %9151 = vmatprep.subr.bf16.mxu0 %v7852
        %9152 = vmatpush1.bf16.msra.mxu0 %v7851
        %9153 = vmatprep.subr.bf16.mxu0 %v7858
        %9154 = vmatpush1.bf16.msra.mxu0 %v7857
        %9155 = vmatprep.subr.bf16.mxu0 %v7864
        %9156 = vmatpush1.bf16.msra.mxu0 %v7863
        %9157 = vmatprep.subr.bf16.mxu0 %v7870
        %9158 = vmatpush1.bf16.msra.mxu0 %v7869
        %9159 = vmatprep.subr.bf16.mxu0 %v7876
        %9160 = vmatpush1.bf16.msra.mxu0 %v7875
        %9161 = vmatprep.subr.bf16.mxu0 %v7882
        %9162 = vmatpush1.bf16.msra.mxu0 %v7881
        %9163 = vmatprep.subr.bf16.mxu0 %v7888
        %9164 = vmatpush1.bf16.msra.mxu0 %v7887
        %9165 = vmatprep.subr.bf16.mxu0 %v7894
        %9166 = vmatpush1.bf16.msra.mxu0 %v7893
        %9167 = vmatprep.subr.bf16.mxu0 %v7900
        %9168 = vmatpush1.bf16.msra.mxu0 %v7899
        %9169 = vmatprep.subr.bf16.mxu0 %v7906
        %9170 = vmatpush1.bf16.msra.mxu0 %v7905
        %9171 = vmatprep.subr.bf16.mxu0 %v7912
        %9172 = vmatpush1.bf16.msra.mxu0 %v7911
        %9173 = vmatprep.subr.bf16.mxu0 %v7918
        %9174 = vmatpush1.bf16.msra.mxu0 %v7917
        %9175 = vmatprep.subr.bf16.mxu0 %v7924
        %9176 = vmatpush1.bf16.msra.mxu0 %v7923
        %9177 = vmatprep.subr.bf16.mxu0 %v7930
        %9178 = vmatpush1.bf16.msra.mxu0 %v7929
        %9179 = vmatprep.subr.bf16.mxu0 %v7936
        %9180 = vmatpush1.bf16.msra.mxu0 %v7935
        %9181 = vmatprep.mubr.bf16.mxu0 %v5337
        %9182 = vmatmul.mubr.bf16.gmra.mrb[0].mxu0 %v5336
        %v9183 = vpop.f32.mrb[0].mxu0
        %v9184 = vadd.f32 %v9143, %v9183
        %v9185 = vpop.f32.mrb[0].mxu0
        %v9186 = vadd.f32 %v9145, %v9185
        %v9187 = vpop.f32.mrb[0].mxu0
        %v9188 = vpop.f32.mrb[0].mxu0
        %9189 = vdwg.mxu0
        %9190 = vmatprep.subr.bf16.mxu0 %v7942
        %9191 = vmatpush1.bf16.msra.mxu0 %v7941
        %9192 = vmatprep.subr.bf16.mxu0 %v7948
        %9193 = vmatpush1.bf16.msra.mxu0 %v7947
        %9194 = vmatprep.subr.bf16.mxu0 %v7954
        %9195 = vmatpush1.bf16.msra.mxu0 %v7953
        %9196 = vmatprep.subr.bf16.mxu0 %v7960
        %9197 = vmatpush1.bf16.msra.mxu0 %v7959
        %9198 = vmatprep.subr.bf16.mxu0 %v7966
        %9199 = vmatpush1.bf16.msra.mxu0 %v7965
        %9200 = vmatprep.subr.bf16.mxu0 %v7972
        %9201 = vmatpush1.bf16.msra.mxu0 %v7971
        %9202 = vmatprep.subr.bf16.mxu0 %v7978
        %9203 = vmatpush1.bf16.msra.mxu0 %v7977
        %9204 = vmatprep.subr.bf16.mxu0 %v7984
        %9205 = vmatpush1.bf16.msra.mxu0 %v7983
        %9206 = vmatprep.subr.bf16.mxu0 %v7990
        %9207 = vmatpush1.bf16.msra.mxu0 %v7989
        %9208 = vmatprep.subr.bf16.mxu0 %v7996
        %9209 = vmatpush1.bf16.msra.mxu0 %v7995
        %9210 = vmatprep.subr.bf16.mxu0 %v8002
        %9211 = vmatpush1.bf16.msra.mxu0 %v8001
        %9212 = vmatprep.subr.bf16.mxu0 %v8008
        %9213 = vmatpush1.bf16.msra.mxu0 %v8007
        %9214 = vmatprep.subr.bf16.mxu0 %v8014
        %9215 = vmatpush1.bf16.msra.mxu0 %v8013
        %9216 = vmatprep.subr.bf16.mxu0 %v8020
        %9217 = vmatpush1.bf16.msra.mxu0 %v8019
        %9218 = vmatprep.subr.bf16.mxu0 %v8026
        %9219 = vmatpush1.bf16.msra.mxu0 %v8025
        %9220 = vmatprep.subr.bf16.mxu0 %v8032
        %9221 = vmatpush1.bf16.msra.mxu0 %v8031
        %9222 = vmatprep.mubr.bf16.mxu0 %v5339
        %9223 = vmatmul.mubr.bf16.gmra.mrb[0].mxu0 %v5338
        %v9224 = vpop.f32.mrb[0].mxu0
        %v9225 = vadd.f32 %v9184, %v9224
        %v9226 = vpop.f32.mrb[0].mxu0
        %v9227 = vadd.f32 %v9186, %v9226
        %v9228 = vpop.f32.mrb[0].mxu0
        %v9229 = vpop.f32.mrb[0].mxu0
        %9230 = vdwg.mxu0
        %9231 = vmatprep.subr.bf16.mxu0 %v8038
        %9232 = vmatpush1.bf16.msra.mxu0 %v8037
        %9233 = vmatprep.subr.bf16.mxu0 %v8044
        %9234 = vmatpush1.bf16.msra.mxu0 %v8043
        %9235 = vmatprep.subr.bf16.mxu0 %v8050
        %9236 = vmatpush1.bf16.msra.mxu0 %v8049
        %9237 = vmatprep.subr.bf16.mxu0 %v8056
        %9238 = vmatpush1.bf16.msra.mxu0 %v8055
        %9239 = vmatprep.subr.bf16.mxu0 %v8062
        %9240 = vmatpush1.bf16.msra.mxu0 %v8061
        %9241 = vmatprep.subr.bf16.mxu0 %v8068
        %9242 = vmatpush1.bf16.msra.mxu0 %v8067
        %9243 = vmatprep.subr.bf16.mxu0 %v8074
        %9244 = vmatpush1.bf16.msra.mxu0 %v8073
        %9245 = vmatprep.subr.bf16.mxu0 %v8080
        %9246 = vmatpush1.bf16.msra.mxu0 %v8079
        %9247 = vmatprep.subr.bf16.mxu0 %v8086
        %9248 = vmatpush1.bf16.msra.mxu0 %v8085
        %9249 = vmatprep.subr.bf16.mxu0 %v8092
        %9250 = vmatpush1.bf16.msra.mxu0 %v8091
        %9251 = vmatprep.subr.bf16.mxu0 %v8098
        %9252 = vmatpush1.bf16.msra.mxu0 %v8097
        %9253 = vmatprep.subr.bf16.mxu0 %v8104
        %9254 = vmatpush1.bf16.msra.mxu0 %v8103
        %9255 = vmatprep.subr.bf16.mxu0 %v8110
        %9256 = vmatpush1.bf16.msra.mxu0 %v8109
        %9257 = vmatprep.subr.bf16.mxu0 %v8116
        %9258 = vmatpush1.bf16.msra.mxu0 %v8115
        %9259 = vmatprep.subr.bf16.mxu0 %v8122
        %9260 = vmatpush1.bf16.msra.mxu0 %v8121
        %9261 = vmatprep.subr.bf16.mxu0 %v8128
        %9262 = vmatpush1.bf16.msra.mxu0 %v8127
        %9263 = vmatprep.mubr.bf16.mxu0 %v5341
        %9264 = vmatmul.mubr.bf16.gmra.mrb[0].mxu0 %v5340
        %v9265 = vpop.f32.mrb[0].mxu0
        %v9266 = vadd.f32 %v9225, %v9265
        %v9267 = vpop.f32.mrb[0].mxu0
        %v9268 = vadd.f32 %v9227, %v9267
        %v9269 = vpop.f32.mrb[0].mxu0
        %v9270 = vpop.f32.mrb[0].mxu0
        %9271 = vdwg.mxu0
        %9272 = vmatprep.subr.bf16.mxu0 %v8134
        %9273 = vmatpush1.bf16.msra.mxu0 %v8133
        %9274 = vmatprep.subr.bf16.mxu0 %v8140
        %9275 = vmatpush1.bf16.msra.mxu0 %v8139
        %9276 = vmatprep.subr.bf16.mxu0 %v8146
        %9277 = vmatpush1.bf16.msra.mxu0 %v8145
        %9278 = vmatprep.subr.bf16.mxu0 %v8152
        %9279 = vmatpush1.bf16.msra.mxu0 %v8151
        %9280 = vmatprep.subr.bf16.mxu0 %v8158
        %9281 = vmatpush1.bf16.msra.mxu0 %v8157
        %9282 = vmatprep.subr.bf16.mxu0 %v8164
        %9283 = vmatpush1.bf16.msra.mxu0 %v8163
        %9284 = vmatprep.subr.bf16.mxu0 %v8170
        %9285 = vmatpush1.bf16.msra.mxu0 %v8169
        %9286 = vmatprep.subr.bf16.mxu0 %v8176
        %9287 = vmatpush1.bf16.msra.mxu0 %v8175
        %9288 = vmatprep.subr.bf16.mxu0 %v8182
        %9289 = vmatpush1.bf16.msra.mxu0 %v8181
        %9290 = vmatprep.subr.bf16.mxu0 %v8188
        %9291 = vmatpush1.bf16.msra.mxu0 %v8187
        %9292 = vmatprep.subr.bf16.mxu0 %v8194
        %9293 = vmatpush1.bf16.msra.mxu0 %v8193
        %9294 = vmatprep.subr.bf16.mxu0 %v8200
        %9295 = vmatpush1.bf16.msra.mxu0 %v8199
        %9296 = vmatprep.subr.bf16.mxu0 %v8206
        %9297 = vmatpush1.bf16.msra.mxu0 %v8205
        %9298 = vmatprep.subr.bf16.mxu0 %v8212
        %9299 = vmatpush1.bf16.msra.mxu0 %v8211
        %9300 = vmatprep.subr.bf16.mxu0 %v8218
        %9301 = vmatpush1.bf16.msra.mxu0 %v8217
        %9302 = vmatprep.subr.bf16.mxu0 %v8224
        %9303 = vmatpush1.bf16.msra.mxu0 %v8223
        %9304 = vmatprep.mubr.bf16.mxu0 %v5343
        %9305 = vmatmul.mubr.bf16.gmra.mrb[0].mxu0 %v5342
        %v9306 = vpop.f32.mrb[0].mxu0
        %v9307 = vadd.f32 %v9266, %v9306
        %v9308 = vpop.f32.mrb[0].mxu0
        %v9309 = vadd.f32 %v9268, %v9308
        %v9310 = vpop.f32.mrb[0].mxu0
        %v9311 = vpop.f32.mrb[0].mxu0
        %9312 = vdwg.mxu0
        %9313 = vmatprep.subr.bf16.mxu0 %v7656
        %9314 = vmatpush1.bf16.msra.mxu0 %v7655
        %9315 = vmatprep.subr.bf16.mxu0 %v7662
        %9316 = vmatpush1.bf16.msra.mxu0 %v7661
        %9317 = vmatprep.subr.bf16.mxu0 %v7668
        %9318 = vmatpush1.bf16.msra.mxu0 %v7667
        %9319 = vmatprep.subr.bf16.mxu0 %v7674
        %9320 = vmatpush1.bf16.msra.mxu0 %v7673
        %9321 = vmatprep.subr.bf16.mxu0 %v7680
        %9322 = vmatpush1.bf16.msra.mxu0 %v7679
        %9323 = vmatprep.subr.bf16.mxu0 %v7686
        %9324 = vmatpush1.bf16.msra.mxu0 %v7685
        %9325 = vmatprep.subr.bf16.mxu0 %v7692
        %9326 = vmatpush1.bf16.msra.mxu0 %v7691
        %9327 = vmatprep.subr.bf16.mxu0 %v7698
        %9328 = vmatpush1.bf16.msra.mxu0 %v7697
        %9329 = vmatprep.subr.bf16.mxu0 %v7704
        %9330 = vmatpush1.bf16.msra.mxu0 %v7703
        %9331 = vmatprep.subr.bf16.mxu0 %v7710
        %9332 = vmatpush1.bf16.msra.mxu0 %v7709
        %9333 = vmatprep.subr.bf16.mxu0 %v7716
        %9334 = vmatpush1.bf16.msra.mxu0 %v7715
        %9335 = vmatprep.subr.bf16.mxu0 %v7722
        %9336 = vmatpush1.bf16.msra.mxu0 %v7721
        %9337 = vmatprep.subr.bf16.mxu0 %v7728
        %9338 = vmatpush1.bf16.msra.mxu0 %v7727
        %9339 = vmatprep.subr.bf16.mxu0 %v7734
        %9340 = vmatpush1.bf16.msra.mxu0 %v7733
        %9341 = vmatprep.subr.bf16.mxu0 %v7740
        %9342 = vmatpush1.bf16.msra.mxu0 %v7739
        %9343 = vmatprep.subr.bf16.mxu0 %v7746
        %9344 = vmatpush1.bf16.msra.mxu0 %v7745
        %9345 = vmatprep.mubr.bf16.mxu0 %v5333
        %9346 = vmatmul.mubr.bf16.gmra.mrb[0].mxu0 %v5332
        %v9347 = vpop.f32.mrb[0].mxu0
        %v9348 = vadd.f32 %v8813, %v9347
        %v9349 = vpop.f32.mrb[0].mxu0
        %v9350 = vadd.f32 %v8814, %v9349
        %v9351 = vpop.f32.mrb[0].mxu0
        %v9352 = vpop.f32.mrb[0].mxu0
        %9353 = vdwg.mxu0
        %9354 = vmatprep.subr.bf16.mxu0 %v7752
        %9355 = vmatpush1.bf16.msra.mxu0 %v7751
        %9356 = vmatprep.subr.bf16.mxu0 %v7758
        %9357 = vmatpush1.bf16.msra.mxu0 %v7757
        %9358 = vmatprep.subr.bf16.mxu0 %v7764
        %9359 = vmatpush1.bf16.msra.mxu0 %v7763
        %9360 = vmatprep.subr.bf16.mxu0 %v7770
        %9361 = vmatpush1.bf16.msra.mxu0 %v7769
        %9362 = vmatprep.subr.bf16.mxu0 %v7776
        %9363 = vmatpush1.bf16.msra.mxu0 %v7775
        %9364 = vmatprep.subr.bf16.mxu0 %v7782
        %9365 = vmatpush1.bf16.msra.mxu0 %v7781
        %9366 = vmatprep.subr.bf16.mxu0 %v7788
        %9367 = vmatpush1.bf16.msra.mxu0 %v7787
        %9368 = vmatprep.subr.bf16.mxu0 %v7794
        %9369 = vmatpush1.bf16.msra.mxu0 %v7793
        %9370 = vmatprep.subr.bf16.mxu0 %v7800
        %9371 = vmatpush1.bf16.msra.mxu0 %v7799
        %9372 = vmatprep.subr.bf16.mxu0 %v7806
        %9373 = vmatpush1.bf16.msra.mxu0 %v7805
        %9374 = vmatprep.subr.bf16.mxu0 %v7812
        %9375 = vmatpush1.bf16.msra.mxu0 %v7811
        %9376 = vmatprep.subr.bf16.mxu0 %v7818
        %9377 = vmatpush1.bf16.msra.mxu0 %v7817
        %9378 = vmatprep.subr.bf16.mxu0 %v7824
        %9379 = vmatpush1.bf16.msra.mxu0 %v7823
        %9380 = vmatprep.subr.bf16.mxu0 %v7830
        %9381 = vmatpush1.bf16.msra.mxu0 %v7829
        %9382 = vmatprep.subr.bf16.mxu0 %v7836
        %9383 = vmatpush1.bf16.msra.mxu0 %v7835
        %9384 = vmatprep.subr.bf16.mxu0 %v7842
        %9385 = vmatpush1.bf16.msra.mxu0 %v7841
        %9386 = vmatprep.mubr.bf16.mxu0 %v5335
        %9387 = vmatmul.mubr.bf16.gmra.mrb[0].mxu0 %v5334
        %v9388 = vpop.f32.mrb[0].mxu0
        %v9389 = vadd.f32 %v9348, %v9388
        %v9390 = vpop.f32.mrb[0].mxu0
        %v9391 = vadd.f32 %v9350, %v9390
        %v9392 = vpop.f32.mrb[0].mxu0
        %v9393 = vpop.f32.mrb[0].mxu0
        %9394 = vdwg.mxu0
        %9395 = vmatprep.subr.bf16.mxu0 %v7848
        %9396 = vmatpush1.bf16.msra.mxu0 %v7847
        %9397 = vmatprep.subr.bf16.mxu0 %v7854
        %9398 = vmatpush1.bf16.msra.mxu0 %v7853
        %9399 = vmatprep.subr.bf16.mxu0 %v7860
        %9400 = vmatpush1.bf16.msra.mxu0 %v7859
        %9401 = vmatprep.subr.bf16.mxu0 %v7866
        %9402 = vmatpush1.bf16.msra.mxu0 %v7865
        %9403 = vmatprep.subr.bf16.mxu0 %v7872
        %9404 = vmatpush1.bf16.msra.mxu0 %v7871
        %9405 = vmatprep.subr.bf16.mxu0 %v7878
        %9406 = vmatpush1.bf16.msra.mxu0 %v7877
        %9407 = vmatprep.subr.bf16.mxu0 %v7884
        %9408 = vmatpush1.bf16.msra.mxu0 %v7883
        %9409 = vmatprep.subr.bf16.mxu0 %v7890
        %9410 = vmatpush1.bf16.msra.mxu0 %v7889
        %9411 = vmatprep.subr.bf16.mxu0 %v7896
        %9412 = vmatpush1.bf16.msra.mxu0 %v7895
        %9413 = vmatprep.subr.bf16.mxu0 %v7902
        %9414 = vmatpush1.bf16.msra.mxu0 %v7901
        %9415 = vmatprep.subr.bf16.mxu0 %v7908
        %9416 = vmatpush1.bf16.msra.mxu0 %v7907
        %9417 = vmatprep.subr.bf16.mxu0 %v7914
        %9418 = vmatpush1.bf16.msra.mxu0 %v7913
        %9419 = vmatprep.subr.bf16.mxu0 %v7920
        %9420 = vmatpush1.bf16.msra.mxu0 %v7919
        %9421 = vmatprep.subr.bf16.mxu0 %v7926
        %9422 = vmatpush1.bf16.msra.mxu0 %v7925
        %9423 = vmatprep.subr.bf16.mxu0 %v7932
        %9424 = vmatpush1.bf16.msra.mxu0 %v7931
        %9425 = vmatprep.subr.bf16.mxu0 %v7938
        %9426 = vmatpush1.bf16.msra.mxu0 %v7937
        %9427 = vmatprep.mubr.bf16.mxu0 %v5337
        %9428 = vmatmul.mubr.bf16.gmra.mrb[0].mxu0 %v5336
        %v9429 = vpop.f32.mrb[0].mxu0
        %v9430 = vadd.f32 %v9389, %v9429
        %v9431 = vpop.f32.mrb[0].mxu0
        %v9432 = vadd.f32 %v9391, %v9431
        %v9433 = vpop.f32.mrb[0].mxu0
        %v9434 = vpop.f32.mrb[0].mxu0
        %9435 = vdwg.mxu0
        %9436 = vmatprep.subr.bf16.mxu0 %v7944
        %9437 = vmatpush1.bf16.msra.mxu0 %v7943
        %9438 = vmatprep.subr.bf16.mxu0 %v7950
        %9439 = vmatpush1.bf16.msra.mxu0 %v7949
        %9440 = vmatprep.subr.bf16.mxu0 %v7956
        %9441 = vmatpush1.bf16.msra.mxu0 %v7955
        %9442 = vmatprep.subr.bf16.mxu0 %v7962
        %9443 = vmatpush1.bf16.msra.mxu0 %v7961
        %9444 = vmatprep.subr.bf16.mxu0 %v7968
        %9445 = vmatpush1.bf16.msra.mxu0 %v7967
        %9446 = vmatprep.subr.bf16.mxu0 %v7974
        %9447 = vmatpush1.bf16.msra.mxu0 %v7973
        %9448 = vmatprep.subr.bf16.mxu0 %v7980
        %9449 = vmatpush1.bf16.msra.mxu0 %v7979
        %9450 = vmatprep.subr.bf16.mxu0 %v7986
        %9451 = vmatpush1.bf16.msra.mxu0 %v7985
        %9452 = vmatprep.subr.bf16.mxu0 %v7992
        %9453 = vmatpush1.bf16.msra.mxu0 %v7991
        %9454 = vmatprep.subr.bf16.mxu0 %v7998
        %9455 = vmatpush1.bf16.msra.mxu0 %v7997
        %9456 = vmatprep.subr.bf16.mxu0 %v8004
        %9457 = vmatpush1.bf16.msra.mxu0 %v8003
        %9458 = vmatprep.subr.bf16.mxu0 %v8010
        %9459 = vmatpush1.bf16.msra.mxu0 %v8009
        %9460 = vmatprep.subr.bf16.mxu0 %v8016
        %9461 = vmatpush1.bf16.msra.mxu0 %v8015
        %9462 = vmatprep.subr.bf16.mxu0 %v8022
        %9463 = vmatpush1.bf16.msra.mxu0 %v8021
        %9464 = vmatprep.subr.bf16.mxu0 %v8028
        %9465 = vmatpush1.bf16.msra.mxu0 %v8027
        %9466 = vmatprep.subr.bf16.mxu0 %v8034
        %9467 = vmatpush1.bf16.msra.mxu0 %v8033
        %9468 = vmatprep.mubr.bf16.mxu0 %v5339
        %9469 = vmatmul.mubr.bf16.gmra.mrb[0].mxu0 %v5338
        %v9470 = vpop.f32.mrb[0].mxu0
        %v9471 = vadd.f32 %v9430, %v9470
        %v9472 = vpop.f32.mrb[0].mxu0
        %v9473 = vadd.f32 %v9432, %v9472
        %v9474 = vpop.f32.mrb[0].mxu0
        %v9475 = vpop.f32.mrb[0].mxu0
        %9476 = vdwg.mxu0
        %9477 = vmatprep.subr.bf16.mxu0 %v8040
        %9478 = vmatpush1.bf16.msra.mxu0 %v8039
        %9479 = vmatprep.subr.bf16.mxu0 %v8046
        %9480 = vmatpush1.bf16.msra.mxu0 %v8045
        %9481 = vmatprep.subr.bf16.mxu0 %v8052
        %9482 = vmatpush1.bf16.msra.mxu0 %v8051
        %9483 = vmatprep.subr.bf16.mxu0 %v8058
        %9484 = vmatpush1.bf16.msra.mxu0 %v8057
        %9485 = vmatprep.subr.bf16.mxu0 %v8064
        %9486 = vmatpush1.bf16.msra.mxu0 %v8063
        %9487 = vmatprep.subr.bf16.mxu0 %v8070
        %9488 = vmatpush1.bf16.msra.mxu0 %v8069
        %9489 = vmatprep.subr.bf16.mxu0 %v8076
        %9490 = vmatpush1.bf16.msra.mxu0 %v8075
        %9491 = vmatprep.subr.bf16.mxu0 %v8082
        %9492 = vmatpush1.bf16.msra.mxu0 %v8081
        %9493 = vmatprep.subr.bf16.mxu0 %v8088
        %9494 = vmatpush1.bf16.msra.mxu0 %v8087
        %9495 = vmatprep.subr.bf16.mxu0 %v8094
        %9496 = vmatpush1.bf16.msra.mxu0 %v8093
        %9497 = vmatprep.subr.bf16.mxu0 %v8100
        %9498 = vmatpush1.bf16.msra.mxu0 %v8099
        %9499 = vmatprep.subr.bf16.mxu0 %v8106
        %9500 = vmatpush1.bf16.msra.mxu0 %v8105
        %9501 = vmatprep.subr.bf16.mxu0 %v8112
        %9502 = vmatpush1.bf16.msra.mxu0 %v8111
        %9503 = vmatprep.subr.bf16.mxu0 %v8118
        %9504 = vmatpush1.bf16.msra.mxu0 %v8117
        %9505 = vmatprep.subr.bf16.mxu0 %v8124
        %9506 = vmatpush1.bf16.msra.mxu0 %v8123
        %9507 = vmatprep.subr.bf16.mxu0 %v8130
        %9508 = vmatpush1.bf16.msra.mxu0 %v8129
        %9509 = vmatprep.mubr.bf16.mxu0 %v5341
        %9510 = vmatmul.mubr.bf16.gmra.mrb[0].mxu0 %v5340
        %v9511 = vpop.f32.mrb[0].mxu0
        %v9512 = vadd.f32 %v9471, %v9511
        %v9513 = vpop.f32.mrb[0].mxu0
        %v9514 = vadd.f32 %v9473, %v9513
        %v9515 = vpop.f32.mrb[0].mxu0
        %v9516 = vpop.f32.mrb[0].mxu0
        %9517 = vdwg.mxu0
        %9518 = vmatprep.subr.bf16.mxu0 %v8136
        %9519 = vmatpush1.bf16.msra.mxu0 %v8135
        %9520 = vmatprep.subr.bf16.mxu0 %v8142
        %9521 = vmatpush1.bf16.msra.mxu0 %v8141
        %9522 = vmatprep.subr.bf16.mxu0 %v8148
        %9523 = vmatpush1.bf16.msra.mxu0 %v8147
        %9524 = vmatprep.subr.bf16.mxu0 %v8154
        %9525 = vmatpush1.bf16.msra.mxu0 %v8153
        %9526 = vmatprep.subr.bf16.mxu0 %v8160
        %9527 = vmatpush1.bf16.msra.mxu0 %v8159
        %9528 = vmatprep.subr.bf16.mxu0 %v8166
        %9529 = vmatpush1.bf16.msra.mxu0 %v8165
        %9530 = vmatprep.subr.bf16.mxu0 %v8172
        %9531 = vmatpush1.bf16.msra.mxu0 %v8171
        %9532 = vmatprep.subr.bf16.mxu0 %v8178
        %9533 = vmatpush1.bf16.msra.mxu0 %v8177
        %9534 = vmatprep.subr.bf16.mxu0 %v8184
        %9535 = vmatpush1.bf16.msra.mxu0 %v8183
        %9536 = vmatprep.subr.bf16.mxu0 %v8190
        %9537 = vmatpush1.bf16.msra.mxu0 %v8189
        %9538 = vmatprep.subr.bf16.mxu0 %v8196
        %9539 = vmatpush1.bf16.msra.mxu0 %v8195
        %9540 = vmatprep.subr.bf16.mxu0 %v8202
        %9541 = vmatpush1.bf16.msra.mxu0 %v8201
        %9542 = vmatprep.subr.bf16.mxu0 %v8208
        %9543 = vmatpush1.bf16.msra.mxu0 %v8207
        %9544 = vmatprep.subr.bf16.mxu0 %v8214
        %9545 = vmatpush1.bf16.msra.mxu0 %v8213
        %9546 = vmatprep.subr.bf16.mxu0 %v8220
        %9547 = vmatpush1.bf16.msra.mxu0 %v8219
        %9548 = vmatprep.subr.bf16.mxu0 %v8226
        %9549 = vmatpush1.bf16.msra.mxu0 %v8225
        %9550 = vmatprep.mubr.bf16.mxu0 %v5343
        %9551 = vmatmul.mubr.bf16.gmra.mrb[0].mxu0 %v5342
        %v9552 = vpop.f32.mrb[0].mxu0
        %v9553 = vadd.f32 %v9512, %v9552
        %v9554 = vpop.f32.mrb[0].mxu0
        %v9555 = vadd.f32 %v9514, %v9554
        %v9556 = vpop.f32.mrb[0].mxu0
        %v9557 = vpop.f32.mrb[0].mxu0
        %9558 = vdwg.mxu0
        %v9559 = vmax.f32 %v9061, 0.0
        %v9560 = vmax.f32 %v9063, 0.0
        %v9561 = vmax.f32 %v9307, 0.0
        %v9562 = vmax.f32 %v9309, 0.0
        %v9563 = vmax.f32 %v9553, 0.0
        %v9564 = vmax.f32 %v9555, 0.0
        %v9565 = vadd.f32 %v9559, %v5306
        %v9566 = vadd.f32 %v9560, %v5307
        %v9567 = vadd.f32 %v9561, %v5308
        %v9568 = vadd.f32 %v9562, %v5309
        %v9569 = vadd.f32 %v9563, %v5310
        %v9570 = vadd.f32 %v9564, %v5311
        %v9577 = vrot.slane %v9565, 1
        %v9578 = vrot.slane %v9566, 1
        %v9579 = vrot.slane %v9567, 1
        %v9580 = vrot.slane %v9568, 1
        %v9581 = vrot.slane %v9569, 1
        %v9582 = vrot.slane %v9570, 1
        %v9589 = vmul.f32 %v9565, %v9577
        %v9590 = vmul.f32 %v9566, %v9578
        %v9591 = vmul.f32 %v9567, %v9579
        %v9592 = vmul.f32 %v9568, %v9580
        %v9593 = vmul.f32 %v9569, %v9581
        %v9594 = vmul.f32 %v9570, %v9582
        %vm9595 = vcmask 1040384
        %v9596 = vsel %vm9595, %v9589, 0.0
        %v9597 = vsel %vm9595, %v9590, 0.0
        %v9598 = vadd.f32 %v9596, %v9597
        %v9599 = vsel %vm9595, %v9591, 0.0
        %v9600 = vadd.f32 %v9598, %v9599
        %v9601 = vsel %vm9595, %v9592, 0.0
        %v9602 = vadd.f32 %v9600, %v9601
        %v9603 = vsel %vm9595, %v9593, 0.0
        %v9604 = vadd.f32 %v9602, %v9603
        %v9605 = vsel %vm9595, %v9594, 0.0
        %v9606 = vadd.f32 %v9604, %v9605
        %9607 = vadd.xlane.f32.xlu0 %v9606
        %v9608 = vpop.xlane.xlu0 %9607
        %v9609 = vrot.slane %v9608, 4
        %v9610 = vadd.f32 %v9608, %v9609
        %v9611 = vrot.slane %v9610, 2
        %v9612 = vadd.f32 %v9610, %v9611
        %v9613 = vrot.slane %v9612, 1
        %v9614 = vadd.f32 %v9612, %v9613
        %s9615 = vtos %v9614
        %v9616 = vstv %s9615
        %v9617 = vmul.f32 %v9565, %v9565
        %v9618 = vmul.f32 %v9566, %v9566
        %v9619 = vmul.f32 %v9567, %v9567
        %v9620 = vmul.f32 %v9568, %v9568
        %v9621 = vmul.f32 %v9569, %v9569
        %v9622 = vmul.f32 %v9570, %v9570
        %v9623 = vsel %vm9595, %v9617, 0.0
        %v9624 = vsel %vm9595, %v9618, 0.0
        %v9625 = vadd.f32 %v9623, %v9624
        %v9626 = vsel %vm9595, %v9619, 0.0
        %v9627 = vadd.f32 %v9625, %v9626
        %v9628 = vsel %vm9595, %v9620, 0.0
        %v9629 = vadd.f32 %v9627, %v9628
        %v9630 = vsel %vm9595, %v9621, 0.0
        %v9631 = vadd.f32 %v9629, %v9630
        %v9632 = vsel %vm9595, %v9622, 0.0
        %v9633 = vadd.f32 %v9631, %v9632
        %9634 = vadd.xlane.f32.xlu0 %v9633
        %v9635 = vpop.xlane.xlu0 %9634
        %v9636 = vrot.slane %v9635, 4
        %v9637 = vadd.f32 %v9635, %v9636
        %v9638 = vrot.slane %v9637, 2
        %v9639 = vadd.f32 %v9637, %v9638
        %v9640 = vrot.slane %v9639, 1
        %v9641 = vadd.f32 %v9639, %v9640
        %s9642 = vtos %v9641
        %v9643 = vstv %s9642
        %v9650 = vrot.slane %v9617, 1
        %v9651 = vrot.slane %v9618, 1
        %v9652 = vrot.slane %v9619, 1
        %v9653 = vrot.slane %v9620, 1
        %v9654 = vrot.slane %v9621, 1
        %v9655 = vrot.slane %v9622, 1
        %v9662 = vsel %vm9595, %v9650, 0.0
        %v9663 = vsel %vm9595, %v9651, 0.0
        %v9664 = vadd.f32 %v9662, %v9663
        %v9665 = vsel %vm9595, %v9652, 0.0
        %v9666 = vadd.f32 %v9664, %v9665
        %v9667 = vsel %vm9595, %v9653, 0.0
        %v9668 = vadd.f32 %v9666, %v9667
        %v9669 = vsel %vm9595, %v9654, 0.0
        %v9670 = vadd.f32 %v9668, %v9669
        %v9671 = vsel %vm9595, %v9655, 0.0
        %v9672 = vadd.f32 %v9670, %v9671
        %9673 = vadd.xlane.f32.xlu0 %v9672
        %v9674 = vpop.xlane.xlu0 %9673
        %v9675 = vrot.slane %v9674, 4
        %v9676 = vadd.f32 %v9674, %v9675
        %v9677 = vrot.slane %v9676, 2
        %v9678 = vadd.f32 %v9676, %v9677
        %v9679 = vrot.slane %v9678, 1
        %v9680 = vadd.f32 %v9678, %v9679
        %s9681 = vtos %v9680
        %v9682 = vstv %s9681
        %v9683 = vmul.f32 %v9643, %v9682
        %v9684 = vrsqrt.pop %v9683
        %v9685 = vmul.f32 %v9683, %v9684
        %vm9686 = vcmp.eq.f32.partialorder %v9683, inf
        %v9687 = vsel %vm9686, %v9683, %v9685
        %vm9688 = vcmp.eq.f32.partialorder %v9683, 0.0
        %v9689 = vand.u32 %v9683, 2147483648
        %v9690 = vsel %vm9688, %v9689, %v9687
        %v9691 = vmax.f32 %v9690, 1e-06
        %v9692 = vrcp.pop %v9691
        %v9693 = vmul.f32 %v9616, %v9692
        %vm9694 = vcmask 0
        %9695 = vst.msk [vmem:[%s294] sm:$0x1] %vm9694, %v9693
        %p9696 = scmp.lt.s32.totalorder %s21, 3
        %s9697 = scalar_select %p9696, %s21, 3
        %s9698 = scalar_lea.vmem %s5, %s9697
        // Predicated region
        $region61: #{tpu_custom_call.1} parent=39 // pred_check
          %p9699 = pneg %p149
        $region62: #{tpu_custom_call.1} parent=39 // pred_check_branch
          %9701 = sbr.rel (%p9699) target = $region64
        $region63: #{tpu_custom_call.1} parent=39 // pred_region
          _
        $region64: #{tpu_custom_call.1} parent=39 // pred_fallthru
          _
      $region40: #{tpu_custom_call.1} parent=5 // pred_fallthru
        _
      %p9702 = scmp.le.s32.totalorder 2, %s16
      // Predicated region
      $region65: #{tpu_custom_call.1} parent=5 // pred_check
        %p9703 = pneg %p9702
      $region66: #{tpu_custom_call.1} parent=5 // pred_check_branch
        %9705 = sbr.rel (%p9703) target = $region68
      $region67: #{tpu_custom_call.1} parent=5 // pred_region
        %s9706 = ssub.s32 %s16, 2
        // Predicated region
        $region69: #{tpu_custom_call.1} parent=67 // pred_check
          %p9707 = pneg %p155
        $region70: #{tpu_custom_call.1} parent=67 // pred_check_branch
          %9709 = sbr.rel (%p9707) target = $region72
        $region71: #{tpu_custom_call.1} parent=67 // pred_region
          %p9710 = scmp.lt.s32.totalorder %s22, 3
          %s9711 = scalar_select %p9710, %s22, 3
          %s9712 = scalar_lea.vmem %s5, %s9711
        $region72: #{tpu_custom_call.1} parent=67 // pred_fallthru
          _
      $region68: #{tpu_custom_call.1} parent=5 // pred_fallthru
        _
    $region6: #{tpu_custom_call.1} parent=1 // loop_footer
      %s20 = sadd.s32 1, %s16
    $region7: #{tpu_custom_call.1} parent=1 // loop_footer_branch
      %15 = sbr.rel target = $region3
    $region8: #{tpu_custom_call.1} parent=1 // loop_exit
      _
    %9713 = vsyncpa [#allocation3], 1
    %s9714 = scalar_lea.sflag [#allocation3], 1
    %9715 = vsyncpa %s9714, 1
    %9716 = vsyncpa [#allocation5], 1
    %9717 = vsyncpa [#allocation8], 1

</llo_original>
